<compile_context>
chip_gen: v7x
topology: tpu7x:2x2x1
jax: 0.10.0
libtpu: 0.0.40
codegen_flags: <defaults>
</compile_context>

<pallas_src>
import functools
import math

import jax
import jax.numpy as jnp
from jax import lax
from jax.experimental import pallas as pl
from jax.experimental.pallas import tpu as pltpu

# ----------------------------- hyperparameters --------------------------------
NTOKEN = 50
NOUTPUTS = 5
D_MODEL = 32
NHEAD = 4
D_HEAD = D_MODEL // NHEAD
D_FFN = 64
NLAYERS = 2

MEM_LEN = 1600      # TransfoXLConfig default
CLAMP_LEN = 1000    # TransfoXLConfig default
LN_EPS = 1e-5
NEG = -1e30         # mask value (matches HF fp32 masking closely enough)
SCALE = 1.0 / math.sqrt(D_HEAD)
EMB_SCALE = math.sqrt(D_MODEL)
DEC_PAD = 128       # lane-dense decoder output width (sliced back to NOUTPUTS)


# ------------------------------- fused kernel ----------------------------------
def _layer_norm(y, g, b):
    mu = jnp.mean(y, axis=-1, keepdims=True)
    var = jnp.mean(jnp.square(y - mu), axis=-1, keepdims=True)
    return (y - mu) * lax.rsqrt(var + LN_EPS) * g + b


def _fused_kernel(src_ref,                        # SMEM (S, B) int32 (scalar prefetch)
                  embed_ref, emb_proj_ref, rT_ref,
                  w_qkv_ref, w_rT_ref, w_o_ref, rwb_ref, rrb_ref,
                  ln1_g_ref, ln1_b_ref,
                  w_ff1_ref, b_ff1_ref, w_ff2_ref, b_ff2_ref,
                  ln2_g_ref, ln2_b_ref,
                  dec_w_ref, dec_b_ref,
                  out_ref,
                  *, q_len, kpad):
    b = pl.program_id(0)
    Q = q_len

    # ---- adaptive embedding (single cluster): lookup -> proj -> scale --------
    rows = []
    for i in range(Q):
        tok = src_ref[i, b]                       # scalar from SMEM
        rows.append(embed_ref[tok])               # dynamic row load, (1, D)
    x = jnp.concatenate(rows, axis=0)             # (Q, D)
    x = jnp.dot(x, emb_proj_ref[...], preferred_element_type=jnp.float32) * EMB_SCALE

    # ---- masks, generated in-kernel ------------------------------------------
    # Mem part works in *pre-rel-shift* column coords c: key j = c - (Q-1-i).
    # Unmasked mem keys (i < j < mlen)  <=>  Q <= c <= mlen + Q - 2 - i.
    row_i = lax.broadcasted_iota(jnp.int32, (Q, kpad), 0)
    col_c = lax.broadcasted_iota(jnp.int32, (Q, kpad), 1)
    mask_mem = jnp.logical_or(col_c < Q, col_c + row_i >= MEM_LEN + Q - 1)   # (Q, kpad)
    mask_mem = jnp.concatenate([mask_mem] * NHEAD, axis=0)                   # (N*Q, kpad)
    qi = lax.broadcasted_iota(jnp.int32, (Q, Q), 0)
    qt = lax.broadcasted_iota(jnp.int32, (Q, Q), 1)
    mask_cur = qt > qi                                                       # (Q, Q) causal

    for l in range(NLAYERS):
        w_qkv = w_qkv_ref[l]                      # (D, 3D)
        w_rT = w_rT_ref[l]                        # (D, D)   (= r_net weight, transposed)
        rwb = rwb_ref[l]                          # (1, D)
        rrb = rrb_ref[l]                          # (1, D)

        qkv = jnp.dot(x, w_qkv, preferred_element_type=jnp.float32)          # (Q, 3D)

        # ---- BD term (pre rel-shift) for all heads, stacked in M -------------
        # bd_n = (q_n + r_r_bias_n) @ w_r_n^T @ r^T   (reassociated: no rk materialized)
        tmp = []
        for n in range(NHEAD):
            hs = slice(n * D_HEAD, (n + 1) * D_HEAD)
            q_rr = qkv[:, hs] + rrb[:, hs]                                    # (Q, Dh)
            tmp.append(jnp.dot(q_rr, w_rT[hs, :], preferred_element_type=jnp.float32))
        tmp = jnp.concatenate(tmp, axis=0)                                    # (N*Q, D)
        bd = jnp.dot(tmp, rT_ref[...], preferred_element_type=jnp.float32)    # (N*Q, kpad)

        # mem-key scores: only BD (mem K is exactly zero), shifted mask handles rel_shift
        s_mem = jnp.where(mask_mem, NEG, bd * SCALE)                          # (N*Q, kpad)

        # ---- current-key scores: AC + rel-shifted BD band --------------------
        s_cur_blocks = []
        for n in range(NHEAD):
            hs = slice(n * D_HEAD, (n + 1) * D_HEAD)
            q_rw = qkv[:, hs] + rwb[:, hs]                                    # (Q, Dh)
            k_n = qkv[:, D_MODEL + n * D_HEAD:D_MODEL + (n + 1) * D_HEAD]     # (Q, Dh)
            ac = lax.dot_general(q_rw, k_n, (((1,), (1,)), ((), ())),
                                 preferred_element_type=jnp.float32)          # (Q, Q)
            # rel_shift for the current block: bd_cur[i, t] = bd[i, mlen + Q-1 + t - i]
            band = bd[n * Q:(n + 1) * Q, MEM_LEN:MEM_LEN + 2 * Q - 1]         # (Q, 2Q-1)
            brows = [band[i:i + 1, Q - 1 - i:2 * Q - 1 - i] for i in range(Q)]
            bd_cur = jnp.concatenate(brows, axis=0)                           # (Q, Q)
            s_cur_blocks.append(jnp.where(mask_cur, NEG, (ac + bd_cur) * SCALE))
        s_cur = jnp.concatenate(s_cur_blocks, axis=0)                         # (N*Q, Q)

        # ---- softmax over mem + current keys (mem only in the denominator) ---
        m = jnp.maximum(jnp.max(s_mem, axis=-1, keepdims=True),
                        jnp.max(s_cur, axis=-1, keepdims=True))               # (N*Q, 1)
        e_cur = jnp.exp(s_cur - m)                                            # (N*Q, Q)
        den = (jnp.sum(jnp.exp(s_mem - m), axis=-1, keepdims=True)
               + jnp.sum(e_cur, axis=-1, keepdims=True))                      # (N*Q, 1)
        inv_den = pl.reciprocal(den, approx=True)

        heads = []
        for n in range(NHEAD):
            v_n = qkv[:, 2 * D_MODEL + n * D_HEAD:2 * D_MODEL + (n + 1) * D_HEAD]
            p_n = e_cur[n * Q:(n + 1) * Q, :]                                 # (Q, Q)
            heads.append(jnp.dot(p_n, v_n, preferred_element_type=jnp.float32)
                         * inv_den[n * Q:(n + 1) * Q, :])
        attn_vec = jnp.concatenate(heads, axis=1)                             # (Q, D)

        # o_net (no bias) + residual + post-LayerNorm
        y = x + jnp.dot(attn_vec, w_o_ref[l], preferred_element_type=jnp.float32)
        x = _layer_norm(y, ln1_g_ref[l], ln1_b_ref[l])

        # positionwise FFN + residual + post-LayerNorm
        h = jnp.maximum(
            jnp.dot(x, w_ff1_ref[l], preferred_element_type=jnp.float32) + b_ff1_ref[l],
            0.0)
        c = jnp.dot(h, w_ff2_ref[l], preferred_element_type=jnp.float32) + b_ff2_ref[l]
        x = _layer_norm(x + c, ln2_g_ref[l], ln2_b_ref[l])

    # ---- decoder Linear (lane-padded to 128) + sigmoid ------------------------
    z = jnp.dot(x, dec_w_ref[...], preferred_element_type=jnp.float32) + dec_b_ref[...]
    out_ref[0] = jax.nn.sigmoid(z)                                            # (Q, 128)


# --------------------------------- wrapper --------------------------------------
def transformer_xl_forward(params, src):
    S, B = src.shape                              # seq-major, like the PyTorch module
    K = MEM_LEN + S                               # klen with zero mems
    KPAD = ((max(K, MEM_LEN + 2 * S - 1) + 127) // 128) * 128   # 128-aligned key dim

    # sinusoidal relative positional embedding (clamped), transposed + zero-padded
    pos_seq = jnp.minimum(jnp.arange(K - 1, -1, -1, dtype=jnp.float32), float(CLAMP_LEN))
    inv_freq = 1.0 / (10000.0 ** (jnp.arange(0, D_MODEL, 2, dtype=jnp.float32) / D_MODEL))
    sinusoid = pos_seq[:, None] * inv_freq[None, :]
    r = jnp.concatenate([jnp.sin(sinusoid), jnp.cos(sinusoid)], axis=-1)      # (K, D)
    rT = jnp.zeros((D_MODEL, KPAD), jnp.float32).at[:, :K].set(r.T)           # (D, KPAD)

    embed3d = params["embed"].reshape(NTOKEN, 1, D_MODEL)
    dec_w = jnp.zeros((D_MODEL, DEC_PAD), jnp.float32).at[:, :NOUTPUTS].set(params["dec_w"])
    dec_b = jnp.zeros((1, DEC_PAD), jnp.float32).at[:, :NOUTPUTS].set(
        params["dec_b"].reshape(1, NOUTPUTS))

    kern = functools.partial(_fused_kernel, q_len=S, kpad=KPAD)

    grid_spec = pltpu.PrefetchScalarGridSpec(
        num_scalar_prefetch=1,                    # token ids -> SMEM
        grid=(B,),                                # one program per batch column
        in_specs=[
            pl.BlockSpec((NTOKEN, 1, D_MODEL), lambda b, s: (0, 0, 0)),       # embed
            pl.BlockSpec((D_MODEL, D_MODEL), lambda b, s: (0, 0)),            # emb_proj
            pl.BlockSpec((D_MODEL, KPAD), lambda b, s: (0, 0)),               # rT
            pl.BlockSpec((NLAYERS, D_MODEL, 3 * D_MODEL), lambda b, s: (0, 0, 0)),
            pl.BlockSpec((NLAYERS, D_MODEL, D_MODEL), lambda b, s: (0, 0, 0)),  # w_rT
            pl.BlockSpec((NLAYERS, D_MODEL, D_MODEL), lambda b, s: (0, 0, 0)),  # w_o
            pl.BlockSpec((NLAYERS, 1, D_MODEL), lambda b, s: (0, 0, 0)),      # r_w_bias
            pl.BlockSpec((NLAYERS, 1, D_MODEL), lambda b, s: (0, 0, 0)),      # r_r_bias
            pl.BlockSpec((NLAYERS, 1, D_MODEL), lambda b, s: (0, 0, 0)),      # ln1_g
            pl.BlockSpec((NLAYERS, 1, D_MODEL), lambda b, s: (0, 0, 0)),      # ln1_b
            pl.BlockSpec((NLAYERS, D_MODEL, D_FFN), lambda b, s: (0, 0, 0)),  # w_ff1
            pl.BlockSpec((NLAYERS, 1, D_FFN), lambda b, s: (0, 0, 0)),        # b_ff1
            pl.BlockSpec((NLAYERS, D_FFN, D_MODEL), lambda b, s: (0, 0, 0)),  # w_ff2
            pl.BlockSpec((NLAYERS, 1, D_MODEL), lambda b, s: (0, 0, 0)),      # b_ff2
            pl.BlockSpec((NLAYERS, 1, D_MODEL), lambda b, s: (0, 0, 0)),      # ln2_g
            pl.BlockSpec((NLAYERS, 1, D_MODEL), lambda b, s: (0, 0, 0)),      # ln2_b
            pl.BlockSpec((D_MODEL, DEC_PAD), lambda b, s: (0, 0)),            # dec_w
            pl.BlockSpec((1, DEC_PAD), lambda b, s: (0, 0)),                  # dec_b
        ],
        out_specs=pl.BlockSpec((1, S, DEC_PAD), lambda b, s: (b, 0, 0)),
    )

    out = pl.pallas_call(
        kern,
        grid_spec=grid_spec,
        out_shape=jax.ShapeDtypeStruct((B, S, DEC_PAD), jnp.float32),
        compiler_params=pltpu.CompilerParams(dimension_semantics=("parallel",)),
    )(src.astype(jnp.int32), embed3d, params["emb_proj"], rT,
      params["w_qkv"], params["w_rT"], params["w_o"],
      params["r_w_bias"], params["r_r_bias"],
      params["ln1_g"], params["ln1_b"],
      params["w_ff1"], params["b_ff1"], params["w_ff2"], params["b_ff2"],
      params["ln2_g"], params["ln2_b"],
      dec_w, dec_b)

    # (B, S, 128) -> (S, B, noutputs), matching the PyTorch module output layout
    return jnp.transpose(out[:, :, :NOUTPUTS], (1, 0, 2))


transformer_xl_forward = jax.jit(transformer_xl_forward)


# ----------------------------- parameter init ----------------------------------
def init_params(key):
    ks = jax.random.split(key, 10)

    def nrm(k, shape, std=0.02):
        return std * jax.random.normal(k, shape, jnp.float32)

    return {
        "embed": nrm(ks[0], (NTOKEN, D_MODEL)),
        "emb_proj": nrm(ks[1], (D_MODEL, D_MODEL)),
        "w_qkv": nrm(ks[2], (NLAYERS, D_MODEL, 3 * D_MODEL)),
        "w_rT": nrm(ks[3], (NLAYERS, D_MODEL, D_MODEL)),        # r_net weight (transposed)
        "w_o": nrm(ks[4], (NLAYERS, D_MODEL, D_MODEL)),
        "r_w_bias": nrm(ks[5], (NLAYERS, 1, D_MODEL)),
        "r_r_bias": nrm(ks[6], (NLAYERS, 1, D_MODEL)),
        "ln1_g": jnp.ones((NLAYERS, 1, D_MODEL), jnp.float32),
        "ln1_b": jnp.zeros((NLAYERS, 1, D_MODEL), jnp.float32),
        "w_ff1": nrm(ks[7], (NLAYERS, D_MODEL, D_FFN)),
        "b_ff1": jnp.zeros((NLAYERS, 1, D_FFN), jnp.float32),
        "w_ff2": nrm(ks[8], (NLAYERS, D_FFN, D_MODEL)),
        "b_ff2": jnp.zeros((NLAYERS, 1, D_MODEL), jnp.float32),
        "ln2_g": jnp.ones((NLAYERS, 1, D_MODEL), jnp.float32),
        "ln2_b": jnp.zeros((NLAYERS, 1, D_MODEL), jnp.float32),
        "dec_w": nrm(ks[9], (D_MODEL, NOUTPUTS)),
        "dec_b": jnp.zeros((NOUTPUTS,), jnp.float32),
    }


# ----------------------------------- main ---------------------------------------
if __name__ == "__main__":
    key = jax.random.PRNGKey(0)
    pkey, dkey = jax.random.split(key)
    params = init_params(pkey)

    S, B = 8, 2                       # seq=8, batch=2
    src = jax.random.randint(dkey, (S, B), 0, NTOKEN, dtype=jnp.int32)

    out = transformer_xl_forward(params, src)
    out = jax.block_until_ready(out)

    assert out.shape == (S, B, NOUTPUTS), out.shape
    assert bool(jnp.all(jnp.isfinite(out)))
    assert bool(jnp.all((out >= 0.0) & (out <= 1.0)))
    print("KERNEL_OK")
</pallas_src>

<mosaic_0001>
module attributes {stable_mosaic.version = 11 : i64} {
  func.func @_fused_kernel(%arg0: i32, %arg1: memref<8x2xi32, #tpu.memory_space<smem>>, %arg2: memref<50x1x32xf32, #tpu.memory_space<vmem>>, %arg3: memref<32x32xf32, #tpu.memory_space<vmem>>, %arg4: memref<32x1664xf32, #tpu.memory_space<vmem>>, %arg5: memref<2x32x96xf32, #tpu.memory_space<vmem>>, %arg6: memref<2x32x32xf32, #tpu.memory_space<vmem>>, %arg7: memref<2x32x32xf32, #tpu.memory_space<vmem>>, %arg8: memref<2x1x32xf32, #tpu.memory_space<vmem>>, %arg9: memref<2x1x32xf32, #tpu.memory_space<vmem>>, %arg10: memref<2x1x32xf32, #tpu.memory_space<vmem>>, %arg11: memref<2x1x32xf32, #tpu.memory_space<vmem>>, %arg12: memref<2x32x64xf32, #tpu.memory_space<vmem>>, %arg13: memref<2x1x64xf32, #tpu.memory_space<vmem>>, %arg14: memref<2x64x32xf32, #tpu.memory_space<vmem>>, %arg15: memref<2x1x32xf32, #tpu.memory_space<vmem>>, %arg16: memref<2x1x32xf32, #tpu.memory_space<vmem>>, %arg17: memref<2x1x32xf32, #tpu.memory_space<vmem>>, %arg18: memref<32x128xf32, #tpu.memory_space<vmem>>, %arg19: memref<1x128xf32, #tpu.memory_space<vmem>>, %arg20: memref<1x8x128xf32, #tpu.memory_space<vmem>>) attributes {dimension_semantics = [#tpu.dimension_semantics<parallel>], iteration_bounds = array<i64: 2>, scalar_prefetch = 1 : i64, scratch_operands = 0 : i64, tpu.core_type = #tpu.core_type<tc>, window_params = [{pipeline_mode = #tpu.pipeline_mode<synchronous>, transform_indices = @transform_0, window_bounds = array<i64: 50, 1, 32>}, {pipeline_mode = #tpu.pipeline_mode<synchronous>, transform_indices = @transform_1, window_bounds = array<i64: 32, 32>}, {pipeline_mode = #tpu.pipeline_mode<synchronous>, transform_indices = @transform_2, window_bounds = array<i64: 32, 1664>}, {pipeline_mode = #tpu.pipeline_mode<synchronous>, transform_indices = @transform_3, window_bounds = array<i64: 2, 32, 96>}, {pipeline_mode = #tpu.pipeline_mode<synchronous>, transform_indices = @transform_4, window_bounds = array<i64: 2, 32, 32>}, {pipeline_mode = #tpu.pipeline_mode<synchronous>, transform_indices = @transform_5, window_bounds = array<i64: 2, 32, 32>}, {pipeline_mode = #tpu.pipeline_mode<synchronous>, transform_indices = @transform_6, window_bounds = array<i64: 2, 1, 32>}, {pipeline_mode = #tpu.pipeline_mode<synchronous>, transform_indices = @transform_7, window_bounds = array<i64: 2, 1, 32>}, {pipeline_mode = #tpu.pipeline_mode<synchronous>, transform_indices = @transform_8, window_bounds = array<i64: 2, 1, 32>}, {pipeline_mode = #tpu.pipeline_mode<synchronous>, transform_indices = @transform_9, window_bounds = array<i64: 2, 1, 32>}, {pipeline_mode = #tpu.pipeline_mode<synchronous>, transform_indices = @transform_10, window_bounds = array<i64: 2, 32, 64>}, {pipeline_mode = #tpu.pipeline_mode<synchronous>, transform_indices = @transform_11, window_bounds = array<i64: 2, 1, 64>}, {pipeline_mode = #tpu.pipeline_mode<synchronous>, transform_indices = @transform_12, window_bounds = array<i64: 2, 64, 32>}, {pipeline_mode = #tpu.pipeline_mode<synchronous>, transform_indices = @transform_13, window_bounds = array<i64: 2, 1, 32>}, {pipeline_mode = #tpu.pipeline_mode<synchronous>, transform_indices = @transform_14, window_bounds = array<i64: 2, 1, 32>}, {pipeline_mode = #tpu.pipeline_mode<synchronous>, transform_indices = @transform_15, window_bounds = array<i64: 2, 1, 32>}, {pipeline_mode = #tpu.pipeline_mode<synchronous>, transform_indices = @transform_16, window_bounds = array<i64: 32, 128>}, {pipeline_mode = #tpu.pipeline_mode<synchronous>, transform_indices = @transform_17, window_bounds = array<i64: 1, 128>}, {transform_indices = @transform_18, window_bounds = array<i64: 1, 8, 128>}]} {
    %c0 = arith.constant 0 : index
    %0 = arith.index_cast %arg0 : i32 to index
    %1 = memref.load %arg1[%c0, %0] : memref<8x2xi32, #tpu.memory_space<smem>>
    %2 = arith.index_cast %1 : i32 to index
    %c0_0 = arith.constant 0 : index
    %c0_1 = arith.constant 0 : index
    %3 = vector.load %arg2[%2, %c0_0, %c0_1] : memref<50x1x32xf32, #tpu.memory_space<vmem>>, vector<1x1x32xf32>
    %4 = vector.shape_cast %3 : vector<1x1x32xf32> to vector<1x32xf32>
    %c1 = arith.constant 1 : index
    %5 = arith.index_cast %arg0 : i32 to index
    %6 = memref.load %arg1[%c1, %5] : memref<8x2xi32, #tpu.memory_space<smem>>
    %7 = arith.index_cast %6 : i32 to index
    %c0_2 = arith.constant 0 : index
    %c0_3 = arith.constant 0 : index
    %8 = vector.load %arg2[%7, %c0_2, %c0_3] : memref<50x1x32xf32, #tpu.memory_space<vmem>>, vector<1x1x32xf32>
    %9 = vector.shape_cast %8 : vector<1x1x32xf32> to vector<1x32xf32>
    %c2 = arith.constant 2 : index
    %10 = arith.index_cast %arg0 : i32 to index
    %11 = memref.load %arg1[%c2, %10] : memref<8x2xi32, #tpu.memory_space<smem>>
    %12 = arith.index_cast %11 : i32 to index
    %c0_4 = arith.constant 0 : index
    %c0_5 = arith.constant 0 : index
    %13 = vector.load %arg2[%12, %c0_4, %c0_5] : memref<50x1x32xf32, #tpu.memory_space<vmem>>, vector<1x1x32xf32>
    %14 = vector.shape_cast %13 : vector<1x1x32xf32> to vector<1x32xf32>
    %c3 = arith.constant 3 : index
    %15 = arith.index_cast %arg0 : i32 to index
    %16 = memref.load %arg1[%c3, %15] : memref<8x2xi32, #tpu.memory_space<smem>>
    %17 = arith.index_cast %16 : i32 to index
    %c0_6 = arith.constant 0 : index
    %c0_7 = arith.constant 0 : index
    %18 = vector.load %arg2[%17, %c0_6, %c0_7] : memref<50x1x32xf32, #tpu.memory_space<vmem>>, vector<1x1x32xf32>
    %19 = vector.shape_cast %18 : vector<1x1x32xf32> to vector<1x32xf32>
    %c4 = arith.constant 4 : index
    %20 = arith.index_cast %arg0 : i32 to index
    %21 = memref.load %arg1[%c4, %20] : memref<8x2xi32, #tpu.memory_space<smem>>
    %22 = arith.index_cast %21 : i32 to index
    %c0_8 = arith.constant 0 : index
    %c0_9 = arith.constant 0 : index
    %23 = vector.load %arg2[%22, %c0_8, %c0_9] : memref<50x1x32xf32, #tpu.memory_space<vmem>>, vector<1x1x32xf32>
    %24 = vector.shape_cast %23 : vector<1x1x32xf32> to vector<1x32xf32>
    %c5 = arith.constant 5 : index
    %25 = arith.index_cast %arg0 : i32 to index
    %26 = memref.load %arg1[%c5, %25] : memref<8x2xi32, #tpu.memory_space<smem>>
    %27 = arith.index_cast %26 : i32 to index
    %c0_10 = arith.constant 0 : index
    %c0_11 = arith.constant 0 : index
    %28 = vector.load %arg2[%27, %c0_10, %c0_11] : memref<50x1x32xf32, #tpu.memory_space<vmem>>, vector<1x1x32xf32>
    %29 = vector.shape_cast %28 : vector<1x1x32xf32> to vector<1x32xf32>
    %c6 = arith.constant 6 : index
    %30 = arith.index_cast %arg0 : i32 to index
    %31 = memref.load %arg1[%c6, %30] : memref<8x2xi32, #tpu.memory_space<smem>>
    %32 = arith.index_cast %31 : i32 to index
    %c0_12 = arith.constant 0 : index
    %c0_13 = arith.constant 0 : index
    %33 = vector.load %arg2[%32, %c0_12, %c0_13] : memref<50x1x32xf32, #tpu.memory_space<vmem>>, vector<1x1x32xf32>
    %34 = vector.shape_cast %33 : vector<1x1x32xf32> to vector<1x32xf32>
    %c7 = arith.constant 7 : index
    %35 = arith.index_cast %arg0 : i32 to index
    %36 = memref.load %arg1[%c7, %35] : memref<8x2xi32, #tpu.memory_space<smem>>
    %37 = arith.index_cast %36 : i32 to index
    %c0_14 = arith.constant 0 : index
    %c0_15 = arith.constant 0 : index
    %38 = vector.load %arg2[%37, %c0_14, %c0_15] : memref<50x1x32xf32, #tpu.memory_space<vmem>>, vector<1x1x32xf32>
    %39 = vector.shape_cast %38 : vector<1x1x32xf32> to vector<1x32xf32>
    %40 = tpu.concatenate %4, %9, %14, %19, %24, %29, %34, %39 in 0 : vector<1x32xf32>, vector<1x32xf32>, vector<1x32xf32>, vector<1x32xf32>, vector<1x32xf32>, vector<1x32xf32>, vector<1x32xf32>, vector<1x32xf32> -> vector<8x32xf32>
    %c0_16 = arith.constant 0 : index
    %c0_17 = arith.constant 0 : index
    %41 = vector.load %arg3[%c0_16, %c0_17] : memref<32x32xf32, #tpu.memory_space<vmem>>, vector<32x32xf32>
    %cst = arith.constant dense<0.000000e+00> : vector<8x32xf32>
    %42 = tpu.matmul %40, %41, %cst {dimension_numbers = #tpu.dot_dimension_numbers<[1], [0], [0], [1], [0, 0, 1, 1], [], []>} : vector<8x32xf32>, vector<32x32xf32>, vector<8x32xf32> -> vector<8x32xf32>
    %cst_18 = arith.constant 5.65685415 : f32
    %43 = vector.broadcast %cst_18 : f32 to vector<8x32xf32>
    %44 = arith.mulf %42, %43 : vector<8x32xf32>
    %45 = tpu.iota {dimensions = array<i32: 0>} : vector<8x1664xi32>
    %46 = tpu.iota {dimensions = array<i32: 1>} : vector<8x1664xi32>
    %c8_i32 = arith.constant 8 : i32
    %47 = vector.broadcast %c8_i32 : i32 to vector<8x1664xi32>
    %48 = arith.cmpi slt, %46, %47 : vector<8x1664xi32>
    %49 = arith.addi %46, %45 : vector<8x1664xi32>
    %c1607_i32 = arith.constant 1607 : i32
    %50 = vector.broadcast %c1607_i32 : i32 to vector<8x1664xi32>
    %51 = arith.cmpi sge, %49, %50 : vector<8x1664xi32>
    %52 = arith.ori %48, %51 : vector<8x1664xi1>
    %53 = tpu.concatenate %52, %52, %52, %52 in 0 : vector<8x1664xi1>, vector<8x1664xi1>, vector<8x1664xi1>, vector<8x1664xi1> -> vector<32x1664xi1>
    %54 = tpu.iota {dimensions = array<i32: 0>} : vector<8x8xi32>
    %55 = tpu.iota {dimensions = array<i32: 1>} : vector<8x8xi32>
    %56 = arith.cmpi sgt, %55, %54 : vector<8x8xi32>
    %c0_19 = arith.constant 0 : index
    %c0_20 = arith.constant 0 : index
    %c0_21 = arith.constant 0 : index
    %57 = vector.load %arg5[%c0_19, %c0_20, %c0_21] : memref<2x32x96xf32, #tpu.memory_space<vmem>>, vector<1x32x96xf32>
    %58 = vector.shape_cast %57 : vector<1x32x96xf32> to vector<32x96xf32>
    %c0_22 = arith.constant 0 : index
    %c0_23 = arith.constant 0 : index
    %c0_24 = arith.constant 0 : index
    %59 = vector.load %arg6[%c0_22, %c0_23, %c0_24] : memref<2x32x32xf32, #tpu.memory_space<vmem>>, vector<1x32x32xf32>
    %60 = vector.shape_cast %59 : vector<1x32x32xf32> to vector<32x32xf32>
    %c0_25 = arith.constant 0 : index
    %c0_26 = arith.constant 0 : index
    %c0_27 = arith.constant 0 : index
    %61 = vector.load %arg8[%c0_25, %c0_26, %c0_27] : memref<2x1x32xf32, #tpu.memory_space<vmem>>, vector<1x1x32xf32>
    %62 = vector.shape_cast %61 : vector<1x1x32xf32> to vector<1x32xf32>
    %c0_28 = arith.constant 0 : index
    %c0_29 = arith.constant 0 : index
    %c0_30 = arith.constant 0 : index
    %63 = vector.load %arg9[%c0_28, %c0_29, %c0_30] : memref<2x1x32xf32, #tpu.memory_space<vmem>>, vector<1x1x32xf32>
    %64 = vector.shape_cast %63 : vector<1x1x32xf32> to vector<1x32xf32>
    %cst_31 = arith.constant dense<0.000000e+00> : vector<8x96xf32>
    %65 = tpu.matmul %44, %58, %cst_31 {dimension_numbers = #tpu.dot_dimension_numbers<[1], [0], [0], [1], [0, 0, 1, 1], [], []>} : vector<8x32xf32>, vector<32x96xf32>, vector<8x96xf32> -> vector<8x96xf32>
    %66 = vector.extract_strided_slice %65 {offsets = [0, 0], sizes = [8, 8], strides = [1, 1]} : vector<8x96xf32> to vector<8x8xf32>
    %67 = vector.extract_strided_slice %64 {offsets = [0, 0], sizes = [1, 8], strides = [1, 1]} : vector<1x32xf32> to vector<1x8xf32>
    %68 = vector.broadcast %67 : vector<1x8xf32> to vector<8x8xf32>
    %69 = arith.addf %66, %68 : vector<8x8xf32>
    %70 = vector.extract_strided_slice %60 {offsets = [0, 0], sizes = [8, 32], strides = [1, 1]} : vector<32x32xf32> to vector<8x32xf32>
    %cst_32 = arith.constant dense<0.000000e+00> : vector<8x32xf32>
    %71 = tpu.matmul %69, %70, %cst_32 {dimension_numbers = #tpu.dot_dimension_numbers<[1], [0], [0], [1], [0, 0, 1, 1], [], []>} : vector<8x8xf32>, vector<8x32xf32>, vector<8x32xf32> -> vector<8x32xf32>
    %72 = vector.extract_strided_slice %65 {offsets = [0, 8], sizes = [8, 8], strides = [1, 1]} : vector<8x96xf32> to vector<8x8xf32>
    %73 = vector.extract_strided_slice %64 {offsets = [0, 8], sizes = [1, 8], strides = [1, 1]} : vector<1x32xf32> to vector<1x8xf32>
    %74 = vector.broadcast %73 : vector<1x8xf32> to vector<8x8xf32>
    %75 = arith.addf %72, %74 : vector<8x8xf32>
    %76 = vector.extract_strided_slice %60 {offsets = [8, 0], sizes = [8, 32], strides = [1, 1]} : vector<32x32xf32> to vector<8x32xf32>
    %cst_33 = arith.constant dense<0.000000e+00> : vector<8x32xf32>
    %77 = tpu.matmul %75, %76, %cst_33 {dimension_numbers = #tpu.dot_dimension_numbers<[1], [0], [0], [1], [0, 0, 1, 1], [], []>} : vector<8x8xf32>, vector<8x32xf32>, vector<8x32xf32> -> vector<8x32xf32>
    %78 = vector.extract_strided_slice %65 {offsets = [0, 16], sizes = [8, 8], strides = [1, 1]} : vector<8x96xf32> to vector<8x8xf32>
    %79 = vector.extract_strided_slice %64 {offsets = [0, 16], sizes = [1, 8], strides = [1, 1]} : vector<1x32xf32> to vector<1x8xf32>
    %80 = vector.broadcast %79 : vector<1x8xf32> to vector<8x8xf32>
    %81 = arith.addf %78, %80 : vector<8x8xf32>
    %82 = vector.extract_strided_slice %60 {offsets = [16, 0], sizes = [8, 32], strides = [1, 1]} : vector<32x32xf32> to vector<8x32xf32>
    %cst_34 = arith.constant dense<0.000000e+00> : vector<8x32xf32>
    %83 = tpu.matmul %81, %82, %cst_34 {dimension_numbers = #tpu.dot_dimension_numbers<[1], [0], [0], [1], [0, 0, 1, 1], [], []>} : vector<8x8xf32>, vector<8x32xf32>, vector<8x32xf32> -> vector<8x32xf32>
    %84 = vector.extract_strided_slice %65 {offsets = [0, 24], sizes = [8, 8], strides = [1, 1]} : vector<8x96xf32> to vector<8x8xf32>
    %85 = vector.extract_strided_slice %64 {offsets = [0, 24], sizes = [1, 8], strides = [1, 1]} : vector<1x32xf32> to vector<1x8xf32>
    %86 = vector.broadcast %85 : vector<1x8xf32> to vector<8x8xf32>
    %87 = arith.addf %84, %86 : vector<8x8xf32>
    %88 = vector.extract_strided_slice %60 {offsets = [24, 0], sizes = [8, 32], strides = [1, 1]} : vector<32x32xf32> to vector<8x32xf32>
    %cst_35 = arith.constant dense<0.000000e+00> : vector<8x32xf32>
    %89 = tpu.matmul %87, %88, %cst_35 {dimension_numbers = #tpu.dot_dimension_numbers<[1], [0], [0], [1], [0, 0, 1, 1], [], []>} : vector<8x8xf32>, vector<8x32xf32>, vector<8x32xf32> -> vector<8x32xf32>
    %90 = tpu.concatenate %71, %77, %83, %89 in 0 : vector<8x32xf32>, vector<8x32xf32>, vector<8x32xf32>, vector<8x32xf32> -> vector<32x32xf32>
    %c0_36 = arith.constant 0 : index
    %c0_37 = arith.constant 0 : index
    %91 = vector.load %arg4[%c0_36, %c0_37] : memref<32x1664xf32, #tpu.memory_space<vmem>>, vector<32x1664xf32>
    %cst_38 = arith.constant dense<0.000000e+00> : vector<32x1664xf32>
    %92 = tpu.matmul %90, %91, %cst_38 {dimension_numbers = #tpu.dot_dimension_numbers<[1], [0], [0], [1], [0, 0, 1, 1], [], []>} : vector<32x32xf32>, vector<32x1664xf32>, vector<32x1664xf32> -> vector<32x1664xf32>
    %cst_39 = arith.constant 0.353553385 : f32
    %93 = vector.broadcast %cst_39 : f32 to vector<32x1664xf32>
    %94 = arith.mulf %92, %93 : vector<32x1664xf32>
    %cst_40 = arith.constant -1.000000e+30 : f32
    %95 = vector.broadcast %cst_40 : f32 to vector<32x1664xf32>
    %96 = arith.select %53, %95, %94 : vector<32x1664xi1>, vector<32x1664xf32>
    %97 = vector.extract_strided_slice %65 {offsets = [0, 0], sizes = [8, 8], strides = [1, 1]} : vector<8x96xf32> to vector<8x8xf32>
    %98 = vector.extract_strided_slice %62 {offsets = [0, 0], sizes = [1, 8], strides = [1, 1]} : vector<1x32xf32> to vector<1x8xf32>
    %99 = vector.broadcast %98 : vector<1x8xf32> to vector<8x8xf32>
    %100 = arith.addf %97, %99 : vector<8x8xf32>
    %101 = vector.extract_strided_slice %65 {offsets = [0, 32], sizes = [8, 8], strides = [1, 1]} : vector<8x96xf32> to vector<8x8xf32>
    %cst_41 = arith.constant dense<0.000000e+00> : vector<8x8xf32>
    %102 = tpu.matmul %100, %101, %cst_41 {dimension_numbers = #tpu.dot_dimension_numbers<[1], [1], [0], [0], [0, 0, 1, 0], [], []>} : vector<8x8xf32>, vector<8x8xf32>, vector<8x8xf32> -> vector<8x8xf32>
    %103 = vector.extract_strided_slice %92 {offsets = [0, 1600], sizes = [8, 15], strides = [1, 1]} : vector<32x1664xf32> to vector<8x15xf32>
    %104 = vector.extract_strided_slice %103 {offsets = [0, 7], sizes = [1, 8], strides = [1, 1]} : vector<8x15xf32> to vector<1x8xf32>
    %105 = vector.extract_strided_slice %103 {offsets = [1, 6], sizes = [1, 8], strides = [1, 1]} : vector<8x15xf32> to vector<1x8xf32>
    %106 = vector.extract_strided_slice %103 {offsets = [2, 5], sizes = [1, 8], strides = [1, 1]} : vector<8x15xf32> to vector<1x8xf32>
    %107 = vector.extract_strided_slice %103 {offsets = [3, 4], sizes = [1, 8], strides = [1, 1]} : vector<8x15xf32> to vector<1x8xf32>
    %108 = vector.extract_strided_slice %103 {offsets = [4, 3], sizes = [1, 8], strides = [1, 1]} : vector<8x15xf32> to vector<1x8xf32>
    %109 = vector.extract_strided_slice %103 {offsets = [5, 2], sizes = [1, 8], strides = [1, 1]} : vector<8x15xf32> to vector<1x8xf32>
    %110 = vector.extract_strided_slice %103 {offsets = [6, 1], sizes = [1, 8], strides = [1, 1]} : vector<8x15xf32> to vector<1x8xf32>
    %111 = vector.extract_strided_slice %103 {offsets = [7, 0], sizes = [1, 8], strides = [1, 1]} : vector<8x15xf32> to vector<1x8xf32>
    %112 = tpu.concatenate %104, %105, %106, %107, %108, %109, %110, %111 in 0 : vector<1x8xf32>, vector<1x8xf32>, vector<1x8xf32>, vector<1x8xf32>, vector<1x8xf32>, vector<1x8xf32>, vector<1x8xf32>, vector<1x8xf32> -> vector<8x8xf32>
    %113 = arith.addf %102, %112 : vector<8x8xf32>
    %cst_42 = arith.constant 0.353553385 : f32
    %114 = vector.broadcast %cst_42 : f32 to vector<8x8xf32>
    %115 = arith.mulf %113, %114 : vector<8x8xf32>
    %cst_43 = arith.constant -1.000000e+30 : f32
    %116 = vector.broadcast %cst_43 : f32 to vector<8x8xf32>
    %117 = arith.select %56, %116, %115 : vector<8x8xi1>, vector<8x8xf32>
    %118 = vector.extract_strided_slice %65 {offsets = [0, 8], sizes = [8, 8], strides = [1, 1]} : vector<8x96xf32> to vector<8x8xf32>
    %119 = vector.extract_strided_slice %62 {offsets = [0, 8], sizes = [1, 8], strides = [1, 1]} : vector<1x32xf32> to vector<1x8xf32>
    %120 = vector.broadcast %119 : vector<1x8xf32> to vector<8x8xf32>
    %121 = arith.addf %118, %120 : vector<8x8xf32>
    %122 = vector.extract_strided_slice %65 {offsets = [0, 40], sizes = [8, 8], strides = [1, 1]} : vector<8x96xf32> to vector<8x8xf32>
    %cst_44 = arith.constant dense<0.000000e+00> : vector<8x8xf32>
    %123 = tpu.matmul %121, %122, %cst_44 {dimension_numbers = #tpu.dot_dimension_numbers<[1], [1], [0], [0], [0, 0, 1, 0], [], []>} : vector<8x8xf32>, vector<8x8xf32>, vector<8x8xf32> -> vector<8x8xf32>
    %124 = vector.extract_strided_slice %92 {offsets = [8, 1600], sizes = [8, 15], strides = [1, 1]} : vector<32x1664xf32> to vector<8x15xf32>
    %125 = vector.extract_strided_slice %124 {offsets = [0, 7], sizes = [1, 8], strides = [1, 1]} : vector<8x15xf32> to vector<1x8xf32>
    %126 = vector.extract_strided_slice %124 {offsets = [1, 6], sizes = [1, 8], strides = [1, 1]} : vector<8x15xf32> to vector<1x8xf32>
    %127 = vector.extract_strided_slice %124 {offsets = [2, 5], sizes = [1, 8], strides = [1, 1]} : vector<8x15xf32> to vector<1x8xf32>
    %128 = vector.extract_strided_slice %124 {offsets = [3, 4], sizes = [1, 8], strides = [1, 1]} : vector<8x15xf32> to vector<1x8xf32>
    %129 = vector.extract_strided_slice %124 {offsets = [4, 3], sizes = [1, 8], strides = [1, 1]} : vector<8x15xf32> to vector<1x8xf32>
    %130 = vector.extract_strided_slice %124 {offsets = [5, 2], sizes = [1, 8], strides = [1, 1]} : vector<8x15xf32> to vector<1x8xf32>
    %131 = vector.extract_strided_slice %124 {offsets = [6, 1], sizes = [1, 8], strides = [1, 1]} : vector<8x15xf32> to vector<1x8xf32>
    %132 = vector.extract_strided_slice %124 {offsets = [7, 0], sizes = [1, 8], strides = [1, 1]} : vector<8x15xf32> to vector<1x8xf32>
    %133 = tpu.concatenate %125, %126, %127, %128, %129, %130, %131, %132 in 0 : vector<1x8xf32>, vector<1x8xf32>, vector<1x8xf32>, vector<1x8xf32>, vector<1x8xf32>, vector<1x8xf32>, vector<1x8xf32>, vector<1x8xf32> -> vector<8x8xf32>
    %134 = arith.addf %123, %133 : vector<8x8xf32>
    %cst_45 = arith.constant 0.353553385 : f32
    %135 = vector.broadcast %cst_45 : f32 to vector<8x8xf32>
    %136 = arith.mulf %134, %135 : vector<8x8xf32>
    %cst_46 = arith.constant -1.000000e+30 : f32
    %137 = vector.broadcast %cst_46 : f32 to vector<8x8xf32>
    %138 = arith.select %56, %137, %136 : vector<8x8xi1>, vector<8x8xf32>
    %139 = vector.extract_strided_slice %65 {offsets = [0, 16], sizes = [8, 8], strides = [1, 1]} : vector<8x96xf32> to vector<8x8xf32>
    %140 = vector.extract_strided_slice %62 {offsets = [0, 16], sizes = [1, 8], strides = [1, 1]} : vector<1x32xf32> to vector<1x8xf32>
    %141 = vector.broadcast %140 : vector<1x8xf32> to vector<8x8xf32>
    %142 = arith.addf %139, %141 : vector<8x8xf32>
    %143 = vector.extract_strided_slice %65 {offsets = [0, 48], sizes = [8, 8], strides = [1, 1]} : vector<8x96xf32> to vector<8x8xf32>
    %cst_47 = arith.constant dense<0.000000e+00> : vector<8x8xf32>
    %144 = tpu.matmul %142, %143, %cst_47 {dimension_numbers = #tpu.dot_dimension_numbers<[1], [1], [0], [0], [0, 0, 1, 0], [], []>} : vector<8x8xf32>, vector<8x8xf32>, vector<8x8xf32> -> vector<8x8xf32>
    %145 = vector.extract_strided_slice %92 {offsets = [16, 1600], sizes = [8, 15], strides = [1, 1]} : vector<32x1664xf32> to vector<8x15xf32>
    %146 = vector.extract_strided_slice %145 {offsets = [0, 7], sizes = [1, 8], strides = [1, 1]} : vector<8x15xf32> to vector<1x8xf32>
    %147 = vector.extract_strided_slice %145 {offsets = [1, 6], sizes = [1, 8], strides = [1, 1]} : vector<8x15xf32> to vector<1x8xf32>
    %148 = vector.extract_strided_slice %145 {offsets = [2, 5], sizes = [1, 8], strides = [1, 1]} : vector<8x15xf32> to vector<1x8xf32>
    %149 = vector.extract_strided_slice %145 {offsets = [3, 4], sizes = [1, 8], strides = [1, 1]} : vector<8x15xf32> to vector<1x8xf32>
    %150 = vector.extract_strided_slice %145 {offsets = [4, 3], sizes = [1, 8], strides = [1, 1]} : vector<8x15xf32> to vector<1x8xf32>
    %151 = vector.extract_strided_slice %145 {offsets = [5, 2], sizes = [1, 8], strides = [1, 1]} : vector<8x15xf32> to vector<1x8xf32>
    %152 = vector.extract_strided_slice %145 {offsets = [6, 1], sizes = [1, 8], strides = [1, 1]} : vector<8x15xf32> to vector<1x8xf32>
    %153 = vector.extract_strided_slice %145 {offsets = [7, 0], sizes = [1, 8], strides = [1, 1]} : vector<8x15xf32> to vector<1x8xf32>
    %154 = tpu.concatenate %146, %147, %148, %149, %150, %151, %152, %153 in 0 : vector<1x8xf32>, vector<1x8xf32>, vector<1x8xf32>, vector<1x8xf32>, vector<1x8xf32>, vector<1x8xf32>, vector<1x8xf32>, vector<1x8xf32> -> vector<8x8xf32>
    %155 = arith.addf %144, %154 : vector<8x8xf32>
    %cst_48 = arith.constant 0.353553385 : f32
    %156 = vector.broadcast %cst_48 : f32 to vector<8x8xf32>
    %157 = arith.mulf %155, %156 : vector<8x8xf32>
    %cst_49 = arith.constant -1.000000e+30 : f32
    %158 = vector.broadcast %cst_49 : f32 to vector<8x8xf32>
    %159 = arith.select %56, %158, %157 : vector<8x8xi1>, vector<8x8xf32>
    %160 = vector.extract_strided_slice %65 {offsets = [0, 24], sizes = [8, 8], strides = [1, 1]} : vector<8x96xf32> to vector<8x8xf32>
    %161 = vector.extract_strided_slice %62 {offsets = [0, 24], sizes = [1, 8], strides = [1, 1]} : vector<1x32xf32> to vector<1x8xf32>
    %162 = vector.broadcast %161 : vector<1x8xf32> to vector<8x8xf32>
    %163 = arith.addf %160, %162 : vector<8x8xf32>
    %164 = vector.extract_strided_slice %65 {offsets = [0, 56], sizes = [8, 8], strides = [1, 1]} : vector<8x96xf32> to vector<8x8xf32>
    %cst_50 = arith.constant dense<0.000000e+00> : vector<8x8xf32>
    %165 = tpu.matmul %163, %164, %cst_50 {dimension_numbers = #tpu.dot_dimension_numbers<[1], [1], [0], [0], [0, 0, 1, 0], [], []>} : vector<8x8xf32>, vector<8x8xf32>, vector<8x8xf32> -> vector<8x8xf32>
    %166 = vector.extract_strided_slice %92 {offsets = [24, 1600], sizes = [8, 15], strides = [1, 1]} : vector<32x1664xf32> to vector<8x15xf32>
    %167 = vector.extract_strided_slice %166 {offsets = [0, 7], sizes = [1, 8], strides = [1, 1]} : vector<8x15xf32> to vector<1x8xf32>
    %168 = vector.extract_strided_slice %166 {offsets = [1, 6], sizes = [1, 8], strides = [1, 1]} : vector<8x15xf32> to vector<1x8xf32>
    %169 = vector.extract_strided_slice %166 {offsets = [2, 5], sizes = [1, 8], strides = [1, 1]} : vector<8x15xf32> to vector<1x8xf32>
    %170 = vector.extract_strided_slice %166 {offsets = [3, 4], sizes = [1, 8], strides = [1, 1]} : vector<8x15xf32> to vector<1x8xf32>
    %171 = vector.extract_strided_slice %166 {offsets = [4, 3], sizes = [1, 8], strides = [1, 1]} : vector<8x15xf32> to vector<1x8xf32>
    %172 = vector.extract_strided_slice %166 {offsets = [5, 2], sizes = [1, 8], strides = [1, 1]} : vector<8x15xf32> to vector<1x8xf32>
    %173 = vector.extract_strided_slice %166 {offsets = [6, 1], sizes = [1, 8], strides = [1, 1]} : vector<8x15xf32> to vector<1x8xf32>
    %174 = vector.extract_strided_slice %166 {offsets = [7, 0], sizes = [1, 8], strides = [1, 1]} : vector<8x15xf32> to vector<1x8xf32>
    %175 = tpu.concatenate %167, %168, %169, %170, %171, %172, %173, %174 in 0 : vector<1x8xf32>, vector<1x8xf32>, vector<1x8xf32>, vector<1x8xf32>, vector<1x8xf32>, vector<1x8xf32>, vector<1x8xf32>, vector<1x8xf32> -> vector<8x8xf32>
    %176 = arith.addf %165, %175 : vector<8x8xf32>
    %cst_51 = arith.constant 0.353553385 : f32
    %177 = vector.broadcast %cst_51 : f32 to vector<8x8xf32>
    %178 = arith.mulf %176, %177 : vector<8x8xf32>
    %cst_52 = arith.constant -1.000000e+30 : f32
    %179 = vector.broadcast %cst_52 : f32 to vector<8x8xf32>
    %180 = arith.select %56, %179, %178 : vector<8x8xi1>, vector<8x8xf32>
    %181 = tpu.concatenate %117, %138, %159, %180 in 0 : vector<8x8xf32>, vector<8x8xf32>, vector<8x8xf32>, vector<8x8xf32> -> vector<32x8xf32>
    %cst_53 = arith.constant dense<0xFF800000> : vector<32xf32>
    %182 = vector.multi_reduction <maximumf>, %96, %cst_53 [1] : vector<32x1664xf32> to vector<32xf32>
    %183 = vector.shape_cast %182 : vector<32xf32> to vector<32x1xf32>
    %cst_54 = arith.constant dense<0xFF800000> : vector<32xf32>
    %184 = vector.multi_reduction <maximumf>, %181, %cst_54 [1] : vector<32x8xf32> to vector<32xf32>
    %185 = vector.shape_cast %184 : vector<32xf32> to vector<32x1xf32>
    %186 = arith.maximumf %183, %185 : vector<32x1xf32>
    %187 = vector.broadcast %186 : vector<32x1xf32> to vector<32x8xf32>
    %188 = arith.subf %181, %187 : vector<32x8xf32>
    %189 = math.exp %188 : vector<32x8xf32>
    %190 = vector.broadcast %186 : vector<32x1xf32> to vector<32x1664xf32>
    %191 = arith.subf %96, %190 : vector<32x1664xf32>
    %192 = math.exp %191 : vector<32x1664xf32>
    %cst_55 = arith.constant dense<0.000000e+00> : vector<32xf32>
    %193 = vector.multi_reduction <add>, %192, %cst_55 [1] : vector<32x1664xf32> to vector<32xf32>
    %194 = vector.shape_cast %193 : vector<32xf32> to vector<32x1xf32>
    %cst_56 = arith.constant dense<0.000000e+00> : vector<32xf32>
    %195 = vector.multi_reduction <add>, %189, %cst_56 [1] : vector<32x8xf32> to vector<32xf32>
    %196 = vector.shape_cast %195 : vector<32xf32> to vector<32x1xf32>
    %197 = arith.addf %194, %196 : vector<32x1xf32>
    %198 = tpu.reciprocal %197 {approx = true} : vector<32x1xf32> -> vector<32x1xf32>
    %199 = vector.extract_strided_slice %65 {offsets = [0, 64], sizes = [8, 8], strides = [1, 1]} : vector<8x96xf32> to vector<8x8xf32>
    %200 = vector.extract_strided_slice %189 {offsets = [0, 0], sizes = [8, 8], strides = [1, 1]} : vector<32x8xf32> to vector<8x8xf32>
    %cst_57 = arith.constant dense<0.000000e+00> : vector<8x8xf32>
    %201 = tpu.matmul %200, %199, %cst_57 {dimension_numbers = #tpu.dot_dimension_numbers<[1], [0], [0], [1], [0, 0, 1, 1], [], []>} : vector<8x8xf32>, vector<8x8xf32>, vector<8x8xf32> -> vector<8x8xf32>
    %202 = vector.extract_strided_slice %198 {offsets = [0, 0], sizes = [8, 1], strides = [1, 1]} : vector<32x1xf32> to vector<8x1xf32>
    %203 = vector.broadcast %202 : vector<8x1xf32> to vector<8x8xf32>
    %204 = arith.mulf %201, %203 : vector<8x8xf32>
    %205 = vector.extract_strided_slice %65 {offsets = [0, 72], sizes = [8, 8], strides = [1, 1]} : vector<8x96xf32> to vector<8x8xf32>
    %206 = vector.extract_strided_slice %189 {offsets = [8, 0], sizes = [8, 8], strides = [1, 1]} : vector<32x8xf32> to vector<8x8xf32>
    %cst_58 = arith.constant dense<0.000000e+00> : vector<8x8xf32>
    %207 = tpu.matmul %206, %205, %cst_58 {dimension_numbers = #tpu.dot_dimension_numbers<[1], [0], [0], [1], [0, 0, 1, 1], [], []>} : vector<8x8xf32>, vector<8x8xf32>, vector<8x8xf32> -> vector<8x8xf32>
    %208 = vector.extract_strided_slice %198 {offsets = [8, 0], sizes = [8, 1], strides = [1, 1]} : vector<32x1xf32> to vector<8x1xf32>
    %209 = vector.broadcast %208 : vector<8x1xf32> to vector<8x8xf32>
    %210 = arith.mulf %207, %209 : vector<8x8xf32>
    %211 = vector.extract_strided_slice %65 {offsets = [0, 80], sizes = [8, 8], strides = [1, 1]} : vector<8x96xf32> to vector<8x8xf32>
    %212 = vector.extract_strided_slice %189 {offsets = [16, 0], sizes = [8, 8], strides = [1, 1]} : vector<32x8xf32> to vector<8x8xf32>
    %cst_59 = arith.constant dense<0.000000e+00> : vector<8x8xf32>
    %213 = tpu.matmul %212, %211, %cst_59 {dimension_numbers = #tpu.dot_dimension_numbers<[1], [0], [0], [1], [0, 0, 1, 1], [], []>} : vector<8x8xf32>, vector<8x8xf32>, vector<8x8xf32> -> vector<8x8xf32>
    %214 = vector.extract_strided_slice %198 {offsets = [16, 0], sizes = [8, 1], strides = [1, 1]} : vector<32x1xf32> to vector<8x1xf32>
    %215 = vector.broadcast %214 : vector<8x1xf32> to vector<8x8xf32>
    %216 = arith.mulf %213, %215 : vector<8x8xf32>
    %217 = vector.extract_strided_slice %65 {offsets = [0, 88], sizes = [8, 8], strides = [1, 1]} : vector<8x96xf32> to vector<8x8xf32>
    %218 = vector.extract_strided_slice %189 {offsets = [24, 0], sizes = [8, 8], strides = [1, 1]} : vector<32x8xf32> to vector<8x8xf32>
    %cst_60 = arith.constant dense<0.000000e+00> : vector<8x8xf32>
    %219 = tpu.matmul %218, %217, %cst_60 {dimension_numbers = #tpu.dot_dimension_numbers<[1], [0], [0], [1], [0, 0, 1, 1], [], []>} : vector<8x8xf32>, vector<8x8xf32>, vector<8x8xf32> -> vector<8x8xf32>
    %220 = vector.extract_strided_slice %198 {offsets = [24, 0], sizes = [8, 1], strides = [1, 1]} : vector<32x1xf32> to vector<8x1xf32>
    %221 = vector.broadcast %220 : vector<8x1xf32> to vector<8x8xf32>
    %222 = arith.mulf %219, %221 : vector<8x8xf32>
    %223 = tpu.concatenate %204, %210, %216, %222 in 1 : vector<8x8xf32>, vector<8x8xf32>, vector<8x8xf32>, vector<8x8xf32> -> vector<8x32xf32>
    %c0_61 = arith.constant 0 : index
    %c0_62 = arith.constant 0 : index
    %c0_63 = arith.constant 0 : index
    %224 = vector.load %arg7[%c0_61, %c0_62, %c0_63] : memref<2x32x32xf32, #tpu.memory_space<vmem>>, vector<1x32x32xf32>
    %225 = vector.shape_cast %224 : vector<1x32x32xf32> to vector<32x32xf32>
    %cst_64 = arith.constant dense<0.000000e+00> : vector<8x32xf32>
    %226 = tpu.matmul %223, %225, %cst_64 {dimension_numbers = #tpu.dot_dimension_numbers<[1], [0], [0], [1], [0, 0, 1, 1], [], []>} : vector<8x32xf32>, vector<32x32xf32>, vector<8x32xf32> -> vector<8x32xf32>
    %227 = arith.addf %44, %226 : vector<8x32xf32>
    %c0_65 = arith.constant 0 : index
    %c0_66 = arith.constant 0 : index
    %c0_67 = arith.constant 0 : index
    %228 = vector.load %arg10[%c0_65, %c0_66, %c0_67] : memref<2x1x32xf32, #tpu.memory_space<vmem>>, vector<1x1x32xf32>
    %229 = vector.shape_cast %228 : vector<1x1x32xf32> to vector<1x32xf32>
    %c0_68 = arith.constant 0 : index
    %c0_69 = arith.constant 0 : index
    %c0_70 = arith.constant 0 : index
    %230 = vector.load %arg11[%c0_68, %c0_69, %c0_70] : memref<2x1x32xf32, #tpu.memory_space<vmem>>, vector<1x1x32xf32>
    %231 = vector.shape_cast %230 : vector<1x1x32xf32> to vector<1x32xf32>
    %cst_71 = arith.constant dense<0.000000e+00> : vector<8xf32>
    %232 = vector.multi_reduction <add>, %227, %cst_71 [1] : vector<8x32xf32> to vector<8xf32>
    %233 = vector.shape_cast %232 : vector<8xf32> to vector<8x1xf32>
    %cst_72 = arith.constant 3.200000e+01 : f32
    %234 = vector.broadcast %cst_72 : f32 to vector<8x1xf32>
    %235 = arith.divf %233, %234 : vector<8x1xf32>
    %236 = vector.broadcast %235 : vector<8x1xf32> to vector<8x32xf32>
    %237 = arith.subf %227, %236 : vector<8x32xf32>
    %238 = arith.mulf %237, %237 : vector<8x32xf32>
    %cst_73 = arith.constant dense<0.000000e+00> : vector<8xf32>
    %239 = vector.multi_reduction <add>, %238, %cst_73 [1] : vector<8x32xf32> to vector<8xf32>
    %240 = vector.shape_cast %239 : vector<8xf32> to vector<8x1xf32>
    %cst_74 = arith.constant 3.200000e+01 : f32
    %241 = vector.broadcast %cst_74 : f32 to vector<8x1xf32>
    %242 = arith.divf %240, %241 : vector<8x1xf32>
    %243 = vector.broadcast %235 : vector<8x1xf32> to vector<8x32xf32>
    %244 = arith.subf %227, %243 : vector<8x32xf32>
    %cst_75 = arith.constant 9.99999974E-6 : f32
    %245 = vector.broadcast %cst_75 : f32 to vector<8x1xf32>
    %246 = arith.addf %242, %245 : vector<8x1xf32>
    %247 = math.rsqrt %246 : vector<8x1xf32>
    %248 = vector.broadcast %247 : vector<8x1xf32> to vector<8x32xf32>
    %249 = arith.mulf %244, %248 : vector<8x32xf32>
    %250 = vector.broadcast %229 : vector<1x32xf32> to vector<8x32xf32>
    %251 = arith.mulf %249, %250 : vector<8x32xf32>
    %252 = vector.broadcast %231 : vector<1x32xf32> to vector<8x32xf32>
    %253 = arith.addf %251, %252 : vector<8x32xf32>
    %c0_76 = arith.constant 0 : index
    %c0_77 = arith.constant 0 : index
    %c0_78 = arith.constant 0 : index
    %254 = vector.load %arg12[%c0_76, %c0_77, %c0_78] : memref<2x32x64xf32, #tpu.memory_space<vmem>>, vector<1x32x64xf32>
    %255 = vector.shape_cast %254 : vector<1x32x64xf32> to vector<32x64xf32>
    %cst_79 = arith.constant dense<0.000000e+00> : vector<8x64xf32>
    %256 = tpu.matmul %253, %255, %cst_79 {dimension_numbers = #tpu.dot_dimension_numbers<[1], [0], [0], [1], [0, 0, 1, 1], [], []>} : vector<8x32xf32>, vector<32x64xf32>, vector<8x64xf32> -> vector<8x64xf32>
    %c0_80 = arith.constant 0 : index
    %c0_81 = arith.constant 0 : index
    %c0_82 = arith.constant 0 : index
    %257 = vector.load %arg13[%c0_80, %c0_81, %c0_82] : memref<2x1x64xf32, #tpu.memory_space<vmem>>, vector<1x1x64xf32>
    %258 = vector.shape_cast %257 : vector<1x1x64xf32> to vector<1x64xf32>
    %259 = vector.broadcast %258 : vector<1x64xf32> to vector<8x64xf32>
    %260 = arith.addf %256, %259 : vector<8x64xf32>
    %cst_83 = arith.constant 0.000000e+00 : f32
    %261 = vector.broadcast %cst_83 : f32 to vector<8x64xf32>
    %262 = arith.maximumf %260, %261 : vector<8x64xf32>
    %c0_84 = arith.constant 0 : index
    %c0_85 = arith.constant 0 : index
    %c0_86 = arith.constant 0 : index
    %263 = vector.load %arg14[%c0_84, %c0_85, %c0_86] : memref<2x64x32xf32, #tpu.memory_space<vmem>>, vector<1x64x32xf32>
    %264 = vector.shape_cast %263 : vector<1x64x32xf32> to vector<64x32xf32>
    %cst_87 = arith.constant dense<0.000000e+00> : vector<8x32xf32>
    %265 = tpu.matmul %262, %264, %cst_87 {dimension_numbers = #tpu.dot_dimension_numbers<[1], [0], [0], [1], [0, 0, 1, 1], [], []>} : vector<8x64xf32>, vector<64x32xf32>, vector<8x32xf32> -> vector<8x32xf32>
    %c0_88 = arith.constant 0 : index
    %c0_89 = arith.constant 0 : index
    %c0_90 = arith.constant 0 : index
    %266 = vector.load %arg15[%c0_88, %c0_89, %c0_90] : memref<2x1x32xf32, #tpu.memory_space<vmem>>, vector<1x1x32xf32>
    %267 = vector.shape_cast %266 : vector<1x1x32xf32> to vector<1x32xf32>
    %268 = vector.broadcast %267 : vector<1x32xf32> to vector<8x32xf32>
    %269 = arith.addf %265, %268 : vector<8x32xf32>
    %270 = arith.addf %253, %269 : vector<8x32xf32>
    %c0_91 = arith.constant 0 : index
    %c0_92 = arith.constant 0 : index
    %c0_93 = arith.constant 0 : index
    %271 = vector.load %arg16[%c0_91, %c0_92, %c0_93] : memref<2x1x32xf32, #tpu.memory_space<vmem>>, vector<1x1x32xf32>
    %272 = vector.shape_cast %271 : vector<1x1x32xf32> to vector<1x32xf32>
    %c0_94 = arith.constant 0 : index
    %c0_95 = arith.constant 0 : index
    %c0_96 = arith.constant 0 : index
    %273 = vector.load %arg17[%c0_94, %c0_95, %c0_96] : memref<2x1x32xf32, #tpu.memory_space<vmem>>, vector<1x1x32xf32>
    %274 = vector.shape_cast %273 : vector<1x1x32xf32> to vector<1x32xf32>
    %cst_97 = arith.constant dense<0.000000e+00> : vector<8xf32>
    %275 = vector.multi_reduction <add>, %270, %cst_97 [1] : vector<8x32xf32> to vector<8xf32>
    %276 = vector.shape_cast %275 : vector<8xf32> to vector<8x1xf32>
    %cst_98 = arith.constant 3.200000e+01 : f32
    %277 = vector.broadcast %cst_98 : f32 to vector<8x1xf32>
    %278 = arith.divf %276, %277 : vector<8x1xf32>
    %279 = vector.broadcast %278 : vector<8x1xf32> to vector<8x32xf32>
    %280 = arith.subf %270, %279 : vector<8x32xf32>
    %281 = arith.mulf %280, %280 : vector<8x32xf32>
    %cst_99 = arith.constant dense<0.000000e+00> : vector<8xf32>
    %282 = vector.multi_reduction <add>, %281, %cst_99 [1] : vector<8x32xf32> to vector<8xf32>
    %283 = vector.shape_cast %282 : vector<8xf32> to vector<8x1xf32>
    %cst_100 = arith.constant 3.200000e+01 : f32
    %284 = vector.broadcast %cst_100 : f32 to vector<8x1xf32>
    %285 = arith.divf %283, %284 : vector<8x1xf32>
    %286 = vector.broadcast %278 : vector<8x1xf32> to vector<8x32xf32>
    %287 = arith.subf %270, %286 : vector<8x32xf32>
    %cst_101 = arith.constant 9.99999974E-6 : f32
    %288 = vector.broadcast %cst_101 : f32 to vector<8x1xf32>
    %289 = arith.addf %285, %288 : vector<8x1xf32>
    %290 = math.rsqrt %289 : vector<8x1xf32>
    %291 = vector.broadcast %290 : vector<8x1xf32> to vector<8x32xf32>
    %292 = arith.mulf %287, %291 : vector<8x32xf32>
    %293 = vector.broadcast %272 : vector<1x32xf32> to vector<8x32xf32>
    %294 = arith.mulf %292, %293 : vector<8x32xf32>
    %295 = vector.broadcast %274 : vector<1x32xf32> to vector<8x32xf32>
    %296 = arith.addf %294, %295 : vector<8x32xf32>
    %c1_102 = arith.constant 1 : index
    %c0_103 = arith.constant 0 : index
    %c0_104 = arith.constant 0 : index
    %297 = vector.load %arg5[%c1_102, %c0_103, %c0_104] : memref<2x32x96xf32, #tpu.memory_space<vmem>>, vector<1x32x96xf32>
    %298 = vector.shape_cast %297 : vector<1x32x96xf32> to vector<32x96xf32>
    %c1_105 = arith.constant 1 : index
    %c0_106 = arith.constant 0 : index
    %c0_107 = arith.constant 0 : index
    %299 = vector.load %arg6[%c1_105, %c0_106, %c0_107] : memref<2x32x32xf32, #tpu.memory_space<vmem>>, vector<1x32x32xf32>
    %300 = vector.shape_cast %299 : vector<1x32x32xf32> to vector<32x32xf32>
    %c1_108 = arith.constant 1 : index
    %c0_109 = arith.constant 0 : index
    %c0_110 = arith.constant 0 : index
    %301 = vector.load %arg8[%c1_108, %c0_109, %c0_110] : memref<2x1x32xf32, #tpu.memory_space<vmem>>, vector<1x1x32xf32>
    %302 = vector.shape_cast %301 : vector<1x1x32xf32> to vector<1x32xf32>
    %c1_111 = arith.constant 1 : index
    %c0_112 = arith.constant 0 : index
    %c0_113 = arith.constant 0 : index
    %303 = vector.load %arg9[%c1_111, %c0_112, %c0_113] : memref<2x1x32xf32, #tpu.memory_space<vmem>>, vector<1x1x32xf32>
    %304 = vector.shape_cast %303 : vector<1x1x32xf32> to vector<1x32xf32>
    %cst_114 = arith.constant dense<0.000000e+00> : vector<8x96xf32>
    %305 = tpu.matmul %296, %298, %cst_114 {dimension_numbers = #tpu.dot_dimension_numbers<[1], [0], [0], [1], [0, 0, 1, 1], [], []>} : vector<8x32xf32>, vector<32x96xf32>, vector<8x96xf32> -> vector<8x96xf32>
    %306 = vector.extract_strided_slice %305 {offsets = [0, 0], sizes = [8, 8], strides = [1, 1]} : vector<8x96xf32> to vector<8x8xf32>
    %307 = vector.extract_strided_slice %304 {offsets = [0, 0], sizes = [1, 8], strides = [1, 1]} : vector<1x32xf32> to vector<1x8xf32>
    %308 = vector.broadcast %307 : vector<1x8xf32> to vector<8x8xf32>
    %309 = arith.addf %306, %308 : vector<8x8xf32>
    %310 = vector.extract_strided_slice %300 {offsets = [0, 0], sizes = [8, 32], strides = [1, 1]} : vector<32x32xf32> to vector<8x32xf32>
    %cst_115 = arith.constant dense<0.000000e+00> : vector<8x32xf32>
    %311 = tpu.matmul %309, %310, %cst_115 {dimension_numbers = #tpu.dot_dimension_numbers<[1], [0], [0], [1], [0, 0, 1, 1], [], []>} : vector<8x8xf32>, vector<8x32xf32>, vector<8x32xf32> -> vector<8x32xf32>
    %312 = vector.extract_strided_slice %305 {offsets = [0, 8], sizes = [8, 8], strides = [1, 1]} : vector<8x96xf32> to vector<8x8xf32>
    %313 = vector.extract_strided_slice %304 {offsets = [0, 8], sizes = [1, 8], strides = [1, 1]} : vector<1x32xf32> to vector<1x8xf32>
    %314 = vector.broadcast %313 : vector<1x8xf32> to vector<8x8xf32>
    %315 = arith.addf %312, %314 : vector<8x8xf32>
    %316 = vector.extract_strided_slice %300 {offsets = [8, 0], sizes = [8, 32], strides = [1, 1]} : vector<32x32xf32> to vector<8x32xf32>
    %cst_116 = arith.constant dense<0.000000e+00> : vector<8x32xf32>
    %317 = tpu.matmul %315, %316, %cst_116 {dimension_numbers = #tpu.dot_dimension_numbers<[1], [0], [0], [1], [0, 0, 1, 1], [], []>} : vector<8x8xf32>, vector<8x32xf32>, vector<8x32xf32> -> vector<8x32xf32>
    %318 = vector.extract_strided_slice %305 {offsets = [0, 16], sizes = [8, 8], strides = [1, 1]} : vector<8x96xf32> to vector<8x8xf32>
    %319 = vector.extract_strided_slice %304 {offsets = [0, 16], sizes = [1, 8], strides = [1, 1]} : vector<1x32xf32> to vector<1x8xf32>
    %320 = vector.broadcast %319 : vector<1x8xf32> to vector<8x8xf32>
    %321 = arith.addf %318, %320 : vector<8x8xf32>
    %322 = vector.extract_strided_slice %300 {offsets = [16, 0], sizes = [8, 32], strides = [1, 1]} : vector<32x32xf32> to vector<8x32xf32>
    %cst_117 = arith.constant dense<0.000000e+00> : vector<8x32xf32>
    %323 = tpu.matmul %321, %322, %cst_117 {dimension_numbers = #tpu.dot_dimension_numbers<[1], [0], [0], [1], [0, 0, 1, 1], [], []>} : vector<8x8xf32>, vector<8x32xf32>, vector<8x32xf32> -> vector<8x32xf32>
    %324 = vector.extract_strided_slice %305 {offsets = [0, 24], sizes = [8, 8], strides = [1, 1]} : vector<8x96xf32> to vector<8x8xf32>
    %325 = vector.extract_strided_slice %304 {offsets = [0, 24], sizes = [1, 8], strides = [1, 1]} : vector<1x32xf32> to vector<1x8xf32>
    %326 = vector.broadcast %325 : vector<1x8xf32> to vector<8x8xf32>
    %327 = arith.addf %324, %326 : vector<8x8xf32>
    %328 = vector.extract_strided_slice %300 {offsets = [24, 0], sizes = [8, 32], strides = [1, 1]} : vector<32x32xf32> to vector<8x32xf32>
    %cst_118 = arith.constant dense<0.000000e+00> : vector<8x32xf32>
    %329 = tpu.matmul %327, %328, %cst_118 {dimension_numbers = #tpu.dot_dimension_numbers<[1], [0], [0], [1], [0, 0, 1, 1], [], []>} : vector<8x8xf32>, vector<8x32xf32>, vector<8x32xf32> -> vector<8x32xf32>
    %330 = tpu.concatenate %311, %317, %323, %329 in 0 : vector<8x32xf32>, vector<8x32xf32>, vector<8x32xf32>, vector<8x32xf32> -> vector<32x32xf32>
    %c0_119 = arith.constant 0 : index
    %c0_120 = arith.constant 0 : index
    %331 = vector.load %arg4[%c0_119, %c0_120] : memref<32x1664xf32, #tpu.memory_space<vmem>>, vector<32x1664xf32>
    %cst_121 = arith.constant dense<0.000000e+00> : vector<32x1664xf32>
    %332 = tpu.matmul %330, %331, %cst_121 {dimension_numbers = #tpu.dot_dimension_numbers<[1], [0], [0], [1], [0, 0, 1, 1], [], []>} : vector<32x32xf32>, vector<32x1664xf32>, vector<32x1664xf32> -> vector<32x1664xf32>
    %cst_122 = arith.constant 0.353553385 : f32
    %333 = vector.broadcast %cst_122 : f32 to vector<32x1664xf32>
    %334 = arith.mulf %332, %333 : vector<32x1664xf32>
    %cst_123 = arith.constant -1.000000e+30 : f32
    %335 = vector.broadcast %cst_123 : f32 to vector<32x1664xf32>
    %336 = arith.select %53, %335, %334 : vector<32x1664xi1>, vector<32x1664xf32>
    %337 = vector.extract_strided_slice %305 {offsets = [0, 0], sizes = [8, 8], strides = [1, 1]} : vector<8x96xf32> to vector<8x8xf32>
    %338 = vector.extract_strided_slice %302 {offsets = [0, 0], sizes = [1, 8], strides = [1, 1]} : vector<1x32xf32> to vector<1x8xf32>
    %339 = vector.broadcast %338 : vector<1x8xf32> to vector<8x8xf32>
    %340 = arith.addf %337, %339 : vector<8x8xf32>
    %341 = vector.extract_strided_slice %305 {offsets = [0, 32], sizes = [8, 8], strides = [1, 1]} : vector<8x96xf32> to vector<8x8xf32>
    %cst_124 = arith.constant dense<0.000000e+00> : vector<8x8xf32>
    %342 = tpu.matmul %340, %341, %cst_124 {dimension_numbers = #tpu.dot_dimension_numbers<[1], [1], [0], [0], [0, 0, 1, 0], [], []>} : vector<8x8xf32>, vector<8x8xf32>, vector<8x8xf32> -> vector<8x8xf32>
    %343 = vector.extract_strided_slice %332 {offsets = [0, 1600], sizes = [8, 15], strides = [1, 1]} : vector<32x1664xf32> to vector<8x15xf32>
    %344 = vector.extract_strided_slice %343 {offsets = [0, 7], sizes = [1, 8], strides = [1, 1]} : vector<8x15xf32> to vector<1x8xf32>
    %345 = vector.extract_strided_slice %343 {offsets = [1, 6], sizes = [1, 8], strides = [1, 1]} : vector<8x15xf32> to vector<1x8xf32>
    %346 = vector.extract_strided_slice %343 {offsets = [2, 5], sizes = [1, 8], strides = [1, 1]} : vector<8x15xf32> to vector<1x8xf32>
    %347 = vector.extract_strided_slice %343 {offsets = [3, 4], sizes = [1, 8], strides = [1, 1]} : vector<8x15xf32> to vector<1x8xf32>
    %348 = vector.extract_strided_slice %343 {offsets = [4, 3], sizes = [1, 8], strides = [1, 1]} : vector<8x15xf32> to vector<1x8xf32>
    %349 = vector.extract_strided_slice %343 {offsets = [5, 2], sizes = [1, 8], strides = [1, 1]} : vector<8x15xf32> to vector<1x8xf32>
    %350 = vector.extract_strided_slice %343 {offsets = [6, 1], sizes = [1, 8], strides = [1, 1]} : vector<8x15xf32> to vector<1x8xf32>
    %351 = vector.extract_strided_slice %343 {offsets = [7, 0], sizes = [1, 8], strides = [1, 1]} : vector<8x15xf32> to vector<1x8xf32>
    %352 = tpu.concatenate %344, %345, %346, %347, %348, %349, %350, %351 in 0 : vector<1x8xf32>, vector<1x8xf32>, vector<1x8xf32>, vector<1x8xf32>, vector<1x8xf32>, vector<1x8xf32>, vector<1x8xf32>, vector<1x8xf32> -> vector<8x8xf32>
    %353 = arith.addf %342, %352 : vector<8x8xf32>
    %cst_125 = arith.constant 0.353553385 : f32
    %354 = vector.broadcast %cst_125 : f32 to vector<8x8xf32>
    %355 = arith.mulf %353, %354 : vector<8x8xf32>
    %cst_126 = arith.constant -1.000000e+30 : f32
    %356 = vector.broadcast %cst_126 : f32 to vector<8x8xf32>
    %357 = arith.select %56, %356, %355 : vector<8x8xi1>, vector<8x8xf32>
    %358 = vector.extract_strided_slice %305 {offsets = [0, 8], sizes = [8, 8], strides = [1, 1]} : vector<8x96xf32> to vector<8x8xf32>
    %359 = vector.extract_strided_slice %302 {offsets = [0, 8], sizes = [1, 8], strides = [1, 1]} : vector<1x32xf32> to vector<1x8xf32>
    %360 = vector.broadcast %359 : vector<1x8xf32> to vector<8x8xf32>
    %361 = arith.addf %358, %360 : vector<8x8xf32>
    %362 = vector.extract_strided_slice %305 {offsets = [0, 40], sizes = [8, 8], strides = [1, 1]} : vector<8x96xf32> to vector<8x8xf32>
    %cst_127 = arith.constant dense<0.000000e+00> : vector<8x8xf32>
    %363 = tpu.matmul %361, %362, %cst_127 {dimension_numbers = #tpu.dot_dimension_numbers<[1], [1], [0], [0], [0, 0, 1, 0], [], []>} : vector<8x8xf32>, vector<8x8xf32>, vector<8x8xf32> -> vector<8x8xf32>
    %364 = vector.extract_strided_slice %332 {offsets = [8, 1600], sizes = [8, 15], strides = [1, 1]} : vector<32x1664xf32> to vector<8x15xf32>
    %365 = vector.extract_strided_slice %364 {offsets = [0, 7], sizes = [1, 8], strides = [1, 1]} : vector<8x15xf32> to vector<1x8xf32>
    %366 = vector.extract_strided_slice %364 {offsets = [1, 6], sizes = [1, 8], strides = [1, 1]} : vector<8x15xf32> to vector<1x8xf32>
    %367 = vector.extract_strided_slice %364 {offsets = [2, 5], sizes = [1, 8], strides = [1, 1]} : vector<8x15xf32> to vector<1x8xf32>
    %368 = vector.extract_strided_slice %364 {offsets = [3, 4], sizes = [1, 8], strides = [1, 1]} : vector<8x15xf32> to vector<1x8xf32>
    %369 = vector.extract_strided_slice %364 {offsets = [4, 3], sizes = [1, 8], strides = [1, 1]} : vector<8x15xf32> to vector<1x8xf32>
    %370 = vector.extract_strided_slice %364 {offsets = [5, 2], sizes = [1, 8], strides = [1, 1]} : vector<8x15xf32> to vector<1x8xf32>
    %371 = vector.extract_strided_slice %364 {offsets = [6, 1], sizes = [1, 8], strides = [1, 1]} : vector<8x15xf32> to vector<1x8xf32>
    %372 = vector.extract_strided_slice %364 {offsets = [7, 0], sizes = [1, 8], strides = [1, 1]} : vector<8x15xf32> to vector<1x8xf32>
    %373 = tpu.concatenate %365, %366, %367, %368, %369, %370, %371, %372 in 0 : vector<1x8xf32>, vector<1x8xf32>, vector<1x8xf32>, vector<1x8xf32>, vector<1x8xf32>, vector<1x8xf32>, vector<1x8xf32>, vector<1x8xf32> -> vector<8x8xf32>
    %374 = arith.addf %363, %373 : vector<8x8xf32>
    %cst_128 = arith.constant 0.353553385 : f32
    %375 = vector.broadcast %cst_128 : f32 to vector<8x8xf32>
    %376 = arith.mulf %374, %375 : vector<8x8xf32>
    %cst_129 = arith.constant -1.000000e+30 : f32
    %377 = vector.broadcast %cst_129 : f32 to vector<8x8xf32>
    %378 = arith.select %56, %377, %376 : vector<8x8xi1>, vector<8x8xf32>
    %379 = vector.extract_strided_slice %305 {offsets = [0, 16], sizes = [8, 8], strides = [1, 1]} : vector<8x96xf32> to vector<8x8xf32>
    %380 = vector.extract_strided_slice %302 {offsets = [0, 16], sizes = [1, 8], strides = [1, 1]} : vector<1x32xf32> to vector<1x8xf32>
    %381 = vector.broadcast %380 : vector<1x8xf32> to vector<8x8xf32>
    %382 = arith.addf %379, %381 : vector<8x8xf32>
    %383 = vector.extract_strided_slice %305 {offsets = [0, 48], sizes = [8, 8], strides = [1, 1]} : vector<8x96xf32> to vector<8x8xf32>
    %cst_130 = arith.constant dense<0.000000e+00> : vector<8x8xf32>
    %384 = tpu.matmul %382, %383, %cst_130 {dimension_numbers = #tpu.dot_dimension_numbers<[1], [1], [0], [0], [0, 0, 1, 0], [], []>} : vector<8x8xf32>, vector<8x8xf32>, vector<8x8xf32> -> vector<8x8xf32>
    %385 = vector.extract_strided_slice %332 {offsets = [16, 1600], sizes = [8, 15], strides = [1, 1]} : vector<32x1664xf32> to vector<8x15xf32>
    %386 = vector.extract_strided_slice %385 {offsets = [0, 7], sizes = [1, 8], strides = [1, 1]} : vector<8x15xf32> to vector<1x8xf32>
    %387 = vector.extract_strided_slice %385 {offsets = [1, 6], sizes = [1, 8], strides = [1, 1]} : vector<8x15xf32> to vector<1x8xf32>
    %388 = vector.extract_strided_slice %385 {offsets = [2, 5], sizes = [1, 8], strides = [1, 1]} : vector<8x15xf32> to vector<1x8xf32>
    %389 = vector.extract_strided_slice %385 {offsets = [3, 4], sizes = [1, 8], strides = [1, 1]} : vector<8x15xf32> to vector<1x8xf32>
    %390 = vector.extract_strided_slice %385 {offsets = [4, 3], sizes = [1, 8], strides = [1, 1]} : vector<8x15xf32> to vector<1x8xf32>
    %391 = vector.extract_strided_slice %385 {offsets = [5, 2], sizes = [1, 8], strides = [1, 1]} : vector<8x15xf32> to vector<1x8xf32>
    %392 = vector.extract_strided_slice %385 {offsets = [6, 1], sizes = [1, 8], strides = [1, 1]} : vector<8x15xf32> to vector<1x8xf32>
    %393 = vector.extract_strided_slice %385 {offsets = [7, 0], sizes = [1, 8], strides = [1, 1]} : vector<8x15xf32> to vector<1x8xf32>
    %394 = tpu.concatenate %386, %387, %388, %389, %390, %391, %392, %393 in 0 : vector<1x8xf32>, vector<1x8xf32>, vector<1x8xf32>, vector<1x8xf32>, vector<1x8xf32>, vector<1x8xf32>, vector<1x8xf32>, vector<1x8xf32> -> vector<8x8xf32>
    %395 = arith.addf %384, %394 : vector<8x8xf32>
    %cst_131 = arith.constant 0.353553385 : f32
    %396 = vector.broadcast %cst_131 : f32 to vector<8x8xf32>
    %397 = arith.mulf %395, %396 : vector<8x8xf32>
    %cst_132 = arith.constant -1.000000e+30 : f32
    %398 = vector.broadcast %cst_132 : f32 to vector<8x8xf32>
    %399 = arith.select %56, %398, %397 : vector<8x8xi1>, vector<8x8xf32>
    %400 = vector.extract_strided_slice %305 {offsets = [0, 24], sizes = [8, 8], strides = [1, 1]} : vector<8x96xf32> to vector<8x8xf32>
    %401 = vector.extract_strided_slice %302 {offsets = [0, 24], sizes = [1, 8], strides = [1, 1]} : vector<1x32xf32> to vector<1x8xf32>
    %402 = vector.broadcast %401 : vector<1x8xf32> to vector<8x8xf32>
    %403 = arith.addf %400, %402 : vector<8x8xf32>
    %404 = vector.extract_strided_slice %305 {offsets = [0, 56], sizes = [8, 8], strides = [1, 1]} : vector<8x96xf32> to vector<8x8xf32>
    %cst_133 = arith.constant dense<0.000000e+00> : vector<8x8xf32>
    %405 = tpu.matmul %403, %404, %cst_133 {dimension_numbers = #tpu.dot_dimension_numbers<[1], [1], [0], [0], [0, 0, 1, 0], [], []>} : vector<8x8xf32>, vector<8x8xf32>, vector<8x8xf32> -> vector<8x8xf32>
    %406 = vector.extract_strided_slice %332 {offsets = [24, 1600], sizes = [8, 15], strides = [1, 1]} : vector<32x1664xf32> to vector<8x15xf32>
    %407 = vector.extract_strided_slice %406 {offsets = [0, 7], sizes = [1, 8], strides = [1, 1]} : vector<8x15xf32> to vector<1x8xf32>
    %408 = vector.extract_strided_slice %406 {offsets = [1, 6], sizes = [1, 8], strides = [1, 1]} : vector<8x15xf32> to vector<1x8xf32>
    %409 = vector.extract_strided_slice %406 {offsets = [2, 5], sizes = [1, 8], strides = [1, 1]} : vector<8x15xf32> to vector<1x8xf32>
    %410 = vector.extract_strided_slice %406 {offsets = [3, 4], sizes = [1, 8], strides = [1, 1]} : vector<8x15xf32> to vector<1x8xf32>
    %411 = vector.extract_strided_slice %406 {offsets = [4, 3], sizes = [1, 8], strides = [1, 1]} : vector<8x15xf32> to vector<1x8xf32>
    %412 = vector.extract_strided_slice %406 {offsets = [5, 2], sizes = [1, 8], strides = [1, 1]} : vector<8x15xf32> to vector<1x8xf32>
    %413 = vector.extract_strided_slice %406 {offsets = [6, 1], sizes = [1, 8], strides = [1, 1]} : vector<8x15xf32> to vector<1x8xf32>
    %414 = vector.extract_strided_slice %406 {offsets = [7, 0], sizes = [1, 8], strides = [1, 1]} : vector<8x15xf32> to vector<1x8xf32>
    %415 = tpu.concatenate %407, %408, %409, %410, %411, %412, %413, %414 in 0 : vector<1x8xf32>, vector<1x8xf32>, vector<1x8xf32>, vector<1x8xf32>, vector<1x8xf32>, vector<1x8xf32>, vector<1x8xf32>, vector<1x8xf32> -> vector<8x8xf32>
    %416 = arith.addf %405, %415 : vector<8x8xf32>
    %cst_134 = arith.constant 0.353553385 : f32
    %417 = vector.broadcast %cst_134 : f32 to vector<8x8xf32>
    %418 = arith.mulf %416, %417 : vector<8x8xf32>
    %cst_135 = arith.constant -1.000000e+30 : f32
    %419 = vector.broadcast %cst_135 : f32 to vector<8x8xf32>
    %420 = arith.select %56, %419, %418 : vector<8x8xi1>, vector<8x8xf32>
    %421 = tpu.concatenate %357, %378, %399, %420 in 0 : vector<8x8xf32>, vector<8x8xf32>, vector<8x8xf32>, vector<8x8xf32> -> vector<32x8xf32>
    %cst_136 = arith.constant dense<0xFF800000> : vector<32xf32>
    %422 = vector.multi_reduction <maximumf>, %336, %cst_136 [1] : vector<32x1664xf32> to vector<32xf32>
    %423 = vector.shape_cast %422 : vector<32xf32> to vector<32x1xf32>
    %cst_137 = arith.constant dense<0xFF800000> : vector<32xf32>
    %424 = vector.multi_reduction <maximumf>, %421, %cst_137 [1] : vector<32x8xf32> to vector<32xf32>
    %425 = vector.shape_cast %424 : vector<32xf32> to vector<32x1xf32>
    %426 = arith.maximumf %423, %425 : vector<32x1xf32>
    %427 = vector.broadcast %426 : vector<32x1xf32> to vector<32x8xf32>
    %428 = arith.subf %421, %427 : vector<32x8xf32>
    %429 = math.exp %428 : vector<32x8xf32>
    %430 = vector.broadcast %426 : vector<32x1xf32> to vector<32x1664xf32>
    %431 = arith.subf %336, %430 : vector<32x1664xf32>
    %432 = math.exp %431 : vector<32x1664xf32>
    %cst_138 = arith.constant dense<0.000000e+00> : vector<32xf32>
    %433 = vector.multi_reduction <add>, %432, %cst_138 [1] : vector<32x1664xf32> to vector<32xf32>
    %434 = vector.shape_cast %433 : vector<32xf32> to vector<32x1xf32>
    %cst_139 = arith.constant dense<0.000000e+00> : vector<32xf32>
    %435 = vector.multi_reduction <add>, %429, %cst_139 [1] : vector<32x8xf32> to vector<32xf32>
    %436 = vector.shape_cast %435 : vector<32xf32> to vector<32x1xf32>
    %437 = arith.addf %434, %436 : vector<32x1xf32>
    %438 = tpu.reciprocal %437 {approx = true} : vector<32x1xf32> -> vector<32x1xf32>
    %439 = vector.extract_strided_slice %305 {offsets = [0, 64], sizes = [8, 8], strides = [1, 1]} : vector<8x96xf32> to vector<8x8xf32>
    %440 = vector.extract_strided_slice %429 {offsets = [0, 0], sizes = [8, 8], strides = [1, 1]} : vector<32x8xf32> to vector<8x8xf32>
    %cst_140 = arith.constant dense<0.000000e+00> : vector<8x8xf32>
    %441 = tpu.matmul %440, %439, %cst_140 {dimension_numbers = #tpu.dot_dimension_numbers<[1], [0], [0], [1], [0, 0, 1, 1], [], []>} : vector<8x8xf32>, vector<8x8xf32>, vector<8x8xf32> -> vector<8x8xf32>
    %442 = vector.extract_strided_slice %438 {offsets = [0, 0], sizes = [8, 1], strides = [1, 1]} : vector<32x1xf32> to vector<8x1xf32>
    %443 = vector.broadcast %442 : vector<8x1xf32> to vector<8x8xf32>
    %444 = arith.mulf %441, %443 : vector<8x8xf32>
    %445 = vector.extract_strided_slice %305 {offsets = [0, 72], sizes = [8, 8], strides = [1, 1]} : vector<8x96xf32> to vector<8x8xf32>
    %446 = vector.extract_strided_slice %429 {offsets = [8, 0], sizes = [8, 8], strides = [1, 1]} : vector<32x8xf32> to vector<8x8xf32>
    %cst_141 = arith.constant dense<0.000000e+00> : vector<8x8xf32>
    %447 = tpu.matmul %446, %445, %cst_141 {dimension_numbers = #tpu.dot_dimension_numbers<[1], [0], [0], [1], [0, 0, 1, 1], [], []>} : vector<8x8xf32>, vector<8x8xf32>, vector<8x8xf32> -> vector<8x8xf32>
    %448 = vector.extract_strided_slice %438 {offsets = [8, 0], sizes = [8, 1], strides = [1, 1]} : vector<32x1xf32> to vector<8x1xf32>
    %449 = vector.broadcast %448 : vector<8x1xf32> to vector<8x8xf32>
    %450 = arith.mulf %447, %449 : vector<8x8xf32>
    %451 = vector.extract_strided_slice %305 {offsets = [0, 80], sizes = [8, 8], strides = [1, 1]} : vector<8x96xf32> to vector<8x8xf32>
    %452 = vector.extract_strided_slice %429 {offsets = [16, 0], sizes = [8, 8], strides = [1, 1]} : vector<32x8xf32> to vector<8x8xf32>
    %cst_142 = arith.constant dense<0.000000e+00> : vector<8x8xf32>
    %453 = tpu.matmul %452, %451, %cst_142 {dimension_numbers = #tpu.dot_dimension_numbers<[1], [0], [0], [1], [0, 0, 1, 1], [], []>} : vector<8x8xf32>, vector<8x8xf32>, vector<8x8xf32> -> vector<8x8xf32>
    %454 = vector.extract_strided_slice %438 {offsets = [16, 0], sizes = [8, 1], strides = [1, 1]} : vector<32x1xf32> to vector<8x1xf32>
    %455 = vector.broadcast %454 : vector<8x1xf32> to vector<8x8xf32>
    %456 = arith.mulf %453, %455 : vector<8x8xf32>
    %457 = vector.extract_strided_slice %305 {offsets = [0, 88], sizes = [8, 8], strides = [1, 1]} : vector<8x96xf32> to vector<8x8xf32>
    %458 = vector.extract_strided_slice %429 {offsets = [24, 0], sizes = [8, 8], strides = [1, 1]} : vector<32x8xf32> to vector<8x8xf32>
    %cst_143 = arith.constant dense<0.000000e+00> : vector<8x8xf32>
    %459 = tpu.matmul %458, %457, %cst_143 {dimension_numbers = #tpu.dot_dimension_numbers<[1], [0], [0], [1], [0, 0, 1, 1], [], []>} : vector<8x8xf32>, vector<8x8xf32>, vector<8x8xf32> -> vector<8x8xf32>
    %460 = vector.extract_strided_slice %438 {offsets = [24, 0], sizes = [8, 1], strides = [1, 1]} : vector<32x1xf32> to vector<8x1xf32>
    %461 = vector.broadcast %460 : vector<8x1xf32> to vector<8x8xf32>
    %462 = arith.mulf %459, %461 : vector<8x8xf32>
    %463 = tpu.concatenate %444, %450, %456, %462 in 1 : vector<8x8xf32>, vector<8x8xf32>, vector<8x8xf32>, vector<8x8xf32> -> vector<8x32xf32>
    %c1_144 = arith.constant 1 : index
    %c0_145 = arith.constant 0 : index
    %c0_146 = arith.constant 0 : index
    %464 = vector.load %arg7[%c1_144, %c0_145, %c0_146] : memref<2x32x32xf32, #tpu.memory_space<vmem>>, vector<1x32x32xf32>
    %465 = vector.shape_cast %464 : vector<1x32x32xf32> to vector<32x32xf32>
    %cst_147 = arith.constant dense<0.000000e+00> : vector<8x32xf32>
    %466 = tpu.matmul %463, %465, %cst_147 {dimension_numbers = #tpu.dot_dimension_numbers<[1], [0], [0], [1], [0, 0, 1, 1], [], []>} : vector<8x32xf32>, vector<32x32xf32>, vector<8x32xf32> -> vector<8x32xf32>
    %467 = arith.addf %296, %466 : vector<8x32xf32>
    %c1_148 = arith.constant 1 : index
    %c0_149 = arith.constant 0 : index
    %c0_150 = arith.constant 0 : index
    %468 = vector.load %arg10[%c1_148, %c0_149, %c0_150] : memref<2x1x32xf32, #tpu.memory_space<vmem>>, vector<1x1x32xf32>
    %469 = vector.shape_cast %468 : vector<1x1x32xf32> to vector<1x32xf32>
    %c1_151 = arith.constant 1 : index
    %c0_152 = arith.constant 0 : index
    %c0_153 = arith.constant 0 : index
    %470 = vector.load %arg11[%c1_151, %c0_152, %c0_153] : memref<2x1x32xf32, #tpu.memory_space<vmem>>, vector<1x1x32xf32>
    %471 = vector.shape_cast %470 : vector<1x1x32xf32> to vector<1x32xf32>
    %cst_154 = arith.constant dense<0.000000e+00> : vector<8xf32>
    %472 = vector.multi_reduction <add>, %467, %cst_154 [1] : vector<8x32xf32> to vector<8xf32>
    %473 = vector.shape_cast %472 : vector<8xf32> to vector<8x1xf32>
    %cst_155 = arith.constant 3.200000e+01 : f32
    %474 = vector.broadcast %cst_155 : f32 to vector<8x1xf32>
    %475 = arith.divf %473, %474 : vector<8x1xf32>
    %476 = vector.broadcast %475 : vector<8x1xf32> to vector<8x32xf32>
    %477 = arith.subf %467, %476 : vector<8x32xf32>
    %478 = arith.mulf %477, %477 : vector<8x32xf32>
    %cst_156 = arith.constant dense<0.000000e+00> : vector<8xf32>
    %479 = vector.multi_reduction <add>, %478, %cst_156 [1] : vector<8x32xf32> to vector<8xf32>
    %480 = vector.shape_cast %479 : vector<8xf32> to vector<8x1xf32>
    %cst_157 = arith.constant 3.200000e+01 : f32
    %481 = vector.broadcast %cst_157 : f32 to vector<8x1xf32>
    %482 = arith.divf %480, %481 : vector<8x1xf32>
    %483 = vector.broadcast %475 : vector<8x1xf32> to vector<8x32xf32>
    %484 = arith.subf %467, %483 : vector<8x32xf32>
    %cst_158 = arith.constant 9.99999974E-6 : f32
    %485 = vector.broadcast %cst_158 : f32 to vector<8x1xf32>
    %486 = arith.addf %482, %485 : vector<8x1xf32>
    %487 = math.rsqrt %486 : vector<8x1xf32>
    %488 = vector.broadcast %487 : vector<8x1xf32> to vector<8x32xf32>
    %489 = arith.mulf %484, %488 : vector<8x32xf32>
    %490 = vector.broadcast %469 : vector<1x32xf32> to vector<8x32xf32>
    %491 = arith.mulf %489, %490 : vector<8x32xf32>
    %492 = vector.broadcast %471 : vector<1x32xf32> to vector<8x32xf32>
    %493 = arith.addf %491, %492 : vector<8x32xf32>
    %c1_159 = arith.constant 1 : index
    %c0_160 = arith.constant 0 : index
    %c0_161 = arith.constant 0 : index
    %494 = vector.load %arg12[%c1_159, %c0_160, %c0_161] : memref<2x32x64xf32, #tpu.memory_space<vmem>>, vector<1x32x64xf32>
    %495 = vector.shape_cast %494 : vector<1x32x64xf32> to vector<32x64xf32>
    %cst_162 = arith.constant dense<0.000000e+00> : vector<8x64xf32>
    %496 = tpu.matmul %493, %495, %cst_162 {dimension_numbers = #tpu.dot_dimension_numbers<[1], [0], [0], [1], [0, 0, 1, 1], [], []>} : vector<8x32xf32>, vector<32x64xf32>, vector<8x64xf32> -> vector<8x64xf32>
    %c1_163 = arith.constant 1 : index
    %c0_164 = arith.constant 0 : index
    %c0_165 = arith.constant 0 : index
    %497 = vector.load %arg13[%c1_163, %c0_164, %c0_165] : memref<2x1x64xf32, #tpu.memory_space<vmem>>, vector<1x1x64xf32>
    %498 = vector.shape_cast %497 : vector<1x1x64xf32> to vector<1x64xf32>
    %499 = vector.broadcast %498 : vector<1x64xf32> to vector<8x64xf32>
    %500 = arith.addf %496, %499 : vector<8x64xf32>
    %cst_166 = arith.constant 0.000000e+00 : f32
    %501 = vector.broadcast %cst_166 : f32 to vector<8x64xf32>
    %502 = arith.maximumf %500, %501 : vector<8x64xf32>
    %c1_167 = arith.constant 1 : index
    %c0_168 = arith.constant 0 : index
    %c0_169 = arith.constant 0 : index
    %503 = vector.load %arg14[%c1_167, %c0_168, %c0_169] : memref<2x64x32xf32, #tpu.memory_space<vmem>>, vector<1x64x32xf32>
    %504 = vector.shape_cast %503 : vector<1x64x32xf32> to vector<64x32xf32>
    %cst_170 = arith.constant dense<0.000000e+00> : vector<8x32xf32>
    %505 = tpu.matmul %502, %504, %cst_170 {dimension_numbers = #tpu.dot_dimension_numbers<[1], [0], [0], [1], [0, 0, 1, 1], [], []>} : vector<8x64xf32>, vector<64x32xf32>, vector<8x32xf32> -> vector<8x32xf32>
    %c1_171 = arith.constant 1 : index
    %c0_172 = arith.constant 0 : index
    %c0_173 = arith.constant 0 : index
    %506 = vector.load %arg15[%c1_171, %c0_172, %c0_173] : memref<2x1x32xf32, #tpu.memory_space<vmem>>, vector<1x1x32xf32>
    %507 = vector.shape_cast %506 : vector<1x1x32xf32> to vector<1x32xf32>
    %508 = vector.broadcast %507 : vector<1x32xf32> to vector<8x32xf32>
    %509 = arith.addf %505, %508 : vector<8x32xf32>
    %510 = arith.addf %493, %509 : vector<8x32xf32>
    %c1_174 = arith.constant 1 : index
    %c0_175 = arith.constant 0 : index
    %c0_176 = arith.constant 0 : index
    %511 = vector.load %arg16[%c1_174, %c0_175, %c0_176] : memref<2x1x32xf32, #tpu.memory_space<vmem>>, vector<1x1x32xf32>
    %512 = vector.shape_cast %511 : vector<1x1x32xf32> to vector<1x32xf32>
    %c1_177 = arith.constant 1 : index
    %c0_178 = arith.constant 0 : index
    %c0_179 = arith.constant 0 : index
    %513 = vector.load %arg17[%c1_177, %c0_178, %c0_179] : memref<2x1x32xf32, #tpu.memory_space<vmem>>, vector<1x1x32xf32>
    %514 = vector.shape_cast %513 : vector<1x1x32xf32> to vector<1x32xf32>
    %cst_180 = arith.constant dense<0.000000e+00> : vector<8xf32>
    %515 = vector.multi_reduction <add>, %510, %cst_180 [1] : vector<8x32xf32> to vector<8xf32>
    %516 = vector.shape_cast %515 : vector<8xf32> to vector<8x1xf32>
    %cst_181 = arith.constant 3.200000e+01 : f32
    %517 = vector.broadcast %cst_181 : f32 to vector<8x1xf32>
    %518 = arith.divf %516, %517 : vector<8x1xf32>
    %519 = vector.broadcast %518 : vector<8x1xf32> to vector<8x32xf32>
    %520 = arith.subf %510, %519 : vector<8x32xf32>
    %521 = arith.mulf %520, %520 : vector<8x32xf32>
    %cst_182 = arith.constant dense<0.000000e+00> : vector<8xf32>
    %522 = vector.multi_reduction <add>, %521, %cst_182 [1] : vector<8x32xf32> to vector<8xf32>
    %523 = vector.shape_cast %522 : vector<8xf32> to vector<8x1xf32>
    %cst_183 = arith.constant 3.200000e+01 : f32
    %524 = vector.broadcast %cst_183 : f32 to vector<8x1xf32>
    %525 = arith.divf %523, %524 : vector<8x1xf32>
    %526 = vector.broadcast %518 : vector<8x1xf32> to vector<8x32xf32>
    %527 = arith.subf %510, %526 : vector<8x32xf32>
    %cst_184 = arith.constant 9.99999974E-6 : f32
    %528 = vector.broadcast %cst_184 : f32 to vector<8x1xf32>
    %529 = arith.addf %525, %528 : vector<8x1xf32>
    %530 = math.rsqrt %529 : vector<8x1xf32>
    %531 = vector.broadcast %530 : vector<8x1xf32> to vector<8x32xf32>
    %532 = arith.mulf %527, %531 : vector<8x32xf32>
    %533 = vector.broadcast %512 : vector<1x32xf32> to vector<8x32xf32>
    %534 = arith.mulf %532, %533 : vector<8x32xf32>
    %535 = vector.broadcast %514 : vector<1x32xf32> to vector<8x32xf32>
    %536 = arith.addf %534, %535 : vector<8x32xf32>
    %c0_185 = arith.constant 0 : index
    %c0_186 = arith.constant 0 : index
    %537 = vector.load %arg18[%c0_185, %c0_186] : memref<32x128xf32, #tpu.memory_space<vmem>>, vector<32x128xf32>
    %cst_187 = arith.constant dense<0.000000e+00> : vector<8x128xf32>
    %538 = tpu.matmul %536, %537, %cst_187 {dimension_numbers = #tpu.dot_dimension_numbers<[1], [0], [0], [1], [0, 0, 1, 1], [], []>} : vector<8x32xf32>, vector<32x128xf32>, vector<8x128xf32> -> vector<8x128xf32>
    %c0_188 = arith.constant 0 : index
    %c0_189 = arith.constant 0 : index
    %539 = vector.load %arg19[%c0_188, %c0_189] : memref<1x128xf32, #tpu.memory_space<vmem>>, vector<1x128xf32>
    %540 = vector.broadcast %539 : vector<1x128xf32> to vector<8x128xf32>
    %541 = arith.addf %538, %540 : vector<8x128xf32>
    %542 = arith.negf %541 : vector<8x128xf32>
    %543 = math.exp %542 : vector<8x128xf32>
    %cst_190 = arith.constant 1.000000e+00 : f32
    %544 = vector.broadcast %cst_190 : f32 to vector<8x128xf32>
    %545 = arith.addf %544, %543 : vector<8x128xf32>
    %546 = arith.divf %544, %545 : vector<8x128xf32>
    %c0_191 = arith.constant 0 : index
    %c0_192 = arith.constant 0 : index
    %c0_193 = arith.constant 0 : index
    %547 = vector.load %arg20[%c0_191, %c0_192, %c0_193] : memref<1x8x128xf32, #tpu.memory_space<vmem>>, vector<1x8x128xf32>
    %548 = vector.shape_cast %547 : vector<1x8x128xf32> to vector<8x128xf32>
    %549 = vector.shape_cast %546 : vector<8x128xf32> to vector<1x8x128xf32>
    tpu.vector_store %arg20[%c0_191, %c0_192, %c0_193], %549 {strides = array<i32>} : memref<1x8x128xf32, #tpu.memory_space<vmem>>, vector<1x8x128xf32>,
    return
  }
  func.func @transform_0(%arg0: i32, %arg1: memref<8x2xi32, #tpu.memory_space<smem>>) -> (i32, i32, i32) {
    %c0_i32 = arith.constant 0 : i32
    %c0_i32_0 = arith.constant 0 : i32
    %c0_i32_1 = arith.constant 0 : i32
    %c0_i32_2 = arith.constant 0 : i32
    return %c0_i32, %c0_i32_0, %c0_i32_1 : i32, i32, i32
  }
  func.func @transform_1(%arg0: i32, %arg1: memref<8x2xi32, #tpu.memory_space<smem>>) -> (i32, i32) {
    %c0_i32 = arith.constant 0 : i32
    %c0_i32_0 = arith.constant 0 : i32
    %c0_i32_1 = arith.constant 0 : i32
    return %c0_i32, %c0_i32_0 : i32, i32
  }
  func.func @transform_2(%arg0: i32, %arg1: memref<8x2xi32, #tpu.memory_space<smem>>) -> (i32, i32) {
    %c0_i32 = arith.constant 0 : i32
    %c0_i32_0 = arith.constant 0 : i32
    %c0_i32_1 = arith.constant 0 : i32
    return %c0_i32, %c0_i32_0 : i32, i32
  }
  func.func @transform_3(%arg0: i32, %arg1: memref<8x2xi32, #tpu.memory_space<smem>>) -> (i32, i32, i32) {
    %c0_i32 = arith.constant 0 : i32
    %c0_i32_0 = arith.constant 0 : i32
    %c0_i32_1 = arith.constant 0 : i32
    %c0_i32_2 = arith.constant 0 : i32
    return %c0_i32, %c0_i32_0, %c0_i32_1 : i32, i32, i32
  }
  func.func @transform_4(%arg0: i32, %arg1: memref<8x2xi32, #tpu.memory_space<smem>>) -> (i32, i32, i32) {
    %c0_i32 = arith.constant 0 : i32
    %c0_i32_0 = arith.constant 0 : i32
    %c0_i32_1 = arith.constant 0 : i32
    %c0_i32_2 = arith.constant 0 : i32
    return %c0_i32, %c0_i32_0, %c0_i32_1 : i32, i32, i32
  }
  func.func @transform_5(%arg0: i32, %arg1: memref<8x2xi32, #tpu.memory_space<smem>>) -> (i32, i32, i32) {
    %c0_i32 = arith.constant 0 : i32
    %c0_i32_0 = arith.constant 0 : i32
    %c0_i32_1 = arith.constant 0 : i32
    %c0_i32_2 = arith.constant 0 : i32
    return %c0_i32, %c0_i32_0, %c0_i32_1 : i32, i32, i32
  }
  func.func @transform_6(%arg0: i32, %arg1: memref<8x2xi32, #tpu.memory_space<smem>>) -> (i32, i32, i32) {
    %c0_i32 = arith.constant 0 : i32
    %c0_i32_0 = arith.constant 0 : i32
    %c0_i32_1 = arith.constant 0 : i32
    %c0_i32_2 = arith.constant 0 : i32
    return %c0_i32, %c0_i32_0, %c0_i32_1 : i32, i32, i32
  }
  func.func @transform_7(%arg0: i32, %arg1: memref<8x2xi32, #tpu.memory_space<smem>>) -> (i32, i32, i32) {
    %c0_i32 = arith.constant 0 : i32
    %c0_i32_0 = arith.constant 0 : i32
    %c0_i32_1 = arith.constant 0 : i32
    %c0_i32_2 = arith.constant 0 : i32
    return %c0_i32, %c0_i32_0, %c0_i32_1 : i32, i32, i32
  }
  func.func @transform_8(%arg0: i32, %arg1: memref<8x2xi32, #tpu.memory_space<smem>>) -> (i32, i32, i32) {
    %c0_i32 = arith.constant 0 : i32
    %c0_i32_0 = arith.constant 0 : i32
    %c0_i32_1 = arith.constant 0 : i32
    %c0_i32_2 = arith.constant 0 : i32
    return %c0_i32, %c0_i32_0, %c0_i32_1 : i32, i32, i32
  }
  func.func @transform_9(%arg0: i32, %arg1: memref<8x2xi32, #tpu.memory_space<smem>>) -> (i32, i32, i32) {
    %c0_i32 = arith.constant 0 : i32
    %c0_i32_0 = arith.constant 0 : i32
    %c0_i32_1 = arith.constant 0 : i32
    %c0_i32_2 = arith.constant 0 : i32
    return %c0_i32, %c0_i32_0, %c0_i32_1 : i32, i32, i32
  }
  func.func @transform_10(%arg0: i32, %arg1: memref<8x2xi32, #tpu.memory_space<smem>>) -> (i32, i32, i32) {
    %c0_i32 = arith.constant 0 : i32
    %c0_i32_0 = arith.constant 0 : i32
    %c0_i32_1 = arith.constant 0 : i32
    %c0_i32_2 = arith.constant 0 : i32
    return %c0_i32, %c0_i32_0, %c0_i32_1 : i32, i32, i32
  }
  func.func @transform_11(%arg0: i32, %arg1: memref<8x2xi32, #tpu.memory_space<smem>>) -> (i32, i32, i32) {
    %c0_i32 = arith.constant 0 : i32
    %c0_i32_0 = arith.constant 0 : i32
    %c0_i32_1 = arith.constant 0 : i32
    %c0_i32_2 = arith.constant 0 : i32
    return %c0_i32, %c0_i32_0, %c0_i32_1 : i32, i32, i32
  }
  func.func @transform_12(%arg0: i32, %arg1: memref<8x2xi32, #tpu.memory_space<smem>>) -> (i32, i32, i32) {
    %c0_i32 = arith.constant 0 : i32
    %c0_i32_0 = arith.constant 0 : i32
    %c0_i32_1 = arith.constant 0 : i32
    %c0_i32_2 = arith.constant 0 : i32
    return %c0_i32, %c0_i32_0, %c0_i32_1 : i32, i32, i32
  }
  func.func @transform_13(%arg0: i32, %arg1: memref<8x2xi32, #tpu.memory_space<smem>>) -> (i32, i32, i32) {
    %c0_i32 = arith.constant 0 : i32
    %c0_i32_0 = arith.constant 0 : i32
    %c0_i32_1 = arith.constant 0 : i32
    %c0_i32_2 = arith.constant 0 : i32
    return %c0_i32, %c0_i32_0, %c0_i32_1 : i32, i32, i32
  }
  func.func @transform_14(%arg0: i32, %arg1: memref<8x2xi32, #tpu.memory_space<smem>>) -> (i32, i32, i32) {
    %c0_i32 = arith.constant 0 : i32
    %c0_i32_0 = arith.constant 0 : i32
    %c0_i32_1 = arith.constant 0 : i32
    %c0_i32_2 = arith.constant 0 : i32
    return %c0_i32, %c0_i32_0, %c0_i32_1 : i32, i32, i32
  }
  func.func @transform_15(%arg0: i32, %arg1: memref<8x2xi32, #tpu.memory_space<smem>>) -> (i32, i32, i32) {
    %c0_i32 = arith.constant 0 : i32
    %c0_i32_0 = arith.constant 0 : i32
    %c0_i32_1 = arith.constant 0 : i32
    %c0_i32_2 = arith.constant 0 : i32
    return %c0_i32, %c0_i32_0, %c0_i32_1 : i32, i32, i32
  }
  func.func @transform_16(%arg0: i32, %arg1: memref<8x2xi32, #tpu.memory_space<smem>>) -> (i32, i32) {
    %c0_i32 = arith.constant 0 : i32
    %c0_i32_0 = arith.constant 0 : i32
    %c0_i32_1 = arith.constant 0 : i32
    return %c0_i32, %c0_i32_0 : i32, i32
  }
  func.func @transform_17(%arg0: i32, %arg1: memref<8x2xi32, #tpu.memory_space<smem>>) -> (i32, i32) {
    %c0_i32 = arith.constant 0 : i32
    %c0_i32_0 = arith.constant 0 : i32
    %c0_i32_1 = arith.constant 0 : i32
    return %c0_i32, %c0_i32_0 : i32, i32
  }
  func.func @transform_18(%arg0: i32, %arg1: memref<8x2xi32, #tpu.memory_space<smem>>) -> (i32, i32, i32) {
    %c0_i32 = arith.constant 0 : i32
    %c0_i32_0 = arith.constant 0 : i32
    %c0_i32_1 = arith.constant 0 : i32
    return %arg0, %c0_i32, %c0_i32_0 : i32, i32, i32
  }
}

</mosaic_0001>

<llo_original>
// kernel: transformer_xl_forward.1
$region0: #{transformer_xl_forward.1}
  #allocation0 [shape = 'u32[]', space=smem, size = 0x4, offset = 0x4, fixed_abs, tag = 'smem constant byte address 0x4 - core index']
  #allocation1 [shape = 'u32[144,128]{1,0:T(1,128)}', space=vmem, size = 0x12000, scoped, tag = 'internal scratch']
  #allocation2 [shape = 's32[1]{0}', space=sflag, size = 0x4, scoped, tag = 'scoped memory for transformer_xl_forward.1']
  #allocation3 [shape = 'u8[4096]{0}', space=smem, size = 0x1000, scoped, tag = 'prefetched SMEM operand 0']
  %s0 = inlined_call_operand.vmem [shape: s32[8,2], index: 0, kind: input, shape index: {}]
  %s1 = inlined_call_operand.vmem [shape: f32[50,1,32], index: 1, kind: input, shape index: {}]
  %s2 = inlined_call_operand.vmem [shape: f32[32,32], index: 2, kind: input, shape index: {}]
  %s3 = inlined_call_operand.vmem [shape: f32[32,1664], index: 3, kind: input, shape index: {}]
  %s4 = inlined_call_operand.vmem [shape: f32[2,32,96], index: 4, kind: input, shape index: {}]
  %s5 = inlined_call_operand.vmem [shape: f32[2,32,32], index: 5, kind: input, shape index: {}]
  %s6 = inlined_call_operand.vmem [shape: f32[2,32,32], index: 6, kind: input, shape index: {}]
  %s7 = inlined_call_operand.vmem [shape: f32[2,1,32], index: 7, kind: input, shape index: {}]
  %s8 = inlined_call_operand.vmem [shape: f32[2,1,32], index: 8, kind: input, shape index: {}]
  %s9 = inlined_call_operand.vmem [shape: f32[2,1,32], index: 9, kind: input, shape index: {}]
  %s10 = inlined_call_operand.vmem [shape: f32[2,1,32], index: 10, kind: input, shape index: {}]
  %s11 = inlined_call_operand.vmem [shape: f32[2,32,64], index: 11, kind: input, shape index: {}]
  %s12 = inlined_call_operand.vmem [shape: f32[2,1,64], index: 12, kind: input, shape index: {}]
  %s13 = inlined_call_operand.vmem [shape: f32[2,64,32], index: 13, kind: input, shape index: {}]
  %s14 = inlined_call_operand.vmem [shape: f32[2,1,32], index: 14, kind: input, shape index: {}]
  %s15 = inlined_call_operand.vmem [shape: f32[2,1,32], index: 15, kind: input, shape index: {}]
  %s16 = inlined_call_operand.vmem [shape: f32[2,1,32], index: 16, kind: input, shape index: {}]
  %s17 = inlined_call_operand.vmem [shape: f32[32,128], index: 17, kind: input, shape index: {}]
  %s18 = inlined_call_operand.vmem [shape: f32[1,128], index: 18, kind: input, shape index: {}]
  %s19 = inlined_call_operand.vmem [shape: f32[2,8,128], index: 19, kind: output, shape index: {}]
  %s20 = sld [smem:[#allocation0]]
  $region105: #{transformer_xl_forward.1} parent=0
    _
  %s22 = ssub.s32 1, %s20
  %s23 = scalar_select 0, %s22, %s20
  %s24 = sshll.u32 %s0, 4
  %s25 = int_to_ptr.vmem [resolvable:$true] %s24
  %27 = dma.vmem_to_smem %s25, 128, [#allocation3], [#allocation2]
  %28 = dma.done [#allocation2], 128
  %29 = sfence
  loop: start=0, step=1, limit=4
  $region2: #{transformer_xl_forward.1} parent=0 // loop_pre_header
    _
  $region3: #{transformer_xl_forward.1} parent=0 // loop_header
    %s31 = sphi 0, %s35
    %p32 = scmp.ge.s32.totalorder %s31, 4
    %s39 = sphi 0, %s39
    %s41 = sphi 0, %s39
    %s42 = sphi 0, %s41
    %s56 = sphi 0, %s42
    %s60 = sphi 0, %s60
    %s62 = sphi 0, %s60
    %s63 = sphi 0, %s62
    %s77 = sphi 0, %s63
    %s81 = sphi 0, %s81
    %s83 = sphi 0, %s81
    %s84 = sphi 0, %s83
    %s98 = sphi 0, %s84
    %s102 = sphi 0, %s102
    %s104 = sphi 0, %s102
    %s105 = sphi 0, %s104
    %s119 = sphi 0, %s105
    %s123 = sphi 0, %s123
    %s125 = sphi 0, %s123
    %s126 = sphi 0, %s125
    %s140 = sphi 0, %s126
    %s144 = sphi 0, %s144
    %s146 = sphi 0, %s144
    %s147 = sphi 0, %s146
    %s161 = sphi 0, %s147
    %s165 = sphi 0, %s165
    %s167 = sphi 0, %s165
    %s168 = sphi 0, %s167
    %s182 = sphi 0, %s168
    %s186 = sphi 0, %s186
    %s188 = sphi 0, %s186
    %s189 = sphi 0, %s188
    %s203 = sphi 0, %s189
    %s207 = sphi 0, %s207
    %s209 = sphi 0, %s207
    %s210 = sphi 0, %s209
    %s224 = sphi 0, %s210
    %s228 = sphi 0, %s228
    %s230 = sphi 0, %s228
    %s231 = sphi 0, %s230
    %s245 = sphi 0, %s231
    %s249 = sphi 0, %s249
    %s251 = sphi 0, %s249
    %s252 = sphi 0, %s251
    %s266 = sphi 0, %s252
    %s270 = sphi 0, %s270
    %s272 = sphi 0, %s270
    %s273 = sphi 0, %s272
    %s287 = sphi 0, %s273
    %s291 = sphi 0, %s291
    %s293 = sphi 0, %s291
    %s294 = sphi 0, %s293
    %s308 = sphi 0, %s294
    %s312 = sphi 0, %s312
    %s314 = sphi 0, %s312
    %s315 = sphi 0, %s314
    %s329 = sphi 0, %s315
    %s333 = sphi 0, %s333
    %s335 = sphi 0, %s333
    %s336 = sphi 0, %s335
    %s350 = sphi 0, %s336
    %s354 = sphi 0, %s354
    %s356 = sphi 0, %s354
    %s357 = sphi 0, %s356
    %s371 = sphi 0, %s357
    %s375 = sphi 0, %s375
    %s377 = sphi 0, %s375
    %s378 = sphi 0, %s377
    %s392 = sphi 0, %s378
    %s396 = sphi 0, %s396
    %s398 = sphi 0, %s396
    %s399 = sphi 0, %s398
    %s413 = sphi 0, %s399
    %s419 = sphi 0, %s421
    %s422 = sphi 0, %s419
    %s423 = sphi 0, %s422
    %s439 = sphi 0, %s423
  $region4: #{transformer_xl_forward.1} parent=0 // loop_header_branch
    %34 = sbr.rel (%p32) target = $region8
  $region5: #{transformer_xl_forward.1} parent=0 // loop_body
    %s36 = ssub.s32 %s31, 1
    %s37 = ssub.s32 %s31, 2
    %s38 = sadd.s32 %s31, 1
    %s40 = sadd.s32 %s39, 1
    %p43 = scmp.eq.s32.totalorder %s31, 1
    %p44 = scmp.ne.s32.totalorder %s39, %s41
    %p45 = scmp.eq.s32.totalorder %s31, 0
    %p46 = por %p44, %p45
    %p47 = scmp.ne.s32.totalorder %s39, %s41
    %p48 = scmp.eq.s32.totalorder %s36, 1
    %p49 = por %p47, %p48
    %p50 = scmp.ne.s32.totalorder %s41, %s42
    %p51 = scmp.eq.s32.totalorder %s36, 0
    %p52 = por %p50, %p51
    %p53 = scmp.ne.s32.totalorder %s41, %s42
    %p54 = scmp.eq.s32.totalorder %s37, 1
    %p55 = por %p53, %p54
    %p57 = scmp.ne.s32.totalorder %s42, %s56
    %p58 = scmp.eq.s32.totalorder %s37, 0
    %p59 = por %p57, %p58
    %s61 = sadd.s32 %s60, 1
    %p64 = scmp.eq.s32.totalorder %s31, 1
    %p65 = scmp.ne.s32.totalorder %s60, %s62
    %p66 = scmp.eq.s32.totalorder %s31, 0
    %p67 = por %p65, %p66
    %p68 = scmp.ne.s32.totalorder %s60, %s62
    %p69 = scmp.eq.s32.totalorder %s36, 1
    %p70 = por %p68, %p69
    %p71 = scmp.ne.s32.totalorder %s62, %s63
    %p72 = scmp.eq.s32.totalorder %s36, 0
    %p73 = por %p71, %p72
    %p74 = scmp.ne.s32.totalorder %s62, %s63
    %p75 = scmp.eq.s32.totalorder %s37, 1
    %p76 = por %p74, %p75
    %p78 = scmp.ne.s32.totalorder %s63, %s77
    %p79 = scmp.eq.s32.totalorder %s37, 0
    %p80 = por %p78, %p79
    %s82 = sadd.s32 %s81, 1
    %p85 = scmp.eq.s32.totalorder %s31, 1
    %p86 = scmp.ne.s32.totalorder %s81, %s83
    %p87 = scmp.eq.s32.totalorder %s31, 0
    %p88 = por %p86, %p87
    %p89 = scmp.ne.s32.totalorder %s81, %s83
    %p90 = scmp.eq.s32.totalorder %s36, 1
    %p91 = por %p89, %p90
    %p92 = scmp.ne.s32.totalorder %s83, %s84
    %p93 = scmp.eq.s32.totalorder %s36, 0
    %p94 = por %p92, %p93
    %p95 = scmp.ne.s32.totalorder %s83, %s84
    %p96 = scmp.eq.s32.totalorder %s37, 1
    %p97 = por %p95, %p96
    %p99 = scmp.ne.s32.totalorder %s84, %s98
    %p100 = scmp.eq.s32.totalorder %s37, 0
    %p101 = por %p99, %p100
    %s103 = sadd.s32 %s102, 1
    %p106 = scmp.eq.s32.totalorder %s31, 1
    %p107 = scmp.ne.s32.totalorder %s102, %s104
    %p108 = scmp.eq.s32.totalorder %s31, 0
    %p109 = por %p107, %p108
    %p110 = scmp.ne.s32.totalorder %s102, %s104
    %p111 = scmp.eq.s32.totalorder %s36, 1
    %p112 = por %p110, %p111
    %p113 = scmp.ne.s32.totalorder %s104, %s105
    %p114 = scmp.eq.s32.totalorder %s36, 0
    %p115 = por %p113, %p114
    %p116 = scmp.ne.s32.totalorder %s104, %s105
    %p117 = scmp.eq.s32.totalorder %s37, 1
    %p118 = por %p116, %p117
    %p120 = scmp.ne.s32.totalorder %s105, %s119
    %p121 = scmp.eq.s32.totalorder %s37, 0
    %p122 = por %p120, %p121
    %s124 = sadd.s32 %s123, 1
    %p127 = scmp.eq.s32.totalorder %s31, 1
    %p128 = scmp.ne.s32.totalorder %s123, %s125
    %p129 = scmp.eq.s32.totalorder %s31, 0
    %p130 = por %p128, %p129
    %p131 = scmp.ne.s32.totalorder %s123, %s125
    %p132 = scmp.eq.s32.totalorder %s36, 1
    %p133 = por %p131, %p132
    %p134 = scmp.ne.s32.totalorder %s125, %s126
    %p135 = scmp.eq.s32.totalorder %s36, 0
    %p136 = por %p134, %p135
    %p137 = scmp.ne.s32.totalorder %s125, %s126
    %p138 = scmp.eq.s32.totalorder %s37, 1
    %p139 = por %p137, %p138
    %p141 = scmp.ne.s32.totalorder %s126, %s140
    %p142 = scmp.eq.s32.totalorder %s37, 0
    %p143 = por %p141, %p142
    %s145 = sadd.s32 %s144, 1
    %p148 = scmp.eq.s32.totalorder %s31, 1
    %p149 = scmp.ne.s32.totalorder %s144, %s146
    %p150 = scmp.eq.s32.totalorder %s31, 0
    %p151 = por %p149, %p150
    %p152 = scmp.ne.s32.totalorder %s144, %s146
    %p153 = scmp.eq.s32.totalorder %s36, 1
    %p154 = por %p152, %p153
    %p155 = scmp.ne.s32.totalorder %s146, %s147
    %p156 = scmp.eq.s32.totalorder %s36, 0
    %p157 = por %p155, %p156
    %p158 = scmp.ne.s32.totalorder %s146, %s147
    %p159 = scmp.eq.s32.totalorder %s37, 1
    %p160 = por %p158, %p159
    %p162 = scmp.ne.s32.totalorder %s147, %s161
    %p163 = scmp.eq.s32.totalorder %s37, 0
    %p164 = por %p162, %p163
    %s166 = sadd.s32 %s165, 1
    %p169 = scmp.eq.s32.totalorder %s31, 1
    %p170 = scmp.ne.s32.totalorder %s165, %s167
    %p171 = scmp.eq.s32.totalorder %s31, 0
    %p172 = por %p170, %p171
    %p173 = scmp.ne.s32.totalorder %s165, %s167
    %p174 = scmp.eq.s32.totalorder %s36, 1
    %p175 = por %p173, %p174
    %p176 = scmp.ne.s32.totalorder %s167, %s168
    %p177 = scmp.eq.s32.totalorder %s36, 0
    %p178 = por %p176, %p177
    %p179 = scmp.ne.s32.totalorder %s167, %s168
    %p180 = scmp.eq.s32.totalorder %s37, 1
    %p181 = por %p179, %p180
    %p183 = scmp.ne.s32.totalorder %s168, %s182
    %p184 = scmp.eq.s32.totalorder %s37, 0
    %p185 = por %p183, %p184
    %s187 = sadd.s32 %s186, 1
    %p190 = scmp.eq.s32.totalorder %s31, 1
    %p191 = scmp.ne.s32.totalorder %s186, %s188
    %p192 = scmp.eq.s32.totalorder %s31, 0
    %p193 = por %p191, %p192
    %p194 = scmp.ne.s32.totalorder %s186, %s188
    %p195 = scmp.eq.s32.totalorder %s36, 1
    %p196 = por %p194, %p195
    %p197 = scmp.ne.s32.totalorder %s188, %s189
    %p198 = scmp.eq.s32.totalorder %s36, 0
    %p199 = por %p197, %p198
    %p200 = scmp.ne.s32.totalorder %s188, %s189
    %p201 = scmp.eq.s32.totalorder %s37, 1
    %p202 = por %p200, %p201
    %p204 = scmp.ne.s32.totalorder %s189, %s203
    %p205 = scmp.eq.s32.totalorder %s37, 0
    %p206 = por %p204, %p205
    %s208 = sadd.s32 %s207, 1
    %p211 = scmp.eq.s32.totalorder %s31, 1
    %p212 = scmp.ne.s32.totalorder %s207, %s209
    %p213 = scmp.eq.s32.totalorder %s31, 0
    %p214 = por %p212, %p213
    %p215 = scmp.ne.s32.totalorder %s207, %s209
    %p216 = scmp.eq.s32.totalorder %s36, 1
    %p217 = por %p215, %p216
    %p218 = scmp.ne.s32.totalorder %s209, %s210
    %p219 = scmp.eq.s32.totalorder %s36, 0
    %p220 = por %p218, %p219
    %p221 = scmp.ne.s32.totalorder %s209, %s210
    %p222 = scmp.eq.s32.totalorder %s37, 1
    %p223 = por %p221, %p222
    %p225 = scmp.ne.s32.totalorder %s210, %s224
    %p226 = scmp.eq.s32.totalorder %s37, 0
    %p227 = por %p225, %p226
    %s229 = sadd.s32 %s228, 1
    %p232 = scmp.eq.s32.totalorder %s31, 1
    %p233 = scmp.ne.s32.totalorder %s228, %s230
    %p234 = scmp.eq.s32.totalorder %s31, 0
    %p235 = por %p233, %p234
    %p236 = scmp.ne.s32.totalorder %s228, %s230
    %p237 = scmp.eq.s32.totalorder %s36, 1
    %p238 = por %p236, %p237
    %p239 = scmp.ne.s32.totalorder %s230, %s231
    %p240 = scmp.eq.s32.totalorder %s36, 0
    %p241 = por %p239, %p240
    %p242 = scmp.ne.s32.totalorder %s230, %s231
    %p243 = scmp.eq.s32.totalorder %s37, 1
    %p244 = por %p242, %p243
    %p246 = scmp.ne.s32.totalorder %s231, %s245
    %p247 = scmp.eq.s32.totalorder %s37, 0
    %p248 = por %p246, %p247
    %s250 = sadd.s32 %s249, 1
    %p253 = scmp.eq.s32.totalorder %s31, 1
    %p254 = scmp.ne.s32.totalorder %s249, %s251
    %p255 = scmp.eq.s32.totalorder %s31, 0
    %p256 = por %p254, %p255
    %p257 = scmp.ne.s32.totalorder %s249, %s251
    %p258 = scmp.eq.s32.totalorder %s36, 1
    %p259 = por %p257, %p258
    %p260 = scmp.ne.s32.totalorder %s251, %s252
    %p261 = scmp.eq.s32.totalorder %s36, 0
    %p262 = por %p260, %p261
    %p263 = scmp.ne.s32.totalorder %s251, %s252
    %p264 = scmp.eq.s32.totalorder %s37, 1
    %p265 = por %p263, %p264
    %p267 = scmp.ne.s32.totalorder %s252, %s266
    %p268 = scmp.eq.s32.totalorder %s37, 0
    %p269 = por %p267, %p268
    %s271 = sadd.s32 %s270, 1
    %p274 = scmp.eq.s32.totalorder %s31, 1
    %p275 = scmp.ne.s32.totalorder %s270, %s272
    %p276 = scmp.eq.s32.totalorder %s31, 0
    %p277 = por %p275, %p276
    %p278 = scmp.ne.s32.totalorder %s270, %s272
    %p279 = scmp.eq.s32.totalorder %s36, 1
    %p280 = por %p278, %p279
    %p281 = scmp.ne.s32.totalorder %s272, %s273
    %p282 = scmp.eq.s32.totalorder %s36, 0
    %p283 = por %p281, %p282
    %p284 = scmp.ne.s32.totalorder %s272, %s273
    %p285 = scmp.eq.s32.totalorder %s37, 1
    %p286 = por %p284, %p285
    %p288 = scmp.ne.s32.totalorder %s273, %s287
    %p289 = scmp.eq.s32.totalorder %s37, 0
    %p290 = por %p288, %p289
    %s292 = sadd.s32 %s291, 1
    %p295 = scmp.eq.s32.totalorder %s31, 1
    %p296 = scmp.ne.s32.totalorder %s291, %s293
    %p297 = scmp.eq.s32.totalorder %s31, 0
    %p298 = por %p296, %p297
    %p299 = scmp.ne.s32.totalorder %s291, %s293
    %p300 = scmp.eq.s32.totalorder %s36, 1
    %p301 = por %p299, %p300
    %p302 = scmp.ne.s32.totalorder %s293, %s294
    %p303 = scmp.eq.s32.totalorder %s36, 0
    %p304 = por %p302, %p303
    %p305 = scmp.ne.s32.totalorder %s293, %s294
    %p306 = scmp.eq.s32.totalorder %s37, 1
    %p307 = por %p305, %p306
    %p309 = scmp.ne.s32.totalorder %s294, %s308
    %p310 = scmp.eq.s32.totalorder %s37, 0
    %p311 = por %p309, %p310
    %s313 = sadd.s32 %s312, 1
    %p316 = scmp.eq.s32.totalorder %s31, 1
    %p317 = scmp.ne.s32.totalorder %s312, %s314
    %p318 = scmp.eq.s32.totalorder %s31, 0
    %p319 = por %p317, %p318
    %p320 = scmp.ne.s32.totalorder %s312, %s314
    %p321 = scmp.eq.s32.totalorder %s36, 1
    %p322 = por %p320, %p321
    %p323 = scmp.ne.s32.totalorder %s314, %s315
    %p324 = scmp.eq.s32.totalorder %s36, 0
    %p325 = por %p323, %p324
    %p326 = scmp.ne.s32.totalorder %s314, %s315
    %p327 = scmp.eq.s32.totalorder %s37, 1
    %p328 = por %p326, %p327
    %p330 = scmp.ne.s32.totalorder %s315, %s329
    %p331 = scmp.eq.s32.totalorder %s37, 0
    %p332 = por %p330, %p331
    %s334 = sadd.s32 %s333, 1
    %p337 = scmp.eq.s32.totalorder %s31, 1
    %p338 = scmp.ne.s32.totalorder %s333, %s335
    %p339 = scmp.eq.s32.totalorder %s31, 0
    %p340 = por %p338, %p339
    %p341 = scmp.ne.s32.totalorder %s333, %s335
    %p342 = scmp.eq.s32.totalorder %s36, 1
    %p343 = por %p341, %p342
    %p344 = scmp.ne.s32.totalorder %s335, %s336
    %p345 = scmp.eq.s32.totalorder %s36, 0
    %p346 = por %p344, %p345
    %p347 = scmp.ne.s32.totalorder %s335, %s336
    %p348 = scmp.eq.s32.totalorder %s37, 1
    %p349 = por %p347, %p348
    %p351 = scmp.ne.s32.totalorder %s336, %s350
    %p352 = scmp.eq.s32.totalorder %s37, 0
    %p353 = por %p351, %p352
    %s355 = sadd.s32 %s354, 1
    %p358 = scmp.eq.s32.totalorder %s31, 1
    %p359 = scmp.ne.s32.totalorder %s354, %s356
    %p360 = scmp.eq.s32.totalorder %s31, 0
    %p361 = por %p359, %p360
    %p362 = scmp.ne.s32.totalorder %s354, %s356
    %p363 = scmp.eq.s32.totalorder %s36, 1
    %p364 = por %p362, %p363
    %p365 = scmp.ne.s32.totalorder %s356, %s357
    %p366 = scmp.eq.s32.totalorder %s36, 0
    %p367 = por %p365, %p366
    %p368 = scmp.ne.s32.totalorder %s356, %s357
    %p369 = scmp.eq.s32.totalorder %s37, 1
    %p370 = por %p368, %p369
    %p372 = scmp.ne.s32.totalorder %s357, %s371
    %p373 = scmp.eq.s32.totalorder %s37, 0
    %p374 = por %p372, %p373
    %s376 = sadd.s32 %s375, 1
    %p379 = scmp.eq.s32.totalorder %s31, 1
    %p380 = scmp.ne.s32.totalorder %s375, %s377
    %p381 = scmp.eq.s32.totalorder %s31, 0
    %p382 = por %p380, %p381
    %p383 = scmp.ne.s32.totalorder %s375, %s377
    %p384 = scmp.eq.s32.totalorder %s36, 1
    %p385 = por %p383, %p384
    %p386 = scmp.ne.s32.totalorder %s377, %s378
    %p387 = scmp.eq.s32.totalorder %s36, 0
    %p388 = por %p386, %p387
    %p389 = scmp.ne.s32.totalorder %s377, %s378
    %p390 = scmp.eq.s32.totalorder %s37, 1
    %p391 = por %p389, %p390
    %p393 = scmp.ne.s32.totalorder %s378, %s392
    %p394 = scmp.eq.s32.totalorder %s37, 0
    %p395 = por %p393, %p394
    %s397 = sadd.s32 %s396, 1
    %p400 = scmp.eq.s32.totalorder %s31, 1
    %p401 = scmp.ne.s32.totalorder %s396, %s398
    %p402 = scmp.eq.s32.totalorder %s31, 0
    %p403 = por %p401, %p402
    %p404 = scmp.ne.s32.totalorder %s396, %s398
    %p405 = scmp.eq.s32.totalorder %s36, 1
    %p406 = por %p404, %p405
    %p407 = scmp.ne.s32.totalorder %s398, %s399
    %p408 = scmp.eq.s32.totalorder %s36, 0
    %p409 = por %p407, %p408
    %p410 = scmp.ne.s32.totalorder %s398, %s399
    %p411 = scmp.eq.s32.totalorder %s37, 1
    %p412 = por %p410, %p411
    %p414 = scmp.ne.s32.totalorder %s399, %s413
    %p415 = scmp.eq.s32.totalorder %s37, 0
    %p416 = por %p414, %p415
    %s417 = ssub.s32 %s31, %s38
    %p418 = scmp.eq.s32.totalorder %s417, 0
    %s420 = sadd.s32 %s419, 1
    %s421 = scalar_select %p418, %s419, %s420
    %p424 = pneg %p418
    %p425 = scmp.eq.s32.totalorder %s31, 1
    %p426 = por %p424, %p425
    %p427 = scmp.ne.s32.totalorder %s419, %s422
    %p428 = scmp.eq.s32.totalorder %s31, 0
    %p429 = por %p427, %p428
    %p430 = scmp.ne.s32.totalorder %s419, %s422
    %p431 = scmp.eq.s32.totalorder %s36, 1
    %p432 = por %p430, %p431
    %p433 = scmp.ne.s32.totalorder %s422, %s423
    %p434 = scmp.eq.s32.totalorder %s36, 0
    %p435 = por %p433, %p434
    %p436 = scmp.ne.s32.totalorder %s422, %s423
    %p437 = scmp.eq.s32.totalorder %s37, 1
    %p438 = por %p436, %p437
    %p440 = scmp.ne.s32.totalorder %s423, %s439
    %p441 = scmp.eq.s32.totalorder %s37, 0
    %p442 = por %p440, %p441
    %p443 = scmp.le.s32.totalorder 1, %s31
    %p444 = scmp.lt.s32.totalorder %s31, 3
    %p445 = pnand %p443, %p444
    %p446 = pneg %p445
    // Predicated region
    $region9: #{transformer_xl_forward.1} parent=5 // pred_check
      _
    $region10: #{transformer_xl_forward.1} parent=5 // pred_check_branch
      %448 = sbr.rel (%p445) target = $region12
    $region11: #{transformer_xl_forward.1} parent=5 // pred_region
      %s449 = ssub.s32 %s31, 1
      // Predicated region
      $region13: #{transformer_xl_forward.1} parent=11 // pred_check
        %p450 = pneg %p52
      $region14: #{transformer_xl_forward.1} parent=11 // pred_check_branch
        %452 = sbr.rel (%p450) target = $region16
      $region15: #{transformer_xl_forward.1} parent=11 // pred_region
        _
      $region16: #{transformer_xl_forward.1} parent=11 // pred_fallthru
        _
      // Predicated region
      $region17: #{transformer_xl_forward.1} parent=11 // pred_check
        %p453 = pneg %p73
      $region18: #{transformer_xl_forward.1} parent=11 // pred_check_branch
        %455 = sbr.rel (%p453) target = $region20
      $region19: #{transformer_xl_forward.1} parent=11 // pred_region
        _
      $region20: #{transformer_xl_forward.1} parent=11 // pred_fallthru
        _
      // Predicated region
      $region21: #{transformer_xl_forward.1} parent=11 // pred_check
        %p456 = pneg %p94
      $region22: #{transformer_xl_forward.1} parent=11 // pred_check_branch
        %458 = sbr.rel (%p456) target = $region24
      $region23: #{transformer_xl_forward.1} parent=11 // pred_region
        _
      $region24: #{transformer_xl_forward.1} parent=11 // pred_fallthru
        _
      // Predicated region
      $region25: #{transformer_xl_forward.1} parent=11 // pred_check
        %p459 = pneg %p115
      $region26: #{transformer_xl_forward.1} parent=11 // pred_check_branch
        %461 = sbr.rel (%p459) target = $region28
      $region27: #{transformer_xl_forward.1} parent=11 // pred_region
        _
      $region28: #{transformer_xl_forward.1} parent=11 // pred_fallthru
        _
      // Predicated region
      $region29: #{transformer_xl_forward.1} parent=11 // pred_check
        %p462 = pneg %p136
      $region30: #{transformer_xl_forward.1} parent=11 // pred_check_branch
        %464 = sbr.rel (%p462) target = $region32
      $region31: #{transformer_xl_forward.1} parent=11 // pred_region
        _
      $region32: #{transformer_xl_forward.1} parent=11 // pred_fallthru
        _
      // Predicated region
      $region33: #{transformer_xl_forward.1} parent=11 // pred_check
        %p465 = pneg %p157
      $region34: #{transformer_xl_forward.1} parent=11 // pred_check_branch
        %467 = sbr.rel (%p465) target = $region36
      $region35: #{transformer_xl_forward.1} parent=11 // pred_region
        _
      $region36: #{transformer_xl_forward.1} parent=11 // pred_fallthru
        _
      // Predicated region
      $region37: #{transformer_xl_forward.1} parent=11 // pred_check
        %p468 = pneg %p178
      $region38: #{transformer_xl_forward.1} parent=11 // pred_check_branch
        %470 = sbr.rel (%p468) target = $region40
      $region39: #{transformer_xl_forward.1} parent=11 // pred_region
        _
      $region40: #{transformer_xl_forward.1} parent=11 // pred_fallthru
        _
      // Predicated region
      $region41: #{transformer_xl_forward.1} parent=11 // pred_check
        %p471 = pneg %p199
      $region42: #{transformer_xl_forward.1} parent=11 // pred_check_branch
        %473 = sbr.rel (%p471) target = $region44
      $region43: #{transformer_xl_forward.1} parent=11 // pred_region
        _
      $region44: #{transformer_xl_forward.1} parent=11 // pred_fallthru
        _
      // Predicated region
      $region45: #{transformer_xl_forward.1} parent=11 // pred_check
        %p474 = pneg %p220
      $region46: #{transformer_xl_forward.1} parent=11 // pred_check_branch
        %476 = sbr.rel (%p474) target = $region48
      $region47: #{transformer_xl_forward.1} parent=11 // pred_region
        _
      $region48: #{transformer_xl_forward.1} parent=11 // pred_fallthru
        _
      // Predicated region
      $region49: #{transformer_xl_forward.1} parent=11 // pred_check
        %p477 = pneg %p241
      $region50: #{transformer_xl_forward.1} parent=11 // pred_check_branch
        %479 = sbr.rel (%p477) target = $region52
      $region51: #{transformer_xl_forward.1} parent=11 // pred_region
        _
      $region52: #{transformer_xl_forward.1} parent=11 // pred_fallthru
        _
      // Predicated region
      $region53: #{transformer_xl_forward.1} parent=11 // pred_check
        %p480 = pneg %p262
      $region54: #{transformer_xl_forward.1} parent=11 // pred_check_branch
        %482 = sbr.rel (%p480) target = $region56
      $region55: #{transformer_xl_forward.1} parent=11 // pred_region
        _
      $region56: #{transformer_xl_forward.1} parent=11 // pred_fallthru
        _
      // Predicated region
      $region57: #{transformer_xl_forward.1} parent=11 // pred_check
        %p483 = pneg %p283
      $region58: #{transformer_xl_forward.1} parent=11 // pred_check_branch
        %485 = sbr.rel (%p483) target = $region60
      $region59: #{transformer_xl_forward.1} parent=11 // pred_region
        _
      $region60: #{transformer_xl_forward.1} parent=11 // pred_fallthru
        _
      // Predicated region
      $region61: #{transformer_xl_forward.1} parent=11 // pred_check
        %p486 = pneg %p304
      $region62: #{transformer_xl_forward.1} parent=11 // pred_check_branch
        %488 = sbr.rel (%p486) target = $region64
      $region63: #{transformer_xl_forward.1} parent=11 // pred_region
        _
      $region64: #{transformer_xl_forward.1} parent=11 // pred_fallthru
        _
      // Predicated region
      $region65: #{transformer_xl_forward.1} parent=11 // pred_check
        %p489 = pneg %p325
      $region66: #{transformer_xl_forward.1} parent=11 // pred_check_branch
        %491 = sbr.rel (%p489) target = $region68
      $region67: #{transformer_xl_forward.1} parent=11 // pred_region
        _
      $region68: #{transformer_xl_forward.1} parent=11 // pred_fallthru
        _
      // Predicated region
      $region69: #{transformer_xl_forward.1} parent=11 // pred_check
        %p492 = pneg %p346
      $region70: #{transformer_xl_forward.1} parent=11 // pred_check_branch
        %494 = sbr.rel (%p492) target = $region72
      $region71: #{transformer_xl_forward.1} parent=11 // pred_region
        _
      $region72: #{transformer_xl_forward.1} parent=11 // pred_fallthru
        _
      // Predicated region
      $region73: #{transformer_xl_forward.1} parent=11 // pred_check
        %p495 = pneg %p367
      $region74: #{transformer_xl_forward.1} parent=11 // pred_check_branch
        %497 = sbr.rel (%p495) target = $region76
      $region75: #{transformer_xl_forward.1} parent=11 // pred_region
        _
      $region76: #{transformer_xl_forward.1} parent=11 // pred_fallthru
        _
      // Predicated region
      $region77: #{transformer_xl_forward.1} parent=11 // pred_check
        %p498 = pneg %p388
      $region78: #{transformer_xl_forward.1} parent=11 // pred_check_branch
        %500 = sbr.rel (%p498) target = $region80
      $region79: #{transformer_xl_forward.1} parent=11 // pred_region
        _
      $region80: #{transformer_xl_forward.1} parent=11 // pred_fallthru
        _
      // Predicated region
      $region81: #{transformer_xl_forward.1} parent=11 // pred_check
        %p501 = pneg %p409
      $region82: #{transformer_xl_forward.1} parent=11 // pred_check_branch
        %503 = sbr.rel (%p501) target = $region84
      $region83: #{transformer_xl_forward.1} parent=11 // pred_region
        _
      $region84: #{transformer_xl_forward.1} parent=11 // pred_fallthru
        _
    $region12: #{transformer_xl_forward.1} parent=5 // pred_fallthru
      _
    %p504 = scmp.lt.s32.totalorder %s31, 2
    // Predicated region
    $region85: #{transformer_xl_forward.1} parent=5 // pred_check
      %p505 = pneg %p504
    $region86: #{transformer_xl_forward.1} parent=5 // pred_check_branch
      %507 = sbr.rel (%p505) target = $region88
    $region87: #{transformer_xl_forward.1} parent=5 // pred_region
      _
    $region88: #{transformer_xl_forward.1} parent=5 // pred_fallthru
      _
    %p508 = scmp.le.s32.totalorder 1, %s31
    %p509 = scmp.lt.s32.totalorder %s31, 3
    %p510 = pnand %p508, %p509
    %p511 = pneg %p510
    // Predicated region
    $region89: #{transformer_xl_forward.1} parent=5 // pred_check
      _
    $region90: #{transformer_xl_forward.1} parent=5 // pred_check_branch
      %513 = sbr.rel (%p510) target = $region92
    $region91: #{transformer_xl_forward.1} parent=5 // pred_region
      %s514 = ssub.s32 %s31, 1
      %p515 = pneg %p52
      %p516 = pneg %p49
      %p517 = pneg %p73
      %p518 = pneg %p70
      %p519 = pneg %p94
      %p520 = pneg %p91
      %p521 = pneg %p115
      %p522 = pneg %p112
      %p523 = pneg %p136
      %p524 = pneg %p133
      %p525 = pneg %p157
      %p526 = pneg %p154
      %p527 = pneg %p178
      %p528 = pneg %p175
      %p529 = pneg %p199
      %p530 = pneg %p196
      %p531 = pneg %p220
      %p532 = pneg %p217
      %p533 = pneg %p241
      %p534 = pneg %p238
      %p535 = pneg %p262
      %p536 = pneg %p259
      %p537 = pneg %p283
      %p538 = pneg %p280
      %p539 = pneg %p304
      %p540 = pneg %p301
      %p541 = pneg %p325
      %p542 = pneg %p322
      %p543 = pneg %p346
      %p544 = pneg %p343
      %p545 = pneg %p367
      %p546 = pneg %p364
      %p547 = pneg %p388
      %p548 = pneg %p385
      %p549 = pneg %p409
      %p550 = pneg %p406
      %p551 = pneg %p435
      %p552 = pneg %p432
      %p553 = scmp.lt.s32.totalorder %s36, 1
      %s554 = scalar_select %p553, %s36, 1
      %s555 = smul.addr %s554, 8
      %s556 = scalar_lea.vmem %s19, %s555
      %p557 = scmp.lt.s32.totalorder %s36, 1
      %s558 = scalar_select %p557, %s36, 1
      %s559 = smul.addr %s558, 8
      %s560 = scalar_lea.vmem %s19, %s559
      %s561 = sld [smem:[#allocation3 + %s36]]
      %s562 = scalar_lea.vmem %s1, %s561
      %v563 = vld [vmem:[%s562] sm:$0x1]
      %s564 = sshra.s32 %s36, 7
      %s565 = sand.u32 %s36, 127
      %s566 = sadd.s32 %s564, 1
      %s567 = smul.u32 %s566, 128
      %s568 = sshra.s32 %s36, 7
      %s569 = sand.u32 %s36, 127
      %s570 = sadd.s32 %s567, %s569
      %s571 = sld [smem:[#allocation3 + %s570]]
      %s572 = scalar_lea.vmem %s1, %s571
      %v573 = vld [vmem:[%s572] sm:$0x1]
      %s574 = sadd.s32 %s564, 2
      %s575 = smul.u32 %s574, 128
      %s576 = sadd.s32 %s575, %s569
      %s577 = sld [smem:[#allocation3 + %s576]]
      %s578 = scalar_lea.vmem %s1, %s577
      %v579 = vld [vmem:[%s578] sm:$0x1]
      %s580 = sadd.s32 %s564, 3
      %s581 = smul.u32 %s580, 128
      %s582 = sadd.s32 %s581, %s569
      %s583 = sld [smem:[#allocation3 + %s582]]
      %s584 = scalar_lea.vmem %s1, %s583
      %v585 = vld [vmem:[%s584] sm:$0x1]
      %s586 = sadd.s32 %s564, 4
      %s587 = smul.u32 %s586, 128
      %s588 = sadd.s32 %s587, %s569
      %s589 = sld [smem:[#allocation3 + %s588]]
      %s590 = scalar_lea.vmem %s1, %s589
      %v591 = vld [vmem:[%s590] sm:$0x1]
      %s592 = sadd.s32 %s564, 5
      %s593 = smul.u32 %s592, 128
      %s594 = sadd.s32 %s593, %s569
      %s595 = sld [smem:[#allocation3 + %s594]]
      %s596 = scalar_lea.vmem %s1, %s595
      %v597 = vld [vmem:[%s596] sm:$0x1]
      %s598 = sadd.s32 %s564, 6
      %s599 = smul.u32 %s598, 128
      %s600 = sadd.s32 %s599, %s569
      %s601 = sld [smem:[#allocation3 + %s600]]
      %s602 = scalar_lea.vmem %s1, %s601
      %v603 = vld [vmem:[%s602] sm:$0x1]
      %s604 = sadd.s32 %s564, 7
      %s605 = smul.u32 %s604, 128
      %s606 = sadd.s32 %s605, %s569
      %s607 = sld [smem:[#allocation3 + %s606]]
      %s608 = scalar_lea.vmem %s1, %s607
      %v609 = vld [vmem:[%s608] sm:$0x1]
      %v611 = vlaneseq
      %v612 = vshrl.u32 %v611, 7
      %v613 = vsub.s32 0, %v612
      %v614 = vrot.slane %v573, %v613
      %v617 = vlaneseq
      %v618 = vshrl.u32 %v617, 7
      %v619 = vsub.s32 0, %v618
      %v620 = vrot.slane %v579, %v619
      %v623 = vlaneseq
      %v624 = vshrl.u32 %v623, 7
      %v625 = vsub.s32 0, %v624
      %v626 = vrot.slane %v585, %v625
      %v629 = vlaneseq
      %v630 = vshrl.u32 %v629, 7
      %v631 = vsub.s32 0, %v630
      %v632 = vrot.slane %v591, %v631
      %v635 = vlaneseq
      %v636 = vshrl.u32 %v635, 7
      %v637 = vsub.s32 0, %v636
      %v638 = vrot.slane %v597, %v637
      %v641 = vlaneseq
      %v642 = vshrl.u32 %v641, 7
      %v643 = vsub.s32 0, %v642
      %v644 = vrot.slane %v603, %v643
      %v647 = vlaneseq
      %v648 = vshrl.u32 %v647, 7
      %v649 = vsub.s32 0, %v648
      %v650 = vrot.slane %v609, %v649
      %vm652 = vcmask 1040384
      %v653 = vsel %vm652, %v563, %v614
      %vm654 = vcmask 1041408
      %v655 = vsel %vm654, %v653, %v620
      %vm656 = vcmask 1042432
      %v657 = vsel %vm656, %v655, %v626
      %vm658 = vcmask 1043456
      %v659 = vsel %vm658, %v657, %v632
      %vm660 = vcmask 1044480
      %v661 = vsel %vm660, %v659, %v638
      %vm662 = vcmask 1045504
      %v663 = vsel %vm662, %v661, %v644
      %vm664 = vcmask 1046528
      %v665 = vsel %vm664, %v663, %v650
      %v666 = vld [vmem:[%s2] sm:$0xff]
      %v667 = vld [vmem:[%s2 + $0x8] sm:$0xff]
      %v668 = vld [vmem:[%s2 + $0x10] sm:$0xff]
      %v669 = vld [vmem:[%s2 + $0x18] sm:$0xff]
      %vm670 = vcmask 261120
      %v672 = vsel %vm670, %v665, 0
      %674 = vmatprep.subr.mxu0 0.0
      %675 = vmatpush1.msra.mxu0 %v666
      %676 = vmatprep.subr.mxu0 0.0
      %677 = vmatpush1.msra.mxu0 %v667
      %678 = vmatprep.subr.mxu0 0.0
      %679 = vmatpush1.msra.mxu0 %v668
      %680 = vmatprep.subr.mxu0 0.0
      %681 = vmatpush1.msra.mxu0 %v669
      %682 = vmatprep.subr.mxu0 0.0
      %683 = vmatpush1.msra.mxu0 0.0
      %684 = vmatprep.subr.mxu0 0.0
      %685 = vmatpush1.msra.mxu0 0.0
      %686 = vmatprep.subr.mxu0 0.0
      %687 = vmatpush1.msra.mxu0 0.0
      %688 = vmatprep.subr.mxu0 0.0
      %689 = vmatpush1.msra.mxu0 0.0
      %690 = vmatprep.subr.mxu0 0.0
      %691 = vmatpush1.msra.mxu0 0.0
      %692 = vmatprep.subr.mxu0 0.0
      %693 = vmatpush1.msra.mxu0 0.0
      %694 = vmatprep.subr.mxu0 0.0
      %695 = vmatpush1.msra.mxu0 0.0
      %696 = vmatprep.subr.mxu0 0.0
      %697 = vmatpush1.msra.mxu0 0.0
      %698 = vmatprep.subr.mxu0 0.0
      %699 = vmatpush1.msra.mxu0 0.0
      %700 = vmatprep.subr.mxu0 0.0
      %701 = vmatpush1.msra.mxu0 0.0
      %702 = vmatprep.subr.mxu0 0.0
      %703 = vmatpush1.msra.mxu0 0.0
      %704 = vmatprep.subr.mxu0 0.0
      %705 = vmatpush1.msra.mxu0 0.0
      %706 = vmatprep.subr.mxu0 0.0
      %707 = vmatpush1.msra.mxu0 0.0
      %708 = vmatprep.subr.mxu0 0.0
      %709 = vmatpush1.msra.mxu0 0.0
      %710 = vmatprep.subr.mxu0 0.0
      %711 = vmatpush1.msra.mxu0 0.0
      %712 = vmatprep.subr.mxu0 0.0
      %713 = vmatpush1.msra.mxu0 0.0
      %714 = vmatprep.subr.mxu0 0.0
      %715 = vmatpush1.msra.mxu0 0.0
      %716 = vmatprep.subr.mxu0 0.0
      %717 = vmatpush1.msra.mxu0 0.0
      %718 = vmatprep.subr.mxu0 0.0
      %719 = vmatpush1.msra.mxu0 0.0
      %720 = vmatprep.subr.mxu0 0.0
      %721 = vmatpush1.msra.mxu0 0.0
      %722 = vmatprep.subr.mxu0 0.0
      %723 = vmatpush1.msra.mxu0 0.0
      %724 = vmatprep.subr.mxu0 0.0
      %725 = vmatpush1.msra.mxu0 0.0
      %726 = vmatprep.subr.mxu0 0.0
      %727 = vmatpush1.msra.mxu0 0.0
      %728 = vmatprep.subr.mxu0 0.0
      %729 = vmatpush1.msra.mxu0 0.0
      %730 = vmatprep.subr.mxu0 0.0
      %731 = vmatpush1.msra.mxu0 0.0
      %732 = vmatprep.subr.mxu0 0.0
      %733 = vmatpush1.msra.mxu0 0.0
      %734 = vmatprep.subr.mxu0 0.0
      %735 = vmatpush1.msra.mxu0 0.0
      %736 = vmatprep.subr.mxu0 0.0
      %737 = vmatpush1.msra.mxu0 0.0
      %738 = vmatprep.mubr.f32.mxu0 0.0
      %739 = vmatmul.mubr.f32.gmra.mrb[0].mxu0 %v672
      %v740 = vpop.f32.mrb[0].mxu0
      %v741 = vadd.f32 0.0, %v740
      %v742 = vpop.f32.mrb[0].mxu0
      %743 = vdwg.mxu0
      %v744 = vmul.f32 %v741, 5.656854
      %v745 = vlaneseq
      %v746 = vshrl.u32 %v745, 7
      %v747 = vlaneseq
      %v748 = vand.u32 %v747, 127
      %v749 = vadd.s32 %v748, 128
      %v750 = vadd.s32 %v748, 256
      %v751 = vadd.s32 %v748, 384
      %v752 = vadd.s32 %v748, 512
      %v753 = vadd.s32 %v748, 640
      %v754 = vadd.s32 %v748, 768
      %v755 = vadd.s32 %v748, 896
      %v756 = vadd.s32 %v748, 1024
      %v757 = vadd.s32 %v748, 1152
      %v758 = vadd.s32 %v748, 1280
      %v759 = vadd.s32 %v748, 1408
      %v760 = vadd.s32 %v748, 1536
      %vm761 = vcmp.lt.s32.totalorder %v748, 8
      %vm762 = vcmp.lt.s32.totalorder %v749, 8
      %vm763 = vcmp.lt.s32.totalorder %v750, 8
      %vm764 = vcmp.lt.s32.totalorder %v751, 8
      %vm765 = vcmp.lt.s32.totalorder %v752, 8
      %vm766 = vcmp.lt.s32.totalorder %v753, 8
      %vm767 = vcmp.lt.s32.totalorder %v754, 8
      %vm768 = vcmp.lt.s32.totalorder %v755, 8
      %vm769 = vcmp.lt.s32.totalorder %v756, 8
      %vm770 = vcmp.lt.s32.totalorder %v757, 8
      %vm771 = vcmp.lt.s32.totalorder %v758, 8
      %vm772 = vcmp.lt.s32.totalorder %v759, 8
      %vm773 = vcmp.lt.s32.totalorder %v760, 8
      %v774 = vadd.s32 %v748, %v746
      %v775 = vadd.s32 %v749, %v746
      %v776 = vadd.s32 %v750, %v746
      %v777 = vadd.s32 %v751, %v746
      %v778 = vadd.s32 %v752, %v746
      %v779 = vadd.s32 %v753, %v746
      %v780 = vadd.s32 %v754, %v746
      %v781 = vadd.s32 %v755, %v746
      %v782 = vadd.s32 %v756, %v746
      %v783 = vadd.s32 %v757, %v746
      %v784 = vadd.s32 %v758, %v746
      %v785 = vadd.s32 %v759, %v746
      %v786 = vadd.s32 %v760, %v746
      %vm787 = vcmp.ge.s32.totalorder %v774, 1607
      %vm788 = vcmp.ge.s32.totalorder %v775, 1607
      %vm789 = vcmp.ge.s32.totalorder %v776, 1607
      %vm790 = vcmp.ge.s32.totalorder %v777, 1607
      %vm791 = vcmp.ge.s32.totalorder %v778, 1607
      %vm792 = vcmp.ge.s32.totalorder %v779, 1607
      %vm793 = vcmp.ge.s32.totalorder %v780, 1607
      %vm794 = vcmp.ge.s32.totalorder %v781, 1607
      %vm795 = vcmp.ge.s32.totalorder %v782, 1607
      %vm796 = vcmp.ge.s32.totalorder %v783, 1607
      %vm797 = vcmp.ge.s32.totalorder %v784, 1607
      %vm798 = vcmp.ge.s32.totalorder %v785, 1607
      %vm799 = vcmp.ge.s32.totalorder %v786, 1607
      %vm800 = vmor %vm761, %vm787
      %vm801 = vmor %vm762, %vm788
      %vm802 = vmor %vm763, %vm789
      %vm803 = vmor %vm764, %vm790
      %vm804 = vmor %vm765, %vm791
      %vm805 = vmor %vm766, %vm792
      %vm806 = vmor %vm767, %vm793
      %vm807 = vmor %vm768, %vm794
      %vm808 = vmor %vm769, %vm795
      %vm809 = vmor %vm770, %vm796
      %vm810 = vmor %vm771, %vm797
      %vm811 = vmor %vm772, %vm798
      %vm812 = vmor %vm773, %vm799
      %vm813 = vcmp.gt.s32.totalorder %v748, %v746
      %v814 = vld [vmem:[%s4] sm:$0xff]
      %v815 = vld [vmem:[%s4 + $0x8] sm:$0xff]
      %v816 = vld [vmem:[%s4 + $0x10] sm:$0xff]
      %v817 = vld [vmem:[%s4 + $0x18] sm:$0xff]
      %v818 = vld [vmem:[%s5] sm:$0xff]
      %v819 = vld [vmem:[%s5 + $0x8] sm:$0xff]
      %v820 = vld [vmem:[%s5 + $0x10] sm:$0xff]
      %v821 = vld [vmem:[%s5 + $0x18] sm:$0xff]
      %v822 = vld [vmem:[%s7] sm:$0x1]
      %v823 = vld [vmem:[%s8] sm:$0x1]
      %v825 = vsel %vm670, %v744, 0
      %827 = vmatprep.subr.mxu0 0.0
      %828 = vmatpush1.msra.mxu0 %v814
      %829 = vmatprep.subr.mxu0 0.0
      %830 = vmatpush1.msra.mxu0 %v815
      %831 = vmatprep.subr.mxu0 0.0
      %832 = vmatpush1.msra.mxu0 %v816
      %833 = vmatprep.subr.mxu0 0.0
      %834 = vmatpush1.msra.mxu0 %v817
      %835 = vmatprep.subr.mxu0 0.0
      %836 = vmatpush1.msra.mxu0 0.0
      %837 = vmatprep.subr.mxu0 0.0
      %838 = vmatpush1.msra.mxu0 0.0
      %839 = vmatprep.subr.mxu0 0.0
      %840 = vmatpush1.msra.mxu0 0.0
      %841 = vmatprep.subr.mxu0 0.0
      %842 = vmatpush1.msra.mxu0 0.0
      %843 = vmatprep.subr.mxu0 0.0
      %844 = vmatpush1.msra.mxu0 0.0
      %845 = vmatprep.subr.mxu0 0.0
      %846 = vmatpush1.msra.mxu0 0.0
      %847 = vmatprep.subr.mxu0 0.0
      %848 = vmatpush1.msra.mxu0 0.0
      %849 = vmatprep.subr.mxu0 0.0
      %850 = vmatpush1.msra.mxu0 0.0
      %851 = vmatprep.subr.mxu0 0.0
      %852 = vmatpush1.msra.mxu0 0.0
      %853 = vmatprep.subr.mxu0 0.0
      %854 = vmatpush1.msra.mxu0 0.0
      %855 = vmatprep.subr.mxu0 0.0
      %856 = vmatpush1.msra.mxu0 0.0
      %857 = vmatprep.subr.mxu0 0.0
      %858 = vmatpush1.msra.mxu0 0.0
      %859 = vmatprep.subr.mxu0 0.0
      %860 = vmatpush1.msra.mxu0 0.0
      %861 = vmatprep.subr.mxu0 0.0
      %862 = vmatpush1.msra.mxu0 0.0
      %863 = vmatprep.subr.mxu0 0.0
      %864 = vmatpush1.msra.mxu0 0.0
      %865 = vmatprep.subr.mxu0 0.0
      %866 = vmatpush1.msra.mxu0 0.0
      %867 = vmatprep.subr.mxu0 0.0
      %868 = vmatpush1.msra.mxu0 0.0
      %869 = vmatprep.subr.mxu0 0.0
      %870 = vmatpush1.msra.mxu0 0.0
      %871 = vmatprep.subr.mxu0 0.0
      %872 = vmatpush1.msra.mxu0 0.0
      %873 = vmatprep.subr.mxu0 0.0
      %874 = vmatpush1.msra.mxu0 0.0
      %875 = vmatprep.subr.mxu0 0.0
      %876 = vmatpush1.msra.mxu0 0.0
      %877 = vmatprep.subr.mxu0 0.0
      %878 = vmatpush1.msra.mxu0 0.0
      %879 = vmatprep.subr.mxu0 0.0
      %880 = vmatpush1.msra.mxu0 0.0
      %881 = vmatprep.subr.mxu0 0.0
      %882 = vmatpush1.msra.mxu0 0.0
      %883 = vmatprep.subr.mxu0 0.0
      %884 = vmatpush1.msra.mxu0 0.0
      %885 = vmatprep.subr.mxu0 0.0
      %886 = vmatpush1.msra.mxu0 0.0
      %887 = vmatprep.subr.mxu0 0.0
      %888 = vmatpush1.msra.mxu0 0.0
      %889 = vmatprep.subr.mxu0 0.0
      %890 = vmatpush1.msra.mxu0 0.0
      %891 = vmatprep.mubr.f32.mxu0 0.0
      %892 = vmatmul.mubr.f32.gmra.mrb[0].mxu0 %v825
      %v893 = vpop.f32.mrb[0].mxu0
      %v894 = vadd.f32 0.0, %v893
      %v895 = vpop.f32.mrb[0].mxu0
      %896 = vdwg.mxu0
      %v898 = vlaneseq
      %v899 = vshrl.u32 %v898, 7
      %v900 = vsub.s32 0, %v899
      %v901 = vrot.slane %v823, %v900
      %v903 = vadd.f32 %v894, %v901
      %vm904 = vcmask 64512
      %v906 = vsel %vm904, %v903, 0
      %908 = vmatprep.subr.mxu0 0.0
      %909 = vmatpush1.msra.mxu0 %v818
      %910 = vmatprep.subr.mxu0 0.0
      %911 = vmatpush1.msra.mxu0 0.0
      %912 = vmatprep.subr.mxu0 0.0
      %913 = vmatpush1.msra.mxu0 0.0
      %914 = vmatprep.subr.mxu0 0.0
      %915 = vmatpush1.msra.mxu0 0.0
      %916 = vmatprep.subr.mxu0 0.0
      %917 = vmatpush1.msra.mxu0 0.0
      %918 = vmatprep.subr.mxu0 0.0
      %919 = vmatpush1.msra.mxu0 0.0
      %920 = vmatprep.subr.mxu0 0.0
      %921 = vmatpush1.msra.mxu0 0.0
      %922 = vmatprep.subr.mxu0 0.0
      %923 = vmatpush1.msra.mxu0 0.0
      %924 = vmatprep.subr.mxu0 0.0
      %925 = vmatpush1.msra.mxu0 0.0
      %926 = vmatprep.subr.mxu0 0.0
      %927 = vmatpush1.msra.mxu0 0.0
      %928 = vmatprep.subr.mxu0 0.0
      %929 = vmatpush1.msra.mxu0 0.0
      %930 = vmatprep.subr.mxu0 0.0
      %931 = vmatpush1.msra.mxu0 0.0
      %932 = vmatprep.subr.mxu0 0.0
      %933 = vmatpush1.msra.mxu0 0.0
      %934 = vmatprep.subr.mxu0 0.0
      %935 = vmatpush1.msra.mxu0 0.0
      %936 = vmatprep.subr.mxu0 0.0
      %937 = vmatpush1.msra.mxu0 0.0
      %938 = vmatprep.subr.mxu0 0.0
      %939 = vmatpush1.msra.mxu0 0.0
      %940 = vmatprep.subr.mxu0 0.0
      %941 = vmatpush1.msra.mxu0 0.0
      %942 = vmatprep.subr.mxu0 0.0
      %943 = vmatpush1.msra.mxu0 0.0
      %944 = vmatprep.subr.mxu0 0.0
      %945 = vmatpush1.msra.mxu0 0.0
      %946 = vmatprep.subr.mxu0 0.0
      %947 = vmatpush1.msra.mxu0 0.0
      %948 = vmatprep.subr.mxu0 0.0
      %949 = vmatpush1.msra.mxu0 0.0
      %950 = vmatprep.subr.mxu0 0.0
      %951 = vmatpush1.msra.mxu0 0.0
      %952 = vmatprep.subr.mxu0 0.0
      %953 = vmatpush1.msra.mxu0 0.0
      %954 = vmatprep.subr.mxu0 0.0
      %955 = vmatpush1.msra.mxu0 0.0
      %956 = vmatprep.subr.mxu0 0.0
      %957 = vmatpush1.msra.mxu0 0.0
      %958 = vmatprep.subr.mxu0 0.0
      %959 = vmatpush1.msra.mxu0 0.0
      %960 = vmatprep.subr.mxu0 0.0
      %961 = vmatpush1.msra.mxu0 0.0
      %962 = vmatprep.subr.mxu0 0.0
      %963 = vmatpush1.msra.mxu0 0.0
      %964 = vmatprep.subr.mxu0 0.0
      %965 = vmatpush1.msra.mxu0 0.0
      %966 = vmatprep.subr.mxu0 0.0
      %967 = vmatpush1.msra.mxu0 0.0
      %968 = vmatprep.subr.mxu0 0.0
      %969 = vmatpush1.msra.mxu0 0.0
      %970 = vmatprep.subr.mxu0 0.0
      %971 = vmatpush1.msra.mxu0 0.0
      %972 = vmatprep.mubr.f32.mxu0 0.0
      %973 = vmatmul.mubr.f32.gmra.mrb[0].mxu0 %v906
      %v974 = vpop.f32.mrb[0].mxu0
      %v975 = vadd.f32 0.0, %v974
      %v976 = vpop.f32.mrb[0].mxu0
      %977 = vdwg.mxu0
      %978 = vrot.lane.b32.xlu0 %v903, 120
      %v979 = vpop.permute.xlu0 %978
      %v980 = vsel %vm904, %v979, 0
      %982 = vmatprep.subr.mxu0 0.0
      %983 = vmatpush1.msra.mxu0 %v819
      %984 = vmatprep.subr.mxu0 0.0
      %985 = vmatpush1.msra.mxu0 0.0
      %986 = vmatprep.subr.mxu0 0.0
      %987 = vmatpush1.msra.mxu0 0.0
      %988 = vmatprep.subr.mxu0 0.0
      %989 = vmatpush1.msra.mxu0 0.0
      %990 = vmatprep.subr.mxu0 0.0
      %991 = vmatpush1.msra.mxu0 0.0
      %992 = vmatprep.subr.mxu0 0.0
      %993 = vmatpush1.msra.mxu0 0.0
      %994 = vmatprep.subr.mxu0 0.0
      %995 = vmatpush1.msra.mxu0 0.0
      %996 = vmatprep.subr.mxu0 0.0
      %997 = vmatpush1.msra.mxu0 0.0
      %998 = vmatprep.subr.mxu0 0.0
      %999 = vmatpush1.msra.mxu0 0.0
      %1000 = vmatprep.subr.mxu0 0.0
      %1001 = vmatpush1.msra.mxu0 0.0
      %1002 = vmatprep.subr.mxu0 0.0
      %1003 = vmatpush1.msra.mxu0 0.0
      %1004 = vmatprep.subr.mxu0 0.0
      %1005 = vmatpush1.msra.mxu0 0.0
      %1006 = vmatprep.subr.mxu0 0.0
      %1007 = vmatpush1.msra.mxu0 0.0
      %1008 = vmatprep.subr.mxu0 0.0
      %1009 = vmatpush1.msra.mxu0 0.0
      %1010 = vmatprep.subr.mxu0 0.0
      %1011 = vmatpush1.msra.mxu0 0.0
      %1012 = vmatprep.subr.mxu0 0.0
      %1013 = vmatpush1.msra.mxu0 0.0
      %1014 = vmatprep.subr.mxu0 0.0
      %1015 = vmatpush1.msra.mxu0 0.0
      %1016 = vmatprep.subr.mxu0 0.0
      %1017 = vmatpush1.msra.mxu0 0.0
      %1018 = vmatprep.subr.mxu0 0.0
      %1019 = vmatpush1.msra.mxu0 0.0
      %1020 = vmatprep.subr.mxu0 0.0
      %1021 = vmatpush1.msra.mxu0 0.0
      %1022 = vmatprep.subr.mxu0 0.0
      %1023 = vmatpush1.msra.mxu0 0.0
      %1024 = vmatprep.subr.mxu0 0.0
      %1025 = vmatpush1.msra.mxu0 0.0
      %1026 = vmatprep.subr.mxu0 0.0
      %1027 = vmatpush1.msra.mxu0 0.0
      %1028 = vmatprep.subr.mxu0 0.0
      %1029 = vmatpush1.msra.mxu0 0.0
      %1030 = vmatprep.subr.mxu0 0.0
      %1031 = vmatpush1.msra.mxu0 0.0
      %1032 = vmatprep.subr.mxu0 0.0
      %1033 = vmatpush1.msra.mxu0 0.0
      %1034 = vmatprep.subr.mxu0 0.0
      %1035 = vmatpush1.msra.mxu0 0.0
      %1036 = vmatprep.subr.mxu0 0.0
      %1037 = vmatpush1.msra.mxu0 0.0
      %1038 = vmatprep.subr.mxu0 0.0
      %1039 = vmatpush1.msra.mxu0 0.0
      %1040 = vmatprep.subr.mxu0 0.0
      %1041 = vmatpush1.msra.mxu0 0.0
      %1042 = vmatprep.subr.mxu0 0.0
      %1043 = vmatpush1.msra.mxu0 0.0
      %1044 = vmatprep.subr.mxu0 0.0
      %1045 = vmatpush1.msra.mxu0 0.0
      %1046 = vmatprep.mubr.f32.mxu0 0.0
      %1047 = vmatmul.mubr.f32.gmra.mrb[0].mxu0 %v980
      %v1048 = vpop.f32.mrb[0].mxu0
      %v1049 = vadd.f32 0.0, %v1048
      %v1050 = vpop.f32.mrb[0].mxu0
      %1051 = vdwg.mxu0
      %1052 = vrot.lane.b32.xlu0 %v903, 112
      %v1053 = vpop.permute.xlu0 %1052
      %v1054 = vsel %vm904, %v1053, 0
      %1056 = vmatprep.subr.mxu0 0.0
      %1057 = vmatpush1.msra.mxu0 %v820
      %1058 = vmatprep.subr.mxu0 0.0
      %1059 = vmatpush1.msra.mxu0 0.0
      %1060 = vmatprep.subr.mxu0 0.0
      %1061 = vmatpush1.msra.mxu0 0.0
      %1062 = vmatprep.subr.mxu0 0.0
      %1063 = vmatpush1.msra.mxu0 0.0
      %1064 = vmatprep.subr.mxu0 0.0
      %1065 = vmatpush1.msra.mxu0 0.0
      %1066 = vmatprep.subr.mxu0 0.0
      %1067 = vmatpush1.msra.mxu0 0.0
      %1068 = vmatprep.subr.mxu0 0.0
      %1069 = vmatpush1.msra.mxu0 0.0
      %1070 = vmatprep.subr.mxu0 0.0
      %1071 = vmatpush1.msra.mxu0 0.0
      %1072 = vmatprep.subr.mxu0 0.0
      %1073 = vmatpush1.msra.mxu0 0.0
      %1074 = vmatprep.subr.mxu0 0.0
      %1075 = vmatpush1.msra.mxu0 0.0
      %1076 = vmatprep.subr.mxu0 0.0
      %1077 = vmatpush1.msra.mxu0 0.0
      %1078 = vmatprep.subr.mxu0 0.0
      %1079 = vmatpush1.msra.mxu0 0.0
      %1080 = vmatprep.subr.mxu0 0.0
      %1081 = vmatpush1.msra.mxu0 0.0
      %1082 = vmatprep.subr.mxu0 0.0
      %1083 = vmatpush1.msra.mxu0 0.0
      %1084 = vmatprep.subr.mxu0 0.0
      %1085 = vmatpush1.msra.mxu0 0.0
      %1086 = vmatprep.subr.mxu0 0.0
      %1087 = vmatpush1.msra.mxu0 0.0
      %1088 = vmatprep.subr.mxu0 0.0
      %1089 = vmatpush1.msra.mxu0 0.0
      %1090 = vmatprep.subr.mxu0 0.0
      %1091 = vmatpush1.msra.mxu0 0.0
      %1092 = vmatprep.subr.mxu0 0.0
      %1093 = vmatpush1.msra.mxu0 0.0
      %1094 = vmatprep.subr.mxu0 0.0
      %1095 = vmatpush1.msra.mxu0 0.0
      %1096 = vmatprep.subr.mxu0 0.0
      %1097 = vmatpush1.msra.mxu0 0.0
      %1098 = vmatprep.subr.mxu0 0.0
      %1099 = vmatpush1.msra.mxu0 0.0
      %1100 = vmatprep.subr.mxu0 0.0
      %1101 = vmatpush1.msra.mxu0 0.0
      %1102 = vmatprep.subr.mxu0 0.0
      %1103 = vmatpush1.msra.mxu0 0.0
      %1104 = vmatprep.subr.mxu0 0.0
      %1105 = vmatpush1.msra.mxu0 0.0
      %1106 = vmatprep.subr.mxu0 0.0
      %1107 = vmatpush1.msra.mxu0 0.0
      %1108 = vmatprep.subr.mxu0 0.0
      %1109 = vmatpush1.msra.mxu0 0.0
      %1110 = vmatprep.subr.mxu0 0.0
      %1111 = vmatpush1.msra.mxu0 0.0
      %1112 = vmatprep.subr.mxu0 0.0
      %1113 = vmatpush1.msra.mxu0 0.0
      %1114 = vmatprep.subr.mxu0 0.0
      %1115 = vmatpush1.msra.mxu0 0.0
      %1116 = vmatprep.subr.mxu0 0.0
      %1117 = vmatpush1.msra.mxu0 0.0
      %1118 = vmatprep.subr.mxu0 0.0
      %1119 = vmatpush1.msra.mxu0 0.0
      %1120 = vmatprep.mubr.f32.mxu0 0.0
      %1121 = vmatmul.mubr.f32.gmra.mrb[0].mxu0 %v1054
      %v1122 = vpop.f32.mrb[0].mxu0
      %v1123 = vadd.f32 0.0, %v1122
      %v1124 = vpop.f32.mrb[0].mxu0
      %1125 = vdwg.mxu0
      %1126 = vrot.lane.b32.xlu0 %v903, 104
      %v1127 = vpop.permute.xlu0 %1126
      %v1128 = vsel %vm904, %v1127, 0
      %1130 = vmatprep.subr.mxu0 0.0
      %1131 = vmatpush1.msra.mxu0 %v821
      %1132 = vmatprep.subr.mxu0 0.0
      %1133 = vmatpush1.msra.mxu0 0.0
      %1134 = vmatprep.subr.mxu0 0.0
      %1135 = vmatpush1.msra.mxu0 0.0
      %1136 = vmatprep.subr.mxu0 0.0
      %1137 = vmatpush1.msra.mxu0 0.0
      %1138 = vmatprep.subr.mxu0 0.0
      %1139 = vmatpush1.msra.mxu0 0.0
      %1140 = vmatprep.subr.mxu0 0.0
      %1141 = vmatpush1.msra.mxu0 0.0
      %1142 = vmatprep.subr.mxu0 0.0
      %1143 = vmatpush1.msra.mxu0 0.0
      %1144 = vmatprep.subr.mxu0 0.0
      %1145 = vmatpush1.msra.mxu0 0.0
      %1146 = vmatprep.subr.mxu0 0.0
      %1147 = vmatpush1.msra.mxu0 0.0
      %1148 = vmatprep.subr.mxu0 0.0
      %1149 = vmatpush1.msra.mxu0 0.0
      %1150 = vmatprep.subr.mxu0 0.0
      %1151 = vmatpush1.msra.mxu0 0.0
      %1152 = vmatprep.subr.mxu0 0.0
      %1153 = vmatpush1.msra.mxu0 0.0
      %1154 = vmatprep.subr.mxu0 0.0
      %1155 = vmatpush1.msra.mxu0 0.0
      %1156 = vmatprep.subr.mxu0 0.0
      %1157 = vmatpush1.msra.mxu0 0.0
      %1158 = vmatprep.subr.mxu0 0.0
      %1159 = vmatpush1.msra.mxu0 0.0
      %1160 = vmatprep.subr.mxu0 0.0
      %1161 = vmatpush1.msra.mxu0 0.0
      %1162 = vmatprep.subr.mxu0 0.0
      %1163 = vmatpush1.msra.mxu0 0.0
      %1164 = vmatprep.subr.mxu0 0.0
      %1165 = vmatpush1.msra.mxu0 0.0
      %1166 = vmatprep.subr.mxu0 0.0
      %1167 = vmatpush1.msra.mxu0 0.0
      %1168 = vmatprep.subr.mxu0 0.0
      %1169 = vmatpush1.msra.mxu0 0.0
      %1170 = vmatprep.subr.mxu0 0.0
      %1171 = vmatpush1.msra.mxu0 0.0
      %1172 = vmatprep.subr.mxu0 0.0
      %1173 = vmatpush1.msra.mxu0 0.0
      %1174 = vmatprep.subr.mxu0 0.0
      %1175 = vmatpush1.msra.mxu0 0.0
      %1176 = vmatprep.subr.mxu0 0.0
      %1177 = vmatpush1.msra.mxu0 0.0
      %1178 = vmatprep.subr.mxu0 0.0
      %1179 = vmatpush1.msra.mxu0 0.0
      %1180 = vmatprep.subr.mxu0 0.0
      %1181 = vmatpush1.msra.mxu0 0.0
      %1182 = vmatprep.subr.mxu0 0.0
      %1183 = vmatpush1.msra.mxu0 0.0
      %1184 = vmatprep.subr.mxu0 0.0
      %1185 = vmatpush1.msra.mxu0 0.0
      %1186 = vmatprep.subr.mxu0 0.0
      %1187 = vmatpush1.msra.mxu0 0.0
      %1188 = vmatprep.subr.mxu0 0.0
      %1189 = vmatpush1.msra.mxu0 0.0
      %1190 = vmatprep.subr.mxu0 0.0
      %1191 = vmatpush1.msra.mxu0 0.0
      %1192 = vmatprep.subr.mxu0 0.0
      %1193 = vmatpush1.msra.mxu0 0.0
      %1194 = vmatprep.mubr.f32.mxu0 0.0
      %1195 = vmatmul.mubr.f32.gmra.mrb[0].mxu0 %v1128
      %v1196 = vpop.f32.mrb[0].mxu0
      %v1197 = vadd.f32 0.0, %v1196
      %v1198 = vpop.f32.mrb[0].mxu0
      %1199 = vdwg.mxu0
      %v1200 = vld [vmem:[%s3] sm:$0xff]
      %v1201 = vld [vmem:[%s3 + $0x8] sm:$0xff]
      %v1202 = vld [vmem:[%s3 + $0x10] sm:$0xff]
      %v1203 = vld [vmem:[%s3 + $0x18] sm:$0xff]
      %v1204 = vld [vmem:[%s3 + $0x20] sm:$0xff]
      %v1205 = vld [vmem:[%s3 + $0x28] sm:$0xff]
      %v1206 = vld [vmem:[%s3 + $0x30] sm:$0xff]
      %v1207 = vld [vmem:[%s3 + $0x38] sm:$0xff]
      %v1208 = vld [vmem:[%s3 + $0x40] sm:$0xff]
      %v1209 = vld [vmem:[%s3 + $0x48] sm:$0xff]
      %v1210 = vld [vmem:[%s3 + $0x50] sm:$0xff]
      %v1211 = vld [vmem:[%s3 + $0x58] sm:$0xff]
      %v1212 = vld [vmem:[%s3 + $0x60] sm:$0xff]
      %v1213 = vld [vmem:[%s3 + $0x68] sm:$0xff]
      %v1214 = vld [vmem:[%s3 + $0x70] sm:$0xff]
      %v1215 = vld [vmem:[%s3 + $0x78] sm:$0xff]
      %v1216 = vld [vmem:[%s3 + $0x80] sm:$0xff]
      %v1217 = vld [vmem:[%s3 + $0x88] sm:$0xff]
      %v1218 = vld [vmem:[%s3 + $0x90] sm:$0xff]
      %v1219 = vld [vmem:[%s3 + $0x98] sm:$0xff]
      %v1220 = vld [vmem:[%s3 + $0xa0] sm:$0xff]
      %v1221 = vld [vmem:[%s3 + $0xa8] sm:$0xff]
      %v1222 = vld [vmem:[%s3 + $0xb0] sm:$0xff]
      %v1223 = vld [vmem:[%s3 + $0xb8] sm:$0xff]
      %v1224 = vld [vmem:[%s3 + $0xc0] sm:$0xff]
      %v1225 = vld [vmem:[%s3 + $0xc8] sm:$0xff]
      %v1226 = vld [vmem:[%s3 + $0xd0] sm:$0xff]
      %v1227 = vld [vmem:[%s3 + $0xd8] sm:$0xff]
      %v1228 = vld [vmem:[%s3 + $0xe0] sm:$0xff]
      %v1229 = vld [vmem:[%s3 + $0xe8] sm:$0xff]
      %v1230 = vld [vmem:[%s3 + $0xf0] sm:$0xff]
      %v1231 = vld [vmem:[%s3 + $0xf8] sm:$0xff]
      %v1232 = vld [vmem:[%s3 + $0x100] sm:$0xff]
      %v1233 = vld [vmem:[%s3 + $0x108] sm:$0xff]
      %v1234 = vld [vmem:[%s3 + $0x110] sm:$0xff]
      %v1235 = vld [vmem:[%s3 + $0x118] sm:$0xff]
      %v1236 = vld [vmem:[%s3 + $0x120] sm:$0xff]
      %v1237 = vld [vmem:[%s3 + $0x128] sm:$0xff]
      %v1238 = vld [vmem:[%s3 + $0x130] sm:$0xff]
      %v1239 = vld [vmem:[%s3 + $0x138] sm:$0xff]
      %v1240 = vld [vmem:[%s3 + $0x140] sm:$0xff]
      %v1241 = vld [vmem:[%s3 + $0x148] sm:$0xff]
      %v1242 = vld [vmem:[%s3 + $0x150] sm:$0xff]
      %v1243 = vld [vmem:[%s3 + $0x158] sm:$0xff]
      %v1244 = vld [vmem:[%s3 + $0x160] sm:$0xff]
      %v1245 = vld [vmem:[%s3 + $0x168] sm:$0xff]
      %v1246 = vld [vmem:[%s3 + $0x170] sm:$0xff]
      %v1247 = vld [vmem:[%s3 + $0x178] sm:$0xff]
      %v1248 = vld [vmem:[%s3 + $0x180] sm:$0xff]
      %v1249 = vld [vmem:[%s3 + $0x188] sm:$0xff]
      %v1250 = vld [vmem:[%s3 + $0x190] sm:$0xff]
      %v1251 = vld [vmem:[%s3 + $0x198] sm:$0xff]
      %v1253 = vsel %vm670, %v975, 0
      %v1256 = vsel %vm670, %v1049, 0
      %v1259 = vsel %vm670, %v1123, 0
      %v1262 = vsel %vm670, %v1197, 0
      %1264 = vmatprep.subr.mxu0 %v1201
      %1265 = vmatpush1.msra.mxu0 %v1200
      %1266 = vmatprep.subr.mxu0 %v1214
      %1267 = vmatpush1.msra.mxu0 %v1213
      %1268 = vmatprep.subr.mxu0 %v1227
      %1269 = vmatpush1.msra.mxu0 %v1226
      %1270 = vmatprep.subr.mxu0 %v1240
      %1271 = vmatpush1.msra.mxu0 %v1239
      %1272 = vmatprep.subr.mxu0 0.0
      %1273 = vmatpush1.msra.mxu0 0.0
      %1274 = vmatprep.subr.mxu0 0.0
      %1275 = vmatpush1.msra.mxu0 0.0
      %1276 = vmatprep.subr.mxu0 0.0
      %1277 = vmatpush1.msra.mxu0 0.0
      %1278 = vmatprep.subr.mxu0 0.0
      %1279 = vmatpush1.msra.mxu0 0.0
      %1280 = vmatprep.subr.mxu0 0.0
      %1281 = vmatpush1.msra.mxu0 0.0
      %1282 = vmatprep.subr.mxu0 0.0
      %1283 = vmatpush1.msra.mxu0 0.0
      %1284 = vmatprep.subr.mxu0 0.0
      %1285 = vmatpush1.msra.mxu0 0.0
      %1286 = vmatprep.subr.mxu0 0.0
      %1287 = vmatpush1.msra.mxu0 0.0
      %1288 = vmatprep.subr.mxu0 0.0
      %1289 = vmatpush1.msra.mxu0 0.0
      %1290 = vmatprep.subr.mxu0 0.0
      %1291 = vmatpush1.msra.mxu0 0.0
      %1292 = vmatprep.subr.mxu0 0.0
      %1293 = vmatpush1.msra.mxu0 0.0
      %1294 = vmatprep.subr.mxu0 0.0
      %1295 = vmatpush1.msra.mxu0 0.0
      %1296 = vmatprep.subr.mxu0 0.0
      %1297 = vmatpush1.msra.mxu0 0.0
      %1298 = vmatprep.subr.mxu0 0.0
      %1299 = vmatpush1.msra.mxu0 0.0
      %1300 = vmatprep.subr.mxu0 0.0
      %1301 = vmatpush1.msra.mxu0 0.0
      %1302 = vmatprep.subr.mxu0 0.0
      %1303 = vmatpush1.msra.mxu0 0.0
      %1304 = vmatprep.subr.mxu0 0.0
      %1305 = vmatpush1.msra.mxu0 0.0
      %1306 = vmatprep.subr.mxu0 0.0
      %1307 = vmatpush1.msra.mxu0 0.0
      %1308 = vmatprep.subr.mxu0 0.0
      %1309 = vmatpush1.msra.mxu0 0.0
      %1310 = vmatprep.subr.mxu0 0.0
      %1311 = vmatpush1.msra.mxu0 0.0
      %1312 = vmatprep.subr.mxu0 0.0
      %1313 = vmatpush1.msra.mxu0 0.0
      %1314 = vmatprep.subr.mxu0 0.0
      %1315 = vmatpush1.msra.mxu0 0.0
      %1316 = vmatprep.subr.mxu0 0.0
      %1317 = vmatpush1.msra.mxu0 0.0
      %1318 = vmatprep.subr.mxu0 0.0
      %1319 = vmatpush1.msra.mxu0 0.0
      %1320 = vmatprep.subr.mxu0 0.0
      %1321 = vmatpush1.msra.mxu0 0.0
      %1322 = vmatprep.subr.mxu0 0.0
      %1323 = vmatpush1.msra.mxu0 0.0
      %1324 = vmatprep.subr.mxu0 0.0
      %1325 = vmatpush1.msra.mxu0 0.0
      %1326 = vmatprep.subr.mxu0 0.0
      %1327 = vmatpush1.msra.mxu0 0.0
      %1328 = vmatprep.mubr.f32.mxu0 0.0
      %1329 = vmatmul.mubr.f32.gmra.mrb[0].mxu0 %v1253
      %v1330 = vpop.f32.mrb[0].mxu0
      %v1331 = vadd.f32 0.0, %v1330
      %v1332 = vpop.f32.mrb[0].mxu0
      %v1333 = vadd.f32 0.0, %v1332
      %1334 = vmatprep.mubr.f32.mxu0 0.0
      %1335 = vmatmul.mubr.f32.gmra.mrb[0].mxu0 %v1256
      %v1336 = vpop.f32.mrb[0].mxu0
      %v1337 = vadd.f32 0.0, %v1336
      %v1338 = vpop.f32.mrb[0].mxu0
      %v1339 = vadd.f32 0.0, %v1338
      %1340 = vmatprep.mubr.f32.mxu0 0.0
      %1341 = vmatmul.mubr.f32.gmra.mrb[0].mxu0 %v1259
      %v1342 = vpop.f32.mrb[0].mxu0
      %v1343 = vadd.f32 0.0, %v1342
      %v1344 = vpop.f32.mrb[0].mxu0
      %v1345 = vadd.f32 0.0, %v1344
      %1346 = vmatprep.mubr.f32.mxu0 0.0
      %1347 = vmatmul.mubr.f32.gmra.mrb[0].mxu0 %v1262
      %v1348 = vpop.f32.mrb[0].mxu0
      %v1349 = vadd.f32 0.0, %v1348
      %v1350 = vpop.f32.mrb[0].mxu0
      %v1351 = vadd.f32 0.0, %v1350
      %1352 = vdwg.mxu0
      %1353 = vmatprep.subr.mxu0 %v1203
      %1354 = vmatpush1.msra.mxu0 %v1202
      %1355 = vmatprep.subr.mxu0 %v1216
      %1356 = vmatpush1.msra.mxu0 %v1215
      %1357 = vmatprep.subr.mxu0 %v1229
      %1358 = vmatpush1.msra.mxu0 %v1228
      %1359 = vmatprep.subr.mxu0 %v1242
      %1360 = vmatpush1.msra.mxu0 %v1241
      %1361 = vmatprep.subr.mxu0 0.0
      %1362 = vmatpush1.msra.mxu0 0.0
      %1363 = vmatprep.subr.mxu0 0.0
      %1364 = vmatpush1.msra.mxu0 0.0
      %1365 = vmatprep.subr.mxu0 0.0
      %1366 = vmatpush1.msra.mxu0 0.0
      %1367 = vmatprep.subr.mxu0 0.0
      %1368 = vmatpush1.msra.mxu0 0.0
      %1369 = vmatprep.subr.mxu0 0.0
      %1370 = vmatpush1.msra.mxu0 0.0
      %1371 = vmatprep.subr.mxu0 0.0
      %1372 = vmatpush1.msra.mxu0 0.0
      %1373 = vmatprep.subr.mxu0 0.0
      %1374 = vmatpush1.msra.mxu0 0.0
      %1375 = vmatprep.subr.mxu0 0.0
      %1376 = vmatpush1.msra.mxu0 0.0
      %1377 = vmatprep.subr.mxu0 0.0
      %1378 = vmatpush1.msra.mxu0 0.0
      %1379 = vmatprep.subr.mxu0 0.0
      %1380 = vmatpush1.msra.mxu0 0.0
      %1381 = vmatprep.subr.mxu0 0.0
      %1382 = vmatpush1.msra.mxu0 0.0
      %1383 = vmatprep.subr.mxu0 0.0
      %1384 = vmatpush1.msra.mxu0 0.0
      %1385 = vmatprep.subr.mxu0 0.0
      %1386 = vmatpush1.msra.mxu0 0.0
      %1387 = vmatprep.subr.mxu0 0.0
      %1388 = vmatpush1.msra.mxu0 0.0
      %1389 = vmatprep.subr.mxu0 0.0
      %1390 = vmatpush1.msra.mxu0 0.0
      %1391 = vmatprep.subr.mxu0 0.0
      %1392 = vmatpush1.msra.mxu0 0.0
      %1393 = vmatprep.subr.mxu0 0.0
      %1394 = vmatpush1.msra.mxu0 0.0
      %1395 = vmatprep.subr.mxu0 0.0
      %1396 = vmatpush1.msra.mxu0 0.0
      %1397 = vmatprep.subr.mxu0 0.0
      %1398 = vmatpush1.msra.mxu0 0.0
      %1399 = vmatprep.subr.mxu0 0.0
      %1400 = vmatpush1.msra.mxu0 0.0
      %1401 = vmatprep.subr.mxu0 0.0
      %1402 = vmatpush1.msra.mxu0 0.0
      %1403 = vmatprep.subr.mxu0 0.0
      %1404 = vmatpush1.msra.mxu0 0.0
      %1405 = vmatprep.subr.mxu0 0.0
      %1406 = vmatpush1.msra.mxu0 0.0
      %1407 = vmatprep.subr.mxu0 0.0
      %1408 = vmatpush1.msra.mxu0 0.0
      %1409 = vmatprep.subr.mxu0 0.0
      %1410 = vmatpush1.msra.mxu0 0.0
      %1411 = vmatprep.subr.mxu0 0.0
      %1412 = vmatpush1.msra.mxu0 0.0
      %1413 = vmatprep.subr.mxu0 0.0
      %1414 = vmatpush1.msra.mxu0 0.0
      %1415 = vmatprep.subr.mxu0 0.0
      %1416 = vmatpush1.msra.mxu0 0.0
      %1417 = vmatprep.mubr.f32.mxu0 0.0
      %1418 = vmatmul.mubr.f32.gmra.mrb[0].mxu0 %v1253
      %v1419 = vpop.f32.mrb[0].mxu0
      %v1420 = vadd.f32 0.0, %v1419
      %v1421 = vpop.f32.mrb[0].mxu0
      %v1422 = vadd.f32 0.0, %v1421
      %1423 = vmatprep.mubr.f32.mxu0 0.0
      %1424 = vmatmul.mubr.f32.gmra.mrb[0].mxu0 %v1256
      %v1425 = vpop.f32.mrb[0].mxu0
      %v1426 = vadd.f32 0.0, %v1425
      %v1427 = vpop.f32.mrb[0].mxu0
      %v1428 = vadd.f32 0.0, %v1427
      %1429 = vmatprep.mubr.f32.mxu0 0.0
      %1430 = vmatmul.mubr.f32.gmra.mrb[0].mxu0 %v1259
      %v1431 = vpop.f32.mrb[0].mxu0
      %v1432 = vadd.f32 0.0, %v1431
      %v1433 = vpop.f32.mrb[0].mxu0
      %v1434 = vadd.f32 0.0, %v1433
      %1435 = vmatprep.mubr.f32.mxu0 0.0
      %1436 = vmatmul.mubr.f32.gmra.mrb[0].mxu0 %v1262
      %v1437 = vpop.f32.mrb[0].mxu0
      %v1438 = vadd.f32 0.0, %v1437
      %v1439 = vpop.f32.mrb[0].mxu0
      %v1440 = vadd.f32 0.0, %v1439
      %1441 = vdwg.mxu0
      %1442 = vmatprep.subr.mxu0 %v1205
      %1443 = vmatpush1.msra.mxu0 %v1204
      %1444 = vmatprep.subr.mxu0 %v1218
      %1445 = vmatpush1.msra.mxu0 %v1217
      %1446 = vmatprep.subr.mxu0 %v1231
      %1447 = vmatpush1.msra.mxu0 %v1230
      %1448 = vmatprep.subr.mxu0 %v1244
      %1449 = vmatpush1.msra.mxu0 %v1243
      %1450 = vmatprep.subr.mxu0 0.0
      %1451 = vmatpush1.msra.mxu0 0.0
      %1452 = vmatprep.subr.mxu0 0.0
      %1453 = vmatpush1.msra.mxu0 0.0
      %1454 = vmatprep.subr.mxu0 0.0
      %1455 = vmatpush1.msra.mxu0 0.0
      %1456 = vmatprep.subr.mxu0 0.0
      %1457 = vmatpush1.msra.mxu0 0.0
      %1458 = vmatprep.subr.mxu0 0.0
      %1459 = vmatpush1.msra.mxu0 0.0
      %1460 = vmatprep.subr.mxu0 0.0
      %1461 = vmatpush1.msra.mxu0 0.0
      %1462 = vmatprep.subr.mxu0 0.0
      %1463 = vmatpush1.msra.mxu0 0.0
      %1464 = vmatprep.subr.mxu0 0.0
      %1465 = vmatpush1.msra.mxu0 0.0
      %1466 = vmatprep.subr.mxu0 0.0
      %1467 = vmatpush1.msra.mxu0 0.0
      %1468 = vmatprep.subr.mxu0 0.0
      %1469 = vmatpush1.msra.mxu0 0.0
      %1470 = vmatprep.subr.mxu0 0.0
      %1471 = vmatpush1.msra.mxu0 0.0
      %1472 = vmatprep.subr.mxu0 0.0
      %1473 = vmatpush1.msra.mxu0 0.0
      %1474 = vmatprep.subr.mxu0 0.0
      %1475 = vmatpush1.msra.mxu0 0.0
      %1476 = vmatprep.subr.mxu0 0.0
      %1477 = vmatpush1.msra.mxu0 0.0
      %1478 = vmatprep.subr.mxu0 0.0
      %1479 = vmatpush1.msra.mxu0 0.0
      %1480 = vmatprep.subr.mxu0 0.0
      %1481 = vmatpush1.msra.mxu0 0.0
      %1482 = vmatprep.subr.mxu0 0.0
      %1483 = vmatpush1.msra.mxu0 0.0
      %1484 = vmatprep.subr.mxu0 0.0
      %1485 = vmatpush1.msra.mxu0 0.0
      %1486 = vmatprep.subr.mxu0 0.0
      %1487 = vmatpush1.msra.mxu0 0.0
      %1488 = vmatprep.subr.mxu0 0.0
      %1489 = vmatpush1.msra.mxu0 0.0
      %1490 = vmatprep.subr.mxu0 0.0
      %1491 = vmatpush1.msra.mxu0 0.0
      %1492 = vmatprep.subr.mxu0 0.0
      %1493 = vmatpush1.msra.mxu0 0.0
      %1494 = vmatprep.subr.mxu0 0.0
      %1495 = vmatpush1.msra.mxu0 0.0
      %1496 = vmatprep.subr.mxu0 0.0
      %1497 = vmatpush1.msra.mxu0 0.0
      %1498 = vmatprep.subr.mxu0 0.0
      %1499 = vmatpush1.msra.mxu0 0.0
      %1500 = vmatprep.subr.mxu0 0.0
      %1501 = vmatpush1.msra.mxu0 0.0
      %1502 = vmatprep.subr.mxu0 0.0
      %1503 = vmatpush1.msra.mxu0 0.0
      %1504 = vmatprep.subr.mxu0 0.0
      %1505 = vmatpush1.msra.mxu0 0.0
      %1506 = vmatprep.mubr.f32.mxu0 0.0
      %1507 = vmatmul.mubr.f32.gmra.mrb[0].mxu0 %v1253
      %v1508 = vpop.f32.mrb[0].mxu0
      %v1509 = vadd.f32 0.0, %v1508
      %v1510 = vpop.f32.mrb[0].mxu0
      %v1511 = vadd.f32 0.0, %v1510
      %1512 = vmatprep.mubr.f32.mxu0 0.0
      %1513 = vmatmul.mubr.f32.gmra.mrb[0].mxu0 %v1256
      %v1514 = vpop.f32.mrb[0].mxu0
      %v1515 = vadd.f32 0.0, %v1514
      %v1516 = vpop.f32.mrb[0].mxu0
      %v1517 = vadd.f32 0.0, %v1516
      %1518 = vmatprep.mubr.f32.mxu0 0.0
      %1519 = vmatmul.mubr.f32.gmra.mrb[0].mxu0 %v1259
      %v1520 = vpop.f32.mrb[0].mxu0
      %v1521 = vadd.f32 0.0, %v1520
      %v1522 = vpop.f32.mrb[0].mxu0
      %v1523 = vadd.f32 0.0, %v1522
      %1524 = vmatprep.mubr.f32.mxu0 0.0
      %1525 = vmatmul.mubr.f32.gmra.mrb[0].mxu0 %v1262
      %v1526 = vpop.f32.mrb[0].mxu0
      %v1527 = vadd.f32 0.0, %v1526
      %v1528 = vpop.f32.mrb[0].mxu0
      %v1529 = vadd.f32 0.0, %v1528
      %1530 = vdwg.mxu0
      %1531 = vmatprep.subr.mxu0 %v1207
      %1532 = vmatpush1.msra.mxu0 %v1206
      %1533 = vmatprep.subr.mxu0 %v1220
      %1534 = vmatpush1.msra.mxu0 %v1219
      %1535 = vmatprep.subr.mxu0 %v1233
      %1536 = vmatpush1.msra.mxu0 %v1232
      %1537 = vmatprep.subr.mxu0 %v1246
      %1538 = vmatpush1.msra.mxu0 %v1245
      %1539 = vmatprep.subr.mxu0 0.0
      %1540 = vmatpush1.msra.mxu0 0.0
      %1541 = vmatprep.subr.mxu0 0.0
      %1542 = vmatpush1.msra.mxu0 0.0
      %1543 = vmatprep.subr.mxu0 0.0
      %1544 = vmatpush1.msra.mxu0 0.0
      %1545 = vmatprep.subr.mxu0 0.0
      %1546 = vmatpush1.msra.mxu0 0.0
      %1547 = vmatprep.subr.mxu0 0.0
      %1548 = vmatpush1.msra.mxu0 0.0
      %1549 = vmatprep.subr.mxu0 0.0
      %1550 = vmatpush1.msra.mxu0 0.0
      %1551 = vmatprep.subr.mxu0 0.0
      %1552 = vmatpush1.msra.mxu0 0.0
      %1553 = vmatprep.subr.mxu0 0.0
      %1554 = vmatpush1.msra.mxu0 0.0
      %1555 = vmatprep.subr.mxu0 0.0
      %1556 = vmatpush1.msra.mxu0 0.0
      %1557 = vmatprep.subr.mxu0 0.0
      %1558 = vmatpush1.msra.mxu0 0.0
      %1559 = vmatprep.subr.mxu0 0.0
      %1560 = vmatpush1.msra.mxu0 0.0
      %1561 = vmatprep.subr.mxu0 0.0
      %1562 = vmatpush1.msra.mxu0 0.0
      %1563 = vmatprep.subr.mxu0 0.0
      %1564 = vmatpush1.msra.mxu0 0.0
      %1565 = vmatprep.subr.mxu0 0.0
      %1566 = vmatpush1.msra.mxu0 0.0
      %1567 = vmatprep.subr.mxu0 0.0
      %1568 = vmatpush1.msra.mxu0 0.0
      %1569 = vmatprep.subr.mxu0 0.0
      %1570 = vmatpush1.msra.mxu0 0.0
      %1571 = vmatprep.subr.mxu0 0.0
      %1572 = vmatpush1.msra.mxu0 0.0
      %1573 = vmatprep.subr.mxu0 0.0
      %1574 = vmatpush1.msra.mxu0 0.0
      %1575 = vmatprep.subr.mxu0 0.0
      %1576 = vmatpush1.msra.mxu0 0.0
      %1577 = vmatprep.subr.mxu0 0.0
      %1578 = vmatpush1.msra.mxu0 0.0
      %1579 = vmatprep.subr.mxu0 0.0
      %1580 = vmatpush1.msra.mxu0 0.0
      %1581 = vmatprep.subr.mxu0 0.0
      %1582 = vmatpush1.msra.mxu0 0.0
      %1583 = vmatprep.subr.mxu0 0.0
      %1584 = vmatpush1.msra.mxu0 0.0
      %1585 = vmatprep.subr.mxu0 0.0
      %1586 = vmatpush1.msra.mxu0 0.0
      %1587 = vmatprep.subr.mxu0 0.0
      %1588 = vmatpush1.msra.mxu0 0.0
      %1589 = vmatprep.subr.mxu0 0.0
      %1590 = vmatpush1.msra.mxu0 0.0
      %1591 = vmatprep.subr.mxu0 0.0
      %1592 = vmatpush1.msra.mxu0 0.0
      %1593 = vmatprep.subr.mxu0 0.0
      %1594 = vmatpush1.msra.mxu0 0.0
      %1595 = vmatprep.mubr.f32.mxu0 0.0
      %1596 = vmatmul.mubr.f32.gmra.mrb[0].mxu0 %v1253
      %v1597 = vpop.f32.mrb[0].mxu0
      %v1598 = vadd.f32 0.0, %v1597
      %v1599 = vpop.f32.mrb[0].mxu0
      %v1600 = vadd.f32 0.0, %v1599
      %1601 = vmatprep.mubr.f32.mxu0 0.0
      %1602 = vmatmul.mubr.f32.gmra.mrb[0].mxu0 %v1256
      %v1603 = vpop.f32.mrb[0].mxu0
      %v1604 = vadd.f32 0.0, %v1603
      %v1605 = vpop.f32.mrb[0].mxu0
      %v1606 = vadd.f32 0.0, %v1605
      %1607 = vmatprep.mubr.f32.mxu0 0.0
      %1608 = vmatmul.mubr.f32.gmra.mrb[0].mxu0 %v1259
      %v1609 = vpop.f32.mrb[0].mxu0
      %v1610 = vadd.f32 0.0, %v1609
      %v1611 = vpop.f32.mrb[0].mxu0
      %v1612 = vadd.f32 0.0, %v1611
      %1613 = vmatprep.mubr.f32.mxu0 0.0
      %1614 = vmatmul.mubr.f32.gmra.mrb[0].mxu0 %v1262
      %v1615 = vpop.f32.mrb[0].mxu0
      %v1616 = vadd.f32 0.0, %v1615
      %v1617 = vpop.f32.mrb[0].mxu0
      %v1618 = vadd.f32 0.0, %v1617
      %1619 = vdwg.mxu0
      %1620 = vmatprep.subr.mxu0 %v1209
      %1621 = vmatpush1.msra.mxu0 %v1208
      %1622 = vmatprep.subr.mxu0 %v1222
      %1623 = vmatpush1.msra.mxu0 %v1221
      %1624 = vmatprep.subr.mxu0 %v1235
      %1625 = vmatpush1.msra.mxu0 %v1234
      %1626 = vmatprep.subr.mxu0 %v1248
      %1627 = vmatpush1.msra.mxu0 %v1247
      %1628 = vmatprep.subr.mxu0 0.0
      %1629 = vmatpush1.msra.mxu0 0.0
      %1630 = vmatprep.subr.mxu0 0.0
      %1631 = vmatpush1.msra.mxu0 0.0
      %1632 = vmatprep.subr.mxu0 0.0
      %1633 = vmatpush1.msra.mxu0 0.0
      %1634 = vmatprep.subr.mxu0 0.0
      %1635 = vmatpush1.msra.mxu0 0.0
      %1636 = vmatprep.subr.mxu0 0.0
      %1637 = vmatpush1.msra.mxu0 0.0
      %1638 = vmatprep.subr.mxu0 0.0
      %1639 = vmatpush1.msra.mxu0 0.0
      %1640 = vmatprep.subr.mxu0 0.0
      %1641 = vmatpush1.msra.mxu0 0.0
      %1642 = vmatprep.subr.mxu0 0.0
      %1643 = vmatpush1.msra.mxu0 0.0
      %1644 = vmatprep.subr.mxu0 0.0
      %1645 = vmatpush1.msra.mxu0 0.0
      %1646 = vmatprep.subr.mxu0 0.0
      %1647 = vmatpush1.msra.mxu0 0.0
      %1648 = vmatprep.subr.mxu0 0.0
      %1649 = vmatpush1.msra.mxu0 0.0
      %1650 = vmatprep.subr.mxu0 0.0
      %1651 = vmatpush1.msra.mxu0 0.0
      %1652 = vmatprep.subr.mxu0 0.0
      %1653 = vmatpush1.msra.mxu0 0.0
      %1654 = vmatprep.subr.mxu0 0.0
      %1655 = vmatpush1.msra.mxu0 0.0
      %1656 = vmatprep.subr.mxu0 0.0
      %1657 = vmatpush1.msra.mxu0 0.0
      %1658 = vmatprep.subr.mxu0 0.0
      %1659 = vmatpush1.msra.mxu0 0.0
      %1660 = vmatprep.subr.mxu0 0.0
      %1661 = vmatpush1.msra.mxu0 0.0
      %1662 = vmatprep.subr.mxu0 0.0
      %1663 = vmatpush1.msra.mxu0 0.0
      %1664 = vmatprep.subr.mxu0 0.0
      %1665 = vmatpush1.msra.mxu0 0.0
      %1666 = vmatprep.subr.mxu0 0.0
      %1667 = vmatpush1.msra.mxu0 0.0
      %1668 = vmatprep.subr.mxu0 0.0
      %1669 = vmatpush1.msra.mxu0 0.0
      %1670 = vmatprep.subr.mxu0 0.0
      %1671 = vmatpush1.msra.mxu0 0.0
      %1672 = vmatprep.subr.mxu0 0.0
      %1673 = vmatpush1.msra.mxu0 0.0
      %1674 = vmatprep.subr.mxu0 0.0
      %1675 = vmatpush1.msra.mxu0 0.0
      %1676 = vmatprep.subr.mxu0 0.0
      %1677 = vmatpush1.msra.mxu0 0.0
      %1678 = vmatprep.subr.mxu0 0.0
      %1679 = vmatpush1.msra.mxu0 0.0
      %1680 = vmatprep.subr.mxu0 0.0
      %1681 = vmatpush1.msra.mxu0 0.0
      %1682 = vmatprep.subr.mxu0 0.0
      %1683 = vmatpush1.msra.mxu0 0.0
      %1684 = vmatprep.mubr.f32.mxu0 0.0
      %1685 = vmatmul.mubr.f32.gmra.mrb[0].mxu0 %v1253
      %v1686 = vpop.f32.mrb[0].mxu0
      %v1687 = vadd.f32 0.0, %v1686
      %v1688 = vpop.f32.mrb[0].mxu0
      %v1689 = vadd.f32 0.0, %v1688
      %1690 = vmatprep.mubr.f32.mxu0 0.0
      %1691 = vmatmul.mubr.f32.gmra.mrb[0].mxu0 %v1256
      %v1692 = vpop.f32.mrb[0].mxu0
      %v1693 = vadd.f32 0.0, %v1692
      %v1694 = vpop.f32.mrb[0].mxu0
      %v1695 = vadd.f32 0.0, %v1694
      %1696 = vmatprep.mubr.f32.mxu0 0.0
      %1697 = vmatmul.mubr.f32.gmra.mrb[0].mxu0 %v1259
      %v1698 = vpop.f32.mrb[0].mxu0
      %v1699 = vadd.f32 0.0, %v1698
      %v1700 = vpop.f32.mrb[0].mxu0
      %v1701 = vadd.f32 0.0, %v1700
      %1702 = vmatprep.mubr.f32.mxu0 0.0
      %1703 = vmatmul.mubr.f32.gmra.mrb[0].mxu0 %v1262
      %v1704 = vpop.f32.mrb[0].mxu0
      %v1705 = vadd.f32 0.0, %v1704
      %v1706 = vpop.f32.mrb[0].mxu0
      %v1707 = vadd.f32 0.0, %v1706
      %1708 = vdwg.mxu0
      %1709 = vmatprep.subr.mxu0 %v1211
      %1710 = vmatpush1.msra.mxu0 %v1210
      %1711 = vmatprep.subr.mxu0 %v1224
      %1712 = vmatpush1.msra.mxu0 %v1223
      %1713 = vmatprep.subr.mxu0 %v1237
      %1714 = vmatpush1.msra.mxu0 %v1236
      %1715 = vmatprep.subr.mxu0 %v1250
      %1716 = vmatpush1.msra.mxu0 %v1249
      %1717 = vmatprep.subr.mxu0 0.0
      %1718 = vmatpush1.msra.mxu0 0.0
      %1719 = vmatprep.subr.mxu0 0.0
      %1720 = vmatpush1.msra.mxu0 0.0
      %1721 = vmatprep.subr.mxu0 0.0
      %1722 = vmatpush1.msra.mxu0 0.0
      %1723 = vmatprep.subr.mxu0 0.0
      %1724 = vmatpush1.msra.mxu0 0.0
      %1725 = vmatprep.subr.mxu0 0.0
      %1726 = vmatpush1.msra.mxu0 0.0
      %1727 = vmatprep.subr.mxu0 0.0
      %1728 = vmatpush1.msra.mxu0 0.0
      %1729 = vmatprep.subr.mxu0 0.0
      %1730 = vmatpush1.msra.mxu0 0.0
      %1731 = vmatprep.subr.mxu0 0.0
      %1732 = vmatpush1.msra.mxu0 0.0
      %1733 = vmatprep.subr.mxu0 0.0
      %1734 = vmatpush1.msra.mxu0 0.0
      %1735 = vmatprep.subr.mxu0 0.0
      %1736 = vmatpush1.msra.mxu0 0.0
      %1737 = vmatprep.subr.mxu0 0.0
      %1738 = vmatpush1.msra.mxu0 0.0
      %1739 = vmatprep.subr.mxu0 0.0
      %1740 = vmatpush1.msra.mxu0 0.0
      %1741 = vmatprep.subr.mxu0 0.0
      %1742 = vmatpush1.msra.mxu0 0.0
      %1743 = vmatprep.subr.mxu0 0.0
      %1744 = vmatpush1.msra.mxu0 0.0
      %1745 = vmatprep.subr.mxu0 0.0
      %1746 = vmatpush1.msra.mxu0 0.0
      %1747 = vmatprep.subr.mxu0 0.0
      %1748 = vmatpush1.msra.mxu0 0.0
      %1749 = vmatprep.subr.mxu0 0.0
      %1750 = vmatpush1.msra.mxu0 0.0
      %1751 = vmatprep.subr.mxu0 0.0
      %1752 = vmatpush1.msra.mxu0 0.0
      %1753 = vmatprep.subr.mxu0 0.0
      %1754 = vmatpush1.msra.mxu0 0.0
      %1755 = vmatprep.subr.mxu0 0.0
      %1756 = vmatpush1.msra.mxu0 0.0
      %1757 = vmatprep.subr.mxu0 0.0
      %1758 = vmatpush1.msra.mxu0 0.0
      %1759 = vmatprep.subr.mxu0 0.0
      %1760 = vmatpush1.msra.mxu0 0.0
      %1761 = vmatprep.subr.mxu0 0.0
      %1762 = vmatpush1.msra.mxu0 0.0
      %1763 = vmatprep.subr.mxu0 0.0
      %1764 = vmatpush1.msra.mxu0 0.0
      %1765 = vmatprep.subr.mxu0 0.0
      %1766 = vmatpush1.msra.mxu0 0.0
      %1767 = vmatprep.subr.mxu0 0.0
      %1768 = vmatpush1.msra.mxu0 0.0
      %1769 = vmatprep.subr.mxu0 0.0
      %1770 = vmatpush1.msra.mxu0 0.0
      %1771 = vmatprep.subr.mxu0 0.0
      %1772 = vmatpush1.msra.mxu0 0.0
      %1773 = vmatprep.mubr.f32.mxu0 0.0
      %1774 = vmatmul.mubr.f32.gmra.mrb[0].mxu0 %v1253
      %v1775 = vpop.f32.mrb[0].mxu0
      %v1776 = vadd.f32 0.0, %v1775
      %v1777 = vpop.f32.mrb[0].mxu0
      %v1778 = vadd.f32 0.0, %v1777
      %1779 = vmatprep.mubr.f32.mxu0 0.0
      %1780 = vmatmul.mubr.f32.gmra.mrb[0].mxu0 %v1256
      %v1781 = vpop.f32.mrb[0].mxu0
      %v1782 = vadd.f32 0.0, %v1781
      %v1783 = vpop.f32.mrb[0].mxu0
      %v1784 = vadd.f32 0.0, %v1783
      %1785 = vmatprep.mubr.f32.mxu0 0.0
      %1786 = vmatmul.mubr.f32.gmra.mrb[0].mxu0 %v1259
      %v1787 = vpop.f32.mrb[0].mxu0
      %v1788 = vadd.f32 0.0, %v1787
      %v1789 = vpop.f32.mrb[0].mxu0
      %v1790 = vadd.f32 0.0, %v1789
      %1791 = vmatprep.mubr.f32.mxu0 0.0
      %1792 = vmatmul.mubr.f32.gmra.mrb[0].mxu0 %v1262
      %v1793 = vpop.f32.mrb[0].mxu0
      %v1794 = vadd.f32 0.0, %v1793
      %v1795 = vpop.f32.mrb[0].mxu0
      %v1796 = vadd.f32 0.0, %v1795
      %1797 = vdwg.mxu0
      %1798 = vmatprep.subr.mxu0 0.0
      %1799 = vmatpush1.msra.mxu0 %v1212
      %1800 = vmatprep.subr.mxu0 0.0
      %1801 = vmatpush1.msra.mxu0 %v1225
      %1802 = vmatprep.subr.mxu0 0.0
      %1803 = vmatpush1.msra.mxu0 %v1238
      %1804 = vmatprep.subr.mxu0 0.0
      %1805 = vmatpush1.msra.mxu0 %v1251
      %1806 = vmatprep.subr.mxu0 0.0
      %1807 = vmatpush1.msra.mxu0 0.0
      %1808 = vmatprep.subr.mxu0 0.0
      %1809 = vmatpush1.msra.mxu0 0.0
      %1810 = vmatprep.subr.mxu0 0.0
      %1811 = vmatpush1.msra.mxu0 0.0
      %1812 = vmatprep.subr.mxu0 0.0
      %1813 = vmatpush1.msra.mxu0 0.0
      %1814 = vmatprep.subr.mxu0 0.0
      %1815 = vmatpush1.msra.mxu0 0.0
      %1816 = vmatprep.subr.mxu0 0.0
      %1817 = vmatpush1.msra.mxu0 0.0
      %1818 = vmatprep.subr.mxu0 0.0
      %1819 = vmatpush1.msra.mxu0 0.0
      %1820 = vmatprep.subr.mxu0 0.0
      %1821 = vmatpush1.msra.mxu0 0.0
      %1822 = vmatprep.subr.mxu0 0.0
      %1823 = vmatpush1.msra.mxu0 0.0
      %1824 = vmatprep.subr.mxu0 0.0
      %1825 = vmatpush1.msra.mxu0 0.0
      %1826 = vmatprep.subr.mxu0 0.0
      %1827 = vmatpush1.msra.mxu0 0.0
      %1828 = vmatprep.subr.mxu0 0.0
      %1829 = vmatpush1.msra.mxu0 0.0
      %1830 = vmatprep.subr.mxu0 0.0
      %1831 = vmatpush1.msra.mxu0 0.0
      %1832 = vmatprep.subr.mxu0 0.0
      %1833 = vmatpush1.msra.mxu0 0.0
      %1834 = vmatprep.subr.mxu0 0.0
      %1835 = vmatpush1.msra.mxu0 0.0
      %1836 = vmatprep.subr.mxu0 0.0
      %1837 = vmatpush1.msra.mxu0 0.0
      %1838 = vmatprep.subr.mxu0 0.0
      %1839 = vmatpush1.msra.mxu0 0.0
      %1840 = vmatprep.subr.mxu0 0.0
      %1841 = vmatpush1.msra.mxu0 0.0
      %1842 = vmatprep.subr.mxu0 0.0
      %1843 = vmatpush1.msra.mxu0 0.0
      %1844 = vmatprep.subr.mxu0 0.0
      %1845 = vmatpush1.msra.mxu0 0.0
      %1846 = vmatprep.subr.mxu0 0.0
      %1847 = vmatpush1.msra.mxu0 0.0
      %1848 = vmatprep.subr.mxu0 0.0
      %1849 = vmatpush1.msra.mxu0 0.0
      %1850 = vmatprep.subr.mxu0 0.0
      %1851 = vmatpush1.msra.mxu0 0.0
      %1852 = vmatprep.subr.mxu0 0.0
      %1853 = vmatpush1.msra.mxu0 0.0
      %1854 = vmatprep.subr.mxu0 0.0
      %1855 = vmatpush1.msra.mxu0 0.0
      %1856 = vmatprep.subr.mxu0 0.0
      %1857 = vmatpush1.msra.mxu0 0.0
      %1858 = vmatprep.subr.mxu0 0.0
      %1859 = vmatpush1.msra.mxu0 0.0
      %1860 = vmatprep.subr.mxu0 0.0
      %1861 = vmatpush1.msra.mxu0 0.0
      %1862 = vmatprep.mubr.f32.mxu0 0.0
      %1863 = vmatmul.mubr.f32.gmra.mrb[0].mxu0 %v1253
      %v1864 = vpop.f32.mrb[0].mxu0
      %v1865 = vadd.f32 0.0, %v1864
      %v1866 = vpop.f32.mrb[0].mxu0
      %1867 = vmatprep.mubr.f32.mxu0 0.0
      %1868 = vmatmul.mubr.f32.gmra.mrb[0].mxu0 %v1256
      %v1869 = vpop.f32.mrb[0].mxu0
      %v1870 = vadd.f32 0.0, %v1869
      %v1871 = vpop.f32.mrb[0].mxu0
      %1872 = vmatprep.mubr.f32.mxu0 0.0
      %1873 = vmatmul.mubr.f32.gmra.mrb[0].mxu0 %v1259
      %v1874 = vpop.f32.mrb[0].mxu0
      %v1875 = vadd.f32 0.0, %v1874
      %v1876 = vpop.f32.mrb[0].mxu0
      %1877 = vmatprep.mubr.f32.mxu0 0.0
      %1878 = vmatmul.mubr.f32.gmra.mrb[0].mxu0 %v1262
      %v1879 = vpop.f32.mrb[0].mxu0
      %v1880 = vadd.f32 0.0, %v1879
      %v1881 = vpop.f32.mrb[0].mxu0
      %1882 = vdwg.mxu0
      %v1883 = vmul.f32 %v1331, 0.35355338
      %v1884 = vmul.f32 %v1333, 0.35355338
      %v1885 = vmul.f32 %v1420, 0.35355338
      %v1886 = vmul.f32 %v1422, 0.35355338
      %v1887 = vmul.f32 %v1509, 0.35355338
      %v1888 = vmul.f32 %v1511, 0.35355338
      %v1889 = vmul.f32 %v1598, 0.35355338
      %v1890 = vmul.f32 %v1600, 0.35355338
      %v1891 = vmul.f32 %v1687, 0.35355338
      %v1892 = vmul.f32 %v1689, 0.35355338
      %v1893 = vmul.f32 %v1776, 0.35355338
      %v1894 = vmul.f32 %v1778, 0.35355338
      %v1895 = vmul.f32 %v1865, 0.35355338
      %v1896 = vmul.f32 %v1337, 0.35355338
      %v1897 = vmul.f32 %v1339, 0.35355338
      %v1898 = vmul.f32 %v1426, 0.35355338
      %v1899 = vmul.f32 %v1428, 0.35355338
      %v1900 = vmul.f32 %v1515, 0.35355338
      %v1901 = vmul.f32 %v1517, 0.35355338
      %v1902 = vmul.f32 %v1604, 0.35355338
      %v1903 = vmul.f32 %v1606, 0.35355338
      %v1904 = vmul.f32 %v1693, 0.35355338
      %v1905 = vmul.f32 %v1695, 0.35355338
      %v1906 = vmul.f32 %v1782, 0.35355338
      %v1907 = vmul.f32 %v1784, 0.35355338
      %v1908 = vmul.f32 %v1870, 0.35355338
      %v1909 = vmul.f32 %v1343, 0.35355338
      %v1910 = vmul.f32 %v1345, 0.35355338
      %v1911 = vmul.f32 %v1432, 0.35355338
      %v1912 = vmul.f32 %v1434, 0.35355338
      %v1913 = vmul.f32 %v1521, 0.35355338
      %v1914 = vmul.f32 %v1523, 0.35355338
      %v1915 = vmul.f32 %v1610, 0.35355338
      %v1916 = vmul.f32 %v1612, 0.35355338
      %v1917 = vmul.f32 %v1699, 0.35355338
      %v1918 = vmul.f32 %v1701, 0.35355338
      %v1919 = vmul.f32 %v1788, 0.35355338
      %v1920 = vmul.f32 %v1790, 0.35355338
      %v1921 = vmul.f32 %v1875, 0.35355338
      %v1922 = vmul.f32 %v1349, 0.35355338
      %v1923 = vmul.f32 %v1351, 0.35355338
      %v1924 = vmul.f32 %v1438, 0.35355338
      %v1925 = vmul.f32 %v1440, 0.35355338
      %v1926 = vmul.f32 %v1527, 0.35355338
      %v1927 = vmul.f32 %v1529, 0.35355338
      %v1928 = vmul.f32 %v1616, 0.35355338
      %v1929 = vmul.f32 %v1618, 0.35355338
      %v1930 = vmul.f32 %v1705, 0.35355338
      %v1931 = vmul.f32 %v1707, 0.35355338
      %v1932 = vmul.f32 %v1794, 0.35355338
      %v1933 = vmul.f32 %v1796, 0.35355338
      %v1934 = vmul.f32 %v1880, 0.35355338
      %v1935 = vsel %vm800, -1e+30, %v1883
      %v1936 = vsel %vm801, -1e+30, %v1884
      %v1937 = vsel %vm802, -1e+30, %v1885
      %v1938 = vsel %vm803, -1e+30, %v1886
      %v1939 = vsel %vm804, -1e+30, %v1887
      %v1940 = vsel %vm805, -1e+30, %v1888
      %v1941 = vsel %vm806, -1e+30, %v1889
      %v1942 = vsel %vm807, -1e+30, %v1890
      %v1943 = vsel %vm808, -1e+30, %v1891
      %v1944 = vsel %vm809, -1e+30, %v1892
      %v1945 = vsel %vm810, -1e+30, %v1893
      %v1946 = vsel %vm811, -1e+30, %v1894
      %v1947 = vsel %vm812, -1e+30, %v1895
      %v1948 = vsel %vm800, -1e+30, %v1896
      %v1949 = vsel %vm801, -1e+30, %v1897
      %v1950 = vsel %vm802, -1e+30, %v1898
      %v1951 = vsel %vm803, -1e+30, %v1899
      %v1952 = vsel %vm804, -1e+30, %v1900
      %v1953 = vsel %vm805, -1e+30, %v1901
      %v1954 = vsel %vm806, -1e+30, %v1902
      %v1955 = vsel %vm807, -1e+30, %v1903
      %v1956 = vsel %vm808, -1e+30, %v1904
      %v1957 = vsel %vm809, -1e+30, %v1905
      %v1958 = vsel %vm810, -1e+30, %v1906
      %v1959 = vsel %vm811, -1e+30, %v1907
      %v1960 = vsel %vm812, -1e+30, %v1908
      %v1961 = vsel %vm800, -1e+30, %v1909
      %v1962 = vsel %vm801, -1e+30, %v1910
      %v1963 = vsel %vm802, -1e+30, %v1911
      %v1964 = vsel %vm803, -1e+30, %v1912
      %v1965 = vsel %vm804, -1e+30, %v1913
      %v1966 = vsel %vm805, -1e+30, %v1914
      %v1967 = vsel %vm806, -1e+30, %v1915
      %v1968 = vsel %vm807, -1e+30, %v1916
      %v1969 = vsel %vm808, -1e+30, %v1917
      %v1970 = vsel %vm809, -1e+30, %v1918
      %v1971 = vsel %vm810, -1e+30, %v1919
      %v1972 = vsel %vm811, -1e+30, %v1920
      %v1973 = vsel %vm812, -1e+30, %v1921
      %v1974 = vsel %vm800, -1e+30, %v1922
      %v1975 = vsel %vm801, -1e+30, %v1923
      %v1976 = vsel %vm802, -1e+30, %v1924
      %v1977 = vsel %vm803, -1e+30, %v1925
      %v1978 = vsel %vm804, -1e+30, %v1926
      %v1979 = vsel %vm805, -1e+30, %v1927
      %v1980 = vsel %vm806, -1e+30, %v1928
      %v1981 = vsel %vm807, -1e+30, %v1929
      %v1982 = vsel %vm808, -1e+30, %v1930
      %v1983 = vsel %vm809, -1e+30, %v1931
      %v1984 = vsel %vm810, -1e+30, %v1932
      %v1985 = vsel %vm811, -1e+30, %v1933
      %v1986 = vsel %vm812, -1e+30, %v1934
      %v1988 = vlaneseq
      %v1989 = vshrl.u32 %v1988, 7
      %v1990 = vsub.s32 0, %v1989
      %v1991 = vrot.slane %v822, %v1990
      %v1993 = vadd.f32 %v894, %v1991
      %1995 = vrot.lane.b32.xlu0 %v1865, 1
      %v1996 = vpop.permute.xlu0 %1995
      %1998 = vrot.lane.b32.xlu0 %v1865, 2
      %v1999 = vpop.permute.xlu0 %1998
      %2001 = vrot.lane.b32.xlu0 %v1865, 3
      %v2002 = vpop.permute.xlu0 %2001
      %2004 = vrot.lane.b32.xlu0 %v1865, 4
      %v2005 = vpop.permute.xlu0 %2004
      %2007 = vrot.lane.b32.xlu0 %v1865, 5
      %v2008 = vpop.permute.xlu0 %2007
      %2010 = vrot.lane.b32.xlu0 %v1865, 6
      %v2011 = vpop.permute.xlu0 %2010
      %2013 = vrot.lane.b32.xlu0 %v1865, 7
      %v2014 = vpop.permute.xlu0 %2013
      %v2016 = vsel %vm652, %v1865, %v1996
      %v2017 = vsel %vm654, %v2016, %v1999
      %v2018 = vsel %vm656, %v2017, %v2002
      %v2019 = vsel %vm658, %v2018, %v2005
      %v2020 = vsel %vm660, %v2019, %v2008
      %v2021 = vsel %vm662, %v2020, %v2011
      %v2022 = vsel %vm664, %v2021, %v2014
      %2024 = vrot.lane.b32.xlu0 %v894, 96
      %v2025 = vpop.permute.xlu0 %2024
      %2027 = vrot.lane.b32.xlu0 %v2022, 57
      %v2028 = vpop.permute.xlu0 %2027
      %v2031 = vsel %vm904, %v1993, 0
      %v2033 = vsel %vm904, %v2025, 0
      %2035 = vmatprep.subr.mxu0 0.0
      %2036 = vmatpush1.xpose.msra.mxu0 %v2033
      %2037 = vmatprep.subr.mxu0 0.0
      %2038 = vmatpush1.xpose.msra.mxu0 0.0
      %2039 = vmatprep.subr.mxu0 0.0
      %2040 = vmatpush1.xpose.msra.mxu0 0.0
      %2041 = vmatprep.subr.mxu0 0.0
      %2042 = vmatpush1.xpose.msra.mxu0 0.0
      %2043 = vmatprep.subr.mxu0 0.0
      %2044 = vmatpush1.xpose.msra.mxu0 0.0
      %2045 = vmatprep.subr.mxu0 0.0
      %2046 = vmatpush1.xpose.msra.mxu0 0.0
      %2047 = vmatprep.subr.mxu0 0.0
      %2048 = vmatpush1.xpose.msra.mxu0 0.0
      %2049 = vmatprep.subr.mxu0 0.0
      %2050 = vmatpush1.xpose.msra.mxu0 0.0
      %2051 = vmatprep.subr.mxu0 0.0
      %2052 = vmatpush1.xpose.msra.mxu0 0.0
      %2053 = vmatprep.subr.mxu0 0.0
      %2054 = vmatpush1.xpose.msra.mxu0 0.0
      %2055 = vmatprep.subr.mxu0 0.0
      %2056 = vmatpush1.xpose.msra.mxu0 0.0
      %2057 = vmatprep.subr.mxu0 0.0
      %2058 = vmatpush1.xpose.msra.mxu0 0.0
      %2059 = vmatprep.subr.mxu0 0.0
      %2060 = vmatpush1.xpose.msra.mxu0 0.0
      %2061 = vmatprep.subr.mxu0 0.0
      %2062 = vmatpush1.xpose.msra.mxu0 0.0
      %2063 = vmatprep.subr.mxu0 0.0
      %2064 = vmatpush1.xpose.msra.mxu0 0.0
      %2065 = vmatprep.subr.mxu0 0.0
      %2066 = vmatpush1.xpose.msra.mxu0 0.0
      %2067 = vmatprep.subr.mxu0 0.0
      %2068 = vmatpush1.xpose.msra.mxu0 0.0
      %2069 = vmatprep.subr.mxu0 0.0
      %2070 = vmatpush1.xpose.msra.mxu0 0.0
      %2071 = vmatprep.subr.mxu0 0.0
      %2072 = vmatpush1.xpose.msra.mxu0 0.0
      %2073 = vmatprep.subr.mxu0 0.0
      %2074 = vmatpush1.xpose.msra.mxu0 0.0
      %2075 = vmatprep.subr.mxu0 0.0
      %2076 = vmatpush1.xpose.msra.mxu0 0.0
      %2077 = vmatprep.subr.mxu0 0.0
      %2078 = vmatpush1.xpose.msra.mxu0 0.0
      %2079 = vmatprep.subr.mxu0 0.0
      %2080 = vmatpush1.xpose.msra.mxu0 0.0
      %2081 = vmatprep.subr.mxu0 0.0
      %2082 = vmatpush1.xpose.msra.mxu0 0.0
      %2083 = vmatprep.subr.mxu0 0.0
      %2084 = vmatpush1.xpose.msra.mxu0 0.0
      %2085 = vmatprep.subr.mxu0 0.0
      %2086 = vmatpush1.xpose.msra.mxu0 0.0
      %2087 = vmatprep.subr.mxu0 0.0
      %2088 = vmatpush1.xpose.msra.mxu0 0.0
      %2089 = vmatprep.subr.mxu0 0.0
      %2090 = vmatpush1.xpose.msra.mxu0 0.0
      %2091 = vmatprep.subr.mxu0 0.0
      %2092 = vmatpush1.xpose.msra.mxu0 0.0
      %2093 = vmatprep.subr.mxu0 0.0
      %2094 = vmatpush1.xpose.msra.mxu0 0.0
      %2095 = vmatprep.subr.mxu0 0.0
      %2096 = vmatpush1.xpose.msra.mxu0 0.0
      %2097 = vmatprep.subr.mxu0 0.0
      %2098 = vmatpush1.xpose.msra.mxu0 0.0
      %2099 = vmatprep.mubr.f32.mxu0 0.0
      %2100 = vmatmul.mubr.f32.gmra.mrb[0].mxu0 %v2031
      %v2101 = vpop.f32.mrb[0].mxu0
      %v2102 = vadd.f32 %v2028, %v2101
      %v2103 = vpop.f32.mrb[0].mxu0
      %2104 = vdwg.mxu0
      %v2105 = vmul.f32 %v2102, 0.35355338
      %v2106 = vsel %vm813, -1e+30, %v2105
      %2108 = vrot.lane.b32.xlu0 %v1870, 1
      %v2109 = vpop.permute.xlu0 %2108
      %2111 = vrot.lane.b32.xlu0 %v1870, 2
      %v2112 = vpop.permute.xlu0 %2111
      %2114 = vrot.lane.b32.xlu0 %v1870, 3
      %v2115 = vpop.permute.xlu0 %2114
      %2117 = vrot.lane.b32.xlu0 %v1870, 4
      %v2118 = vpop.permute.xlu0 %2117
      %2120 = vrot.lane.b32.xlu0 %v1870, 5
      %v2121 = vpop.permute.xlu0 %2120
      %2123 = vrot.lane.b32.xlu0 %v1870, 6
      %v2124 = vpop.permute.xlu0 %2123
      %2126 = vrot.lane.b32.xlu0 %v1870, 7
      %v2127 = vpop.permute.xlu0 %2126
      %v2129 = vsel %vm652, %v1870, %v2109
      %v2130 = vsel %vm654, %v2129, %v2112
      %v2131 = vsel %vm656, %v2130, %v2115
      %v2132 = vsel %vm658, %v2131, %v2118
      %v2133 = vsel %vm660, %v2132, %v2121
      %v2134 = vsel %vm662, %v2133, %v2124
      %v2135 = vsel %vm664, %v2134, %v2127
      %2136 = vrot.lane.b32.xlu0 %v1993, 120
      %v2137 = vpop.permute.xlu0 %2136
      %2138 = vrot.lane.b32.xlu0 %v894, 88
      %v2139 = vpop.permute.xlu0 %2138
      %2141 = vrot.lane.b32.xlu0 %v2135, 57
      %v2142 = vpop.permute.xlu0 %2141
      %v2144 = vsel %vm904, %v2137, 0
      %v2146 = vsel %vm904, %v2139, 0
      %2148 = vmatprep.subr.mxu0 0.0
      %2149 = vmatpush1.xpose.msra.mxu0 %v2146
      %2150 = vmatprep.subr.mxu0 0.0
      %2151 = vmatpush1.xpose.msra.mxu0 0.0
      %2152 = vmatprep.subr.mxu0 0.0
      %2153 = vmatpush1.xpose.msra.mxu0 0.0
      %2154 = vmatprep.subr.mxu0 0.0
      %2155 = vmatpush1.xpose.msra.mxu0 0.0
      %2156 = vmatprep.subr.mxu0 0.0
      %2157 = vmatpush1.xpose.msra.mxu0 0.0
      %2158 = vmatprep.subr.mxu0 0.0
      %2159 = vmatpush1.xpose.msra.mxu0 0.0
      %2160 = vmatprep.subr.mxu0 0.0
      %2161 = vmatpush1.xpose.msra.mxu0 0.0
      %2162 = vmatprep.subr.mxu0 0.0
      %2163 = vmatpush1.xpose.msra.mxu0 0.0
      %2164 = vmatprep.subr.mxu0 0.0
      %2165 = vmatpush1.xpose.msra.mxu0 0.0
      %2166 = vmatprep.subr.mxu0 0.0
      %2167 = vmatpush1.xpose.msra.mxu0 0.0
      %2168 = vmatprep.subr.mxu0 0.0
      %2169 = vmatpush1.xpose.msra.mxu0 0.0
      %2170 = vmatprep.subr.mxu0 0.0
      %2171 = vmatpush1.xpose.msra.mxu0 0.0
      %2172 = vmatprep.subr.mxu0 0.0
      %2173 = vmatpush1.xpose.msra.mxu0 0.0
      %2174 = vmatprep.subr.mxu0 0.0
      %2175 = vmatpush1.xpose.msra.mxu0 0.0
      %2176 = vmatprep.subr.mxu0 0.0
      %2177 = vmatpush1.xpose.msra.mxu0 0.0
      %2178 = vmatprep.subr.mxu0 0.0
      %2179 = vmatpush1.xpose.msra.mxu0 0.0
      %2180 = vmatprep.subr.mxu0 0.0
      %2181 = vmatpush1.xpose.msra.mxu0 0.0
      %2182 = vmatprep.subr.mxu0 0.0
      %2183 = vmatpush1.xpose.msra.mxu0 0.0
      %2184 = vmatprep.subr.mxu0 0.0
      %2185 = vmatpush1.xpose.msra.mxu0 0.0
      %2186 = vmatprep.subr.mxu0 0.0
      %2187 = vmatpush1.xpose.msra.mxu0 0.0
      %2188 = vmatprep.subr.mxu0 0.0
      %2189 = vmatpush1.xpose.msra.mxu0 0.0
      %2190 = vmatprep.subr.mxu0 0.0
      %2191 = vmatpush1.xpose.msra.mxu0 0.0
      %2192 = vmatprep.subr.mxu0 0.0
      %2193 = vmatpush1.xpose.msra.mxu0 0.0
      %2194 = vmatprep.subr.mxu0 0.0
      %2195 = vmatpush1.xpose.msra.mxu0 0.0
      %2196 = vmatprep.subr.mxu0 0.0
      %2197 = vmatpush1.xpose.msra.mxu0 0.0
      %2198 = vmatprep.subr.mxu0 0.0
      %2199 = vmatpush1.xpose.msra.mxu0 0.0
      %2200 = vmatprep.subr.mxu0 0.0
      %2201 = vmatpush1.xpose.msra.mxu0 0.0
      %2202 = vmatprep.subr.mxu0 0.0
      %2203 = vmatpush1.xpose.msra.mxu0 0.0
      %2204 = vmatprep.subr.mxu0 0.0
      %2205 = vmatpush1.xpose.msra.mxu0 0.0
      %2206 = vmatprep.subr.mxu0 0.0
      %2207 = vmatpush1.xpose.msra.mxu0 0.0
      %2208 = vmatprep.subr.mxu0 0.0
      %2209 = vmatpush1.xpose.msra.mxu0 0.0
      %2210 = vmatprep.subr.mxu0 0.0
      %2211 = vmatpush1.xpose.msra.mxu0 0.0
      %2212 = vmatprep.mubr.f32.mxu0 0.0
      %2213 = vmatmul.mubr.f32.gmra.mrb[0].mxu0 %v2144
      %v2214 = vpop.f32.mrb[0].mxu0
      %v2215 = vadd.f32 %v2142, %v2214
      %v2216 = vpop.f32.mrb[0].mxu0
      %2217 = vdwg.mxu0
      %v2218 = vmul.f32 %v2215, 0.35355338
      %v2219 = vsel %vm813, -1e+30, %v2218
      %2221 = vrot.lane.b32.xlu0 %v1875, 1
      %v2222 = vpop.permute.xlu0 %2221
      %2224 = vrot.lane.b32.xlu0 %v1875, 2
      %v2225 = vpop.permute.xlu0 %2224
      %2227 = vrot.lane.b32.xlu0 %v1875, 3
      %v2228 = vpop.permute.xlu0 %2227
      %2230 = vrot.lane.b32.xlu0 %v1875, 4
      %v2231 = vpop.permute.xlu0 %2230
      %2233 = vrot.lane.b32.xlu0 %v1875, 5
      %v2234 = vpop.permute.xlu0 %2233
      %2236 = vrot.lane.b32.xlu0 %v1875, 6
      %v2237 = vpop.permute.xlu0 %2236
      %2239 = vrot.lane.b32.xlu0 %v1875, 7
      %v2240 = vpop.permute.xlu0 %2239
      %v2242 = vsel %vm652, %v1875, %v2222
      %v2243 = vsel %vm654, %v2242, %v2225
      %v2244 = vsel %vm656, %v2243, %v2228
      %v2245 = vsel %vm658, %v2244, %v2231
      %v2246 = vsel %vm660, %v2245, %v2234
      %v2247 = vsel %vm662, %v2246, %v2237
      %v2248 = vsel %vm664, %v2247, %v2240
      %2249 = vrot.lane.b32.xlu0 %v1993, 112
      %v2250 = vpop.permute.xlu0 %2249
      %2251 = vrot.lane.b32.xlu0 %v894, 80
      %v2252 = vpop.permute.xlu0 %2251
      %2254 = vrot.lane.b32.xlu0 %v2248, 57
      %v2255 = vpop.permute.xlu0 %2254
      %v2257 = vsel %vm904, %v2250, 0
      %v2259 = vsel %vm904, %v2252, 0
      %2261 = vmatprep.subr.mxu0 0.0
      %2262 = vmatpush1.xpose.msra.mxu0 %v2259
      %2263 = vmatprep.subr.mxu0 0.0
      %2264 = vmatpush1.xpose.msra.mxu0 0.0
      %2265 = vmatprep.subr.mxu0 0.0
      %2266 = vmatpush1.xpose.msra.mxu0 0.0
      %2267 = vmatprep.subr.mxu0 0.0
      %2268 = vmatpush1.xpose.msra.mxu0 0.0
      %2269 = vmatprep.subr.mxu0 0.0
      %2270 = vmatpush1.xpose.msra.mxu0 0.0
      %2271 = vmatprep.subr.mxu0 0.0
      %2272 = vmatpush1.xpose.msra.mxu0 0.0
      %2273 = vmatprep.subr.mxu0 0.0
      %2274 = vmatpush1.xpose.msra.mxu0 0.0
      %2275 = vmatprep.subr.mxu0 0.0
      %2276 = vmatpush1.xpose.msra.mxu0 0.0
      %2277 = vmatprep.subr.mxu0 0.0
      %2278 = vmatpush1.xpose.msra.mxu0 0.0
      %2279 = vmatprep.subr.mxu0 0.0
      %2280 = vmatpush1.xpose.msra.mxu0 0.0
      %2281 = vmatprep.subr.mxu0 0.0
      %2282 = vmatpush1.xpose.msra.mxu0 0.0
      %2283 = vmatprep.subr.mxu0 0.0
      %2284 = vmatpush1.xpose.msra.mxu0 0.0
      %2285 = vmatprep.subr.mxu0 0.0
      %2286 = vmatpush1.xpose.msra.mxu0 0.0
      %2287 = vmatprep.subr.mxu0 0.0
      %2288 = vmatpush1.xpose.msra.mxu0 0.0
      %2289 = vmatprep.subr.mxu0 0.0
      %2290 = vmatpush1.xpose.msra.mxu0 0.0
      %2291 = vmatprep.subr.mxu0 0.0
      %2292 = vmatpush1.xpose.msra.mxu0 0.0
      %2293 = vmatprep.subr.mxu0 0.0
      %2294 = vmatpush1.xpose.msra.mxu0 0.0
      %2295 = vmatprep.subr.mxu0 0.0
      %2296 = vmatpush1.xpose.msra.mxu0 0.0
      %2297 = vmatprep.subr.mxu0 0.0
      %2298 = vmatpush1.xpose.msra.mxu0 0.0
      %2299 = vmatprep.subr.mxu0 0.0
      %2300 = vmatpush1.xpose.msra.mxu0 0.0
      %2301 = vmatprep.subr.mxu0 0.0
      %2302 = vmatpush1.xpose.msra.mxu0 0.0
      %2303 = vmatprep.subr.mxu0 0.0
      %2304 = vmatpush1.xpose.msra.mxu0 0.0
      %2305 = vmatprep.subr.mxu0 0.0
      %2306 = vmatpush1.xpose.msra.mxu0 0.0
      %2307 = vmatprep.subr.mxu0 0.0
      %2308 = vmatpush1.xpose.msra.mxu0 0.0
      %2309 = vmatprep.subr.mxu0 0.0
      %2310 = vmatpush1.xpose.msra.mxu0 0.0
      %2311 = vmatprep.subr.mxu0 0.0
      %2312 = vmatpush1.xpose.msra.mxu0 0.0
      %2313 = vmatprep.subr.mxu0 0.0
      %2314 = vmatpush1.xpose.msra.mxu0 0.0
      %2315 = vmatprep.subr.mxu0 0.0
      %2316 = vmatpush1.xpose.msra.mxu0 0.0
      %2317 = vmatprep.subr.mxu0 0.0
      %2318 = vmatpush1.xpose.msra.mxu0 0.0
      %2319 = vmatprep.subr.mxu0 0.0
      %2320 = vmatpush1.xpose.msra.mxu0 0.0
      %2321 = vmatprep.subr.mxu0 0.0
      %2322 = vmatpush1.xpose.msra.mxu0 0.0
      %2323 = vmatprep.subr.mxu0 0.0
      %2324 = vmatpush1.xpose.msra.mxu0 0.0
      %2325 = vmatprep.mubr.f32.mxu0 0.0
      %2326 = vmatmul.mubr.f32.gmra.mrb[0].mxu0 %v2257
      %v2327 = vpop.f32.mrb[0].mxu0
      %v2328 = vadd.f32 %v2255, %v2327
      %v2329 = vpop.f32.mrb[0].mxu0
      %2330 = vdwg.mxu0
      %v2331 = vmul.f32 %v2328, 0.35355338
      %v2332 = vsel %vm813, -1e+30, %v2331
      %2334 = vrot.lane.b32.xlu0 %v1880, 1
      %v2335 = vpop.permute.xlu0 %2334
      %2337 = vrot.lane.b32.xlu0 %v1880, 2
      %v2338 = vpop.permute.xlu0 %2337
      %2340 = vrot.lane.b32.xlu0 %v1880, 3
      %v2341 = vpop.permute.xlu0 %2340
      %2343 = vrot.lane.b32.xlu0 %v1880, 4
      %v2344 = vpop.permute.xlu0 %2343
      %2346 = vrot.lane.b32.xlu0 %v1880, 5
      %v2347 = vpop.permute.xlu0 %2346
      %2349 = vrot.lane.b32.xlu0 %v1880, 6
      %v2350 = vpop.permute.xlu0 %2349
      %2352 = vrot.lane.b32.xlu0 %v1880, 7
      %v2353 = vpop.permute.xlu0 %2352
      %v2355 = vsel %vm652, %v1880, %v2335
      %v2356 = vsel %vm654, %v2355, %v2338
      %v2357 = vsel %vm656, %v2356, %v2341
      %v2358 = vsel %vm658, %v2357, %v2344
      %v2359 = vsel %vm660, %v2358, %v2347
      %v2360 = vsel %vm662, %v2359, %v2350
      %v2361 = vsel %vm664, %v2360, %v2353
      %2362 = vrot.lane.b32.xlu0 %v1993, 104
      %v2363 = vpop.permute.xlu0 %2362
      %2364 = vrot.lane.b32.xlu0 %v894, 72
      %v2365 = vpop.permute.xlu0 %2364
      %2367 = vrot.lane.b32.xlu0 %v2361, 57
      %v2368 = vpop.permute.xlu0 %2367
      %v2370 = vsel %vm904, %v2363, 0
      %v2372 = vsel %vm904, %v2365, 0
      %2374 = vmatprep.subr.mxu0 0.0
      %2375 = vmatpush1.xpose.msra.mxu0 %v2372
      %2376 = vmatprep.subr.mxu0 0.0
      %2377 = vmatpush1.xpose.msra.mxu0 0.0
      %2378 = vmatprep.subr.mxu0 0.0
      %2379 = vmatpush1.xpose.msra.mxu0 0.0
      %2380 = vmatprep.subr.mxu0 0.0
      %2381 = vmatpush1.xpose.msra.mxu0 0.0
      %2382 = vmatprep.subr.mxu0 0.0
      %2383 = vmatpush1.xpose.msra.mxu0 0.0
      %2384 = vmatprep.subr.mxu0 0.0
      %2385 = vmatpush1.xpose.msra.mxu0 0.0
      %2386 = vmatprep.subr.mxu0 0.0
      %2387 = vmatpush1.xpose.msra.mxu0 0.0
      %2388 = vmatprep.subr.mxu0 0.0
      %2389 = vmatpush1.xpose.msra.mxu0 0.0
      %2390 = vmatprep.subr.mxu0 0.0
      %2391 = vmatpush1.xpose.msra.mxu0 0.0
      %2392 = vmatprep.subr.mxu0 0.0
      %2393 = vmatpush1.xpose.msra.mxu0 0.0
      %2394 = vmatprep.subr.mxu0 0.0
      %2395 = vmatpush1.xpose.msra.mxu0 0.0
      %2396 = vmatprep.subr.mxu0 0.0
      %2397 = vmatpush1.xpose.msra.mxu0 0.0
      %2398 = vmatprep.subr.mxu0 0.0
      %2399 = vmatpush1.xpose.msra.mxu0 0.0
      %2400 = vmatprep.subr.mxu0 0.0
      %2401 = vmatpush1.xpose.msra.mxu0 0.0
      %2402 = vmatprep.subr.mxu0 0.0
      %2403 = vmatpush1.xpose.msra.mxu0 0.0
      %2404 = vmatprep.subr.mxu0 0.0
      %2405 = vmatpush1.xpose.msra.mxu0 0.0
      %2406 = vmatprep.subr.mxu0 0.0
      %2407 = vmatpush1.xpose.msra.mxu0 0.0
      %2408 = vmatprep.subr.mxu0 0.0
      %2409 = vmatpush1.xpose.msra.mxu0 0.0
      %2410 = vmatprep.subr.mxu0 0.0
      %2411 = vmatpush1.xpose.msra.mxu0 0.0
      %2412 = vmatprep.subr.mxu0 0.0
      %2413 = vmatpush1.xpose.msra.mxu0 0.0
      %2414 = vmatprep.subr.mxu0 0.0
      %2415 = vmatpush1.xpose.msra.mxu0 0.0
      %2416 = vmatprep.subr.mxu0 0.0
      %2417 = vmatpush1.xpose.msra.mxu0 0.0
      %2418 = vmatprep.subr.mxu0 0.0
      %2419 = vmatpush1.xpose.msra.mxu0 0.0
      %2420 = vmatprep.subr.mxu0 0.0
      %2421 = vmatpush1.xpose.msra.mxu0 0.0
      %2422 = vmatprep.subr.mxu0 0.0
      %2423 = vmatpush1.xpose.msra.mxu0 0.0
      %2424 = vmatprep.subr.mxu0 0.0
      %2425 = vmatpush1.xpose.msra.mxu0 0.0
      %2426 = vmatprep.subr.mxu0 0.0
      %2427 = vmatpush1.xpose.msra.mxu0 0.0
      %2428 = vmatprep.subr.mxu0 0.0
      %2429 = vmatpush1.xpose.msra.mxu0 0.0
      %2430 = vmatprep.subr.mxu0 0.0
      %2431 = vmatpush1.xpose.msra.mxu0 0.0
      %2432 = vmatprep.subr.mxu0 0.0
      %2433 = vmatpush1.xpose.msra.mxu0 0.0
      %2434 = vmatprep.subr.mxu0 0.0
      %2435 = vmatpush1.xpose.msra.mxu0 0.0
      %2436 = vmatprep.subr.mxu0 0.0
      %2437 = vmatpush1.xpose.msra.mxu0 0.0
      %2438 = vmatprep.mubr.f32.mxu0 0.0
      %2439 = vmatmul.mubr.f32.gmra.mrb[0].mxu0 %v2370
      %v2440 = vpop.f32.mrb[0].mxu0
      %v2441 = vadd.f32 %v2368, %v2440
      %v2442 = vpop.f32.mrb[0].mxu0
      %2443 = vdwg.mxu0
      %v2444 = vmul.f32 %v2441, 0.35355338
      %v2445 = vsel %vm813, -1e+30, %v2444
      %v2446 = vmax.f32 %v1935, %v1936
      %v2447 = vmax.f32 %v2446, %v1937
      %v2448 = vmax.f32 %v2447, %v1938
      %v2449 = vmax.f32 %v2448, %v1939
      %v2450 = vmax.f32 %v2449, %v1940
      %v2451 = vmax.f32 %v2450, %v1941
      %v2452 = vmax.f32 %v2451, %v1942
      %v2453 = vmax.f32 %v2452, %v1943
      %v2454 = vmax.f32 %v2453, %v1944
      %v2455 = vmax.f32 %v2454, %v1945
      %v2456 = vmax.f32 %v2455, %v1946
      %v2457 = vmax.f32 %v2456, %v1947
      %2458 = vmax.xlane.f32.xlu0 %v2457
      %v2459 = vpop.xlane.xlu0 %2458
      %v2460 = vmax.f32 %v1948, %v1949
      %v2461 = vmax.f32 %v2460, %v1950
      %v2462 = vmax.f32 %v2461, %v1951
      %v2463 = vmax.f32 %v2462, %v1952
      %v2464 = vmax.f32 %v2463, %v1953
      %v2465 = vmax.f32 %v2464, %v1954
      %v2466 = vmax.f32 %v2465, %v1955
      %v2467 = vmax.f32 %v2466, %v1956
      %v2468 = vmax.f32 %v2467, %v1957
      %v2469 = vmax.f32 %v2468, %v1958
      %v2470 = vmax.f32 %v2469, %v1959
      %v2471 = vmax.f32 %v2470, %v1960
      %2472 = vmax.xlane.f32.xlu0 %v2471
      %v2473 = vpop.xlane.xlu0 %2472
      %v2474 = vmax.f32 %v1961, %v1962
      %v2475 = vmax.f32 %v2474, %v1963
      %v2476 = vmax.f32 %v2475, %v1964
      %v2477 = vmax.f32 %v2476, %v1965
      %v2478 = vmax.f32 %v2477, %v1966
      %v2479 = vmax.f32 %v2478, %v1967
      %v2480 = vmax.f32 %v2479, %v1968
      %v2481 = vmax.f32 %v2480, %v1969
      %v2482 = vmax.f32 %v2481, %v1970
      %v2483 = vmax.f32 %v2482, %v1971
      %v2484 = vmax.f32 %v2483, %v1972
      %v2485 = vmax.f32 %v2484, %v1973
      %2486 = vmax.xlane.f32.xlu0 %v2485
      %v2487 = vpop.xlane.xlu0 %2486
      %v2488 = vmax.f32 %v1974, %v1975
      %v2489 = vmax.f32 %v2488, %v1976
      %v2490 = vmax.f32 %v2489, %v1977
      %v2491 = vmax.f32 %v2490, %v1978
      %v2492 = vmax.f32 %v2491, %v1979
      %v2493 = vmax.f32 %v2492, %v1980
      %v2494 = vmax.f32 %v2493, %v1981
      %v2495 = vmax.f32 %v2494, %v1982
      %v2496 = vmax.f32 %v2495, %v1983
      %v2497 = vmax.f32 %v2496, %v1984
      %v2498 = vmax.f32 %v2497, %v1985
      %v2499 = vmax.f32 %v2498, %v1986
      %2500 = vmax.xlane.f32.xlu0 %v2499
      %v2501 = vpop.xlane.xlu0 %2500
      %v2502 = vsel %vm904, %v2106, -inf
      %2503 = vmax.xlane.f32.xlu0 %v2502
      %v2504 = vpop.xlane.xlu0 %2503
      %v2505 = vsel %vm904, %v2219, -inf
      %2506 = vmax.xlane.f32.xlu0 %v2505
      %v2507 = vpop.xlane.xlu0 %2506
      %v2508 = vsel %vm904, %v2332, -inf
      %2509 = vmax.xlane.f32.xlu0 %v2508
      %v2510 = vpop.xlane.xlu0 %2509
      %v2511 = vsel %vm904, %v2445, -inf
      %2512 = vmax.xlane.f32.xlu0 %v2511
      %v2513 = vpop.xlane.xlu0 %2512
      %v2514 = vmax.f32 %v2459, %v2504
      %v2515 = vmax.f32 %v2473, %v2507
      %v2516 = vmax.f32 %v2487, %v2510
      %v2517 = vmax.f32 %v2501, %v2513
      %v2518 = vsub.f32 %v2106, %v2514
      %v2519 = vsub.f32 %v2219, %v2515
      %v2520 = vsub.f32 %v2332, %v2516
      %v2521 = vsub.f32 %v2445, %v2517
      %v2522 = vmul.f32 %v2518, 1.442695
      %v2523 = vpow.pop %v2522
      %v2524 = vmul.f32 %v2519, 1.442695
      %v2525 = vpow.pop %v2524
      %v2526 = vmul.f32 %v2520, 1.442695
      %v2527 = vpow.pop %v2526
      %v2528 = vmul.f32 %v2521, 1.442695
      %v2529 = vpow.pop %v2528
      %v2530 = vsub.f32 %v1935, %v2514
      %v2531 = vsub.f32 %v1936, %v2514
      %v2532 = vsub.f32 %v1937, %v2514
      %v2533 = vsub.f32 %v1938, %v2514
      %v2534 = vsub.f32 %v1939, %v2514
      %v2535 = vsub.f32 %v1940, %v2514
      %v2536 = vsub.f32 %v1941, %v2514
      %v2537 = vsub.f32 %v1942, %v2514
      %v2538 = vsub.f32 %v1943, %v2514
      %v2539 = vsub.f32 %v1944, %v2514
      %v2540 = vsub.f32 %v1945, %v2514
      %v2541 = vsub.f32 %v1946, %v2514
      %v2542 = vsub.f32 %v1947, %v2514
      %v2543 = vsub.f32 %v1948, %v2515
      %v2544 = vsub.f32 %v1949, %v2515
      %v2545 = vsub.f32 %v1950, %v2515
      %v2546 = vsub.f32 %v1951, %v2515
      %v2547 = vsub.f32 %v1952, %v2515
      %v2548 = vsub.f32 %v1953, %v2515
      %v2549 = vsub.f32 %v1954, %v2515
      %v2550 = vsub.f32 %v1955, %v2515
      %v2551 = vsub.f32 %v1956, %v2515
      %v2552 = vsub.f32 %v1957, %v2515
      %v2553 = vsub.f32 %v1958, %v2515
      %v2554 = vsub.f32 %v1959, %v2515
      %v2555 = vsub.f32 %v1960, %v2515
      %v2556 = vsub.f32 %v1961, %v2516
      %v2557 = vsub.f32 %v1962, %v2516
      %v2558 = vsub.f32 %v1963, %v2516
      %v2559 = vsub.f32 %v1964, %v2516
      %v2560 = vsub.f32 %v1965, %v2516
      %v2561 = vsub.f32 %v1966, %v2516
      %v2562 = vsub.f32 %v1967, %v2516
      %v2563 = vsub.f32 %v1968, %v2516
      %v2564 = vsub.f32 %v1969, %v2516
      %v2565 = vsub.f32 %v1970, %v2516
      %v2566 = vsub.f32 %v1971, %v2516
      %v2567 = vsub.f32 %v1972, %v2516
      %v2568 = vsub.f32 %v1973, %v2516
      %v2569 = vsub.f32 %v1974, %v2517
      %v2570 = vsub.f32 %v1975, %v2517
      %v2571 = vsub.f32 %v1976, %v2517
      %v2572 = vsub.f32 %v1977, %v2517
      %v2573 = vsub.f32 %v1978, %v2517
      %v2574 = vsub.f32 %v1979, %v2517
      %v2575 = vsub.f32 %v1980, %v2517
      %v2576 = vsub.f32 %v1981, %v2517
      %v2577 = vsub.f32 %v1982, %v2517
      %v2578 = vsub.f32 %v1983, %v2517
      %v2579 = vsub.f32 %v1984, %v2517
      %v2580 = vsub.f32 %v1985, %v2517
      %v2581 = vsub.f32 %v1986, %v2517
      %v2582 = vmul.f32 %v2530, 1.442695
      %v2583 = vpow.pop %v2582
      %v2584 = vmul.f32 %v2531, 1.442695
      %v2585 = vpow.pop %v2584
      %v2586 = vmul.f32 %v2532, 1.442695
      %v2587 = vpow.pop %v2586
      %v2588 = vmul.f32 %v2533, 1.442695
      %v2589 = vpow.pop %v2588
      %v2590 = vmul.f32 %v2534, 1.442695
      %v2591 = vpow.pop %v2590
      %v2592 = vmul.f32 %v2535, 1.442695
      %v2593 = vpow.pop %v2592
      %v2594 = vmul.f32 %v2536, 1.442695
      %v2595 = vpow.pop %v2594
      %v2596 = vmul.f32 %v2537, 1.442695
      %v2597 = vpow.pop %v2596
      %v2598 = vmul.f32 %v2538, 1.442695
      %v2599 = vpow.pop %v2598
      %v2600 = vmul.f32 %v2539, 1.442695
      %v2601 = vpow.pop %v2600
      %v2602 = vmul.f32 %v2540, 1.442695
      %v2603 = vpow.pop %v2602
      %v2604 = vmul.f32 %v2541, 1.442695
      %v2605 = vpow.pop %v2604
      %v2606 = vmul.f32 %v2542, 1.442695
      %v2607 = vpow.pop %v2606
      %v2608 = vmul.f32 %v2543, 1.442695
      %v2609 = vpow.pop %v2608
      %v2610 = vmul.f32 %v2544, 1.442695
      %v2611 = vpow.pop %v2610
      %v2612 = vmul.f32 %v2545, 1.442695
      %v2613 = vpow.pop %v2612
      %v2614 = vmul.f32 %v2546, 1.442695
      %v2615 = vpow.pop %v2614
      %v2616 = vmul.f32 %v2547, 1.442695
      %v2617 = vpow.pop %v2616
      %v2618 = vmul.f32 %v2548, 1.442695
      %v2619 = vpow.pop %v2618
      %v2620 = vmul.f32 %v2549, 1.442695
      %v2621 = vpow.pop %v2620
      %v2622 = vmul.f32 %v2550, 1.442695
      %v2623 = vpow.pop %v2622
      %v2624 = vmul.f32 %v2551, 1.442695
      %v2625 = vpow.pop %v2624
      %v2626 = vmul.f32 %v2552, 1.442695
      %v2627 = vpow.pop %v2626
      %v2628 = vmul.f32 %v2553, 1.442695
      %v2629 = vpow.pop %v2628
      %v2630 = vmul.f32 %v2554, 1.442695
      %v2631 = vpow.pop %v2630
      %v2632 = vmul.f32 %v2555, 1.442695
      %v2633 = vpow.pop %v2632
      %v2634 = vmul.f32 %v2556, 1.442695
      %v2635 = vpow.pop %v2634
      %v2636 = vmul.f32 %v2557, 1.442695
      %v2637 = vpow.pop %v2636
      %v2638 = vmul.f32 %v2558, 1.442695
      %v2639 = vpow.pop %v2638
      %v2640 = vmul.f32 %v2559, 1.442695
      %v2641 = vpow.pop %v2640
      %v2642 = vmul.f32 %v2560, 1.442695
      %v2643 = vpow.pop %v2642
      %v2644 = vmul.f32 %v2561, 1.442695
      %v2645 = vpow.pop %v2644
      %v2646 = vmul.f32 %v2562, 1.442695
      %v2647 = vpow.pop %v2646
      %v2648 = vmul.f32 %v2563, 1.442695
      %v2649 = vpow.pop %v2648
      %v2650 = vmul.f32 %v2564, 1.442695
      %v2651 = vpow.pop %v2650
      %v2652 = vmul.f32 %v2565, 1.442695
      %v2653 = vpow.pop %v2652
      %v2654 = vmul.f32 %v2566, 1.442695
      %v2655 = vpow.pop %v2654
      %v2656 = vmul.f32 %v2567, 1.442695
      %v2657 = vpow.pop %v2656
      %v2658 = vmul.f32 %v2568, 1.442695
      %v2659 = vpow.pop %v2658
      %v2660 = vmul.f32 %v2569, 1.442695
      %v2661 = vpow.pop %v2660
      %v2662 = vmul.f32 %v2570, 1.442695
      %v2663 = vpow.pop %v2662
      %v2664 = vmul.f32 %v2571, 1.442695
      %v2665 = vpow.pop %v2664
      %v2666 = vmul.f32 %v2572, 1.442695
      %v2667 = vpow.pop %v2666
      %v2668 = vmul.f32 %v2573, 1.442695
      %v2669 = vpow.pop %v2668
      %v2670 = vmul.f32 %v2574, 1.442695
      %v2671 = vpow.pop %v2670
      %v2672 = vmul.f32 %v2575, 1.442695
      %v2673 = vpow.pop %v2672
      %v2674 = vmul.f32 %v2576, 1.442695
      %v2675 = vpow.pop %v2674
      %v2676 = vmul.f32 %v2577, 1.442695
      %v2677 = vpow.pop %v2676
      %v2678 = vmul.f32 %v2578, 1.442695
      %v2679 = vpow.pop %v2678
      %v2680 = vmul.f32 %v2579, 1.442695
      %v2681 = vpow.pop %v2680
      %v2682 = vmul.f32 %v2580, 1.442695
      %v2683 = vpow.pop %v2682
      %v2684 = vmul.f32 %v2581, 1.442695
      %v2685 = vpow.pop %v2684
      %v2686 = vadd.f32 %v2583, %v2585
      %v2687 = vadd.f32 %v2686, %v2587
      %v2688 = vadd.f32 %v2687, %v2589
      %v2689 = vadd.f32 %v2688, %v2591
      %v2690 = vadd.f32 %v2689, %v2593
      %v2691 = vadd.f32 %v2690, %v2595
      %v2692 = vadd.f32 %v2691, %v2597
      %v2693 = vadd.f32 %v2692, %v2599
      %v2694 = vadd.f32 %v2693, %v2601
      %v2695 = vadd.f32 %v2694, %v2603
      %v2696 = vadd.f32 %v2695, %v2605
      %v2697 = vadd.f32 %v2696, %v2607
      %2698 = vadd.xlane.f32.xlu0 %v2697
      %v2699 = vpop.xlane.xlu0 %2698
      %v2700 = vadd.f32 %v2609, %v2611
      %v2701 = vadd.f32 %v2700, %v2613
      %v2702 = vadd.f32 %v2701, %v2615
      %v2703 = vadd.f32 %v2702, %v2617
      %v2704 = vadd.f32 %v2703, %v2619
      %v2705 = vadd.f32 %v2704, %v2621
      %v2706 = vadd.f32 %v2705, %v2623
      %v2707 = vadd.f32 %v2706, %v2625
      %v2708 = vadd.f32 %v2707, %v2627
      %v2709 = vadd.f32 %v2708, %v2629
      %v2710 = vadd.f32 %v2709, %v2631
      %v2711 = vadd.f32 %v2710, %v2633
      %2712 = vadd.xlane.f32.xlu0 %v2711
      %v2713 = vpop.xlane.xlu0 %2712
      %v2714 = vadd.f32 %v2635, %v2637
      %v2715 = vadd.f32 %v2714, %v2639
      %v2716 = vadd.f32 %v2715, %v2641
      %v2717 = vadd.f32 %v2716, %v2643
      %v2718 = vadd.f32 %v2717, %v2645
      %v2719 = vadd.f32 %v2718, %v2647
      %v2720 = vadd.f32 %v2719, %v2649
      %v2721 = vadd.f32 %v2720, %v2651
      %v2722 = vadd.f32 %v2721, %v2653
      %v2723 = vadd.f32 %v2722, %v2655
      %v2724 = vadd.f32 %v2723, %v2657
      %v2725 = vadd.f32 %v2724, %v2659
      %2726 = vadd.xlane.f32.xlu0 %v2725
      %v2727 = vpop.xlane.xlu0 %2726
      %v2728 = vadd.f32 %v2661, %v2663
      %v2729 = vadd.f32 %v2728, %v2665
      %v2730 = vadd.f32 %v2729, %v2667
      %v2731 = vadd.f32 %v2730, %v2669
      %v2732 = vadd.f32 %v2731, %v2671
      %v2733 = vadd.f32 %v2732, %v2673
      %v2734 = vadd.f32 %v2733, %v2675
      %v2735 = vadd.f32 %v2734, %v2677
      %v2736 = vadd.f32 %v2735, %v2679
      %v2737 = vadd.f32 %v2736, %v2681
      %v2738 = vadd.f32 %v2737, %v2683
      %v2739 = vadd.f32 %v2738, %v2685
      %2740 = vadd.xlane.f32.xlu0 %v2739
      %v2741 = vpop.xlane.xlu0 %2740
      %v2742 = vsel %vm904, %v2523, 0.0
      %2743 = vadd.xlane.f32.xlu0 %v2742
      %v2744 = vpop.xlane.xlu0 %2743
      %v2745 = vsel %vm904, %v2525, 0.0
      %2746 = vadd.xlane.f32.xlu0 %v2745
      %v2747 = vpop.xlane.xlu0 %2746
      %v2748 = vsel %vm904, %v2527, 0.0
      %2749 = vadd.xlane.f32.xlu0 %v2748
      %v2750 = vpop.xlane.xlu0 %2749
      %v2751 = vsel %vm904, %v2529, 0.0
      %2752 = vadd.xlane.f32.xlu0 %v2751
      %v2753 = vpop.xlane.xlu0 %2752
      %v2754 = vadd.f32 %v2699, %v2744
      %v2755 = vadd.f32 %v2713, %v2747
      %v2756 = vadd.f32 %v2727, %v2750
      %v2757 = vadd.f32 %v2741, %v2753
      %v2758 = vrcp.pop %v2754
      %v2759 = vrcp.pop %v2755
      %v2760 = vrcp.pop %v2756
      %v2761 = vrcp.pop %v2757
      %2762 = vrot.lane.b32.xlu0 %v894, 64
      %v2763 = vpop.permute.xlu0 %2762
      %v2766 = vsel %vm904, %v2523, 0
      %2768 = vmatprep.subr.mxu0 0.0
      %2769 = vmatpush1.msra.mxu0 %v2763
      %2770 = vmatprep.subr.mxu0 0.0
      %2771 = vmatpush1.msra.mxu0 0.0
      %2772 = vmatprep.subr.mxu0 0.0
      %2773 = vmatpush1.msra.mxu0 0.0
      %2774 = vmatprep.subr.mxu0 0.0
      %2775 = vmatpush1.msra.mxu0 0.0
      %2776 = vmatprep.subr.mxu0 0.0
      %2777 = vmatpush1.msra.mxu0 0.0
      %2778 = vmatprep.subr.mxu0 0.0
      %2779 = vmatpush1.msra.mxu0 0.0
      %2780 = vmatprep.subr.mxu0 0.0
      %2781 = vmatpush1.msra.mxu0 0.0
      %2782 = vmatprep.subr.mxu0 0.0
      %2783 = vmatpush1.msra.mxu0 0.0
      %2784 = vmatprep.subr.mxu0 0.0
      %2785 = vmatpush1.msra.mxu0 0.0
      %2786 = vmatprep.subr.mxu0 0.0
      %2787 = vmatpush1.msra.mxu0 0.0
      %2788 = vmatprep.subr.mxu0 0.0
      %2789 = vmatpush1.msra.mxu0 0.0
      %2790 = vmatprep.subr.mxu0 0.0
      %2791 = vmatpush1.msra.mxu0 0.0
      %2792 = vmatprep.subr.mxu0 0.0
      %2793 = vmatpush1.msra.mxu0 0.0
      %2794 = vmatprep.subr.mxu0 0.0
      %2795 = vmatpush1.msra.mxu0 0.0
      %2796 = vmatprep.subr.mxu0 0.0
      %2797 = vmatpush1.msra.mxu0 0.0
      %2798 = vmatprep.subr.mxu0 0.0
      %2799 = vmatpush1.msra.mxu0 0.0
      %2800 = vmatprep.subr.mxu0 0.0
      %2801 = vmatpush1.msra.mxu0 0.0
      %2802 = vmatprep.subr.mxu0 0.0
      %2803 = vmatpush1.msra.mxu0 0.0
      %2804 = vmatprep.subr.mxu0 0.0
      %2805 = vmatpush1.msra.mxu0 0.0
      %2806 = vmatprep.subr.mxu0 0.0
      %2807 = vmatpush1.msra.mxu0 0.0
      %2808 = vmatprep.subr.mxu0 0.0
      %2809 = vmatpush1.msra.mxu0 0.0
      %2810 = vmatprep.subr.mxu0 0.0
      %2811 = vmatpush1.msra.mxu0 0.0
      %2812 = vmatprep.subr.mxu0 0.0
      %2813 = vmatpush1.msra.mxu0 0.0
      %2814 = vmatprep.subr.mxu0 0.0
      %2815 = vmatpush1.msra.mxu0 0.0
      %2816 = vmatprep.subr.mxu0 0.0
      %2817 = vmatpush1.msra.mxu0 0.0
      %2818 = vmatprep.subr.mxu0 0.0
      %2819 = vmatpush1.msra.mxu0 0.0
      %2820 = vmatprep.subr.mxu0 0.0
      %2821 = vmatpush1.msra.mxu0 0.0
      %2822 = vmatprep.subr.mxu0 0.0
      %2823 = vmatpush1.msra.mxu0 0.0
      %2824 = vmatprep.subr.mxu0 0.0
      %2825 = vmatpush1.msra.mxu0 0.0
      %2826 = vmatprep.subr.mxu0 0.0
      %2827 = vmatpush1.msra.mxu0 0.0
      %2828 = vmatprep.subr.mxu0 0.0
      %2829 = vmatpush1.msra.mxu0 0.0
      %2830 = vmatprep.subr.mxu0 0.0
      %2831 = vmatpush1.msra.mxu0 0.0
      %2832 = vmatprep.mubr.f32.mxu0 0.0
      %2833 = vmatmul.mubr.f32.gmra.mrb[0].mxu0 %v2766
      %v2834 = vpop.f32.mrb[0].mxu0
      %v2835 = vadd.f32 0.0, %v2834
      %v2836 = vpop.f32.mrb[0].mxu0
      %2837 = vdwg.mxu0
      %v2838 = vmul.f32 %v2835, %v2758
      %2839 = vrot.lane.b32.xlu0 %v894, 56
      %v2840 = vpop.permute.xlu0 %2839
      %v2843 = vsel %vm904, %v2525, 0
      %2845 = vmatprep.subr.mxu0 0.0
      %2846 = vmatpush1.msra.mxu0 %v2840
      %2847 = vmatprep.subr.mxu0 0.0
      %2848 = vmatpush1.msra.mxu0 0.0
      %2849 = vmatprep.subr.mxu0 0.0
      %2850 = vmatpush1.msra.mxu0 0.0
      %2851 = vmatprep.subr.mxu0 0.0
      %2852 = vmatpush1.msra.mxu0 0.0
      %2853 = vmatprep.subr.mxu0 0.0
      %2854 = vmatpush1.msra.mxu0 0.0
      %2855 = vmatprep.subr.mxu0 0.0
      %2856 = vmatpush1.msra.mxu0 0.0
      %2857 = vmatprep.subr.mxu0 0.0
      %2858 = vmatpush1.msra.mxu0 0.0
      %2859 = vmatprep.subr.mxu0 0.0
      %2860 = vmatpush1.msra.mxu0 0.0
      %2861 = vmatprep.subr.mxu0 0.0
      %2862 = vmatpush1.msra.mxu0 0.0
      %2863 = vmatprep.subr.mxu0 0.0
      %2864 = vmatpush1.msra.mxu0 0.0
      %2865 = vmatprep.subr.mxu0 0.0
      %2866 = vmatpush1.msra.mxu0 0.0
      %2867 = vmatprep.subr.mxu0 0.0
      %2868 = vmatpush1.msra.mxu0 0.0
      %2869 = vmatprep.subr.mxu0 0.0
      %2870 = vmatpush1.msra.mxu0 0.0
      %2871 = vmatprep.subr.mxu0 0.0
      %2872 = vmatpush1.msra.mxu0 0.0
      %2873 = vmatprep.subr.mxu0 0.0
      %2874 = vmatpush1.msra.mxu0 0.0
      %2875 = vmatprep.subr.mxu0 0.0
      %2876 = vmatpush1.msra.mxu0 0.0
      %2877 = vmatprep.subr.mxu0 0.0
      %2878 = vmatpush1.msra.mxu0 0.0
      %2879 = vmatprep.subr.mxu0 0.0
      %2880 = vmatpush1.msra.mxu0 0.0
      %2881 = vmatprep.subr.mxu0 0.0
      %2882 = vmatpush1.msra.mxu0 0.0
      %2883 = vmatprep.subr.mxu0 0.0
      %2884 = vmatpush1.msra.mxu0 0.0
      %2885 = vmatprep.subr.mxu0 0.0
      %2886 = vmatpush1.msra.mxu0 0.0
      %2887 = vmatprep.subr.mxu0 0.0
      %2888 = vmatpush1.msra.mxu0 0.0
      %2889 = vmatprep.subr.mxu0 0.0
      %2890 = vmatpush1.msra.mxu0 0.0
      %2891 = vmatprep.subr.mxu0 0.0
      %2892 = vmatpush1.msra.mxu0 0.0
      %2893 = vmatprep.subr.mxu0 0.0
      %2894 = vmatpush1.msra.mxu0 0.0
      %2895 = vmatprep.subr.mxu0 0.0
      %2896 = vmatpush1.msra.mxu0 0.0
      %2897 = vmatprep.subr.mxu0 0.0
      %2898 = vmatpush1.msra.mxu0 0.0
      %2899 = vmatprep.subr.mxu0 0.0
      %2900 = vmatpush1.msra.mxu0 0.0
      %2901 = vmatprep.subr.mxu0 0.0
      %2902 = vmatpush1.msra.mxu0 0.0
      %2903 = vmatprep.subr.mxu0 0.0
      %2904 = vmatpush1.msra.mxu0 0.0
      %2905 = vmatprep.subr.mxu0 0.0
      %2906 = vmatpush1.msra.mxu0 0.0
      %2907 = vmatprep.subr.mxu0 0.0
      %2908 = vmatpush1.msra.mxu0 0.0
      %2909 = vmatprep.mubr.f32.mxu0 0.0
      %2910 = vmatmul.mubr.f32.gmra.mrb[0].mxu0 %v2843
      %v2911 = vpop.f32.mrb[0].mxu0
      %v2912 = vadd.f32 0.0, %v2911
      %v2913 = vpop.f32.mrb[0].mxu0
      %2914 = vdwg.mxu0
      %v2915 = vmul.f32 %v2912, %v2759
      %2916 = vrot.lane.b32.xlu0 %v894, 48
      %v2917 = vpop.permute.xlu0 %2916
      %v2920 = vsel %vm904, %v2527, 0
      %2922 = vmatprep.subr.mxu0 0.0
      %2923 = vmatpush1.msra.mxu0 %v2917
      %2924 = vmatprep.subr.mxu0 0.0
      %2925 = vmatpush1.msra.mxu0 0.0
      %2926 = vmatprep.subr.mxu0 0.0
      %2927 = vmatpush1.msra.mxu0 0.0
      %2928 = vmatprep.subr.mxu0 0.0
      %2929 = vmatpush1.msra.mxu0 0.0
      %2930 = vmatprep.subr.mxu0 0.0
      %2931 = vmatpush1.msra.mxu0 0.0
      %2932 = vmatprep.subr.mxu0 0.0
      %2933 = vmatpush1.msra.mxu0 0.0
      %2934 = vmatprep.subr.mxu0 0.0
      %2935 = vmatpush1.msra.mxu0 0.0
      %2936 = vmatprep.subr.mxu0 0.0
      %2937 = vmatpush1.msra.mxu0 0.0
      %2938 = vmatprep.subr.mxu0 0.0
      %2939 = vmatpush1.msra.mxu0 0.0
      %2940 = vmatprep.subr.mxu0 0.0
      %2941 = vmatpush1.msra.mxu0 0.0
      %2942 = vmatprep.subr.mxu0 0.0
      %2943 = vmatpush1.msra.mxu0 0.0
      %2944 = vmatprep.subr.mxu0 0.0
      %2945 = vmatpush1.msra.mxu0 0.0
      %2946 = vmatprep.subr.mxu0 0.0
      %2947 = vmatpush1.msra.mxu0 0.0
      %2948 = vmatprep.subr.mxu0 0.0
      %2949 = vmatpush1.msra.mxu0 0.0
      %2950 = vmatprep.subr.mxu0 0.0
      %2951 = vmatpush1.msra.mxu0 0.0
      %2952 = vmatprep.subr.mxu0 0.0
      %2953 = vmatpush1.msra.mxu0 0.0
      %2954 = vmatprep.subr.mxu0 0.0
      %2955 = vmatpush1.msra.mxu0 0.0
      %2956 = vmatprep.subr.mxu0 0.0
      %2957 = vmatpush1.msra.mxu0 0.0
      %2958 = vmatprep.subr.mxu0 0.0
      %2959 = vmatpush1.msra.mxu0 0.0
      %2960 = vmatprep.subr.mxu0 0.0
      %2961 = vmatpush1.msra.mxu0 0.0
      %2962 = vmatprep.subr.mxu0 0.0
      %2963 = vmatpush1.msra.mxu0 0.0
      %2964 = vmatprep.subr.mxu0 0.0
      %2965 = vmatpush1.msra.mxu0 0.0
      %2966 = vmatprep.subr.mxu0 0.0
      %2967 = vmatpush1.msra.mxu0 0.0
      %2968 = vmatprep.subr.mxu0 0.0
      %2969 = vmatpush1.msra.mxu0 0.0
      %2970 = vmatprep.subr.mxu0 0.0
      %2971 = vmatpush1.msra.mxu0 0.0
      %2972 = vmatprep.subr.mxu0 0.0
      %2973 = vmatpush1.msra.mxu0 0.0
      %2974 = vmatprep.subr.mxu0 0.0
      %2975 = vmatpush1.msra.mxu0 0.0
      %2976 = vmatprep.subr.mxu0 0.0
      %2977 = vmatpush1.msra.mxu0 0.0
      %2978 = vmatprep.subr.mxu0 0.0
      %2979 = vmatpush1.msra.mxu0 0.0
      %2980 = vmatprep.subr.mxu0 0.0
      %2981 = vmatpush1.msra.mxu0 0.0
      %2982 = vmatprep.subr.mxu0 0.0
      %2983 = vmatpush1.msra.mxu0 0.0
      %2984 = vmatprep.subr.mxu0 0.0
      %2985 = vmatpush1.msra.mxu0 0.0
      %2986 = vmatprep.mubr.f32.mxu0 0.0
      %2987 = vmatmul.mubr.f32.gmra.mrb[0].mxu0 %v2920
      %v2988 = vpop.f32.mrb[0].mxu0
      %v2989 = vadd.f32 0.0, %v2988
      %v2990 = vpop.f32.mrb[0].mxu0
      %2991 = vdwg.mxu0
      %v2992 = vmul.f32 %v2989, %v2760
      %2993 = vrot.lane.b32.xlu0 %v894, 40
      %v2994 = vpop.permute.xlu0 %2993
      %v2997 = vsel %vm904, %v2529, 0
      %2999 = vmatprep.subr.mxu0 0.0
      %3000 = vmatpush1.msra.mxu0 %v2994
      %3001 = vmatprep.subr.mxu0 0.0
      %3002 = vmatpush1.msra.mxu0 0.0
      %3003 = vmatprep.subr.mxu0 0.0
      %3004 = vmatpush1.msra.mxu0 0.0
      %3005 = vmatprep.subr.mxu0 0.0
      %3006 = vmatpush1.msra.mxu0 0.0
      %3007 = vmatprep.subr.mxu0 0.0
      %3008 = vmatpush1.msra.mxu0 0.0
      %3009 = vmatprep.subr.mxu0 0.0
      %3010 = vmatpush1.msra.mxu0 0.0
      %3011 = vmatprep.subr.mxu0 0.0
      %3012 = vmatpush1.msra.mxu0 0.0
      %3013 = vmatprep.subr.mxu0 0.0
      %3014 = vmatpush1.msra.mxu0 0.0
      %3015 = vmatprep.subr.mxu0 0.0
      %3016 = vmatpush1.msra.mxu0 0.0
      %3017 = vmatprep.subr.mxu0 0.0
      %3018 = vmatpush1.msra.mxu0 0.0
      %3019 = vmatprep.subr.mxu0 0.0
      %3020 = vmatpush1.msra.mxu0 0.0
      %3021 = vmatprep.subr.mxu0 0.0
      %3022 = vmatpush1.msra.mxu0 0.0
      %3023 = vmatprep.subr.mxu0 0.0
      %3024 = vmatpush1.msra.mxu0 0.0
      %3025 = vmatprep.subr.mxu0 0.0
      %3026 = vmatpush1.msra.mxu0 0.0
      %3027 = vmatprep.subr.mxu0 0.0
      %3028 = vmatpush1.msra.mxu0 0.0
      %3029 = vmatprep.subr.mxu0 0.0
      %3030 = vmatpush1.msra.mxu0 0.0
      %3031 = vmatprep.subr.mxu0 0.0
      %3032 = vmatpush1.msra.mxu0 0.0
      %3033 = vmatprep.subr.mxu0 0.0
      %3034 = vmatpush1.msra.mxu0 0.0
      %3035 = vmatprep.subr.mxu0 0.0
      %3036 = vmatpush1.msra.mxu0 0.0
      %3037 = vmatprep.subr.mxu0 0.0
      %3038 = vmatpush1.msra.mxu0 0.0
      %3039 = vmatprep.subr.mxu0 0.0
      %3040 = vmatpush1.msra.mxu0 0.0
      %3041 = vmatprep.subr.mxu0 0.0
      %3042 = vmatpush1.msra.mxu0 0.0
      %3043 = vmatprep.subr.mxu0 0.0
      %3044 = vmatpush1.msra.mxu0 0.0
      %3045 = vmatprep.subr.mxu0 0.0
      %3046 = vmatpush1.msra.mxu0 0.0
      %3047 = vmatprep.subr.mxu0 0.0
      %3048 = vmatpush1.msra.mxu0 0.0
      %3049 = vmatprep.subr.mxu0 0.0
      %3050 = vmatpush1.msra.mxu0 0.0
      %3051 = vmatprep.subr.mxu0 0.0
      %3052 = vmatpush1.msra.mxu0 0.0
      %3053 = vmatprep.subr.mxu0 0.0
      %3054 = vmatpush1.msra.mxu0 0.0
      %3055 = vmatprep.subr.mxu0 0.0
      %3056 = vmatpush1.msra.mxu0 0.0
      %3057 = vmatprep.subr.mxu0 0.0
      %3058 = vmatpush1.msra.mxu0 0.0
      %3059 = vmatprep.subr.mxu0 0.0
      %3060 = vmatpush1.msra.mxu0 0.0
      %3061 = vmatprep.subr.mxu0 0.0
      %3062 = vmatpush1.msra.mxu0 0.0
      %3063 = vmatprep.mubr.f32.mxu0 0.0
      %3064 = vmatmul.mubr.f32.gmra.mrb[0].mxu0 %v2997
      %v3065 = vpop.f32.mrb[0].mxu0
      %v3066 = vadd.f32 0.0, %v3065
      %v3067 = vpop.f32.mrb[0].mxu0
      %3068 = vdwg.mxu0
      %v3069 = vmul.f32 %v3066, %v2761
      %3071 = vrot.lane.b32.xlu0 %v2915, 8
      %v3072 = vpop.permute.xlu0 %3071
      %3075 = vrot.lane.b32.xlu0 %v2992, 16
      %v3076 = vpop.permute.xlu0 %3075
      %3079 = vrot.lane.b32.xlu0 %v3069, 24
      %v3080 = vpop.permute.xlu0 %3079
      %v3082 = vsel %vm904, %v2838, %v3072
      %vm3083 = vcmask 130048
      %v3084 = vsel %vm3083, %v3082, %v3076
      %vm3085 = vcmask 195584
      %v3086 = vsel %vm3085, %v3084, %v3080
      %v3087 = vld [vmem:[%s6] sm:$0xff]
      %v3088 = vld [vmem:[%s6 + $0x8] sm:$0xff]
      %v3089 = vld [vmem:[%s6 + $0x10] sm:$0xff]
      %v3090 = vld [vmem:[%s6 + $0x18] sm:$0xff]
      %v3092 = vsel %vm670, %v3086, 0
      %3094 = vmatprep.subr.mxu0 0.0
      %3095 = vmatpush1.msra.mxu0 %v3087
      %3096 = vmatprep.subr.mxu0 0.0
      %3097 = vmatpush1.msra.mxu0 %v3088
      %3098 = vmatprep.subr.mxu0 0.0
      %3099 = vmatpush1.msra.mxu0 %v3089
      %3100 = vmatprep.subr.mxu0 0.0
      %3101 = vmatpush1.msra.mxu0 %v3090
      %3102 = vmatprep.subr.mxu0 0.0
      %3103 = vmatpush1.msra.mxu0 0.0
      %3104 = vmatprep.subr.mxu0 0.0
      %3105 = vmatpush1.msra.mxu0 0.0
      %3106 = vmatprep.subr.mxu0 0.0
      %3107 = vmatpush1.msra.mxu0 0.0
      %3108 = vmatprep.subr.mxu0 0.0
      %3109 = vmatpush1.msra.mxu0 0.0
      %3110 = vmatprep.subr.mxu0 0.0
      %3111 = vmatpush1.msra.mxu0 0.0
      %3112 = vmatprep.subr.mxu0 0.0
      %3113 = vmatpush1.msra.mxu0 0.0
      %3114 = vmatprep.subr.mxu0 0.0
      %3115 = vmatpush1.msra.mxu0 0.0
      %3116 = vmatprep.subr.mxu0 0.0
      %3117 = vmatpush1.msra.mxu0 0.0
      %3118 = vmatprep.subr.mxu0 0.0
      %3119 = vmatpush1.msra.mxu0 0.0
      %3120 = vmatprep.subr.mxu0 0.0
      %3121 = vmatpush1.msra.mxu0 0.0
      %3122 = vmatprep.subr.mxu0 0.0
      %3123 = vmatpush1.msra.mxu0 0.0
      %3124 = vmatprep.subr.mxu0 0.0
      %3125 = vmatpush1.msra.mxu0 0.0
      %3126 = vmatprep.subr.mxu0 0.0
      %3127 = vmatpush1.msra.mxu0 0.0
      %3128 = vmatprep.subr.mxu0 0.0
      %3129 = vmatpush1.msra.mxu0 0.0
      %3130 = vmatprep.subr.mxu0 0.0
      %3131 = vmatpush1.msra.mxu0 0.0
      %3132 = vmatprep.subr.mxu0 0.0
      %3133 = vmatpush1.msra.mxu0 0.0
      %3134 = vmatprep.subr.mxu0 0.0
      %3135 = vmatpush1.msra.mxu0 0.0
      %3136 = vmatprep.subr.mxu0 0.0
      %3137 = vmatpush1.msra.mxu0 0.0
      %3138 = vmatprep.subr.mxu0 0.0
      %3139 = vmatpush1.msra.mxu0 0.0
      %3140 = vmatprep.subr.mxu0 0.0
      %3141 = vmatpush1.msra.mxu0 0.0
      %3142 = vmatprep.subr.mxu0 0.0
      %3143 = vmatpush1.msra.mxu0 0.0
      %3144 = vmatprep.subr.mxu0 0.0
      %3145 = vmatpush1.msra.mxu0 0.0
      %3146 = vmatprep.subr.mxu0 0.0
      %3147 = vmatpush1.msra.mxu0 0.0
      %3148 = vmatprep.subr.mxu0 0.0
      %3149 = vmatpush1.msra.mxu0 0.0
      %3150 = vmatprep.subr.mxu0 0.0
      %3151 = vmatpush1.msra.mxu0 0.0
      %3152 = vmatprep.subr.mxu0 0.0
      %3153 = vmatpush1.msra.mxu0 0.0
      %3154 = vmatprep.subr.mxu0 0.0
      %3155 = vmatpush1.msra.mxu0 0.0
      %3156 = vmatprep.subr.mxu0 0.0
      %3157 = vmatpush1.msra.mxu0 0.0
      %3158 = vmatprep.mubr.f32.mxu0 0.0
      %3159 = vmatmul.mubr.f32.gmra.mrb[0].mxu0 %v3092
      %v3160 = vpop.f32.mrb[0].mxu0
      %v3161 = vadd.f32 0.0, %v3160
      %v3162 = vpop.f32.mrb[0].mxu0
      %3163 = vdwg.mxu0
      %v3164 = vadd.f32 %v744, %v3161
      %v3165 = vld [vmem:[%s9] sm:$0x1]
      %v3166 = vld [vmem:[%s10] sm:$0x1]
      %v3167 = vsel %vm670, %v3164, 0.0
      %3168 = vadd.xlane.f32.xlu0 %v3167
      %v3169 = vpop.xlane.xlu0 %3168
      %v3170 = vrcp.pop 32.0
      %v3171 = vmul.f32 %v3169, %v3170
      %v3172 = vsub.f32 %v3164, %v3171
      %v3173 = vmul.f32 %v3172, %v3172
      %v3174 = vsel %vm670, %v3173, 0.0
      %3175 = vadd.xlane.f32.xlu0 %v3174
      %v3176 = vpop.xlane.xlu0 %3175
      %v3177 = vmul.f32 %v3176, %v3170
      %v3178 = vadd.f32 %v3177, 1e-05
      %v3179 = vrsqrt.pop %v3178
      %v3180 = vmul.f32 %v3172, %v3179
      %v3182 = vlaneseq
      %v3183 = vshrl.u32 %v3182, 7
      %v3184 = vsub.s32 0, %v3183
      %v3185 = vrot.slane %v3165, %v3184
      %v3187 = vmul.f32 %v3180, %v3185
      %v3189 = vlaneseq
      %v3190 = vshrl.u32 %v3189, 7
      %v3191 = vsub.s32 0, %v3190
      %v3192 = vrot.slane %v3166, %v3191
      %v3194 = vadd.f32 %v3187, %v3192
      %v3195 = vld [vmem:[%s11] sm:$0xff]
      %v3196 = vld [vmem:[%s11 + $0x8] sm:$0xff]
      %v3197 = vld [vmem:[%s11 + $0x10] sm:$0xff]
      %v3198 = vld [vmem:[%s11 + $0x18] sm:$0xff]
      %v3199 = vld [vmem:[%s12] sm:$0x1]
      %v3201 = vlaneseq
      %v3202 = vshrl.u32 %v3201, 7
      %v3203 = vsub.s32 0, %v3202
      %v3204 = vrot.slane %v3199, %v3203
      %v3207 = vsel %vm670, %v3194, 0
      %3209 = vmatprep.subr.mxu0 0.0
      %3210 = vmatpush1.msra.mxu0 %v3195
      %3211 = vmatprep.subr.mxu0 0.0
      %3212 = vmatpush1.msra.mxu0 %v3196
      %3213 = vmatprep.subr.mxu0 0.0
      %3214 = vmatpush1.msra.mxu0 %v3197
      %3215 = vmatprep.subr.mxu0 0.0
      %3216 = vmatpush1.msra.mxu0 %v3198
      %3217 = vmatprep.subr.mxu0 0.0
      %3218 = vmatpush1.msra.mxu0 0.0
      %3219 = vmatprep.subr.mxu0 0.0
      %3220 = vmatpush1.msra.mxu0 0.0
      %3221 = vmatprep.subr.mxu0 0.0
      %3222 = vmatpush1.msra.mxu0 0.0
      %3223 = vmatprep.subr.mxu0 0.0
      %3224 = vmatpush1.msra.mxu0 0.0
      %3225 = vmatprep.subr.mxu0 0.0
      %3226 = vmatpush1.msra.mxu0 0.0
      %3227 = vmatprep.subr.mxu0 0.0
      %3228 = vmatpush1.msra.mxu0 0.0
      %3229 = vmatprep.subr.mxu0 0.0
      %3230 = vmatpush1.msra.mxu0 0.0
      %3231 = vmatprep.subr.mxu0 0.0
      %3232 = vmatpush1.msra.mxu0 0.0
      %3233 = vmatprep.subr.mxu0 0.0
      %3234 = vmatpush1.msra.mxu0 0.0
      %3235 = vmatprep.subr.mxu0 0.0
      %3236 = vmatpush1.msra.mxu0 0.0
      %3237 = vmatprep.subr.mxu0 0.0
      %3238 = vmatpush1.msra.mxu0 0.0
      %3239 = vmatprep.subr.mxu0 0.0
      %3240 = vmatpush1.msra.mxu0 0.0
      %3241 = vmatprep.subr.mxu0 0.0
      %3242 = vmatpush1.msra.mxu0 0.0
      %3243 = vmatprep.subr.mxu0 0.0
      %3244 = vmatpush1.msra.mxu0 0.0
      %3245 = vmatprep.subr.mxu0 0.0
      %3246 = vmatpush1.msra.mxu0 0.0
      %3247 = vmatprep.subr.mxu0 0.0
      %3248 = vmatpush1.msra.mxu0 0.0
      %3249 = vmatprep.subr.mxu0 0.0
      %3250 = vmatpush1.msra.mxu0 0.0
      %3251 = vmatprep.subr.mxu0 0.0
      %3252 = vmatpush1.msra.mxu0 0.0
      %3253 = vmatprep.subr.mxu0 0.0
      %3254 = vmatpush1.msra.mxu0 0.0
      %3255 = vmatprep.subr.mxu0 0.0
      %3256 = vmatpush1.msra.mxu0 0.0
      %3257 = vmatprep.subr.mxu0 0.0
      %3258 = vmatpush1.msra.mxu0 0.0
      %3259 = vmatprep.subr.mxu0 0.0
      %3260 = vmatpush1.msra.mxu0 0.0
      %3261 = vmatprep.subr.mxu0 0.0
      %3262 = vmatpush1.msra.mxu0 0.0
      %3263 = vmatprep.subr.mxu0 0.0
      %3264 = vmatpush1.msra.mxu0 0.0
      %3265 = vmatprep.subr.mxu0 0.0
      %3266 = vmatpush1.msra.mxu0 0.0
      %3267 = vmatprep.subr.mxu0 0.0
      %3268 = vmatpush1.msra.mxu0 0.0
      %3269 = vmatprep.subr.mxu0 0.0
      %3270 = vmatpush1.msra.mxu0 0.0
      %3271 = vmatprep.subr.mxu0 0.0
      %3272 = vmatpush1.msra.mxu0 0.0
      %3273 = vmatprep.mubr.f32.mxu0 0.0
      %3274 = vmatmul.mubr.f32.gmra.mrb[0].mxu0 %v3207
      %v3275 = vpop.f32.mrb[0].mxu0
      %v3276 = vadd.f32 %v3204, %v3275
      %v3277 = vpop.f32.mrb[0].mxu0
      %3278 = vdwg.mxu0
      %v3279 = vmax.f32 %v3276, 0.0
      %v3280 = vld [vmem:[%s13] sm:$0xff]
      %v3281 = vld [vmem:[%s13 + $0x8] sm:$0xff]
      %v3282 = vld [vmem:[%s13 + $0x10] sm:$0xff]
      %v3283 = vld [vmem:[%s13 + $0x18] sm:$0xff]
      %v3284 = vld [vmem:[%s13 + $0x20] sm:$0xff]
      %v3285 = vld [vmem:[%s13 + $0x28] sm:$0xff]
      %v3286 = vld [vmem:[%s13 + $0x30] sm:$0xff]
      %v3287 = vld [vmem:[%s13 + $0x38] sm:$0xff]
      %v3288 = vld [vmem:[%s14] sm:$0x1]
      %v3290 = vlaneseq
      %v3291 = vshrl.u32 %v3290, 7
      %v3292 = vsub.s32 0, %v3291
      %v3293 = vrot.slane %v3288, %v3292
      %vm3295 = vcmask 523264
      %v3297 = vsel %vm3295, %v3279, 0
      %3299 = vmatprep.subr.mxu0 0.0
      %3300 = vmatpush1.msra.mxu0 %v3280
      %3301 = vmatprep.subr.mxu0 0.0
      %3302 = vmatpush1.msra.mxu0 %v3281
      %3303 = vmatprep.subr.mxu0 0.0
      %3304 = vmatpush1.msra.mxu0 %v3282
      %3305 = vmatprep.subr.mxu0 0.0
      %3306 = vmatpush1.msra.mxu0 %v3283
      %3307 = vmatprep.subr.mxu0 0.0
      %3308 = vmatpush1.msra.mxu0 %v3284
      %3309 = vmatprep.subr.mxu0 0.0
      %3310 = vmatpush1.msra.mxu0 %v3285
      %3311 = vmatprep.subr.mxu0 0.0
      %3312 = vmatpush1.msra.mxu0 %v3286
      %3313 = vmatprep.subr.mxu0 0.0
      %3314 = vmatpush1.msra.mxu0 %v3287
      %3315 = vmatprep.subr.mxu0 0.0
      %3316 = vmatpush1.msra.mxu0 0.0
      %3317 = vmatprep.subr.mxu0 0.0
      %3318 = vmatpush1.msra.mxu0 0.0
      %3319 = vmatprep.subr.mxu0 0.0
      %3320 = vmatpush1.msra.mxu0 0.0
      %3321 = vmatprep.subr.mxu0 0.0
      %3322 = vmatpush1.msra.mxu0 0.0
      %3323 = vmatprep.subr.mxu0 0.0
      %3324 = vmatpush1.msra.mxu0 0.0
      %3325 = vmatprep.subr.mxu0 0.0
      %3326 = vmatpush1.msra.mxu0 0.0
      %3327 = vmatprep.subr.mxu0 0.0
      %3328 = vmatpush1.msra.mxu0 0.0
      %3329 = vmatprep.subr.mxu0 0.0
      %3330 = vmatpush1.msra.mxu0 0.0
      %3331 = vmatprep.subr.mxu0 0.0
      %3332 = vmatpush1.msra.mxu0 0.0
      %3333 = vmatprep.subr.mxu0 0.0
      %3334 = vmatpush1.msra.mxu0 0.0
      %3335 = vmatprep.subr.mxu0 0.0
      %3336 = vmatpush1.msra.mxu0 0.0
      %3337 = vmatprep.subr.mxu0 0.0
      %3338 = vmatpush1.msra.mxu0 0.0
      %3339 = vmatprep.subr.mxu0 0.0
      %3340 = vmatpush1.msra.mxu0 0.0
      %3341 = vmatprep.subr.mxu0 0.0
      %3342 = vmatpush1.msra.mxu0 0.0
      %3343 = vmatprep.subr.mxu0 0.0
      %3344 = vmatpush1.msra.mxu0 0.0
      %3345 = vmatprep.subr.mxu0 0.0
      %3346 = vmatpush1.msra.mxu0 0.0
      %3347 = vmatprep.subr.mxu0 0.0
      %3348 = vmatpush1.msra.mxu0 0.0
      %3349 = vmatprep.subr.mxu0 0.0
      %3350 = vmatpush1.msra.mxu0 0.0
      %3351 = vmatprep.subr.mxu0 0.0
      %3352 = vmatpush1.msra.mxu0 0.0
      %3353 = vmatprep.subr.mxu0 0.0
      %3354 = vmatpush1.msra.mxu0 0.0
      %3355 = vmatprep.subr.mxu0 0.0
      %3356 = vmatpush1.msra.mxu0 0.0
      %3357 = vmatprep.subr.mxu0 0.0
      %3358 = vmatpush1.msra.mxu0 0.0
      %3359 = vmatprep.subr.mxu0 0.0
      %3360 = vmatpush1.msra.mxu0 0.0
      %3361 = vmatprep.subr.mxu0 0.0
      %3362 = vmatpush1.msra.mxu0 0.0
      %3363 = vmatprep.mubr.f32.mxu0 0.0
      %3364 = vmatmul.mubr.f32.gmra.mrb[0].mxu0 %v3297
      %v3365 = vpop.f32.mrb[0].mxu0
      %v3366 = vadd.f32 %v3293, %v3365
      %v3367 = vpop.f32.mrb[0].mxu0
      %3368 = vdwg.mxu0
      %v3369 = vadd.f32 %v3194, %v3366
      %v3370 = vld [vmem:[%s15] sm:$0x1]
      %v3371 = vld [vmem:[%s16] sm:$0x1]
      %v3372 = vsel %vm670, %v3369, 0.0
      %3373 = vadd.xlane.f32.xlu0 %v3372
      %v3374 = vpop.xlane.xlu0 %3373
      %v3375 = vmul.f32 %v3374, %v3170
      %v3376 = vsub.f32 %v3369, %v3375
      %v3377 = vmul.f32 %v3376, %v3376
      %v3378 = vsel %vm670, %v3377, 0.0
      %3379 = vadd.xlane.f32.xlu0 %v3378
      %v3380 = vpop.xlane.xlu0 %3379
      %v3381 = vmul.f32 %v3380, %v3170
      %v3382 = vadd.f32 %v3381, 1e-05
      %v3383 = vrsqrt.pop %v3382
      %v3384 = vmul.f32 %v3376, %v3383
      %v3386 = vlaneseq
      %v3387 = vshrl.u32 %v3386, 7
      %v3388 = vsub.s32 0, %v3387
      %v3389 = vrot.slane %v3370, %v3388
      %v3391 = vmul.f32 %v3384, %v3389
      %v3393 = vlaneseq
      %v3394 = vshrl.u32 %v3393, 7
      %v3395 = vsub.s32 0, %v3394
      %v3396 = vrot.slane %v3371, %v3395
      %v3398 = vadd.f32 %v3391, %v3396
      %s3399 = scalar_lea.vmem %s4, 32
      %v3400 = vld [vmem:[%s3399] sm:$0xff]
      %v3401 = vld [vmem:[%s3399 + $0x8] sm:$0xff]
      %v3402 = vld [vmem:[%s3399 + $0x10] sm:$0xff]
      %v3403 = vld [vmem:[%s3399 + $0x18] sm:$0xff]
      %s3404 = scalar_lea.vmem %s5, 32
      %v3405 = vld [vmem:[%s3404] sm:$0xff]
      %v3406 = vld [vmem:[%s3404 + $0x8] sm:$0xff]
      %v3407 = vld [vmem:[%s3404 + $0x10] sm:$0xff]
      %v3408 = vld [vmem:[%s3404 + $0x18] sm:$0xff]
      %s3409 = scalar_lea.vmem %s7, 1
      %v3410 = vld [vmem:[%s3409] sm:$0x1]
      %s3411 = scalar_lea.vmem %s8, 1
      %v3412 = vld [vmem:[%s3411] sm:$0x1]
      %v3414 = vsel %vm670, %v3398, 0
      %3416 = vmatprep.subr.mxu0 0.0
      %3417 = vmatpush1.msra.mxu0 %v3400
      %3418 = vmatprep.subr.mxu0 0.0
      %3419 = vmatpush1.msra.mxu0 %v3401
      %3420 = vmatprep.subr.mxu0 0.0
      %3421 = vmatpush1.msra.mxu0 %v3402
      %3422 = vmatprep.subr.mxu0 0.0
      %3423 = vmatpush1.msra.mxu0 %v3403
      %3424 = vmatprep.subr.mxu0 0.0
      %3425 = vmatpush1.msra.mxu0 0.0
      %3426 = vmatprep.subr.mxu0 0.0
      %3427 = vmatpush1.msra.mxu0 0.0
      %3428 = vmatprep.subr.mxu0 0.0
      %3429 = vmatpush1.msra.mxu0 0.0
      %3430 = vmatprep.subr.mxu0 0.0
      %3431 = vmatpush1.msra.mxu0 0.0
      %3432 = vmatprep.subr.mxu0 0.0
      %3433 = vmatpush1.msra.mxu0 0.0
      %3434 = vmatprep.subr.mxu0 0.0
      %3435 = vmatpush1.msra.mxu0 0.0
      %3436 = vmatprep.subr.mxu0 0.0
      %3437 = vmatpush1.msra.mxu0 0.0
      %3438 = vmatprep.subr.mxu0 0.0
      %3439 = vmatpush1.msra.mxu0 0.0
      %3440 = vmatprep.subr.mxu0 0.0
      %3441 = vmatpush1.msra.mxu0 0.0
      %3442 = vmatprep.subr.mxu0 0.0
      %3443 = vmatpush1.msra.mxu0 0.0
      %3444 = vmatprep.subr.mxu0 0.0
      %3445 = vmatpush1.msra.mxu0 0.0
      %3446 = vmatprep.subr.mxu0 0.0
      %3447 = vmatpush1.msra.mxu0 0.0
      %3448 = vmatprep.subr.mxu0 0.0
      %3449 = vmatpush1.msra.mxu0 0.0
      %3450 = vmatprep.subr.mxu0 0.0
      %3451 = vmatpush1.msra.mxu0 0.0
      %3452 = vmatprep.subr.mxu0 0.0
      %3453 = vmatpush1.msra.mxu0 0.0
      %3454 = vmatprep.subr.mxu0 0.0
      %3455 = vmatpush1.msra.mxu0 0.0
      %3456 = vmatprep.subr.mxu0 0.0
      %3457 = vmatpush1.msra.mxu0 0.0
      %3458 = vmatprep.subr.mxu0 0.0
      %3459 = vmatpush1.msra.mxu0 0.0
      %3460 = vmatprep.subr.mxu0 0.0
      %3461 = vmatpush1.msra.mxu0 0.0
      %3462 = vmatprep.subr.mxu0 0.0
      %3463 = vmatpush1.msra.mxu0 0.0
      %3464 = vmatprep.subr.mxu0 0.0
      %3465 = vmatpush1.msra.mxu0 0.0
      %3466 = vmatprep.subr.mxu0 0.0
      %3467 = vmatpush1.msra.mxu0 0.0
      %3468 = vmatprep.subr.mxu0 0.0
      %3469 = vmatpush1.msra.mxu0 0.0
      %3470 = vmatprep.subr.mxu0 0.0
      %3471 = vmatpush1.msra.mxu0 0.0
      %3472 = vmatprep.subr.mxu0 0.0
      %3473 = vmatpush1.msra.mxu0 0.0
      %3474 = vmatprep.subr.mxu0 0.0
      %3475 = vmatpush1.msra.mxu0 0.0
      %3476 = vmatprep.subr.mxu0 0.0
      %3477 = vmatpush1.msra.mxu0 0.0
      %3478 = vmatprep.subr.mxu0 0.0
      %3479 = vmatpush1.msra.mxu0 0.0
      %3480 = vmatprep.mubr.f32.mxu0 0.0
      %3481 = vmatmul.mubr.f32.gmra.mrb[0].mxu0 %v3414
      %v3482 = vpop.f32.mrb[0].mxu0
      %v3483 = vadd.f32 0.0, %v3482
      %v3484 = vpop.f32.mrb[0].mxu0
      %3485 = vdwg.mxu0
      %v3487 = vlaneseq
      %v3488 = vshrl.u32 %v3487, 7
      %v3489 = vsub.s32 0, %v3488
      %v3490 = vrot.slane %v3412, %v3489
      %v3492 = vadd.f32 %v3483, %v3490
      %v3494 = vsel %vm904, %v3492, 0
      %3496 = vmatprep.subr.mxu0 0.0
      %3497 = vmatpush1.msra.mxu0 %v3405
      %3498 = vmatprep.subr.mxu0 0.0
      %3499 = vmatpush1.msra.mxu0 0.0
      %3500 = vmatprep.subr.mxu0 0.0
      %3501 = vmatpush1.msra.mxu0 0.0
      %3502 = vmatprep.subr.mxu0 0.0
      %3503 = vmatpush1.msra.mxu0 0.0
      %3504 = vmatprep.subr.mxu0 0.0
      %3505 = vmatpush1.msra.mxu0 0.0
      %3506 = vmatprep.subr.mxu0 0.0
      %3507 = vmatpush1.msra.mxu0 0.0
      %3508 = vmatprep.subr.mxu0 0.0
      %3509 = vmatpush1.msra.mxu0 0.0
      %3510 = vmatprep.subr.mxu0 0.0
      %3511 = vmatpush1.msra.mxu0 0.0
      %3512 = vmatprep.subr.mxu0 0.0
      %3513 = vmatpush1.msra.mxu0 0.0
      %3514 = vmatprep.subr.mxu0 0.0
      %3515 = vmatpush1.msra.mxu0 0.0
      %3516 = vmatprep.subr.mxu0 0.0
      %3517 = vmatpush1.msra.mxu0 0.0
      %3518 = vmatprep.subr.mxu0 0.0
      %3519 = vmatpush1.msra.mxu0 0.0
      %3520 = vmatprep.subr.mxu0 0.0
      %3521 = vmatpush1.msra.mxu0 0.0
      %3522 = vmatprep.subr.mxu0 0.0
      %3523 = vmatpush1.msra.mxu0 0.0
      %3524 = vmatprep.subr.mxu0 0.0
      %3525 = vmatpush1.msra.mxu0 0.0
      %3526 = vmatprep.subr.mxu0 0.0
      %3527 = vmatpush1.msra.mxu0 0.0
      %3528 = vmatprep.subr.mxu0 0.0
      %3529 = vmatpush1.msra.mxu0 0.0
      %3530 = vmatprep.subr.mxu0 0.0
      %3531 = vmatpush1.msra.mxu0 0.0
      %3532 = vmatprep.subr.mxu0 0.0
      %3533 = vmatpush1.msra.mxu0 0.0
      %3534 = vmatprep.subr.mxu0 0.0
      %3535 = vmatpush1.msra.mxu0 0.0
      %3536 = vmatprep.subr.mxu0 0.0
      %3537 = vmatpush1.msra.mxu0 0.0
      %3538 = vmatprep.subr.mxu0 0.0
      %3539 = vmatpush1.msra.mxu0 0.0
      %3540 = vmatprep.subr.mxu0 0.0
      %3541 = vmatpush1.msra.mxu0 0.0
      %3542 = vmatprep.subr.mxu0 0.0
      %3543 = vmatpush1.msra.mxu0 0.0
      %3544 = vmatprep.subr.mxu0 0.0
      %3545 = vmatpush1.msra.mxu0 0.0
      %3546 = vmatprep.subr.mxu0 0.0
      %3547 = vmatpush1.msra.mxu0 0.0
      %3548 = vmatprep.subr.mxu0 0.0
      %3549 = vmatpush1.msra.mxu0 0.0
      %3550 = vmatprep.subr.mxu0 0.0
      %3551 = vmatpush1.msra.mxu0 0.0
      %3552 = vmatprep.subr.mxu0 0.0
      %3553 = vmatpush1.msra.mxu0 0.0
      %3554 = vmatprep.subr.mxu0 0.0
      %3555 = vmatpush1.msra.mxu0 0.0
      %3556 = vmatprep.subr.mxu0 0.0
      %3557 = vmatpush1.msra.mxu0 0.0
      %3558 = vmatprep.subr.mxu0 0.0
      %3559 = vmatpush1.msra.mxu0 0.0
      %3560 = vmatprep.mubr.f32.mxu0 0.0
      %3561 = vmatmul.mubr.f32.gmra.mrb[0].mxu0 %v3494
      %v3562 = vpop.f32.mrb[0].mxu0
      %v3563 = vadd.f32 0.0, %v3562
      %v3564 = vpop.f32.mrb[0].mxu0
      %3565 = vdwg.mxu0
      %3566 = vrot.lane.b32.xlu0 %v3492, 120
      %v3567 = vpop.permute.xlu0 %3566
      %v3568 = vsel %vm904, %v3567, 0
      %3570 = vmatprep.subr.mxu0 0.0
      %3571 = vmatpush1.msra.mxu0 %v3406
      %3572 = vmatprep.subr.mxu0 0.0
      %3573 = vmatpush1.msra.mxu0 0.0
      %3574 = vmatprep.subr.mxu0 0.0
      %3575 = vmatpush1.msra.mxu0 0.0
      %3576 = vmatprep.subr.mxu0 0.0
      %3577 = vmatpush1.msra.mxu0 0.0
      %3578 = vmatprep.subr.mxu0 0.0
      %3579 = vmatpush1.msra.mxu0 0.0
      %3580 = vmatprep.subr.mxu0 0.0
      %3581 = vmatpush1.msra.mxu0 0.0
      %3582 = vmatprep.subr.mxu0 0.0
      %3583 = vmatpush1.msra.mxu0 0.0
      %3584 = vmatprep.subr.mxu0 0.0
      %3585 = vmatpush1.msra.mxu0 0.0
      %3586 = vmatprep.subr.mxu0 0.0
      %3587 = vmatpush1.msra.mxu0 0.0
      %3588 = vmatprep.subr.mxu0 0.0
      %3589 = vmatpush1.msra.mxu0 0.0
      %3590 = vmatprep.subr.mxu0 0.0
      %3591 = vmatpush1.msra.mxu0 0.0
      %3592 = vmatprep.subr.mxu0 0.0
      %3593 = vmatpush1.msra.mxu0 0.0
      %3594 = vmatprep.subr.mxu0 0.0
      %3595 = vmatpush1.msra.mxu0 0.0
      %3596 = vmatprep.subr.mxu0 0.0
      %3597 = vmatpush1.msra.mxu0 0.0
      %3598 = vmatprep.subr.mxu0 0.0
      %3599 = vmatpush1.msra.mxu0 0.0
      %3600 = vmatprep.subr.mxu0 0.0
      %3601 = vmatpush1.msra.mxu0 0.0
      %3602 = vmatprep.subr.mxu0 0.0
      %3603 = vmatpush1.msra.mxu0 0.0
      %3604 = vmatprep.subr.mxu0 0.0
      %3605 = vmatpush1.msra.mxu0 0.0
      %3606 = vmatprep.subr.mxu0 0.0
      %3607 = vmatpush1.msra.mxu0 0.0
      %3608 = vmatprep.subr.mxu0 0.0
      %3609 = vmatpush1.msra.mxu0 0.0
      %3610 = vmatprep.subr.mxu0 0.0
      %3611 = vmatpush1.msra.mxu0 0.0
      %3612 = vmatprep.subr.mxu0 0.0
      %3613 = vmatpush1.msra.mxu0 0.0
      %3614 = vmatprep.subr.mxu0 0.0
      %3615 = vmatpush1.msra.mxu0 0.0
      %3616 = vmatprep.subr.mxu0 0.0
      %3617 = vmatpush1.msra.mxu0 0.0
      %3618 = vmatprep.subr.mxu0 0.0
      %3619 = vmatpush1.msra.mxu0 0.0
      %3620 = vmatprep.subr.mxu0 0.0
      %3621 = vmatpush1.msra.mxu0 0.0
      %3622 = vmatprep.subr.mxu0 0.0
      %3623 = vmatpush1.msra.mxu0 0.0
      %3624 = vmatprep.subr.mxu0 0.0
      %3625 = vmatpush1.msra.mxu0 0.0
      %3626 = vmatprep.subr.mxu0 0.0
      %3627 = vmatpush1.msra.mxu0 0.0
      %3628 = vmatprep.subr.mxu0 0.0
      %3629 = vmatpush1.msra.mxu0 0.0
      %3630 = vmatprep.subr.mxu0 0.0
      %3631 = vmatpush1.msra.mxu0 0.0
      %3632 = vmatprep.subr.mxu0 0.0
      %3633 = vmatpush1.msra.mxu0 0.0
      %3634 = vmatprep.mubr.f32.mxu0 0.0
      %3635 = vmatmul.mubr.f32.gmra.mrb[0].mxu0 %v3568
      %v3636 = vpop.f32.mrb[0].mxu0
      %v3637 = vadd.f32 0.0, %v3636
      %v3638 = vpop.f32.mrb[0].mxu0
      %3639 = vdwg.mxu0
      %3640 = vrot.lane.b32.xlu0 %v3492, 112
      %v3641 = vpop.permute.xlu0 %3640
      %v3642 = vsel %vm904, %v3641, 0
      %3644 = vmatprep.subr.mxu0 0.0
      %3645 = vmatpush1.msra.mxu0 %v3407
      %3646 = vmatprep.subr.mxu0 0.0
      %3647 = vmatpush1.msra.mxu0 0.0
      %3648 = vmatprep.subr.mxu0 0.0
      %3649 = vmatpush1.msra.mxu0 0.0
      %3650 = vmatprep.subr.mxu0 0.0
      %3651 = vmatpush1.msra.mxu0 0.0
      %3652 = vmatprep.subr.mxu0 0.0
      %3653 = vmatpush1.msra.mxu0 0.0
      %3654 = vmatprep.subr.mxu0 0.0
      %3655 = vmatpush1.msra.mxu0 0.0
      %3656 = vmatprep.subr.mxu0 0.0
      %3657 = vmatpush1.msra.mxu0 0.0
      %3658 = vmatprep.subr.mxu0 0.0
      %3659 = vmatpush1.msra.mxu0 0.0
      %3660 = vmatprep.subr.mxu0 0.0
      %3661 = vmatpush1.msra.mxu0 0.0
      %3662 = vmatprep.subr.mxu0 0.0
      %3663 = vmatpush1.msra.mxu0 0.0
      %3664 = vmatprep.subr.mxu0 0.0
      %3665 = vmatpush1.msra.mxu0 0.0
      %3666 = vmatprep.subr.mxu0 0.0
      %3667 = vmatpush1.msra.mxu0 0.0
      %3668 = vmatprep.subr.mxu0 0.0
      %3669 = vmatpush1.msra.mxu0 0.0
      %3670 = vmatprep.subr.mxu0 0.0
      %3671 = vmatpush1.msra.mxu0 0.0
      %3672 = vmatprep.subr.mxu0 0.0
      %3673 = vmatpush1.msra.mxu0 0.0
      %3674 = vmatprep.subr.mxu0 0.0
      %3675 = vmatpush1.msra.mxu0 0.0
      %3676 = vmatprep.subr.mxu0 0.0
      %3677 = vmatpush1.msra.mxu0 0.0
      %3678 = vmatprep.subr.mxu0 0.0
      %3679 = vmatpush1.msra.mxu0 0.0
      %3680 = vmatprep.subr.mxu0 0.0
      %3681 = vmatpush1.msra.mxu0 0.0
      %3682 = vmatprep.subr.mxu0 0.0
      %3683 = vmatpush1.msra.mxu0 0.0
      %3684 = vmatprep.subr.mxu0 0.0
      %3685 = vmatpush1.msra.mxu0 0.0
      %3686 = vmatprep.subr.mxu0 0.0
      %3687 = vmatpush1.msra.mxu0 0.0
      %3688 = vmatprep.subr.mxu0 0.0
      %3689 = vmatpush1.msra.mxu0 0.0
      %3690 = vmatprep.subr.mxu0 0.0
      %3691 = vmatpush1.msra.mxu0 0.0
      %3692 = vmatprep.subr.mxu0 0.0
      %3693 = vmatpush1.msra.mxu0 0.0
      %3694 = vmatprep.subr.mxu0 0.0
      %3695 = vmatpush1.msra.mxu0 0.0
      %3696 = vmatprep.subr.mxu0 0.0
      %3697 = vmatpush1.msra.mxu0 0.0
      %3698 = vmatprep.subr.mxu0 0.0
      %3699 = vmatpush1.msra.mxu0 0.0
      %3700 = vmatprep.subr.mxu0 0.0
      %3701 = vmatpush1.msra.mxu0 0.0
      %3702 = vmatprep.subr.mxu0 0.0
      %3703 = vmatpush1.msra.mxu0 0.0
      %3704 = vmatprep.subr.mxu0 0.0
      %3705 = vmatpush1.msra.mxu0 0.0
      %3706 = vmatprep.subr.mxu0 0.0
      %3707 = vmatpush1.msra.mxu0 0.0
      %3708 = vmatprep.mubr.f32.mxu0 0.0
      %3709 = vmatmul.mubr.f32.gmra.mrb[0].mxu0 %v3642
      %v3710 = vpop.f32.mrb[0].mxu0
      %v3711 = vadd.f32 0.0, %v3710
      %v3712 = vpop.f32.mrb[0].mxu0
      %3713 = vdwg.mxu0
      %3714 = vrot.lane.b32.xlu0 %v3492, 104
      %v3715 = vpop.permute.xlu0 %3714
      %v3716 = vsel %vm904, %v3715, 0
      %3718 = vmatprep.subr.mxu0 0.0
      %3719 = vmatpush1.msra.mxu0 %v3408
      %3720 = vmatprep.subr.mxu0 0.0
      %3721 = vmatpush1.msra.mxu0 0.0
      %3722 = vmatprep.subr.mxu0 0.0
      %3723 = vmatpush1.msra.mxu0 0.0
      %3724 = vmatprep.subr.mxu0 0.0
      %3725 = vmatpush1.msra.mxu0 0.0
      %3726 = vmatprep.subr.mxu0 0.0
      %3727 = vmatpush1.msra.mxu0 0.0
      %3728 = vmatprep.subr.mxu0 0.0
      %3729 = vmatpush1.msra.mxu0 0.0
      %3730 = vmatprep.subr.mxu0 0.0
      %3731 = vmatpush1.msra.mxu0 0.0
      %3732 = vmatprep.subr.mxu0 0.0
      %3733 = vmatpush1.msra.mxu0 0.0
      %3734 = vmatprep.subr.mxu0 0.0
      %3735 = vmatpush1.msra.mxu0 0.0
      %3736 = vmatprep.subr.mxu0 0.0
      %3737 = vmatpush1.msra.mxu0 0.0
      %3738 = vmatprep.subr.mxu0 0.0
      %3739 = vmatpush1.msra.mxu0 0.0
      %3740 = vmatprep.subr.mxu0 0.0
      %3741 = vmatpush1.msra.mxu0 0.0
      %3742 = vmatprep.subr.mxu0 0.0
      %3743 = vmatpush1.msra.mxu0 0.0
      %3744 = vmatprep.subr.mxu0 0.0
      %3745 = vmatpush1.msra.mxu0 0.0
      %3746 = vmatprep.subr.mxu0 0.0
      %3747 = vmatpush1.msra.mxu0 0.0
      %3748 = vmatprep.subr.mxu0 0.0
      %3749 = vmatpush1.msra.mxu0 0.0
      %3750 = vmatprep.subr.mxu0 0.0
      %3751 = vmatpush1.msra.mxu0 0.0
      %3752 = vmatprep.subr.mxu0 0.0
      %3753 = vmatpush1.msra.mxu0 0.0
      %3754 = vmatprep.subr.mxu0 0.0
      %3755 = vmatpush1.msra.mxu0 0.0
      %3756 = vmatprep.subr.mxu0 0.0
      %3757 = vmatpush1.msra.mxu0 0.0
      %3758 = vmatprep.subr.mxu0 0.0
      %3759 = vmatpush1.msra.mxu0 0.0
      %3760 = vmatprep.subr.mxu0 0.0
      %3761 = vmatpush1.msra.mxu0 0.0
      %3762 = vmatprep.subr.mxu0 0.0
      %3763 = vmatpush1.msra.mxu0 0.0
      %3764 = vmatprep.subr.mxu0 0.0
      %3765 = vmatpush1.msra.mxu0 0.0
      %3766 = vmatprep.subr.mxu0 0.0
      %3767 = vmatpush1.msra.mxu0 0.0
      %3768 = vmatprep.subr.mxu0 0.0
      %3769 = vmatpush1.msra.mxu0 0.0
      %3770 = vmatprep.subr.mxu0 0.0
      %3771 = vmatpush1.msra.mxu0 0.0
      %3772 = vmatprep.subr.mxu0 0.0
      %3773 = vmatpush1.msra.mxu0 0.0
      %3774 = vmatprep.subr.mxu0 0.0
      %3775 = vmatpush1.msra.mxu0 0.0
      %3776 = vmatprep.subr.mxu0 0.0
      %3777 = vmatpush1.msra.mxu0 0.0
      %3778 = vmatprep.subr.mxu0 0.0
      %3779 = vmatpush1.msra.mxu0 0.0
      %3780 = vmatprep.subr.mxu0 0.0
      %3781 = vmatpush1.msra.mxu0 0.0
      %3782 = vmatprep.mubr.f32.mxu0 0.0
      %3783 = vmatmul.mubr.f32.gmra.mrb[0].mxu0 %v3716
      %v3784 = vpop.f32.mrb[0].mxu0
      %v3785 = vadd.f32 0.0, %v3784
      %v3786 = vpop.f32.mrb[0].mxu0
      %3787 = vdwg.mxu0
      %v3789 = vsel %vm670, %v3563, 0
      %v3792 = vsel %vm670, %v3637, 0
      %v3795 = vsel %vm670, %v3711, 0
      %v3798 = vsel %vm670, %v3785, 0
      %3800 = vmatprep.subr.mxu0 %v1201
      %3801 = vmatpush1.msra.mxu0 %v1200
      %3802 = vmatprep.subr.mxu0 %v1214
      %3803 = vmatpush1.msra.mxu0 %v1213
      %3804 = vmatprep.subr.mxu0 %v1227
      %3805 = vmatpush1.msra.mxu0 %v1226
      %3806 = vmatprep.subr.mxu0 %v1240
      %3807 = vmatpush1.msra.mxu0 %v1239
      %3808 = vmatprep.subr.mxu0 0.0
      %3809 = vmatpush1.msra.mxu0 0.0
      %3810 = vmatprep.subr.mxu0 0.0
      %3811 = vmatpush1.msra.mxu0 0.0
      %3812 = vmatprep.subr.mxu0 0.0
      %3813 = vmatpush1.msra.mxu0 0.0
      %3814 = vmatprep.subr.mxu0 0.0
      %3815 = vmatpush1.msra.mxu0 0.0
      %3816 = vmatprep.subr.mxu0 0.0
      %3817 = vmatpush1.msra.mxu0 0.0
      %3818 = vmatprep.subr.mxu0 0.0
      %3819 = vmatpush1.msra.mxu0 0.0
      %3820 = vmatprep.subr.mxu0 0.0
      %3821 = vmatpush1.msra.mxu0 0.0
      %3822 = vmatprep.subr.mxu0 0.0
      %3823 = vmatpush1.msra.mxu0 0.0
      %3824 = vmatprep.subr.mxu0 0.0
      %3825 = vmatpush1.msra.mxu0 0.0
      %3826 = vmatprep.subr.mxu0 0.0
      %3827 = vmatpush1.msra.mxu0 0.0
      %3828 = vmatprep.subr.mxu0 0.0
      %3829 = vmatpush1.msra.mxu0 0.0
      %3830 = vmatprep.subr.mxu0 0.0
      %3831 = vmatpush1.msra.mxu0 0.0
      %3832 = vmatprep.subr.mxu0 0.0
      %3833 = vmatpush1.msra.mxu0 0.0
      %3834 = vmatprep.subr.mxu0 0.0
      %3835 = vmatpush1.msra.mxu0 0.0
      %3836 = vmatprep.subr.mxu0 0.0
      %3837 = vmatpush1.msra.mxu0 0.0
      %3838 = vmatprep.subr.mxu0 0.0
      %3839 = vmatpush1.msra.mxu0 0.0
      %3840 = vmatprep.subr.mxu0 0.0
      %3841 = vmatpush1.msra.mxu0 0.0
      %3842 = vmatprep.subr.mxu0 0.0
      %3843 = vmatpush1.msra.mxu0 0.0
      %3844 = vmatprep.subr.mxu0 0.0
      %3845 = vmatpush1.msra.mxu0 0.0
      %3846 = vmatprep.subr.mxu0 0.0
      %3847 = vmatpush1.msra.mxu0 0.0
      %3848 = vmatprep.subr.mxu0 0.0
      %3849 = vmatpush1.msra.mxu0 0.0
      %3850 = vmatprep.subr.mxu0 0.0
      %3851 = vmatpush1.msra.mxu0 0.0
      %3852 = vmatprep.subr.mxu0 0.0
      %3853 = vmatpush1.msra.mxu0 0.0
      %3854 = vmatprep.subr.mxu0 0.0
      %3855 = vmatpush1.msra.mxu0 0.0
      %3856 = vmatprep.subr.mxu0 0.0
      %3857 = vmatpush1.msra.mxu0 0.0
      %3858 = vmatprep.subr.mxu0 0.0
      %3859 = vmatpush1.msra.mxu0 0.0
      %3860 = vmatprep.subr.mxu0 0.0
      %3861 = vmatpush1.msra.mxu0 0.0
      %3862 = vmatprep.subr.mxu0 0.0
      %3863 = vmatpush1.msra.mxu0 0.0
      %3864 = vmatprep.mubr.f32.mxu0 0.0
      %3865 = vmatmul.mubr.f32.gmra.mrb[0].mxu0 %v3789
      %v3866 = vpop.f32.mrb[0].mxu0
      %v3867 = vadd.f32 0.0, %v3866
      %v3868 = vpop.f32.mrb[0].mxu0
      %v3869 = vadd.f32 0.0, %v3868
      %3870 = vmatprep.mubr.f32.mxu0 0.0
      %3871 = vmatmul.mubr.f32.gmra.mrb[0].mxu0 %v3792
      %v3872 = vpop.f32.mrb[0].mxu0
      %v3873 = vadd.f32 0.0, %v3872
      %v3874 = vpop.f32.mrb[0].mxu0
      %v3875 = vadd.f32 0.0, %v3874
      %3876 = vmatprep.mubr.f32.mxu0 0.0
      %3877 = vmatmul.mubr.f32.gmra.mrb[0].mxu0 %v3795
      %v3878 = vpop.f32.mrb[0].mxu0
      %v3879 = vadd.f32 0.0, %v3878
      %v3880 = vpop.f32.mrb[0].mxu0
      %v3881 = vadd.f32 0.0, %v3880
      %3882 = vmatprep.mubr.f32.mxu0 0.0
      %3883 = vmatmul.mubr.f32.gmra.mrb[0].mxu0 %v3798
      %v3884 = vpop.f32.mrb[0].mxu0
      %v3885 = vadd.f32 0.0, %v3884
      %v3886 = vpop.f32.mrb[0].mxu0
      %v3887 = vadd.f32 0.0, %v3886
      %3888 = vdwg.mxu0
      %3889 = vmatprep.subr.mxu0 %v1203
      %3890 = vmatpush1.msra.mxu0 %v1202
      %3891 = vmatprep.subr.mxu0 %v1216
      %3892 = vmatpush1.msra.mxu0 %v1215
      %3893 = vmatprep.subr.mxu0 %v1229
      %3894 = vmatpush1.msra.mxu0 %v1228
      %3895 = vmatprep.subr.mxu0 %v1242
      %3896 = vmatpush1.msra.mxu0 %v1241
      %3897 = vmatprep.subr.mxu0 0.0
      %3898 = vmatpush1.msra.mxu0 0.0
      %3899 = vmatprep.subr.mxu0 0.0
      %3900 = vmatpush1.msra.mxu0 0.0
      %3901 = vmatprep.subr.mxu0 0.0
      %3902 = vmatpush1.msra.mxu0 0.0
      %3903 = vmatprep.subr.mxu0 0.0
      %3904 = vmatpush1.msra.mxu0 0.0
      %3905 = vmatprep.subr.mxu0 0.0
      %3906 = vmatpush1.msra.mxu0 0.0
      %3907 = vmatprep.subr.mxu0 0.0
      %3908 = vmatpush1.msra.mxu0 0.0
      %3909 = vmatprep.subr.mxu0 0.0
      %3910 = vmatpush1.msra.mxu0 0.0
      %3911 = vmatprep.subr.mxu0 0.0
      %3912 = vmatpush1.msra.mxu0 0.0
      %3913 = vmatprep.subr.mxu0 0.0
      %3914 = vmatpush1.msra.mxu0 0.0
      %3915 = vmatprep.subr.mxu0 0.0
      %3916 = vmatpush1.msra.mxu0 0.0
      %3917 = vmatprep.subr.mxu0 0.0
      %3918 = vmatpush1.msra.mxu0 0.0
      %3919 = vmatprep.subr.mxu0 0.0
      %3920 = vmatpush1.msra.mxu0 0.0
      %3921 = vmatprep.subr.mxu0 0.0
      %3922 = vmatpush1.msra.mxu0 0.0
      %3923 = vmatprep.subr.mxu0 0.0
      %3924 = vmatpush1.msra.mxu0 0.0
      %3925 = vmatprep.subr.mxu0 0.0
      %3926 = vmatpush1.msra.mxu0 0.0
      %3927 = vmatprep.subr.mxu0 0.0
      %3928 = vmatpush1.msra.mxu0 0.0
      %3929 = vmatprep.subr.mxu0 0.0
      %3930 = vmatpush1.msra.mxu0 0.0
      %3931 = vmatprep.subr.mxu0 0.0
      %3932 = vmatpush1.msra.mxu0 0.0
      %3933 = vmatprep.subr.mxu0 0.0
      %3934 = vmatpush1.msra.mxu0 0.0
      %3935 = vmatprep.subr.mxu0 0.0
      %3936 = vmatpush1.msra.mxu0 0.0
      %3937 = vmatprep.subr.mxu0 0.0
      %3938 = vmatpush1.msra.mxu0 0.0
      %3939 = vmatprep.subr.mxu0 0.0
      %3940 = vmatpush1.msra.mxu0 0.0
      %3941 = vmatprep.subr.mxu0 0.0
      %3942 = vmatpush1.msra.mxu0 0.0
      %3943 = vmatprep.subr.mxu0 0.0
      %3944 = vmatpush1.msra.mxu0 0.0
      %3945 = vmatprep.subr.mxu0 0.0
      %3946 = vmatpush1.msra.mxu0 0.0
      %3947 = vmatprep.subr.mxu0 0.0
      %3948 = vmatpush1.msra.mxu0 0.0
      %3949 = vmatprep.subr.mxu0 0.0
      %3950 = vmatpush1.msra.mxu0 0.0
      %3951 = vmatprep.subr.mxu0 0.0
      %3952 = vmatpush1.msra.mxu0 0.0
      %3953 = vmatprep.mubr.f32.mxu0 0.0
      %3954 = vmatmul.mubr.f32.gmra.mrb[0].mxu0 %v3789
      %v3955 = vpop.f32.mrb[0].mxu0
      %v3956 = vadd.f32 0.0, %v3955
      %v3957 = vpop.f32.mrb[0].mxu0
      %v3958 = vadd.f32 0.0, %v3957
      %3959 = vmatprep.mubr.f32.mxu0 0.0
      %3960 = vmatmul.mubr.f32.gmra.mrb[0].mxu0 %v3792
      %v3961 = vpop.f32.mrb[0].mxu0
      %v3962 = vadd.f32 0.0, %v3961
      %v3963 = vpop.f32.mrb[0].mxu0
      %v3964 = vadd.f32 0.0, %v3963
      %3965 = vmatprep.mubr.f32.mxu0 0.0
      %3966 = vmatmul.mubr.f32.gmra.mrb[0].mxu0 %v3795
      %v3967 = vpop.f32.mrb[0].mxu0
      %v3968 = vadd.f32 0.0, %v3967
      %v3969 = vpop.f32.mrb[0].mxu0
      %v3970 = vadd.f32 0.0, %v3969
      %3971 = vmatprep.mubr.f32.mxu0 0.0
      %3972 = vmatmul.mubr.f32.gmra.mrb[0].mxu0 %v3798
      %v3973 = vpop.f32.mrb[0].mxu0
      %v3974 = vadd.f32 0.0, %v3973
      %v3975 = vpop.f32.mrb[0].mxu0
      %v3976 = vadd.f32 0.0, %v3975
      %3977 = vdwg.mxu0
      %3978 = vmatprep.subr.mxu0 %v1205
      %3979 = vmatpush1.msra.mxu0 %v1204
      %3980 = vmatprep.subr.mxu0 %v1218
      %3981 = vmatpush1.msra.mxu0 %v1217
      %3982 = vmatprep.subr.mxu0 %v1231
      %3983 = vmatpush1.msra.mxu0 %v1230
      %3984 = vmatprep.subr.mxu0 %v1244
      %3985 = vmatpush1.msra.mxu0 %v1243
      %3986 = vmatprep.subr.mxu0 0.0
      %3987 = vmatpush1.msra.mxu0 0.0
      %3988 = vmatprep.subr.mxu0 0.0
      %3989 = vmatpush1.msra.mxu0 0.0
      %3990 = vmatprep.subr.mxu0 0.0
      %3991 = vmatpush1.msra.mxu0 0.0
      %3992 = vmatprep.subr.mxu0 0.0
      %3993 = vmatpush1.msra.mxu0 0.0
      %3994 = vmatprep.subr.mxu0 0.0
      %3995 = vmatpush1.msra.mxu0 0.0
      %3996 = vmatprep.subr.mxu0 0.0
      %3997 = vmatpush1.msra.mxu0 0.0
      %3998 = vmatprep.subr.mxu0 0.0
      %3999 = vmatpush1.msra.mxu0 0.0
      %4000 = vmatprep.subr.mxu0 0.0
      %4001 = vmatpush1.msra.mxu0 0.0
      %4002 = vmatprep.subr.mxu0 0.0
      %4003 = vmatpush1.msra.mxu0 0.0
      %4004 = vmatprep.subr.mxu0 0.0
      %4005 = vmatpush1.msra.mxu0 0.0
      %4006 = vmatprep.subr.mxu0 0.0
      %4007 = vmatpush1.msra.mxu0 0.0
      %4008 = vmatprep.subr.mxu0 0.0
      %4009 = vmatpush1.msra.mxu0 0.0
      %4010 = vmatprep.subr.mxu0 0.0
      %4011 = vmatpush1.msra.mxu0 0.0
      %4012 = vmatprep.subr.mxu0 0.0
      %4013 = vmatpush1.msra.mxu0 0.0
      %4014 = vmatprep.subr.mxu0 0.0
      %4015 = vmatpush1.msra.mxu0 0.0
      %4016 = vmatprep.subr.mxu0 0.0
      %4017 = vmatpush1.msra.mxu0 0.0
      %4018 = vmatprep.subr.mxu0 0.0
      %4019 = vmatpush1.msra.mxu0 0.0
      %4020 = vmatprep.subr.mxu0 0.0
      %4021 = vmatpush1.msra.mxu0 0.0
      %4022 = vmatprep.subr.mxu0 0.0
      %4023 = vmatpush1.msra.mxu0 0.0
      %4024 = vmatprep.subr.mxu0 0.0
      %4025 = vmatpush1.msra.mxu0 0.0
      %4026 = vmatprep.subr.mxu0 0.0
      %4027 = vmatpush1.msra.mxu0 0.0
      %4028 = vmatprep.subr.mxu0 0.0
      %4029 = vmatpush1.msra.mxu0 0.0
      %4030 = vmatprep.subr.mxu0 0.0
      %4031 = vmatpush1.msra.mxu0 0.0
      %4032 = vmatprep.subr.mxu0 0.0
      %4033 = vmatpush1.msra.mxu0 0.0
      %4034 = vmatprep.subr.mxu0 0.0
      %4035 = vmatpush1.msra.mxu0 0.0
      %4036 = vmatprep.subr.mxu0 0.0
      %4037 = vmatpush1.msra.mxu0 0.0
      %4038 = vmatprep.subr.mxu0 0.0
      %4039 = vmatpush1.msra.mxu0 0.0
      %4040 = vmatprep.subr.mxu0 0.0
      %4041 = vmatpush1.msra.mxu0 0.0
      %4042 = vmatprep.mubr.f32.mxu0 0.0
      %4043 = vmatmul.mubr.f32.gmra.mrb[0].mxu0 %v3789
      %v4044 = vpop.f32.mrb[0].mxu0
      %v4045 = vadd.f32 0.0, %v4044
      %v4046 = vpop.f32.mrb[0].mxu0
      %v4047 = vadd.f32 0.0, %v4046
      %4048 = vmatprep.mubr.f32.mxu0 0.0
      %4049 = vmatmul.mubr.f32.gmra.mrb[0].mxu0 %v3792
      %v4050 = vpop.f32.mrb[0].mxu0
      %v4051 = vadd.f32 0.0, %v4050
      %v4052 = vpop.f32.mrb[0].mxu0
      %v4053 = vadd.f32 0.0, %v4052
      %4054 = vmatprep.mubr.f32.mxu0 0.0
      %4055 = vmatmul.mubr.f32.gmra.mrb[0].mxu0 %v3795
      %v4056 = vpop.f32.mrb[0].mxu0
      %v4057 = vadd.f32 0.0, %v4056
      %v4058 = vpop.f32.mrb[0].mxu0
      %v4059 = vadd.f32 0.0, %v4058
      %4060 = vmatprep.mubr.f32.mxu0 0.0
      %4061 = vmatmul.mubr.f32.gmra.mrb[0].mxu0 %v3798
      %v4062 = vpop.f32.mrb[0].mxu0
      %v4063 = vadd.f32 0.0, %v4062
      %v4064 = vpop.f32.mrb[0].mxu0
      %v4065 = vadd.f32 0.0, %v4064
      %4066 = vdwg.mxu0
      %4067 = vmatprep.subr.mxu0 %v1207
      %4068 = vmatpush1.msra.mxu0 %v1206
      %4069 = vmatprep.subr.mxu0 %v1220
      %4070 = vmatpush1.msra.mxu0 %v1219
      %4071 = vmatprep.subr.mxu0 %v1233
      %4072 = vmatpush1.msra.mxu0 %v1232
      %4073 = vmatprep.subr.mxu0 %v1246
      %4074 = vmatpush1.msra.mxu0 %v1245
      %4075 = vmatprep.subr.mxu0 0.0
      %4076 = vmatpush1.msra.mxu0 0.0
      %4077 = vmatprep.subr.mxu0 0.0
      %4078 = vmatpush1.msra.mxu0 0.0
      %4079 = vmatprep.subr.mxu0 0.0
      %4080 = vmatpush1.msra.mxu0 0.0
      %4081 = vmatprep.subr.mxu0 0.0
      %4082 = vmatpush1.msra.mxu0 0.0
      %4083 = vmatprep.subr.mxu0 0.0
      %4084 = vmatpush1.msra.mxu0 0.0
      %4085 = vmatprep.subr.mxu0 0.0
      %4086 = vmatpush1.msra.mxu0 0.0
      %4087 = vmatprep.subr.mxu0 0.0
      %4088 = vmatpush1.msra.mxu0 0.0
      %4089 = vmatprep.subr.mxu0 0.0
      %4090 = vmatpush1.msra.mxu0 0.0
      %4091 = vmatprep.subr.mxu0 0.0
      %4092 = vmatpush1.msra.mxu0 0.0
      %4093 = vmatprep.subr.mxu0 0.0
      %4094 = vmatpush1.msra.mxu0 0.0
      %4095 = vmatprep.subr.mxu0 0.0
      %4096 = vmatpush1.msra.mxu0 0.0
      %4097 = vmatprep.subr.mxu0 0.0
      %4098 = vmatpush1.msra.mxu0 0.0
      %4099 = vmatprep.subr.mxu0 0.0
      %4100 = vmatpush1.msra.mxu0 0.0
      %4101 = vmatprep.subr.mxu0 0.0
      %4102 = vmatpush1.msra.mxu0 0.0
      %4103 = vmatprep.subr.mxu0 0.0
      %4104 = vmatpush1.msra.mxu0 0.0
      %4105 = vmatprep.subr.mxu0 0.0
      %4106 = vmatpush1.msra.mxu0 0.0
      %4107 = vmatprep.subr.mxu0 0.0
      %4108 = vmatpush1.msra.mxu0 0.0
      %4109 = vmatprep.subr.mxu0 0.0
      %4110 = vmatpush1.msra.mxu0 0.0
      %4111 = vmatprep.subr.mxu0 0.0
      %4112 = vmatpush1.msra.mxu0 0.0
      %4113 = vmatprep.subr.mxu0 0.0
      %4114 = vmatpush1.msra.mxu0 0.0
      %4115 = vmatprep.subr.mxu0 0.0
      %4116 = vmatpush1.msra.mxu0 0.0
      %4117 = vmatprep.subr.mxu0 0.0
      %4118 = vmatpush1.msra.mxu0 0.0
      %4119 = vmatprep.subr.mxu0 0.0
      %4120 = vmatpush1.msra.mxu0 0.0
      %4121 = vmatprep.subr.mxu0 0.0
      %4122 = vmatpush1.msra.mxu0 0.0
      %4123 = vmatprep.subr.mxu0 0.0
      %4124 = vmatpush1.msra.mxu0 0.0
      %4125 = vmatprep.subr.mxu0 0.0
      %4126 = vmatpush1.msra.mxu0 0.0
      %4127 = vmatprep.subr.mxu0 0.0
      %4128 = vmatpush1.msra.mxu0 0.0
      %4129 = vmatprep.subr.mxu0 0.0
      %4130 = vmatpush1.msra.mxu0 0.0
      %4131 = vmatprep.mubr.f32.mxu0 0.0
      %4132 = vmatmul.mubr.f32.gmra.mrb[0].mxu0 %v3789
      %v4133 = vpop.f32.mrb[0].mxu0
      %v4134 = vadd.f32 0.0, %v4133
      %v4135 = vpop.f32.mrb[0].mxu0
      %v4136 = vadd.f32 0.0, %v4135
      %4137 = vmatprep.mubr.f32.mxu0 0.0
      %4138 = vmatmul.mubr.f32.gmra.mrb[0].mxu0 %v3792
      %v4139 = vpop.f32.mrb[0].mxu0
      %v4140 = vadd.f32 0.0, %v4139
      %v4141 = vpop.f32.mrb[0].mxu0
      %v4142 = vadd.f32 0.0, %v4141
      %4143 = vmatprep.mubr.f32.mxu0 0.0
      %4144 = vmatmul.mubr.f32.gmra.mrb[0].mxu0 %v3795
      %v4145 = vpop.f32.mrb[0].mxu0
      %v4146 = vadd.f32 0.0, %v4145
      %v4147 = vpop.f32.mrb[0].mxu0
      %v4148 = vadd.f32 0.0, %v4147
      %4149 = vmatprep.mubr.f32.mxu0 0.0
      %4150 = vmatmul.mubr.f32.gmra.mrb[0].mxu0 %v3798
      %v4151 = vpop.f32.mrb[0].mxu0
      %v4152 = vadd.f32 0.0, %v4151
      %v4153 = vpop.f32.mrb[0].mxu0
      %v4154 = vadd.f32 0.0, %v4153
      %4155 = vdwg.mxu0
      %4156 = vmatprep.subr.mxu0 %v1209
      %4157 = vmatpush1.msra.mxu0 %v1208
      %4158 = vmatprep.subr.mxu0 %v1222
      %4159 = vmatpush1.msra.mxu0 %v1221
      %4160 = vmatprep.subr.mxu0 %v1235
      %4161 = vmatpush1.msra.mxu0 %v1234
      %4162 = vmatprep.subr.mxu0 %v1248
      %4163 = vmatpush1.msra.mxu0 %v1247
      %4164 = vmatprep.subr.mxu0 0.0
      %4165 = vmatpush1.msra.mxu0 0.0
      %4166 = vmatprep.subr.mxu0 0.0
      %4167 = vmatpush1.msra.mxu0 0.0
      %4168 = vmatprep.subr.mxu0 0.0
      %4169 = vmatpush1.msra.mxu0 0.0
      %4170 = vmatprep.subr.mxu0 0.0
      %4171 = vmatpush1.msra.mxu0 0.0
      %4172 = vmatprep.subr.mxu0 0.0
      %4173 = vmatpush1.msra.mxu0 0.0
      %4174 = vmatprep.subr.mxu0 0.0
      %4175 = vmatpush1.msra.mxu0 0.0
      %4176 = vmatprep.subr.mxu0 0.0
      %4177 = vmatpush1.msra.mxu0 0.0
      %4178 = vmatprep.subr.mxu0 0.0
      %4179 = vmatpush1.msra.mxu0 0.0
      %4180 = vmatprep.subr.mxu0 0.0
      %4181 = vmatpush1.msra.mxu0 0.0
      %4182 = vmatprep.subr.mxu0 0.0
      %4183 = vmatpush1.msra.mxu0 0.0
      %4184 = vmatprep.subr.mxu0 0.0
      %4185 = vmatpush1.msra.mxu0 0.0
      %4186 = vmatprep.subr.mxu0 0.0
      %4187 = vmatpush1.msra.mxu0 0.0
      %4188 = vmatprep.subr.mxu0 0.0
      %4189 = vmatpush1.msra.mxu0 0.0
      %4190 = vmatprep.subr.mxu0 0.0
      %4191 = vmatpush1.msra.mxu0 0.0
      %4192 = vmatprep.subr.mxu0 0.0
      %4193 = vmatpush1.msra.mxu0 0.0
      %4194 = vmatprep.subr.mxu0 0.0
      %4195 = vmatpush1.msra.mxu0 0.0
      %4196 = vmatprep.subr.mxu0 0.0
      %4197 = vmatpush1.msra.mxu0 0.0
      %4198 = vmatprep.subr.mxu0 0.0
      %4199 = vmatpush1.msra.mxu0 0.0
      %4200 = vmatprep.subr.mxu0 0.0
      %4201 = vmatpush1.msra.mxu0 0.0
      %4202 = vmatprep.subr.mxu0 0.0
      %4203 = vmatpush1.msra.mxu0 0.0
      %4204 = vmatprep.subr.mxu0 0.0
      %4205 = vmatpush1.msra.mxu0 0.0
      %4206 = vmatprep.subr.mxu0 0.0
      %4207 = vmatpush1.msra.mxu0 0.0
      %4208 = vmatprep.subr.mxu0 0.0
      %4209 = vmatpush1.msra.mxu0 0.0
      %4210 = vmatprep.subr.mxu0 0.0
      %4211 = vmatpush1.msra.mxu0 0.0
      %4212 = vmatprep.subr.mxu0 0.0
      %4213 = vmatpush1.msra.mxu0 0.0
      %4214 = vmatprep.subr.mxu0 0.0
      %4215 = vmatpush1.msra.mxu0 0.0
      %4216 = vmatprep.subr.mxu0 0.0
      %4217 = vmatpush1.msra.mxu0 0.0
      %4218 = vmatprep.subr.mxu0 0.0
      %4219 = vmatpush1.msra.mxu0 0.0
      %4220 = vmatprep.mubr.f32.mxu0 0.0
      %4221 = vmatmul.mubr.f32.gmra.mrb[0].mxu0 %v3789
      %v4222 = vpop.f32.mrb[0].mxu0
      %v4223 = vadd.f32 0.0, %v4222
      %v4224 = vpop.f32.mrb[0].mxu0
      %v4225 = vadd.f32 0.0, %v4224
      %4226 = vmatprep.mubr.f32.mxu0 0.0
      %4227 = vmatmul.mubr.f32.gmra.mrb[0].mxu0 %v3792
      %v4228 = vpop.f32.mrb[0].mxu0
      %v4229 = vadd.f32 0.0, %v4228
      %v4230 = vpop.f32.mrb[0].mxu0
      %v4231 = vadd.f32 0.0, %v4230
      %4232 = vmatprep.mubr.f32.mxu0 0.0
      %4233 = vmatmul.mubr.f32.gmra.mrb[0].mxu0 %v3795
      %v4234 = vpop.f32.mrb[0].mxu0
      %v4235 = vadd.f32 0.0, %v4234
      %v4236 = vpop.f32.mrb[0].mxu0
      %v4237 = vadd.f32 0.0, %v4236
      %4238 = vmatprep.mubr.f32.mxu0 0.0
      %4239 = vmatmul.mubr.f32.gmra.mrb[0].mxu0 %v3798
      %v4240 = vpop.f32.mrb[0].mxu0
      %v4241 = vadd.f32 0.0, %v4240
      %v4242 = vpop.f32.mrb[0].mxu0
      %v4243 = vadd.f32 0.0, %v4242
      %4244 = vdwg.mxu0
      %4245 = vmatprep.subr.mxu0 %v1211
      %4246 = vmatpush1.msra.mxu0 %v1210
      %4247 = vmatprep.subr.mxu0 %v1224
      %4248 = vmatpush1.msra.mxu0 %v1223
      %4249 = vmatprep.subr.mxu0 %v1237
      %4250 = vmatpush1.msra.mxu0 %v1236
      %4251 = vmatprep.subr.mxu0 %v1250
      %4252 = vmatpush1.msra.mxu0 %v1249
      %4253 = vmatprep.subr.mxu0 0.0
      %4254 = vmatpush1.msra.mxu0 0.0
      %4255 = vmatprep.subr.mxu0 0.0
      %4256 = vmatpush1.msra.mxu0 0.0
      %4257 = vmatprep.subr.mxu0 0.0
      %4258 = vmatpush1.msra.mxu0 0.0
      %4259 = vmatprep.subr.mxu0 0.0
      %4260 = vmatpush1.msra.mxu0 0.0
      %4261 = vmatprep.subr.mxu0 0.0
      %4262 = vmatpush1.msra.mxu0 0.0
      %4263 = vmatprep.subr.mxu0 0.0
      %4264 = vmatpush1.msra.mxu0 0.0
      %4265 = vmatprep.subr.mxu0 0.0
      %4266 = vmatpush1.msra.mxu0 0.0
      %4267 = vmatprep.subr.mxu0 0.0
      %4268 = vmatpush1.msra.mxu0 0.0
      %4269 = vmatprep.subr.mxu0 0.0
      %4270 = vmatpush1.msra.mxu0 0.0
      %4271 = vmatprep.subr.mxu0 0.0
      %4272 = vmatpush1.msra.mxu0 0.0
      %4273 = vmatprep.subr.mxu0 0.0
      %4274 = vmatpush1.msra.mxu0 0.0
      %4275 = vmatprep.subr.mxu0 0.0
      %4276 = vmatpush1.msra.mxu0 0.0
      %4277 = vmatprep.subr.mxu0 0.0
      %4278 = vmatpush1.msra.mxu0 0.0
      %4279 = vmatprep.subr.mxu0 0.0
      %4280 = vmatpush1.msra.mxu0 0.0
      %4281 = vmatprep.subr.mxu0 0.0
      %4282 = vmatpush1.msra.mxu0 0.0
      %4283 = vmatprep.subr.mxu0 0.0
      %4284 = vmatpush1.msra.mxu0 0.0
      %4285 = vmatprep.subr.mxu0 0.0
      %4286 = vmatpush1.msra.mxu0 0.0
      %4287 = vmatprep.subr.mxu0 0.0
      %4288 = vmatpush1.msra.mxu0 0.0
      %4289 = vmatprep.subr.mxu0 0.0
      %4290 = vmatpush1.msra.mxu0 0.0
      %4291 = vmatprep.subr.mxu0 0.0
      %4292 = vmatpush1.msra.mxu0 0.0
      %4293 = vmatprep.subr.mxu0 0.0
      %4294 = vmatpush1.msra.mxu0 0.0
      %4295 = vmatprep.subr.mxu0 0.0
      %4296 = vmatpush1.msra.mxu0 0.0
      %4297 = vmatprep.subr.mxu0 0.0
      %4298 = vmatpush1.msra.mxu0 0.0
      %4299 = vmatprep.subr.mxu0 0.0
      %4300 = vmatpush1.msra.mxu0 0.0
      %4301 = vmatprep.subr.mxu0 0.0
      %4302 = vmatpush1.msra.mxu0 0.0
      %4303 = vmatprep.subr.mxu0 0.0
      %4304 = vmatpush1.msra.mxu0 0.0
      %4305 = vmatprep.subr.mxu0 0.0
      %4306 = vmatpush1.msra.mxu0 0.0
      %4307 = vmatprep.subr.mxu0 0.0
      %4308 = vmatpush1.msra.mxu0 0.0
      %4309 = vmatprep.mubr.f32.mxu0 0.0
      %4310 = vmatmul.mubr.f32.gmra.mrb[0].mxu0 %v3789
      %v4311 = vpop.f32.mrb[0].mxu0
      %v4312 = vadd.f32 0.0, %v4311
      %v4313 = vpop.f32.mrb[0].mxu0
      %v4314 = vadd.f32 0.0, %v4313
      %4315 = vmatprep.mubr.f32.mxu0 0.0
      %4316 = vmatmul.mubr.f32.gmra.mrb[0].mxu0 %v3792
      %v4317 = vpop.f32.mrb[0].mxu0
      %v4318 = vadd.f32 0.0, %v4317
      %v4319 = vpop.f32.mrb[0].mxu0
      %v4320 = vadd.f32 0.0, %v4319
      %4321 = vmatprep.mubr.f32.mxu0 0.0
      %4322 = vmatmul.mubr.f32.gmra.mrb[0].mxu0 %v3795
      %v4323 = vpop.f32.mrb[0].mxu0
      %v4324 = vadd.f32 0.0, %v4323
      %v4325 = vpop.f32.mrb[0].mxu0
      %v4326 = vadd.f32 0.0, %v4325
      %4327 = vmatprep.mubr.f32.mxu0 0.0
      %4328 = vmatmul.mubr.f32.gmra.mrb[0].mxu0 %v3798
      %v4329 = vpop.f32.mrb[0].mxu0
      %v4330 = vadd.f32 0.0, %v4329
      %v4331 = vpop.f32.mrb[0].mxu0
      %v4332 = vadd.f32 0.0, %v4331
      %4333 = vdwg.mxu0
      %4334 = vmatprep.subr.mxu0 0.0
      %4335 = vmatpush1.msra.mxu0 %v1212
      %4336 = vmatprep.subr.mxu0 0.0
      %4337 = vmatpush1.msra.mxu0 %v1225
      %4338 = vmatprep.subr.mxu0 0.0
      %4339 = vmatpush1.msra.mxu0 %v1238
      %4340 = vmatprep.subr.mxu0 0.0
      %4341 = vmatpush1.msra.mxu0 %v1251
      %4342 = vmatprep.subr.mxu0 0.0
      %4343 = vmatpush1.msra.mxu0 0.0
      %4344 = vmatprep.subr.mxu0 0.0
      %4345 = vmatpush1.msra.mxu0 0.0
      %4346 = vmatprep.subr.mxu0 0.0
      %4347 = vmatpush1.msra.mxu0 0.0
      %4348 = vmatprep.subr.mxu0 0.0
      %4349 = vmatpush1.msra.mxu0 0.0
      %4350 = vmatprep.subr.mxu0 0.0
      %4351 = vmatpush1.msra.mxu0 0.0
      %4352 = vmatprep.subr.mxu0 0.0
      %4353 = vmatpush1.msra.mxu0 0.0
      %4354 = vmatprep.subr.mxu0 0.0
      %4355 = vmatpush1.msra.mxu0 0.0
      %4356 = vmatprep.subr.mxu0 0.0
      %4357 = vmatpush1.msra.mxu0 0.0
      %4358 = vmatprep.subr.mxu0 0.0
      %4359 = vmatpush1.msra.mxu0 0.0
      %4360 = vmatprep.subr.mxu0 0.0
      %4361 = vmatpush1.msra.mxu0 0.0
      %4362 = vmatprep.subr.mxu0 0.0
      %4363 = vmatpush1.msra.mxu0 0.0
      %4364 = vmatprep.subr.mxu0 0.0
      %4365 = vmatpush1.msra.mxu0 0.0
      %4366 = vmatprep.subr.mxu0 0.0
      %4367 = vmatpush1.msra.mxu0 0.0
      %4368 = vmatprep.subr.mxu0 0.0
      %4369 = vmatpush1.msra.mxu0 0.0
      %4370 = vmatprep.subr.mxu0 0.0
      %4371 = vmatpush1.msra.mxu0 0.0
      %4372 = vmatprep.subr.mxu0 0.0
      %4373 = vmatpush1.msra.mxu0 0.0
      %4374 = vmatprep.subr.mxu0 0.0
      %4375 = vmatpush1.msra.mxu0 0.0
      %4376 = vmatprep.subr.mxu0 0.0
      %4377 = vmatpush1.msra.mxu0 0.0
      %4378 = vmatprep.subr.mxu0 0.0
      %4379 = vmatpush1.msra.mxu0 0.0
      %4380 = vmatprep.subr.mxu0 0.0
      %4381 = vmatpush1.msra.mxu0 0.0
      %4382 = vmatprep.subr.mxu0 0.0
      %4383 = vmatpush1.msra.mxu0 0.0
      %4384 = vmatprep.subr.mxu0 0.0
      %4385 = vmatpush1.msra.mxu0 0.0
      %4386 = vmatprep.subr.mxu0 0.0
      %4387 = vmatpush1.msra.mxu0 0.0
      %4388 = vmatprep.subr.mxu0 0.0
      %4389 = vmatpush1.msra.mxu0 0.0
      %4390 = vmatprep.subr.mxu0 0.0
      %4391 = vmatpush1.msra.mxu0 0.0
      %4392 = vmatprep.subr.mxu0 0.0
      %4393 = vmatpush1.msra.mxu0 0.0
      %4394 = vmatprep.subr.mxu0 0.0
      %4395 = vmatpush1.msra.mxu0 0.0
      %4396 = vmatprep.subr.mxu0 0.0
      %4397 = vmatpush1.msra.mxu0 0.0
      %4398 = vmatprep.mubr.f32.mxu0 0.0
      %4399 = vmatmul.mubr.f32.gmra.mrb[0].mxu0 %v3789
      %v4400 = vpop.f32.mrb[0].mxu0
      %v4401 = vadd.f32 0.0, %v4400
      %v4402 = vpop.f32.mrb[0].mxu0
      %4403 = vmatprep.mubr.f32.mxu0 0.0
      %4404 = vmatmul.mubr.f32.gmra.mrb[0].mxu0 %v3792
      %v4405 = vpop.f32.mrb[0].mxu0
      %v4406 = vadd.f32 0.0, %v4405
      %v4407 = vpop.f32.mrb[0].mxu0
      %4408 = vmatprep.mubr.f32.mxu0 0.0
      %4409 = vmatmul.mubr.f32.gmra.mrb[0].mxu0 %v3795
      %v4410 = vpop.f32.mrb[0].mxu0
      %v4411 = vadd.f32 0.0, %v4410
      %v4412 = vpop.f32.mrb[0].mxu0
      %4413 = vmatprep.mubr.f32.mxu0 0.0
      %4414 = vmatmul.mubr.f32.gmra.mrb[0].mxu0 %v3798
      %v4415 = vpop.f32.mrb[0].mxu0
      %v4416 = vadd.f32 0.0, %v4415
      %v4417 = vpop.f32.mrb[0].mxu0
      %4418 = vdwg.mxu0
      %v4419 = vmul.f32 %v3867, 0.35355338
      %v4420 = vmul.f32 %v3869, 0.35355338
      %v4421 = vmul.f32 %v3956, 0.35355338
      %v4422 = vmul.f32 %v3958, 0.35355338
      %v4423 = vmul.f32 %v4045, 0.35355338
      %v4424 = vmul.f32 %v4047, 0.35355338
      %v4425 = vmul.f32 %v4134, 0.35355338
      %v4426 = vmul.f32 %v4136, 0.35355338
      %v4427 = vmul.f32 %v4223, 0.35355338
      %v4428 = vmul.f32 %v4225, 0.35355338
      %v4429 = vmul.f32 %v4312, 0.35355338
      %v4430 = vmul.f32 %v4314, 0.35355338
      %v4431 = vmul.f32 %v4401, 0.35355338
      %v4432 = vmul.f32 %v3873, 0.35355338
      %v4433 = vmul.f32 %v3875, 0.35355338
      %v4434 = vmul.f32 %v3962, 0.35355338
      %v4435 = vmul.f32 %v3964, 0.35355338
      %v4436 = vmul.f32 %v4051, 0.35355338
      %v4437 = vmul.f32 %v4053, 0.35355338
      %v4438 = vmul.f32 %v4140, 0.35355338
      %v4439 = vmul.f32 %v4142, 0.35355338
      %v4440 = vmul.f32 %v4229, 0.35355338
      %v4441 = vmul.f32 %v4231, 0.35355338
      %v4442 = vmul.f32 %v4318, 0.35355338
      %v4443 = vmul.f32 %v4320, 0.35355338
      %v4444 = vmul.f32 %v4406, 0.35355338
      %v4445 = vmul.f32 %v3879, 0.35355338
      %v4446 = vmul.f32 %v3881, 0.35355338
      %v4447 = vmul.f32 %v3968, 0.35355338
      %v4448 = vmul.f32 %v3970, 0.35355338
      %v4449 = vmul.f32 %v4057, 0.35355338
      %v4450 = vmul.f32 %v4059, 0.35355338
      %v4451 = vmul.f32 %v4146, 0.35355338
      %v4452 = vmul.f32 %v4148, 0.35355338
      %v4453 = vmul.f32 %v4235, 0.35355338
      %v4454 = vmul.f32 %v4237, 0.35355338
      %v4455 = vmul.f32 %v4324, 0.35355338
      %v4456 = vmul.f32 %v4326, 0.35355338
      %v4457 = vmul.f32 %v4411, 0.35355338
      %v4458 = vmul.f32 %v3885, 0.35355338
      %v4459 = vmul.f32 %v3887, 0.35355338
      %v4460 = vmul.f32 %v3974, 0.35355338
      %v4461 = vmul.f32 %v3976, 0.35355338
      %v4462 = vmul.f32 %v4063, 0.35355338
      %v4463 = vmul.f32 %v4065, 0.35355338
      %v4464 = vmul.f32 %v4152, 0.35355338
      %v4465 = vmul.f32 %v4154, 0.35355338
      %v4466 = vmul.f32 %v4241, 0.35355338
      %v4467 = vmul.f32 %v4243, 0.35355338
      %v4468 = vmul.f32 %v4330, 0.35355338
      %v4469 = vmul.f32 %v4332, 0.35355338
      %v4470 = vmul.f32 %v4416, 0.35355338
      %v4471 = vsel %vm800, -1e+30, %v4419
      %v4472 = vsel %vm801, -1e+30, %v4420
      %v4473 = vsel %vm802, -1e+30, %v4421
      %v4474 = vsel %vm803, -1e+30, %v4422
      %v4475 = vsel %vm804, -1e+30, %v4423
      %v4476 = vsel %vm805, -1e+30, %v4424
      %v4477 = vsel %vm806, -1e+30, %v4425
      %v4478 = vsel %vm807, -1e+30, %v4426
      %v4479 = vsel %vm808, -1e+30, %v4427
      %v4480 = vsel %vm809, -1e+30, %v4428
      %v4481 = vsel %vm810, -1e+30, %v4429
      %v4482 = vsel %vm811, -1e+30, %v4430
      %v4483 = vsel %vm812, -1e+30, %v4431
      %v4484 = vsel %vm800, -1e+30, %v4432
      %v4485 = vsel %vm801, -1e+30, %v4433
      %v4486 = vsel %vm802, -1e+30, %v4434
      %v4487 = vsel %vm803, -1e+30, %v4435
      %v4488 = vsel %vm804, -1e+30, %v4436
      %v4489 = vsel %vm805, -1e+30, %v4437
      %v4490 = vsel %vm806, -1e+30, %v4438
      %v4491 = vsel %vm807, -1e+30, %v4439
      %v4492 = vsel %vm808, -1e+30, %v4440
      %v4493 = vsel %vm809, -1e+30, %v4441
      %v4494 = vsel %vm810, -1e+30, %v4442
      %v4495 = vsel %vm811, -1e+30, %v4443
      %v4496 = vsel %vm812, -1e+30, %v4444
      %v4497 = vsel %vm800, -1e+30, %v4445
      %v4498 = vsel %vm801, -1e+30, %v4446
      %v4499 = vsel %vm802, -1e+30, %v4447
      %v4500 = vsel %vm803, -1e+30, %v4448
      %v4501 = vsel %vm804, -1e+30, %v4449
      %v4502 = vsel %vm805, -1e+30, %v4450
      %v4503 = vsel %vm806, -1e+30, %v4451
      %v4504 = vsel %vm807, -1e+30, %v4452
      %v4505 = vsel %vm808, -1e+30, %v4453
      %v4506 = vsel %vm809, -1e+30, %v4454
      %v4507 = vsel %vm810, -1e+30, %v4455
      %v4508 = vsel %vm811, -1e+30, %v4456
      %v4509 = vsel %vm812, -1e+30, %v4457
      %v4510 = vsel %vm800, -1e+30, %v4458
      %v4511 = vsel %vm801, -1e+30, %v4459
      %v4512 = vsel %vm802, -1e+30, %v4460
      %v4513 = vsel %vm803, -1e+30, %v4461
      %v4514 = vsel %vm804, -1e+30, %v4462
      %v4515 = vsel %vm805, -1e+30, %v4463
      %v4516 = vsel %vm806, -1e+30, %v4464
      %v4517 = vsel %vm807, -1e+30, %v4465
      %v4518 = vsel %vm808, -1e+30, %v4466
      %v4519 = vsel %vm809, -1e+30, %v4467
      %v4520 = vsel %vm810, -1e+30, %v4468
      %v4521 = vsel %vm811, -1e+30, %v4469
      %v4522 = vsel %vm812, -1e+30, %v4470
      %v4524 = vlaneseq
      %v4525 = vshrl.u32 %v4524, 7
      %v4526 = vsub.s32 0, %v4525
      %v4527 = vrot.slane %v3410, %v4526
      %v4529 = vadd.f32 %v3483, %v4527
      %4531 = vrot.lane.b32.xlu0 %v4401, 1
      %v4532 = vpop.permute.xlu0 %4531
      %4534 = vrot.lane.b32.xlu0 %v4401, 2
      %v4535 = vpop.permute.xlu0 %4534
      %4537 = vrot.lane.b32.xlu0 %v4401, 3
      %v4538 = vpop.permute.xlu0 %4537
      %4540 = vrot.lane.b32.xlu0 %v4401, 4
      %v4541 = vpop.permute.xlu0 %4540
      %4543 = vrot.lane.b32.xlu0 %v4401, 5
      %v4544 = vpop.permute.xlu0 %4543
      %4546 = vrot.lane.b32.xlu0 %v4401, 6
      %v4547 = vpop.permute.xlu0 %4546
      %4549 = vrot.lane.b32.xlu0 %v4401, 7
      %v4550 = vpop.permute.xlu0 %4549
      %v4552 = vsel %vm652, %v4401, %v4532
      %v4553 = vsel %vm654, %v4552, %v4535
      %v4554 = vsel %vm656, %v4553, %v4538
      %v4555 = vsel %vm658, %v4554, %v4541
      %v4556 = vsel %vm660, %v4555, %v4544
      %v4557 = vsel %vm662, %v4556, %v4547
      %v4558 = vsel %vm664, %v4557, %v4550
      %4560 = vrot.lane.b32.xlu0 %v3483, 96
      %v4561 = vpop.permute.xlu0 %4560
      %4563 = vrot.lane.b32.xlu0 %v4558, 57
      %v4564 = vpop.permute.xlu0 %4563
      %v4567 = vsel %vm904, %v4529, 0
      %v4569 = vsel %vm904, %v4561, 0
      %4571 = vmatprep.subr.mxu0 0.0
      %4572 = vmatpush1.xpose.msra.mxu0 %v4569
      %4573 = vmatprep.subr.mxu0 0.0
      %4574 = vmatpush1.xpose.msra.mxu0 0.0
      %4575 = vmatprep.subr.mxu0 0.0
      %4576 = vmatpush1.xpose.msra.mxu0 0.0
      %4577 = vmatprep.subr.mxu0 0.0
      %4578 = vmatpush1.xpose.msra.mxu0 0.0
      %4579 = vmatprep.subr.mxu0 0.0
      %4580 = vmatpush1.xpose.msra.mxu0 0.0
      %4581 = vmatprep.subr.mxu0 0.0
      %4582 = vmatpush1.xpose.msra.mxu0 0.0
      %4583 = vmatprep.subr.mxu0 0.0
      %4584 = vmatpush1.xpose.msra.mxu0 0.0
      %4585 = vmatprep.subr.mxu0 0.0
      %4586 = vmatpush1.xpose.msra.mxu0 0.0
      %4587 = vmatprep.subr.mxu0 0.0
      %4588 = vmatpush1.xpose.msra.mxu0 0.0
      %4589 = vmatprep.subr.mxu0 0.0
      %4590 = vmatpush1.xpose.msra.mxu0 0.0
      %4591 = vmatprep.subr.mxu0 0.0
      %4592 = vmatpush1.xpose.msra.mxu0 0.0
      %4593 = vmatprep.subr.mxu0 0.0
      %4594 = vmatpush1.xpose.msra.mxu0 0.0
      %4595 = vmatprep.subr.mxu0 0.0
      %4596 = vmatpush1.xpose.msra.mxu0 0.0
      %4597 = vmatprep.subr.mxu0 0.0
      %4598 = vmatpush1.xpose.msra.mxu0 0.0
      %4599 = vmatprep.subr.mxu0 0.0
      %4600 = vmatpush1.xpose.msra.mxu0 0.0
      %4601 = vmatprep.subr.mxu0 0.0
      %4602 = vmatpush1.xpose.msra.mxu0 0.0
      %4603 = vmatprep.subr.mxu0 0.0
      %4604 = vmatpush1.xpose.msra.mxu0 0.0
      %4605 = vmatprep.subr.mxu0 0.0
      %4606 = vmatpush1.xpose.msra.mxu0 0.0
      %4607 = vmatprep.subr.mxu0 0.0
      %4608 = vmatpush1.xpose.msra.mxu0 0.0
      %4609 = vmatprep.subr.mxu0 0.0
      %4610 = vmatpush1.xpose.msra.mxu0 0.0
      %4611 = vmatprep.subr.mxu0 0.0
      %4612 = vmatpush1.xpose.msra.mxu0 0.0
      %4613 = vmatprep.subr.mxu0 0.0
      %4614 = vmatpush1.xpose.msra.mxu0 0.0
      %4615 = vmatprep.subr.mxu0 0.0
      %4616 = vmatpush1.xpose.msra.mxu0 0.0
      %4617 = vmatprep.subr.mxu0 0.0
      %4618 = vmatpush1.xpose.msra.mxu0 0.0
      %4619 = vmatprep.subr.mxu0 0.0
      %4620 = vmatpush1.xpose.msra.mxu0 0.0
      %4621 = vmatprep.subr.mxu0 0.0
      %4622 = vmatpush1.xpose.msra.mxu0 0.0
      %4623 = vmatprep.subr.mxu0 0.0
      %4624 = vmatpush1.xpose.msra.mxu0 0.0
      %4625 = vmatprep.subr.mxu0 0.0
      %4626 = vmatpush1.xpose.msra.mxu0 0.0
      %4627 = vmatprep.subr.mxu0 0.0
      %4628 = vmatpush1.xpose.msra.mxu0 0.0
      %4629 = vmatprep.subr.mxu0 0.0
      %4630 = vmatpush1.xpose.msra.mxu0 0.0
      %4631 = vmatprep.subr.mxu0 0.0
      %4632 = vmatpush1.xpose.msra.mxu0 0.0
      %4633 = vmatprep.subr.mxu0 0.0
      %4634 = vmatpush1.xpose.msra.mxu0 0.0
      %4635 = vmatprep.mubr.f32.mxu0 0.0
      %4636 = vmatmul.mubr.f32.gmra.mrb[0].mxu0 %v4567
      %v4637 = vpop.f32.mrb[0].mxu0
      %v4638 = vadd.f32 %v4564, %v4637
      %v4639 = vpop.f32.mrb[0].mxu0
      %4640 = vdwg.mxu0
      %v4641 = vmul.f32 %v4638, 0.35355338
      %v4642 = vsel %vm813, -1e+30, %v4641
      %4644 = vrot.lane.b32.xlu0 %v4406, 1
      %v4645 = vpop.permute.xlu0 %4644
      %4647 = vrot.lane.b32.xlu0 %v4406, 2
      %v4648 = vpop.permute.xlu0 %4647
      %4650 = vrot.lane.b32.xlu0 %v4406, 3
      %v4651 = vpop.permute.xlu0 %4650
      %4653 = vrot.lane.b32.xlu0 %v4406, 4
      %v4654 = vpop.permute.xlu0 %4653
      %4656 = vrot.lane.b32.xlu0 %v4406, 5
      %v4657 = vpop.permute.xlu0 %4656
      %4659 = vrot.lane.b32.xlu0 %v4406, 6
      %v4660 = vpop.permute.xlu0 %4659
      %4662 = vrot.lane.b32.xlu0 %v4406, 7
      %v4663 = vpop.permute.xlu0 %4662
      %v4665 = vsel %vm652, %v4406, %v4645
      %v4666 = vsel %vm654, %v4665, %v4648
      %v4667 = vsel %vm656, %v4666, %v4651
      %v4668 = vsel %vm658, %v4667, %v4654
      %v4669 = vsel %vm660, %v4668, %v4657
      %v4670 = vsel %vm662, %v4669, %v4660
      %v4671 = vsel %vm664, %v4670, %v4663
      %4672 = vrot.lane.b32.xlu0 %v4529, 120
      %v4673 = vpop.permute.xlu0 %4672
      %4674 = vrot.lane.b32.xlu0 %v3483, 88
      %v4675 = vpop.permute.xlu0 %4674
      %4677 = vrot.lane.b32.xlu0 %v4671, 57
      %v4678 = vpop.permute.xlu0 %4677
      %v4680 = vsel %vm904, %v4673, 0
      %v4682 = vsel %vm904, %v4675, 0
      %4684 = vmatprep.subr.mxu0 0.0
      %4685 = vmatpush1.xpose.msra.mxu0 %v4682
      %4686 = vmatprep.subr.mxu0 0.0
      %4687 = vmatpush1.xpose.msra.mxu0 0.0
      %4688 = vmatprep.subr.mxu0 0.0
      %4689 = vmatpush1.xpose.msra.mxu0 0.0
      %4690 = vmatprep.subr.mxu0 0.0
      %4691 = vmatpush1.xpose.msra.mxu0 0.0
      %4692 = vmatprep.subr.mxu0 0.0
      %4693 = vmatpush1.xpose.msra.mxu0 0.0
      %4694 = vmatprep.subr.mxu0 0.0
      %4695 = vmatpush1.xpose.msra.mxu0 0.0
      %4696 = vmatprep.subr.mxu0 0.0
      %4697 = vmatpush1.xpose.msra.mxu0 0.0
      %4698 = vmatprep.subr.mxu0 0.0
      %4699 = vmatpush1.xpose.msra.mxu0 0.0
      %4700 = vmatprep.subr.mxu0 0.0
      %4701 = vmatpush1.xpose.msra.mxu0 0.0
      %4702 = vmatprep.subr.mxu0 0.0
      %4703 = vmatpush1.xpose.msra.mxu0 0.0
      %4704 = vmatprep.subr.mxu0 0.0
      %4705 = vmatpush1.xpose.msra.mxu0 0.0
      %4706 = vmatprep.subr.mxu0 0.0
      %4707 = vmatpush1.xpose.msra.mxu0 0.0
      %4708 = vmatprep.subr.mxu0 0.0
      %4709 = vmatpush1.xpose.msra.mxu0 0.0
      %4710 = vmatprep.subr.mxu0 0.0
      %4711 = vmatpush1.xpose.msra.mxu0 0.0
      %4712 = vmatprep.subr.mxu0 0.0
      %4713 = vmatpush1.xpose.msra.mxu0 0.0
      %4714 = vmatprep.subr.mxu0 0.0
      %4715 = vmatpush1.xpose.msra.mxu0 0.0
      %4716 = vmatprep.subr.mxu0 0.0
      %4717 = vmatpush1.xpose.msra.mxu0 0.0
      %4718 = vmatprep.subr.mxu0 0.0
      %4719 = vmatpush1.xpose.msra.mxu0 0.0
      %4720 = vmatprep.subr.mxu0 0.0
      %4721 = vmatpush1.xpose.msra.mxu0 0.0
      %4722 = vmatprep.subr.mxu0 0.0
      %4723 = vmatpush1.xpose.msra.mxu0 0.0
      %4724 = vmatprep.subr.mxu0 0.0
      %4725 = vmatpush1.xpose.msra.mxu0 0.0
      %4726 = vmatprep.subr.mxu0 0.0
      %4727 = vmatpush1.xpose.msra.mxu0 0.0
      %4728 = vmatprep.subr.mxu0 0.0
      %4729 = vmatpush1.xpose.msra.mxu0 0.0
      %4730 = vmatprep.subr.mxu0 0.0
      %4731 = vmatpush1.xpose.msra.mxu0 0.0
      %4732 = vmatprep.subr.mxu0 0.0
      %4733 = vmatpush1.xpose.msra.mxu0 0.0
      %4734 = vmatprep.subr.mxu0 0.0
      %4735 = vmatpush1.xpose.msra.mxu0 0.0
      %4736 = vmatprep.subr.mxu0 0.0
      %4737 = vmatpush1.xpose.msra.mxu0 0.0
      %4738 = vmatprep.subr.mxu0 0.0
      %4739 = vmatpush1.xpose.msra.mxu0 0.0
      %4740 = vmatprep.subr.mxu0 0.0
      %4741 = vmatpush1.xpose.msra.mxu0 0.0
      %4742 = vmatprep.subr.mxu0 0.0
      %4743 = vmatpush1.xpose.msra.mxu0 0.0
      %4744 = vmatprep.subr.mxu0 0.0
      %4745 = vmatpush1.xpose.msra.mxu0 0.0
      %4746 = vmatprep.subr.mxu0 0.0
      %4747 = vmatpush1.xpose.msra.mxu0 0.0
      %4748 = vmatprep.mubr.f32.mxu0 0.0
      %4749 = vmatmul.mubr.f32.gmra.mrb[0].mxu0 %v4680
      %v4750 = vpop.f32.mrb[0].mxu0
      %v4751 = vadd.f32 %v4678, %v4750
      %v4752 = vpop.f32.mrb[0].mxu0
      %4753 = vdwg.mxu0
      %v4754 = vmul.f32 %v4751, 0.35355338
      %v4755 = vsel %vm813, -1e+30, %v4754
      %4757 = vrot.lane.b32.xlu0 %v4411, 1
      %v4758 = vpop.permute.xlu0 %4757
      %4760 = vrot.lane.b32.xlu0 %v4411, 2
      %v4761 = vpop.permute.xlu0 %4760
      %4763 = vrot.lane.b32.xlu0 %v4411, 3
      %v4764 = vpop.permute.xlu0 %4763
      %4766 = vrot.lane.b32.xlu0 %v4411, 4
      %v4767 = vpop.permute.xlu0 %4766
      %4769 = vrot.lane.b32.xlu0 %v4411, 5
      %v4770 = vpop.permute.xlu0 %4769
      %4772 = vrot.lane.b32.xlu0 %v4411, 6
      %v4773 = vpop.permute.xlu0 %4772
      %4775 = vrot.lane.b32.xlu0 %v4411, 7
      %v4776 = vpop.permute.xlu0 %4775
      %v4778 = vsel %vm652, %v4411, %v4758
      %v4779 = vsel %vm654, %v4778, %v4761
      %v4780 = vsel %vm656, %v4779, %v4764
      %v4781 = vsel %vm658, %v4780, %v4767
      %v4782 = vsel %vm660, %v4781, %v4770
      %v4783 = vsel %vm662, %v4782, %v4773
      %v4784 = vsel %vm664, %v4783, %v4776
      %4785 = vrot.lane.b32.xlu0 %v4529, 112
      %v4786 = vpop.permute.xlu0 %4785
      %4787 = vrot.lane.b32.xlu0 %v3483, 80
      %v4788 = vpop.permute.xlu0 %4787
      %4790 = vrot.lane.b32.xlu0 %v4784, 57
      %v4791 = vpop.permute.xlu0 %4790
      %v4793 = vsel %vm904, %v4786, 0
      %v4795 = vsel %vm904, %v4788, 0
      %4797 = vmatprep.subr.mxu0 0.0
      %4798 = vmatpush1.xpose.msra.mxu0 %v4795
      %4799 = vmatprep.subr.mxu0 0.0
      %4800 = vmatpush1.xpose.msra.mxu0 0.0
      %4801 = vmatprep.subr.mxu0 0.0
      %4802 = vmatpush1.xpose.msra.mxu0 0.0
      %4803 = vmatprep.subr.mxu0 0.0
      %4804 = vmatpush1.xpose.msra.mxu0 0.0
      %4805 = vmatprep.subr.mxu0 0.0
      %4806 = vmatpush1.xpose.msra.mxu0 0.0
      %4807 = vmatprep.subr.mxu0 0.0
      %4808 = vmatpush1.xpose.msra.mxu0 0.0
      %4809 = vmatprep.subr.mxu0 0.0
      %4810 = vmatpush1.xpose.msra.mxu0 0.0
      %4811 = vmatprep.subr.mxu0 0.0
      %4812 = vmatpush1.xpose.msra.mxu0 0.0
      %4813 = vmatprep.subr.mxu0 0.0
      %4814 = vmatpush1.xpose.msra.mxu0 0.0
      %4815 = vmatprep.subr.mxu0 0.0
      %4816 = vmatpush1.xpose.msra.mxu0 0.0
      %4817 = vmatprep.subr.mxu0 0.0
      %4818 = vmatpush1.xpose.msra.mxu0 0.0
      %4819 = vmatprep.subr.mxu0 0.0
      %4820 = vmatpush1.xpose.msra.mxu0 0.0
      %4821 = vmatprep.subr.mxu0 0.0
      %4822 = vmatpush1.xpose.msra.mxu0 0.0
      %4823 = vmatprep.subr.mxu0 0.0
      %4824 = vmatpush1.xpose.msra.mxu0 0.0
      %4825 = vmatprep.subr.mxu0 0.0
      %4826 = vmatpush1.xpose.msra.mxu0 0.0
      %4827 = vmatprep.subr.mxu0 0.0
      %4828 = vmatpush1.xpose.msra.mxu0 0.0
      %4829 = vmatprep.subr.mxu0 0.0
      %4830 = vmatpush1.xpose.msra.mxu0 0.0
      %4831 = vmatprep.subr.mxu0 0.0
      %4832 = vmatpush1.xpose.msra.mxu0 0.0
      %4833 = vmatprep.subr.mxu0 0.0
      %4834 = vmatpush1.xpose.msra.mxu0 0.0
      %4835 = vmatprep.subr.mxu0 0.0
      %4836 = vmatpush1.xpose.msra.mxu0 0.0
      %4837 = vmatprep.subr.mxu0 0.0
      %4838 = vmatpush1.xpose.msra.mxu0 0.0
      %4839 = vmatprep.subr.mxu0 0.0
      %4840 = vmatpush1.xpose.msra.mxu0 0.0
      %4841 = vmatprep.subr.mxu0 0.0
      %4842 = vmatpush1.xpose.msra.mxu0 0.0
      %4843 = vmatprep.subr.mxu0 0.0
      %4844 = vmatpush1.xpose.msra.mxu0 0.0
      %4845 = vmatprep.subr.mxu0 0.0
      %4846 = vmatpush1.xpose.msra.mxu0 0.0
      %4847 = vmatprep.subr.mxu0 0.0
      %4848 = vmatpush1.xpose.msra.mxu0 0.0
      %4849 = vmatprep.subr.mxu0 0.0
      %4850 = vmatpush1.xpose.msra.mxu0 0.0
      %4851 = vmatprep.subr.mxu0 0.0
      %4852 = vmatpush1.xpose.msra.mxu0 0.0
      %4853 = vmatprep.subr.mxu0 0.0
      %4854 = vmatpush1.xpose.msra.mxu0 0.0
      %4855 = vmatprep.subr.mxu0 0.0
      %4856 = vmatpush1.xpose.msra.mxu0 0.0
      %4857 = vmatprep.subr.mxu0 0.0
      %4858 = vmatpush1.xpose.msra.mxu0 0.0
      %4859 = vmatprep.subr.mxu0 0.0
      %4860 = vmatpush1.xpose.msra.mxu0 0.0
      %4861 = vmatprep.mubr.f32.mxu0 0.0
      %4862 = vmatmul.mubr.f32.gmra.mrb[0].mxu0 %v4793
      %v4863 = vpop.f32.mrb[0].mxu0
      %v4864 = vadd.f32 %v4791, %v4863
      %v4865 = vpop.f32.mrb[0].mxu0
      %4866 = vdwg.mxu0
      %v4867 = vmul.f32 %v4864, 0.35355338
      %v4868 = vsel %vm813, -1e+30, %v4867
      %4870 = vrot.lane.b32.xlu0 %v4416, 1
      %v4871 = vpop.permute.xlu0 %4870
      %4873 = vrot.lane.b32.xlu0 %v4416, 2
      %v4874 = vpop.permute.xlu0 %4873
      %4876 = vrot.lane.b32.xlu0 %v4416, 3
      %v4877 = vpop.permute.xlu0 %4876
      %4879 = vrot.lane.b32.xlu0 %v4416, 4
      %v4880 = vpop.permute.xlu0 %4879
      %4882 = vrot.lane.b32.xlu0 %v4416, 5
      %v4883 = vpop.permute.xlu0 %4882
      %4885 = vrot.lane.b32.xlu0 %v4416, 6
      %v4886 = vpop.permute.xlu0 %4885
      %4888 = vrot.lane.b32.xlu0 %v4416, 7
      %v4889 = vpop.permute.xlu0 %4888
      %v4891 = vsel %vm652, %v4416, %v4871
      %v4892 = vsel %vm654, %v4891, %v4874
      %v4893 = vsel %vm656, %v4892, %v4877
      %v4894 = vsel %vm658, %v4893, %v4880
      %v4895 = vsel %vm660, %v4894, %v4883
      %v4896 = vsel %vm662, %v4895, %v4886
      %v4897 = vsel %vm664, %v4896, %v4889
      %4898 = vrot.lane.b32.xlu0 %v4529, 104
      %v4899 = vpop.permute.xlu0 %4898
      %4900 = vrot.lane.b32.xlu0 %v3483, 72
      %v4901 = vpop.permute.xlu0 %4900
      %4903 = vrot.lane.b32.xlu0 %v4897, 57
      %v4904 = vpop.permute.xlu0 %4903
      %v4906 = vsel %vm904, %v4899, 0
      %v4908 = vsel %vm904, %v4901, 0
      %4910 = vmatprep.subr.mxu0 0.0
      %4911 = vmatpush1.xpose.msra.mxu0 %v4908
      %4912 = vmatprep.subr.mxu0 0.0
      %4913 = vmatpush1.xpose.msra.mxu0 0.0
      %4914 = vmatprep.subr.mxu0 0.0
      %4915 = vmatpush1.xpose.msra.mxu0 0.0
      %4916 = vmatprep.subr.mxu0 0.0
      %4917 = vmatpush1.xpose.msra.mxu0 0.0
      %4918 = vmatprep.subr.mxu0 0.0
      %4919 = vmatpush1.xpose.msra.mxu0 0.0
      %4920 = vmatprep.subr.mxu0 0.0
      %4921 = vmatpush1.xpose.msra.mxu0 0.0
      %4922 = vmatprep.subr.mxu0 0.0
      %4923 = vmatpush1.xpose.msra.mxu0 0.0
      %4924 = vmatprep.subr.mxu0 0.0
      %4925 = vmatpush1.xpose.msra.mxu0 0.0
      %4926 = vmatprep.subr.mxu0 0.0
      %4927 = vmatpush1.xpose.msra.mxu0 0.0
      %4928 = vmatprep.subr.mxu0 0.0
      %4929 = vmatpush1.xpose.msra.mxu0 0.0
      %4930 = vmatprep.subr.mxu0 0.0
      %4931 = vmatpush1.xpose.msra.mxu0 0.0
      %4932 = vmatprep.subr.mxu0 0.0
      %4933 = vmatpush1.xpose.msra.mxu0 0.0
      %4934 = vmatprep.subr.mxu0 0.0
      %4935 = vmatpush1.xpose.msra.mxu0 0.0
      %4936 = vmatprep.subr.mxu0 0.0
      %4937 = vmatpush1.xpose.msra.mxu0 0.0
      %4938 = vmatprep.subr.mxu0 0.0
      %4939 = vmatpush1.xpose.msra.mxu0 0.0
      %4940 = vmatprep.subr.mxu0 0.0
      %4941 = vmatpush1.xpose.msra.mxu0 0.0
      %4942 = vmatprep.subr.mxu0 0.0
      %4943 = vmatpush1.xpose.msra.mxu0 0.0
      %4944 = vmatprep.subr.mxu0 0.0
      %4945 = vmatpush1.xpose.msra.mxu0 0.0
      %4946 = vmatprep.subr.mxu0 0.0
      %4947 = vmatpush1.xpose.msra.mxu0 0.0
      %4948 = vmatprep.subr.mxu0 0.0
      %4949 = vmatpush1.xpose.msra.mxu0 0.0
      %4950 = vmatprep.subr.mxu0 0.0
      %4951 = vmatpush1.xpose.msra.mxu0 0.0
      %4952 = vmatprep.subr.mxu0 0.0
      %4953 = vmatpush1.xpose.msra.mxu0 0.0
      %4954 = vmatprep.subr.mxu0 0.0
      %4955 = vmatpush1.xpose.msra.mxu0 0.0
      %4956 = vmatprep.subr.mxu0 0.0
      %4957 = vmatpush1.xpose.msra.mxu0 0.0
      %4958 = vmatprep.subr.mxu0 0.0
      %4959 = vmatpush1.xpose.msra.mxu0 0.0
      %4960 = vmatprep.subr.mxu0 0.0
      %4961 = vmatpush1.xpose.msra.mxu0 0.0
      %4962 = vmatprep.subr.mxu0 0.0
      %4963 = vmatpush1.xpose.msra.mxu0 0.0
      %4964 = vmatprep.subr.mxu0 0.0
      %4965 = vmatpush1.xpose.msra.mxu0 0.0
      %4966 = vmatprep.subr.mxu0 0.0
      %4967 = vmatpush1.xpose.msra.mxu0 0.0
      %4968 = vmatprep.subr.mxu0 0.0
      %4969 = vmatpush1.xpose.msra.mxu0 0.0
      %4970 = vmatprep.subr.mxu0 0.0
      %4971 = vmatpush1.xpose.msra.mxu0 0.0
      %4972 = vmatprep.subr.mxu0 0.0
      %4973 = vmatpush1.xpose.msra.mxu0 0.0
      %4974 = vmatprep.mubr.f32.mxu0 0.0
      %4975 = vmatmul.mubr.f32.gmra.mrb[0].mxu0 %v4906
      %v4976 = vpop.f32.mrb[0].mxu0
      %v4977 = vadd.f32 %v4904, %v4976
      %v4978 = vpop.f32.mrb[0].mxu0
      %4979 = vdwg.mxu0
      %v4980 = vmul.f32 %v4977, 0.35355338
      %v4981 = vsel %vm813, -1e+30, %v4980
      %v4982 = vmax.f32 %v4471, %v4472
      %v4983 = vmax.f32 %v4982, %v4473
      %v4984 = vmax.f32 %v4983, %v4474
      %v4985 = vmax.f32 %v4984, %v4475
      %v4986 = vmax.f32 %v4985, %v4476
      %v4987 = vmax.f32 %v4986, %v4477
      %v4988 = vmax.f32 %v4987, %v4478
      %v4989 = vmax.f32 %v4988, %v4479
      %v4990 = vmax.f32 %v4989, %v4480
      %v4991 = vmax.f32 %v4990, %v4481
      %v4992 = vmax.f32 %v4991, %v4482
      %v4993 = vmax.f32 %v4992, %v4483
      %4994 = vmax.xlane.f32.xlu0 %v4993
      %v4995 = vpop.xlane.xlu0 %4994
      %v4996 = vmax.f32 %v4484, %v4485
      %v4997 = vmax.f32 %v4996, %v4486
      %v4998 = vmax.f32 %v4997, %v4487
      %v4999 = vmax.f32 %v4998, %v4488
      %v5000 = vmax.f32 %v4999, %v4489
      %v5001 = vmax.f32 %v5000, %v4490
      %v5002 = vmax.f32 %v5001, %v4491
      %v5003 = vmax.f32 %v5002, %v4492
      %v5004 = vmax.f32 %v5003, %v4493
      %v5005 = vmax.f32 %v5004, %v4494
      %v5006 = vmax.f32 %v5005, %v4495
      %v5007 = vmax.f32 %v5006, %v4496
      %5008 = vmax.xlane.f32.xlu0 %v5007
      %v5009 = vpop.xlane.xlu0 %5008
      %v5010 = vmax.f32 %v4497, %v4498
      %v5011 = vmax.f32 %v5010, %v4499
      %v5012 = vmax.f32 %v5011, %v4500
      %v5013 = vmax.f32 %v5012, %v4501
      %v5014 = vmax.f32 %v5013, %v4502
      %v5015 = vmax.f32 %v5014, %v4503
      %v5016 = vmax.f32 %v5015, %v4504
      %v5017 = vmax.f32 %v5016, %v4505
      %v5018 = vmax.f32 %v5017, %v4506
      %v5019 = vmax.f32 %v5018, %v4507
      %v5020 = vmax.f32 %v5019, %v4508
      %v5021 = vmax.f32 %v5020, %v4509
      %5022 = vmax.xlane.f32.xlu0 %v5021
      %v5023 = vpop.xlane.xlu0 %5022
      %v5024 = vmax.f32 %v4510, %v4511
      %v5025 = vmax.f32 %v5024, %v4512
      %v5026 = vmax.f32 %v5025, %v4513
      %v5027 = vmax.f32 %v5026, %v4514
      %v5028 = vmax.f32 %v5027, %v4515
      %v5029 = vmax.f32 %v5028, %v4516
      %v5030 = vmax.f32 %v5029, %v4517
      %v5031 = vmax.f32 %v5030, %v4518
      %v5032 = vmax.f32 %v5031, %v4519
      %v5033 = vmax.f32 %v5032, %v4520
      %v5034 = vmax.f32 %v5033, %v4521
      %v5035 = vmax.f32 %v5034, %v4522
      %5036 = vmax.xlane.f32.xlu0 %v5035
      %v5037 = vpop.xlane.xlu0 %5036
      %v5038 = vsel %vm904, %v4642, -inf
      %5039 = vmax.xlane.f32.xlu0 %v5038
      %v5040 = vpop.xlane.xlu0 %5039
      %v5041 = vsel %vm904, %v4755, -inf
      %5042 = vmax.xlane.f32.xlu0 %v5041
      %v5043 = vpop.xlane.xlu0 %5042
      %v5044 = vsel %vm904, %v4868, -inf
      %5045 = vmax.xlane.f32.xlu0 %v5044
      %v5046 = vpop.xlane.xlu0 %5045
      %v5047 = vsel %vm904, %v4981, -inf
      %5048 = vmax.xlane.f32.xlu0 %v5047
      %v5049 = vpop.xlane.xlu0 %5048
      %v5050 = vmax.f32 %v4995, %v5040
      %v5051 = vmax.f32 %v5009, %v5043
      %v5052 = vmax.f32 %v5023, %v5046
      %v5053 = vmax.f32 %v5037, %v5049
      %v5054 = vsub.f32 %v4642, %v5050
      %v5055 = vsub.f32 %v4755, %v5051
      %v5056 = vsub.f32 %v4868, %v5052
      %v5057 = vsub.f32 %v4981, %v5053
      %v5058 = vmul.f32 %v5054, 1.442695
      %v5059 = vpow.pop %v5058
      %v5060 = vmul.f32 %v5055, 1.442695
      %v5061 = vpow.pop %v5060
      %v5062 = vmul.f32 %v5056, 1.442695
      %v5063 = vpow.pop %v5062
      %v5064 = vmul.f32 %v5057, 1.442695
      %v5065 = vpow.pop %v5064
      %v5066 = vsub.f32 %v4471, %v5050
      %v5067 = vsub.f32 %v4472, %v5050
      %v5068 = vsub.f32 %v4473, %v5050
      %v5069 = vsub.f32 %v4474, %v5050
      %v5070 = vsub.f32 %v4475, %v5050
      %v5071 = vsub.f32 %v4476, %v5050
      %v5072 = vsub.f32 %v4477, %v5050
      %v5073 = vsub.f32 %v4478, %v5050
      %v5074 = vsub.f32 %v4479, %v5050
      %v5075 = vsub.f32 %v4480, %v5050
      %v5076 = vsub.f32 %v4481, %v5050
      %v5077 = vsub.f32 %v4482, %v5050
      %v5078 = vsub.f32 %v4483, %v5050
      %v5079 = vsub.f32 %v4484, %v5051
      %v5080 = vsub.f32 %v4485, %v5051
      %v5081 = vsub.f32 %v4486, %v5051
      %v5082 = vsub.f32 %v4487, %v5051
      %v5083 = vsub.f32 %v4488, %v5051
      %v5084 = vsub.f32 %v4489, %v5051
      %v5085 = vsub.f32 %v4490, %v5051
      %v5086 = vsub.f32 %v4491, %v5051
      %v5087 = vsub.f32 %v4492, %v5051
      %v5088 = vsub.f32 %v4493, %v5051
      %v5089 = vsub.f32 %v4494, %v5051
      %v5090 = vsub.f32 %v4495, %v5051
      %v5091 = vsub.f32 %v4496, %v5051
      %v5092 = vsub.f32 %v4497, %v5052
      %v5093 = vsub.f32 %v4498, %v5052
      %v5094 = vsub.f32 %v4499, %v5052
      %v5095 = vsub.f32 %v4500, %v5052
      %v5096 = vsub.f32 %v4501, %v5052
      %v5097 = vsub.f32 %v4502, %v5052
      %v5098 = vsub.f32 %v4503, %v5052
      %v5099 = vsub.f32 %v4504, %v5052
      %v5100 = vsub.f32 %v4505, %v5052
      %v5101 = vsub.f32 %v4506, %v5052
      %v5102 = vsub.f32 %v4507, %v5052
      %v5103 = vsub.f32 %v4508, %v5052
      %v5104 = vsub.f32 %v4509, %v5052
      %v5105 = vsub.f32 %v4510, %v5053
      %v5106 = vsub.f32 %v4511, %v5053
      %v5107 = vsub.f32 %v4512, %v5053
      %v5108 = vsub.f32 %v4513, %v5053
      %v5109 = vsub.f32 %v4514, %v5053
      %v5110 = vsub.f32 %v4515, %v5053
      %v5111 = vsub.f32 %v4516, %v5053
      %v5112 = vsub.f32 %v4517, %v5053
      %v5113 = vsub.f32 %v4518, %v5053
      %v5114 = vsub.f32 %v4519, %v5053
      %v5115 = vsub.f32 %v4520, %v5053
      %v5116 = vsub.f32 %v4521, %v5053
      %v5117 = vsub.f32 %v4522, %v5053
      %v5118 = vmul.f32 %v5066, 1.442695
      %v5119 = vpow.pop %v5118
      %v5120 = vmul.f32 %v5067, 1.442695
      %v5121 = vpow.pop %v5120
      %v5122 = vmul.f32 %v5068, 1.442695
      %v5123 = vpow.pop %v5122
      %v5124 = vmul.f32 %v5069, 1.442695
      %v5125 = vpow.pop %v5124
      %v5126 = vmul.f32 %v5070, 1.442695
      %v5127 = vpow.pop %v5126
      %v5128 = vmul.f32 %v5071, 1.442695
      %v5129 = vpow.pop %v5128
      %v5130 = vmul.f32 %v5072, 1.442695
      %v5131 = vpow.pop %v5130
      %v5132 = vmul.f32 %v5073, 1.442695
      %v5133 = vpow.pop %v5132
      %v5134 = vmul.f32 %v5074, 1.442695
      %v5135 = vpow.pop %v5134
      %v5136 = vmul.f32 %v5075, 1.442695
      %v5137 = vpow.pop %v5136
      %v5138 = vmul.f32 %v5076, 1.442695
      %v5139 = vpow.pop %v5138
      %v5140 = vmul.f32 %v5077, 1.442695
      %v5141 = vpow.pop %v5140
      %v5142 = vmul.f32 %v5078, 1.442695
      %v5143 = vpow.pop %v5142
      %v5144 = vmul.f32 %v5079, 1.442695
      %v5145 = vpow.pop %v5144
      %v5146 = vmul.f32 %v5080, 1.442695
      %v5147 = vpow.pop %v5146
      %v5148 = vmul.f32 %v5081, 1.442695
      %v5149 = vpow.pop %v5148
      %v5150 = vmul.f32 %v5082, 1.442695
      %v5151 = vpow.pop %v5150
      %v5152 = vmul.f32 %v5083, 1.442695
      %v5153 = vpow.pop %v5152
      %v5154 = vmul.f32 %v5084, 1.442695
      %v5155 = vpow.pop %v5154
      %v5156 = vmul.f32 %v5085, 1.442695
      %v5157 = vpow.pop %v5156
      %v5158 = vmul.f32 %v5086, 1.442695
      %v5159 = vpow.pop %v5158
      %v5160 = vmul.f32 %v5087, 1.442695
      %v5161 = vpow.pop %v5160
      %v5162 = vmul.f32 %v5088, 1.442695
      %v5163 = vpow.pop %v5162
      %v5164 = vmul.f32 %v5089, 1.442695
      %v5165 = vpow.pop %v5164
      %v5166 = vmul.f32 %v5090, 1.442695
      %v5167 = vpow.pop %v5166
      %v5168 = vmul.f32 %v5091, 1.442695
      %v5169 = vpow.pop %v5168
      %v5170 = vmul.f32 %v5092, 1.442695
      %v5171 = vpow.pop %v5170
      %v5172 = vmul.f32 %v5093, 1.442695
      %v5173 = vpow.pop %v5172
      %v5174 = vmul.f32 %v5094, 1.442695
      %v5175 = vpow.pop %v5174
      %v5176 = vmul.f32 %v5095, 1.442695
      %v5177 = vpow.pop %v5176
      %v5178 = vmul.f32 %v5096, 1.442695
      %v5179 = vpow.pop %v5178
      %v5180 = vmul.f32 %v5097, 1.442695
      %v5181 = vpow.pop %v5180
      %v5182 = vmul.f32 %v5098, 1.442695
      %v5183 = vpow.pop %v5182
      %v5184 = vmul.f32 %v5099, 1.442695
      %v5185 = vpow.pop %v5184
      %v5186 = vmul.f32 %v5100, 1.442695
      %v5187 = vpow.pop %v5186
      %v5188 = vmul.f32 %v5101, 1.442695
      %v5189 = vpow.pop %v5188
      %v5190 = vmul.f32 %v5102, 1.442695
      %v5191 = vpow.pop %v5190
      %v5192 = vmul.f32 %v5103, 1.442695
      %v5193 = vpow.pop %v5192
      %v5194 = vmul.f32 %v5104, 1.442695
      %v5195 = vpow.pop %v5194
      %v5196 = vmul.f32 %v5105, 1.442695
      %v5197 = vpow.pop %v5196
      %v5198 = vmul.f32 %v5106, 1.442695
      %v5199 = vpow.pop %v5198
      %v5200 = vmul.f32 %v5107, 1.442695
      %v5201 = vpow.pop %v5200
      %v5202 = vmul.f32 %v5108, 1.442695
      %v5203 = vpow.pop %v5202
      %v5204 = vmul.f32 %v5109, 1.442695
      %v5205 = vpow.pop %v5204
      %v5206 = vmul.f32 %v5110, 1.442695
      %v5207 = vpow.pop %v5206
      %v5208 = vmul.f32 %v5111, 1.442695
      %v5209 = vpow.pop %v5208
      %v5210 = vmul.f32 %v5112, 1.442695
      %v5211 = vpow.pop %v5210
      %v5212 = vmul.f32 %v5113, 1.442695
      %v5213 = vpow.pop %v5212
      %v5214 = vmul.f32 %v5114, 1.442695
      %v5215 = vpow.pop %v5214
      %v5216 = vmul.f32 %v5115, 1.442695
      %v5217 = vpow.pop %v5216
      %v5218 = vmul.f32 %v5116, 1.442695
      %v5219 = vpow.pop %v5218
      %v5220 = vmul.f32 %v5117, 1.442695
      %v5221 = vpow.pop %v5220
      %v5222 = vadd.f32 %v5119, %v5121
      %v5223 = vadd.f32 %v5222, %v5123
      %v5224 = vadd.f32 %v5223, %v5125
      %v5225 = vadd.f32 %v5224, %v5127
      %v5226 = vadd.f32 %v5225, %v5129
      %v5227 = vadd.f32 %v5226, %v5131
      %v5228 = vadd.f32 %v5227, %v5133
      %v5229 = vadd.f32 %v5228, %v5135
      %v5230 = vadd.f32 %v5229, %v5137
      %v5231 = vadd.f32 %v5230, %v5139
      %v5232 = vadd.f32 %v5231, %v5141
      %v5233 = vadd.f32 %v5232, %v5143
      %5234 = vadd.xlane.f32.xlu0 %v5233
      %v5235 = vpop.xlane.xlu0 %5234
      %v5236 = vadd.f32 %v5145, %v5147
      %v5237 = vadd.f32 %v5236, %v5149
      %v5238 = vadd.f32 %v5237, %v5151
      %v5239 = vadd.f32 %v5238, %v5153
      %v5240 = vadd.f32 %v5239, %v5155
      %v5241 = vadd.f32 %v5240, %v5157
      %v5242 = vadd.f32 %v5241, %v5159
      %v5243 = vadd.f32 %v5242, %v5161
      %v5244 = vadd.f32 %v5243, %v5163
      %v5245 = vadd.f32 %v5244, %v5165
      %v5246 = vadd.f32 %v5245, %v5167
      %v5247 = vadd.f32 %v5246, %v5169
      %5248 = vadd.xlane.f32.xlu0 %v5247
      %v5249 = vpop.xlane.xlu0 %5248
      %v5250 = vadd.f32 %v5171, %v5173
      %v5251 = vadd.f32 %v5250, %v5175
      %v5252 = vadd.f32 %v5251, %v5177
      %v5253 = vadd.f32 %v5252, %v5179
      %v5254 = vadd.f32 %v5253, %v5181
      %v5255 = vadd.f32 %v5254, %v5183
      %v5256 = vadd.f32 %v5255, %v5185
      %v5257 = vadd.f32 %v5256, %v5187
      %v5258 = vadd.f32 %v5257, %v5189
      %v5259 = vadd.f32 %v5258, %v5191
      %v5260 = vadd.f32 %v5259, %v5193
      %v5261 = vadd.f32 %v5260, %v5195
      %5262 = vadd.xlane.f32.xlu0 %v5261
      %v5263 = vpop.xlane.xlu0 %5262
      %v5264 = vadd.f32 %v5197, %v5199
      %v5265 = vadd.f32 %v5264, %v5201
      %v5266 = vadd.f32 %v5265, %v5203
      %v5267 = vadd.f32 %v5266, %v5205
      %v5268 = vadd.f32 %v5267, %v5207
      %v5269 = vadd.f32 %v5268, %v5209
      %v5270 = vadd.f32 %v5269, %v5211
      %v5271 = vadd.f32 %v5270, %v5213
      %v5272 = vadd.f32 %v5271, %v5215
      %v5273 = vadd.f32 %v5272, %v5217
      %v5274 = vadd.f32 %v5273, %v5219
      %v5275 = vadd.f32 %v5274, %v5221
      %5276 = vadd.xlane.f32.xlu0 %v5275
      %v5277 = vpop.xlane.xlu0 %5276
      %v5278 = vsel %vm904, %v5059, 0.0
      %5279 = vadd.xlane.f32.xlu0 %v5278
      %v5280 = vpop.xlane.xlu0 %5279
      %v5281 = vsel %vm904, %v5061, 0.0
      %5282 = vadd.xlane.f32.xlu0 %v5281
      %v5283 = vpop.xlane.xlu0 %5282
      %v5284 = vsel %vm904, %v5063, 0.0
      %5285 = vadd.xlane.f32.xlu0 %v5284
      %v5286 = vpop.xlane.xlu0 %5285
      %v5287 = vsel %vm904, %v5065, 0.0
      %5288 = vadd.xlane.f32.xlu0 %v5287
      %v5289 = vpop.xlane.xlu0 %5288
      %v5290 = vadd.f32 %v5235, %v5280
      %v5291 = vadd.f32 %v5249, %v5283
      %v5292 = vadd.f32 %v5263, %v5286
      %v5293 = vadd.f32 %v5277, %v5289
      %v5294 = vrcp.pop %v5290
      %v5295 = vrcp.pop %v5291
      %v5296 = vrcp.pop %v5292
      %v5297 = vrcp.pop %v5293
      %5298 = vrot.lane.b32.xlu0 %v3483, 64
      %v5299 = vpop.permute.xlu0 %5298
      %v5302 = vsel %vm904, %v5059, 0
      %5304 = vmatprep.subr.mxu0 0.0
      %5305 = vmatpush1.msra.mxu0 %v5299
      %5306 = vmatprep.subr.mxu0 0.0
      %5307 = vmatpush1.msra.mxu0 0.0
      %5308 = vmatprep.subr.mxu0 0.0
      %5309 = vmatpush1.msra.mxu0 0.0
      %5310 = vmatprep.subr.mxu0 0.0
      %5311 = vmatpush1.msra.mxu0 0.0
      %5312 = vmatprep.subr.mxu0 0.0
      %5313 = vmatpush1.msra.mxu0 0.0
      %5314 = vmatprep.subr.mxu0 0.0
      %5315 = vmatpush1.msra.mxu0 0.0
      %5316 = vmatprep.subr.mxu0 0.0
      %5317 = vmatpush1.msra.mxu0 0.0
      %5318 = vmatprep.subr.mxu0 0.0
      %5319 = vmatpush1.msra.mxu0 0.0
      %5320 = vmatprep.subr.mxu0 0.0
      %5321 = vmatpush1.msra.mxu0 0.0
      %5322 = vmatprep.subr.mxu0 0.0
      %5323 = vmatpush1.msra.mxu0 0.0
      %5324 = vmatprep.subr.mxu0 0.0
      %5325 = vmatpush1.msra.mxu0 0.0
      %5326 = vmatprep.subr.mxu0 0.0
      %5327 = vmatpush1.msra.mxu0 0.0
      %5328 = vmatprep.subr.mxu0 0.0
      %5329 = vmatpush1.msra.mxu0 0.0
      %5330 = vmatprep.subr.mxu0 0.0
      %5331 = vmatpush1.msra.mxu0 0.0
      %5332 = vmatprep.subr.mxu0 0.0
      %5333 = vmatpush1.msra.mxu0 0.0
      %5334 = vmatprep.subr.mxu0 0.0
      %5335 = vmatpush1.msra.mxu0 0.0
      %5336 = vmatprep.subr.mxu0 0.0
      %5337 = vmatpush1.msra.mxu0 0.0
      %5338 = vmatprep.subr.mxu0 0.0
      %5339 = vmatpush1.msra.mxu0 0.0
      %5340 = vmatprep.subr.mxu0 0.0
      %5341 = vmatpush1.msra.mxu0 0.0
      %5342 = vmatprep.subr.mxu0 0.0
      %5343 = vmatpush1.msra.mxu0 0.0
      %5344 = vmatprep.subr.mxu0 0.0
      %5345 = vmatpush1.msra.mxu0 0.0
      %5346 = vmatprep.subr.mxu0 0.0
      %5347 = vmatpush1.msra.mxu0 0.0
      %5348 = vmatprep.subr.mxu0 0.0
      %5349 = vmatpush1.msra.mxu0 0.0
      %5350 = vmatprep.subr.mxu0 0.0
      %5351 = vmatpush1.msra.mxu0 0.0
      %5352 = vmatprep.subr.mxu0 0.0
      %5353 = vmatpush1.msra.mxu0 0.0
      %5354 = vmatprep.subr.mxu0 0.0
      %5355 = vmatpush1.msra.mxu0 0.0
      %5356 = vmatprep.subr.mxu0 0.0
      %5357 = vmatpush1.msra.mxu0 0.0
      %5358 = vmatprep.subr.mxu0 0.0
      %5359 = vmatpush1.msra.mxu0 0.0
      %5360 = vmatprep.subr.mxu0 0.0
      %5361 = vmatpush1.msra.mxu0 0.0
      %5362 = vmatprep.subr.mxu0 0.0
      %5363 = vmatpush1.msra.mxu0 0.0
      %5364 = vmatprep.subr.mxu0 0.0
      %5365 = vmatpush1.msra.mxu0 0.0
      %5366 = vmatprep.subr.mxu0 0.0
      %5367 = vmatpush1.msra.mxu0 0.0
      %5368 = vmatprep.mubr.f32.mxu0 0.0
      %5369 = vmatmul.mubr.f32.gmra.mrb[0].mxu0 %v5302
      %v5370 = vpop.f32.mrb[0].mxu0
      %v5371 = vadd.f32 0.0, %v5370
      %v5372 = vpop.f32.mrb[0].mxu0
      %5373 = vdwg.mxu0
      %v5374 = vmul.f32 %v5371, %v5294
      %5375 = vrot.lane.b32.xlu0 %v3483, 56
      %v5376 = vpop.permute.xlu0 %5375
      %v5379 = vsel %vm904, %v5061, 0
      %5381 = vmatprep.subr.mxu0 0.0
      %5382 = vmatpush1.msra.mxu0 %v5376
      %5383 = vmatprep.subr.mxu0 0.0
      %5384 = vmatpush1.msra.mxu0 0.0
      %5385 = vmatprep.subr.mxu0 0.0
      %5386 = vmatpush1.msra.mxu0 0.0
      %5387 = vmatprep.subr.mxu0 0.0
      %5388 = vmatpush1.msra.mxu0 0.0
      %5389 = vmatprep.subr.mxu0 0.0
      %5390 = vmatpush1.msra.mxu0 0.0
      %5391 = vmatprep.subr.mxu0 0.0
      %5392 = vmatpush1.msra.mxu0 0.0
      %5393 = vmatprep.subr.mxu0 0.0
      %5394 = vmatpush1.msra.mxu0 0.0
      %5395 = vmatprep.subr.mxu0 0.0
      %5396 = vmatpush1.msra.mxu0 0.0
      %5397 = vmatprep.subr.mxu0 0.0
      %5398 = vmatpush1.msra.mxu0 0.0
      %5399 = vmatprep.subr.mxu0 0.0
      %5400 = vmatpush1.msra.mxu0 0.0
      %5401 = vmatprep.subr.mxu0 0.0
      %5402 = vmatpush1.msra.mxu0 0.0
      %5403 = vmatprep.subr.mxu0 0.0
      %5404 = vmatpush1.msra.mxu0 0.0
      %5405 = vmatprep.subr.mxu0 0.0
      %5406 = vmatpush1.msra.mxu0 0.0
      %5407 = vmatprep.subr.mxu0 0.0
      %5408 = vmatpush1.msra.mxu0 0.0
      %5409 = vmatprep.subr.mxu0 0.0
      %5410 = vmatpush1.msra.mxu0 0.0
      %5411 = vmatprep.subr.mxu0 0.0
      %5412 = vmatpush1.msra.mxu0 0.0
      %5413 = vmatprep.subr.mxu0 0.0
      %5414 = vmatpush1.msra.mxu0 0.0
      %5415 = vmatprep.subr.mxu0 0.0
      %5416 = vmatpush1.msra.mxu0 0.0
      %5417 = vmatprep.subr.mxu0 0.0
      %5418 = vmatpush1.msra.mxu0 0.0
      %5419 = vmatprep.subr.mxu0 0.0
      %5420 = vmatpush1.msra.mxu0 0.0
      %5421 = vmatprep.subr.mxu0 0.0
      %5422 = vmatpush1.msra.mxu0 0.0
      %5423 = vmatprep.subr.mxu0 0.0
      %5424 = vmatpush1.msra.mxu0 0.0
      %5425 = vmatprep.subr.mxu0 0.0
      %5426 = vmatpush1.msra.mxu0 0.0
      %5427 = vmatprep.subr.mxu0 0.0
      %5428 = vmatpush1.msra.mxu0 0.0
      %5429 = vmatprep.subr.mxu0 0.0
      %5430 = vmatpush1.msra.mxu0 0.0
      %5431 = vmatprep.subr.mxu0 0.0
      %5432 = vmatpush1.msra.mxu0 0.0
      %5433 = vmatprep.subr.mxu0 0.0
      %5434 = vmatpush1.msra.mxu0 0.0
      %5435 = vmatprep.subr.mxu0 0.0
      %5436 = vmatpush1.msra.mxu0 0.0
      %5437 = vmatprep.subr.mxu0 0.0
      %5438 = vmatpush1.msra.mxu0 0.0
      %5439 = vmatprep.subr.mxu0 0.0
      %5440 = vmatpush1.msra.mxu0 0.0
      %5441 = vmatprep.subr.mxu0 0.0
      %5442 = vmatpush1.msra.mxu0 0.0
      %5443 = vmatprep.subr.mxu0 0.0
      %5444 = vmatpush1.msra.mxu0 0.0
      %5445 = vmatprep.mubr.f32.mxu0 0.0
      %5446 = vmatmul.mubr.f32.gmra.mrb[0].mxu0 %v5379
      %v5447 = vpop.f32.mrb[0].mxu0
      %v5448 = vadd.f32 0.0, %v5447
      %v5449 = vpop.f32.mrb[0].mxu0
      %5450 = vdwg.mxu0
      %v5451 = vmul.f32 %v5448, %v5295
      %5452 = vrot.lane.b32.xlu0 %v3483, 48
      %v5453 = vpop.permute.xlu0 %5452
      %v5456 = vsel %vm904, %v5063, 0
      %5458 = vmatprep.subr.mxu0 0.0
      %5459 = vmatpush1.msra.mxu0 %v5453
      %5460 = vmatprep.subr.mxu0 0.0
      %5461 = vmatpush1.msra.mxu0 0.0
      %5462 = vmatprep.subr.mxu0 0.0
      %5463 = vmatpush1.msra.mxu0 0.0
      %5464 = vmatprep.subr.mxu0 0.0
      %5465 = vmatpush1.msra.mxu0 0.0
      %5466 = vmatprep.subr.mxu0 0.0
      %5467 = vmatpush1.msra.mxu0 0.0
      %5468 = vmatprep.subr.mxu0 0.0
      %5469 = vmatpush1.msra.mxu0 0.0
      %5470 = vmatprep.subr.mxu0 0.0
      %5471 = vmatpush1.msra.mxu0 0.0
      %5472 = vmatprep.subr.mxu0 0.0
      %5473 = vmatpush1.msra.mxu0 0.0
      %5474 = vmatprep.subr.mxu0 0.0
      %5475 = vmatpush1.msra.mxu0 0.0
      %5476 = vmatprep.subr.mxu0 0.0
      %5477 = vmatpush1.msra.mxu0 0.0
      %5478 = vmatprep.subr.mxu0 0.0
      %5479 = vmatpush1.msra.mxu0 0.0
      %5480 = vmatprep.subr.mxu0 0.0
      %5481 = vmatpush1.msra.mxu0 0.0
      %5482 = vmatprep.subr.mxu0 0.0
      %5483 = vmatpush1.msra.mxu0 0.0
      %5484 = vmatprep.subr.mxu0 0.0
      %5485 = vmatpush1.msra.mxu0 0.0
      %5486 = vmatprep.subr.mxu0 0.0
      %5487 = vmatpush1.msra.mxu0 0.0
      %5488 = vmatprep.subr.mxu0 0.0
      %5489 = vmatpush1.msra.mxu0 0.0
      %5490 = vmatprep.subr.mxu0 0.0
      %5491 = vmatpush1.msra.mxu0 0.0
      %5492 = vmatprep.subr.mxu0 0.0
      %5493 = vmatpush1.msra.mxu0 0.0
      %5494 = vmatprep.subr.mxu0 0.0
      %5495 = vmatpush1.msra.mxu0 0.0
      %5496 = vmatprep.subr.mxu0 0.0
      %5497 = vmatpush1.msra.mxu0 0.0
      %5498 = vmatprep.subr.mxu0 0.0
      %5499 = vmatpush1.msra.mxu0 0.0
      %5500 = vmatprep.subr.mxu0 0.0
      %5501 = vmatpush1.msra.mxu0 0.0
      %5502 = vmatprep.subr.mxu0 0.0
      %5503 = vmatpush1.msra.mxu0 0.0
      %5504 = vmatprep.subr.mxu0 0.0
      %5505 = vmatpush1.msra.mxu0 0.0
      %5506 = vmatprep.subr.mxu0 0.0
      %5507 = vmatpush1.msra.mxu0 0.0
      %5508 = vmatprep.subr.mxu0 0.0
      %5509 = vmatpush1.msra.mxu0 0.0
      %5510 = vmatprep.subr.mxu0 0.0
      %5511 = vmatpush1.msra.mxu0 0.0
      %5512 = vmatprep.subr.mxu0 0.0
      %5513 = vmatpush1.msra.mxu0 0.0
      %5514 = vmatprep.subr.mxu0 0.0
      %5515 = vmatpush1.msra.mxu0 0.0
      %5516 = vmatprep.subr.mxu0 0.0
      %5517 = vmatpush1.msra.mxu0 0.0
      %5518 = vmatprep.subr.mxu0 0.0
      %5519 = vmatpush1.msra.mxu0 0.0
      %5520 = vmatprep.subr.mxu0 0.0
      %5521 = vmatpush1.msra.mxu0 0.0
      %5522 = vmatprep.mubr.f32.mxu0 0.0
      %5523 = vmatmul.mubr.f32.gmra.mrb[0].mxu0 %v5456
      %v5524 = vpop.f32.mrb[0].mxu0
      %v5525 = vadd.f32 0.0, %v5524
      %v5526 = vpop.f32.mrb[0].mxu0
      %5527 = vdwg.mxu0
      %v5528 = vmul.f32 %v5525, %v5296
      %5529 = vrot.lane.b32.xlu0 %v3483, 40
      %v5530 = vpop.permute.xlu0 %5529
      %v5533 = vsel %vm904, %v5065, 0
      %5535 = vmatprep.subr.mxu0 0.0
      %5536 = vmatpush1.msra.mxu0 %v5530
      %5537 = vmatprep.subr.mxu0 0.0
      %5538 = vmatpush1.msra.mxu0 0.0
      %5539 = vmatprep.subr.mxu0 0.0
      %5540 = vmatpush1.msra.mxu0 0.0
      %5541 = vmatprep.subr.mxu0 0.0
      %5542 = vmatpush1.msra.mxu0 0.0
      %5543 = vmatprep.subr.mxu0 0.0
      %5544 = vmatpush1.msra.mxu0 0.0
      %5545 = vmatprep.subr.mxu0 0.0
      %5546 = vmatpush1.msra.mxu0 0.0
      %5547 = vmatprep.subr.mxu0 0.0
      %5548 = vmatpush1.msra.mxu0 0.0
      %5549 = vmatprep.subr.mxu0 0.0
      %5550 = vmatpush1.msra.mxu0 0.0
      %5551 = vmatprep.subr.mxu0 0.0
      %5552 = vmatpush1.msra.mxu0 0.0
      %5553 = vmatprep.subr.mxu0 0.0
      %5554 = vmatpush1.msra.mxu0 0.0
      %5555 = vmatprep.subr.mxu0 0.0
      %5556 = vmatpush1.msra.mxu0 0.0
      %5557 = vmatprep.subr.mxu0 0.0
      %5558 = vmatpush1.msra.mxu0 0.0
      %5559 = vmatprep.subr.mxu0 0.0
      %5560 = vmatpush1.msra.mxu0 0.0
      %5561 = vmatprep.subr.mxu0 0.0
      %5562 = vmatpush1.msra.mxu0 0.0
      %5563 = vmatprep.subr.mxu0 0.0
      %5564 = vmatpush1.msra.mxu0 0.0
      %5565 = vmatprep.subr.mxu0 0.0
      %5566 = vmatpush1.msra.mxu0 0.0
      %5567 = vmatprep.subr.mxu0 0.0
      %5568 = vmatpush1.msra.mxu0 0.0
      %5569 = vmatprep.subr.mxu0 0.0
      %5570 = vmatpush1.msra.mxu0 0.0
      %5571 = vmatprep.subr.mxu0 0.0
      %5572 = vmatpush1.msra.mxu0 0.0
      %5573 = vmatprep.subr.mxu0 0.0
      %5574 = vmatpush1.msra.mxu0 0.0
      %5575 = vmatprep.subr.mxu0 0.0
      %5576 = vmatpush1.msra.mxu0 0.0
      %5577 = vmatprep.subr.mxu0 0.0
      %5578 = vmatpush1.msra.mxu0 0.0
      %5579 = vmatprep.subr.mxu0 0.0
      %5580 = vmatpush1.msra.mxu0 0.0
      %5581 = vmatprep.subr.mxu0 0.0
      %5582 = vmatpush1.msra.mxu0 0.0
      %5583 = vmatprep.subr.mxu0 0.0
      %5584 = vmatpush1.msra.mxu0 0.0
      %5585 = vmatprep.subr.mxu0 0.0
      %5586 = vmatpush1.msra.mxu0 0.0
      %5587 = vmatprep.subr.mxu0 0.0
      %5588 = vmatpush1.msra.mxu0 0.0
      %5589 = vmatprep.subr.mxu0 0.0
      %5590 = vmatpush1.msra.mxu0 0.0
      %5591 = vmatprep.subr.mxu0 0.0
      %5592 = vmatpush1.msra.mxu0 0.0
      %5593 = vmatprep.subr.mxu0 0.0
      %5594 = vmatpush1.msra.mxu0 0.0
      %5595 = vmatprep.subr.mxu0 0.0
      %5596 = vmatpush1.msra.mxu0 0.0
      %5597 = vmatprep.subr.mxu0 0.0
      %5598 = vmatpush1.msra.mxu0 0.0
      %5599 = vmatprep.mubr.f32.mxu0 0.0
      %5600 = vmatmul.mubr.f32.gmra.mrb[0].mxu0 %v5533
      %v5601 = vpop.f32.mrb[0].mxu0
      %v5602 = vadd.f32 0.0, %v5601
      %v5603 = vpop.f32.mrb[0].mxu0
      %5604 = vdwg.mxu0
      %v5605 = vmul.f32 %v5602, %v5297
      %5607 = vrot.lane.b32.xlu0 %v5451, 8
      %v5608 = vpop.permute.xlu0 %5607
      %5611 = vrot.lane.b32.xlu0 %v5528, 16
      %v5612 = vpop.permute.xlu0 %5611
      %5615 = vrot.lane.b32.xlu0 %v5605, 24
      %v5616 = vpop.permute.xlu0 %5615
      %v5618 = vsel %vm904, %v5374, %v5608
      %v5619 = vsel %vm3083, %v5618, %v5612
      %v5620 = vsel %vm3085, %v5619, %v5616
      %s5621 = scalar_lea.vmem %s6, 32
      %v5622 = vld [vmem:[%s5621] sm:$0xff]
      %v5623 = vld [vmem:[%s5621 + $0x8] sm:$0xff]
      %v5624 = vld [vmem:[%s5621 + $0x10] sm:$0xff]
      %v5625 = vld [vmem:[%s5621 + $0x18] sm:$0xff]
      %v5627 = vsel %vm670, %v5620, 0
      %5629 = vmatprep.subr.mxu0 0.0
      %5630 = vmatpush1.msra.mxu0 %v5622
      %5631 = vmatprep.subr.mxu0 0.0
      %5632 = vmatpush1.msra.mxu0 %v5623
      %5633 = vmatprep.subr.mxu0 0.0
      %5634 = vmatpush1.msra.mxu0 %v5624
      %5635 = vmatprep.subr.mxu0 0.0
      %5636 = vmatpush1.msra.mxu0 %v5625
      %5637 = vmatprep.subr.mxu0 0.0
      %5638 = vmatpush1.msra.mxu0 0.0
      %5639 = vmatprep.subr.mxu0 0.0
      %5640 = vmatpush1.msra.mxu0 0.0
      %5641 = vmatprep.subr.mxu0 0.0
      %5642 = vmatpush1.msra.mxu0 0.0
      %5643 = vmatprep.subr.mxu0 0.0
      %5644 = vmatpush1.msra.mxu0 0.0
      %5645 = vmatprep.subr.mxu0 0.0
      %5646 = vmatpush1.msra.mxu0 0.0
      %5647 = vmatprep.subr.mxu0 0.0
      %5648 = vmatpush1.msra.mxu0 0.0
      %5649 = vmatprep.subr.mxu0 0.0
      %5650 = vmatpush1.msra.mxu0 0.0
      %5651 = vmatprep.subr.mxu0 0.0
      %5652 = vmatpush1.msra.mxu0 0.0
      %5653 = vmatprep.subr.mxu0 0.0
      %5654 = vmatpush1.msra.mxu0 0.0
      %5655 = vmatprep.subr.mxu0 0.0
      %5656 = vmatpush1.msra.mxu0 0.0
      %5657 = vmatprep.subr.mxu0 0.0
      %5658 = vmatpush1.msra.mxu0 0.0
      %5659 = vmatprep.subr.mxu0 0.0
      %5660 = vmatpush1.msra.mxu0 0.0
      %5661 = vmatprep.subr.mxu0 0.0
      %5662 = vmatpush1.msra.mxu0 0.0
      %5663 = vmatprep.subr.mxu0 0.0
      %5664 = vmatpush1.msra.mxu0 0.0
      %5665 = vmatprep.subr.mxu0 0.0
      %5666 = vmatpush1.msra.mxu0 0.0
      %5667 = vmatprep.subr.mxu0 0.0
      %5668 = vmatpush1.msra.mxu0 0.0
      %5669 = vmatprep.subr.mxu0 0.0
      %5670 = vmatpush1.msra.mxu0 0.0
      %5671 = vmatprep.subr.mxu0 0.0
      %5672 = vmatpush1.msra.mxu0 0.0
      %5673 = vmatprep.subr.mxu0 0.0
      %5674 = vmatpush1.msra.mxu0 0.0
      %5675 = vmatprep.subr.mxu0 0.0
      %5676 = vmatpush1.msra.mxu0 0.0
      %5677 = vmatprep.subr.mxu0 0.0
      %5678 = vmatpush1.msra.mxu0 0.0
      %5679 = vmatprep.subr.mxu0 0.0
      %5680 = vmatpush1.msra.mxu0 0.0
      %5681 = vmatprep.subr.mxu0 0.0
      %5682 = vmatpush1.msra.mxu0 0.0
      %5683 = vmatprep.subr.mxu0 0.0
      %5684 = vmatpush1.msra.mxu0 0.0
      %5685 = vmatprep.subr.mxu0 0.0
      %5686 = vmatpush1.msra.mxu0 0.0
      %5687 = vmatprep.subr.mxu0 0.0
      %5688 = vmatpush1.msra.mxu0 0.0
      %5689 = vmatprep.subr.mxu0 0.0
      %5690 = vmatpush1.msra.mxu0 0.0
      %5691 = vmatprep.subr.mxu0 0.0
      %5692 = vmatpush1.msra.mxu0 0.0
      %5693 = vmatprep.mubr.f32.mxu0 0.0
      %5694 = vmatmul.mubr.f32.gmra.mrb[0].mxu0 %v5627
      %v5695 = vpop.f32.mrb[0].mxu0
      %v5696 = vadd.f32 0.0, %v5695
      %v5697 = vpop.f32.mrb[0].mxu0
      %5698 = vdwg.mxu0
      %v5699 = vadd.f32 %v3398, %v5696
      %s5700 = scalar_lea.vmem %s9, 1
      %v5701 = vld [vmem:[%s5700] sm:$0x1]
      %s5702 = scalar_lea.vmem %s10, 1
      %v5703 = vld [vmem:[%s5702] sm:$0x1]
      %v5704 = vsel %vm670, %v5699, 0.0
      %5705 = vadd.xlane.f32.xlu0 %v5704
      %v5706 = vpop.xlane.xlu0 %5705
      %v5707 = vmul.f32 %v5706, %v3170
      %v5708 = vsub.f32 %v5699, %v5707
      %v5709 = vmul.f32 %v5708, %v5708
      %v5710 = vsel %vm670, %v5709, 0.0
      %5711 = vadd.xlane.f32.xlu0 %v5710
      %v5712 = vpop.xlane.xlu0 %5711
      %v5713 = vmul.f32 %v5712, %v3170
      %v5714 = vadd.f32 %v5713, 1e-05
      %v5715 = vrsqrt.pop %v5714
      %v5716 = vmul.f32 %v5708, %v5715
      %v5718 = vlaneseq
      %v5719 = vshrl.u32 %v5718, 7
      %v5720 = vsub.s32 0, %v5719
      %v5721 = vrot.slane %v5701, %v5720
      %v5723 = vmul.f32 %v5716, %v5721
      %v5725 = vlaneseq
      %v5726 = vshrl.u32 %v5725, 7
      %v5727 = vsub.s32 0, %v5726
      %v5728 = vrot.slane %v5703, %v5727
      %v5730 = vadd.f32 %v5723, %v5728
      %s5731 = scalar_lea.vmem %s11, 32
      %v5732 = vld [vmem:[%s5731] sm:$0xff]
      %v5733 = vld [vmem:[%s5731 + $0x8] sm:$0xff]
      %v5734 = vld [vmem:[%s5731 + $0x10] sm:$0xff]
      %v5735 = vld [vmem:[%s5731 + $0x18] sm:$0xff]
      %s5736 = scalar_lea.vmem %s12, 1
      %v5737 = vld [vmem:[%s5736] sm:$0x1]
      %v5739 = vlaneseq
      %v5740 = vshrl.u32 %v5739, 7
      %v5741 = vsub.s32 0, %v5740
      %v5742 = vrot.slane %v5737, %v5741
      %v5745 = vsel %vm670, %v5730, 0
      %5747 = vmatprep.subr.mxu0 0.0
      %5748 = vmatpush1.msra.mxu0 %v5732
      %5749 = vmatprep.subr.mxu0 0.0
      %5750 = vmatpush1.msra.mxu0 %v5733
      %5751 = vmatprep.subr.mxu0 0.0
      %5752 = vmatpush1.msra.mxu0 %v5734
      %5753 = vmatprep.subr.mxu0 0.0
      %5754 = vmatpush1.msra.mxu0 %v5735
      %5755 = vmatprep.subr.mxu0 0.0
      %5756 = vmatpush1.msra.mxu0 0.0
      %5757 = vmatprep.subr.mxu0 0.0
      %5758 = vmatpush1.msra.mxu0 0.0
      %5759 = vmatprep.subr.mxu0 0.0
      %5760 = vmatpush1.msra.mxu0 0.0
      %5761 = vmatprep.subr.mxu0 0.0
      %5762 = vmatpush1.msra.mxu0 0.0
      %5763 = vmatprep.subr.mxu0 0.0
      %5764 = vmatpush1.msra.mxu0 0.0
      %5765 = vmatprep.subr.mxu0 0.0
      %5766 = vmatpush1.msra.mxu0 0.0
      %5767 = vmatprep.subr.mxu0 0.0
      %5768 = vmatpush1.msra.mxu0 0.0
      %5769 = vmatprep.subr.mxu0 0.0
      %5770 = vmatpush1.msra.mxu0 0.0
      %5771 = vmatprep.subr.mxu0 0.0
      %5772 = vmatpush1.msra.mxu0 0.0
      %5773 = vmatprep.subr.mxu0 0.0
      %5774 = vmatpush1.msra.mxu0 0.0
      %5775 = vmatprep.subr.mxu0 0.0
      %5776 = vmatpush1.msra.mxu0 0.0
      %5777 = vmatprep.subr.mxu0 0.0
      %5778 = vmatpush1.msra.mxu0 0.0
      %5779 = vmatprep.subr.mxu0 0.0
      %5780 = vmatpush1.msra.mxu0 0.0
      %5781 = vmatprep.subr.mxu0 0.0
      %5782 = vmatpush1.msra.mxu0 0.0
      %5783 = vmatprep.subr.mxu0 0.0
      %5784 = vmatpush1.msra.mxu0 0.0
      %5785 = vmatprep.subr.mxu0 0.0
      %5786 = vmatpush1.msra.mxu0 0.0
      %5787 = vmatprep.subr.mxu0 0.0
      %5788 = vmatpush1.msra.mxu0 0.0
      %5789 = vmatprep.subr.mxu0 0.0
      %5790 = vmatpush1.msra.mxu0 0.0
      %5791 = vmatprep.subr.mxu0 0.0
      %5792 = vmatpush1.msra.mxu0 0.0
      %5793 = vmatprep.subr.mxu0 0.0
      %5794 = vmatpush1.msra.mxu0 0.0
      %5795 = vmatprep.subr.mxu0 0.0
      %5796 = vmatpush1.msra.mxu0 0.0
      %5797 = vmatprep.subr.mxu0 0.0
      %5798 = vmatpush1.msra.mxu0 0.0
      %5799 = vmatprep.subr.mxu0 0.0
      %5800 = vmatpush1.msra.mxu0 0.0
      %5801 = vmatprep.subr.mxu0 0.0
      %5802 = vmatpush1.msra.mxu0 0.0
      %5803 = vmatprep.subr.mxu0 0.0
      %5804 = vmatpush1.msra.mxu0 0.0
      %5805 = vmatprep.subr.mxu0 0.0
      %5806 = vmatpush1.msra.mxu0 0.0
      %5807 = vmatprep.subr.mxu0 0.0
      %5808 = vmatpush1.msra.mxu0 0.0
      %5809 = vmatprep.subr.mxu0 0.0
      %5810 = vmatpush1.msra.mxu0 0.0
      %5811 = vmatprep.mubr.f32.mxu0 0.0
      %5812 = vmatmul.mubr.f32.gmra.mrb[0].mxu0 %v5745
      %v5813 = vpop.f32.mrb[0].mxu0
      %v5814 = vadd.f32 %v5742, %v5813
      %v5815 = vpop.f32.mrb[0].mxu0
      %5816 = vdwg.mxu0
      %v5817 = vmax.f32 %v5814, 0.0
      %s5818 = scalar_lea.vmem %s13, 64
      %v5819 = vld [vmem:[%s5818] sm:$0xff]
      %v5820 = vld [vmem:[%s5818 + $0x8] sm:$0xff]
      %v5821 = vld [vmem:[%s5818 + $0x10] sm:$0xff]
      %v5822 = vld [vmem:[%s5818 + $0x18] sm:$0xff]
      %v5823 = vld [vmem:[%s5818 + $0x20] sm:$0xff]
      %v5824 = vld [vmem:[%s5818 + $0x28] sm:$0xff]
      %v5825 = vld [vmem:[%s5818 + $0x30] sm:$0xff]
      %v5826 = vld [vmem:[%s5818 + $0x38] sm:$0xff]
      %s5827 = scalar_lea.vmem %s14, 1
      %v5828 = vld [vmem:[%s5827] sm:$0x1]
      %v5830 = vlaneseq
      %v5831 = vshrl.u32 %v5830, 7
      %v5832 = vsub.s32 0, %v5831
      %v5833 = vrot.slane %v5828, %v5832
      %v5836 = vsel %vm3295, %v5817, 0
      %5838 = vmatprep.subr.mxu0 0.0
      %5839 = vmatpush1.msra.mxu0 %v5819
      %5840 = vmatprep.subr.mxu0 0.0
      %5841 = vmatpush1.msra.mxu0 %v5820
      %5842 = vmatprep.subr.mxu0 0.0
      %5843 = vmatpush1.msra.mxu0 %v5821
      %5844 = vmatprep.subr.mxu0 0.0
      %5845 = vmatpush1.msra.mxu0 %v5822
      %5846 = vmatprep.subr.mxu0 0.0
      %5847 = vmatpush1.msra.mxu0 %v5823
      %5848 = vmatprep.subr.mxu0 0.0
      %5849 = vmatpush1.msra.mxu0 %v5824
      %5850 = vmatprep.subr.mxu0 0.0
      %5851 = vmatpush1.msra.mxu0 %v5825
      %5852 = vmatprep.subr.mxu0 0.0
      %5853 = vmatpush1.msra.mxu0 %v5826
      %5854 = vmatprep.subr.mxu0 0.0
      %5855 = vmatpush1.msra.mxu0 0.0
      %5856 = vmatprep.subr.mxu0 0.0
      %5857 = vmatpush1.msra.mxu0 0.0
      %5858 = vmatprep.subr.mxu0 0.0
      %5859 = vmatpush1.msra.mxu0 0.0
      %5860 = vmatprep.subr.mxu0 0.0
      %5861 = vmatpush1.msra.mxu0 0.0
      %5862 = vmatprep.subr.mxu0 0.0
      %5863 = vmatpush1.msra.mxu0 0.0
      %5864 = vmatprep.subr.mxu0 0.0
      %5865 = vmatpush1.msra.mxu0 0.0
      %5866 = vmatprep.subr.mxu0 0.0
      %5867 = vmatpush1.msra.mxu0 0.0
      %5868 = vmatprep.subr.mxu0 0.0
      %5869 = vmatpush1.msra.mxu0 0.0
      %5870 = vmatprep.subr.mxu0 0.0
      %5871 = vmatpush1.msra.mxu0 0.0
      %5872 = vmatprep.subr.mxu0 0.0
      %5873 = vmatpush1.msra.mxu0 0.0
      %5874 = vmatprep.subr.mxu0 0.0
      %5875 = vmatpush1.msra.mxu0 0.0
      %5876 = vmatprep.subr.mxu0 0.0
      %5877 = vmatpush1.msra.mxu0 0.0
      %5878 = vmatprep.subr.mxu0 0.0
      %5879 = vmatpush1.msra.mxu0 0.0
      %5880 = vmatprep.subr.mxu0 0.0
      %5881 = vmatpush1.msra.mxu0 0.0
      %5882 = vmatprep.subr.mxu0 0.0
      %5883 = vmatpush1.msra.mxu0 0.0
      %5884 = vmatprep.subr.mxu0 0.0
      %5885 = vmatpush1.msra.mxu0 0.0
      %5886 = vmatprep.subr.mxu0 0.0
      %5887 = vmatpush1.msra.mxu0 0.0
      %5888 = vmatprep.subr.mxu0 0.0
      %5889 = vmatpush1.msra.mxu0 0.0
      %5890 = vmatprep.subr.mxu0 0.0
      %5891 = vmatpush1.msra.mxu0 0.0
      %5892 = vmatprep.subr.mxu0 0.0
      %5893 = vmatpush1.msra.mxu0 0.0
      %5894 = vmatprep.subr.mxu0 0.0
      %5895 = vmatpush1.msra.mxu0 0.0
      %5896 = vmatprep.subr.mxu0 0.0
      %5897 = vmatpush1.msra.mxu0 0.0
      %5898 = vmatprep.subr.mxu0 0.0
      %5899 = vmatpush1.msra.mxu0 0.0
      %5900 = vmatprep.subr.mxu0 0.0
      %5901 = vmatpush1.msra.mxu0 0.0
      %5902 = vmatprep.mubr.f32.mxu0 0.0
      %5903 = vmatmul.mubr.f32.gmra.mrb[0].mxu0 %v5836
      %v5904 = vpop.f32.mrb[0].mxu0
      %v5905 = vadd.f32 %v5833, %v5904
      %v5906 = vpop.f32.mrb[0].mxu0
      %5907 = vdwg.mxu0
      %v5908 = vadd.f32 %v5730, %v5905
      %s5909 = scalar_lea.vmem %s15, 1
      %v5910 = vld [vmem:[%s5909] sm:$0x1]
      %s5911 = scalar_lea.vmem %s16, 1
      %v5912 = vld [vmem:[%s5911] sm:$0x1]
      %v5913 = vsel %vm670, %v5908, 0.0
      %5914 = vadd.xlane.f32.xlu0 %v5913
      %v5915 = vpop.xlane.xlu0 %5914
      %v5916 = vmul.f32 %v5915, %v3170
      %v5917 = vsub.f32 %v5908, %v5916
      %v5918 = vmul.f32 %v5917, %v5917
      %v5919 = vsel %vm670, %v5918, 0.0
      %5920 = vadd.xlane.f32.xlu0 %v5919
      %v5921 = vpop.xlane.xlu0 %5920
      %v5922 = vmul.f32 %v5921, %v3170
      %v5923 = vadd.f32 %v5922, 1e-05
      %v5924 = vrsqrt.pop %v5923
      %v5925 = vmul.f32 %v5917, %v5924
      %v5927 = vlaneseq
      %v5928 = vshrl.u32 %v5927, 7
      %v5929 = vsub.s32 0, %v5928
      %v5930 = vrot.slane %v5910, %v5929
      %v5932 = vmul.f32 %v5925, %v5930
      %v5934 = vlaneseq
      %v5935 = vshrl.u32 %v5934, 7
      %v5936 = vsub.s32 0, %v5935
      %v5937 = vrot.slane %v5912, %v5936
      %v5939 = vadd.f32 %v5932, %v5937
      %v5940 = vld [vmem:[%s17] sm:$0xff]
      %v5941 = vld [vmem:[%s17 + $0x8] sm:$0xff]
      %v5942 = vld [vmem:[%s17 + $0x10] sm:$0xff]
      %v5943 = vld [vmem:[%s17 + $0x18] sm:$0xff]
      %v5944 = vld [vmem:[%s18] sm:$0x1]
      %v5946 = vlaneseq
      %v5947 = vshrl.u32 %v5946, 7
      %v5948 = vsub.s32 0, %v5947
      %v5949 = vrot.slane %v5944, %v5948
      %v5952 = vsel %vm670, %v5939, 0
      %5954 = vmatprep.subr.mxu0 0.0
      %5955 = vmatpush1.msra.mxu0 %v5940
      %5956 = vmatprep.subr.mxu0 0.0
      %5957 = vmatpush1.msra.mxu0 %v5941
      %5958 = vmatprep.subr.mxu0 0.0
      %5959 = vmatpush1.msra.mxu0 %v5942
      %5960 = vmatprep.subr.mxu0 0.0
      %5961 = vmatpush1.msra.mxu0 %v5943
      %5962 = vmatprep.subr.mxu0 0.0
      %5963 = vmatpush1.msra.mxu0 0.0
      %5964 = vmatprep.subr.mxu0 0.0
      %5965 = vmatpush1.msra.mxu0 0.0
      %5966 = vmatprep.subr.mxu0 0.0
      %5967 = vmatpush1.msra.mxu0 0.0
      %5968 = vmatprep.subr.mxu0 0.0
      %5969 = vmatpush1.msra.mxu0 0.0
      %5970 = vmatprep.subr.mxu0 0.0
      %5971 = vmatpush1.msra.mxu0 0.0
      %5972 = vmatprep.subr.mxu0 0.0
      %5973 = vmatpush1.msra.mxu0 0.0
      %5974 = vmatprep.subr.mxu0 0.0
      %5975 = vmatpush1.msra.mxu0 0.0
      %5976 = vmatprep.subr.mxu0 0.0
      %5977 = vmatpush1.msra.mxu0 0.0
      %5978 = vmatprep.subr.mxu0 0.0
      %5979 = vmatpush1.msra.mxu0 0.0
      %5980 = vmatprep.subr.mxu0 0.0
      %5981 = vmatpush1.msra.mxu0 0.0
      %5982 = vmatprep.subr.mxu0 0.0
      %5983 = vmatpush1.msra.mxu0 0.0
      %5984 = vmatprep.subr.mxu0 0.0
      %5985 = vmatpush1.msra.mxu0 0.0
      %5986 = vmatprep.subr.mxu0 0.0
      %5987 = vmatpush1.msra.mxu0 0.0
      %5988 = vmatprep.subr.mxu0 0.0
      %5989 = vmatpush1.msra.mxu0 0.0
      %5990 = vmatprep.subr.mxu0 0.0
      %5991 = vmatpush1.msra.mxu0 0.0
      %5992 = vmatprep.subr.mxu0 0.0
      %5993 = vmatpush1.msra.mxu0 0.0
      %5994 = vmatprep.subr.mxu0 0.0
      %5995 = vmatpush1.msra.mxu0 0.0
      %5996 = vmatprep.subr.mxu0 0.0
      %5997 = vmatpush1.msra.mxu0 0.0
      %5998 = vmatprep.subr.mxu0 0.0
      %5999 = vmatpush1.msra.mxu0 0.0
      %6000 = vmatprep.subr.mxu0 0.0
      %6001 = vmatpush1.msra.mxu0 0.0
      %6002 = vmatprep.subr.mxu0 0.0
      %6003 = vmatpush1.msra.mxu0 0.0
      %6004 = vmatprep.subr.mxu0 0.0
      %6005 = vmatpush1.msra.mxu0 0.0
      %6006 = vmatprep.subr.mxu0 0.0
      %6007 = vmatpush1.msra.mxu0 0.0
      %6008 = vmatprep.subr.mxu0 0.0
      %6009 = vmatpush1.msra.mxu0 0.0
      %6010 = vmatprep.subr.mxu0 0.0
      %6011 = vmatpush1.msra.mxu0 0.0
      %6012 = vmatprep.subr.mxu0 0.0
      %6013 = vmatpush1.msra.mxu0 0.0
      %6014 = vmatprep.subr.mxu0 0.0
      %6015 = vmatpush1.msra.mxu0 0.0
      %6016 = vmatprep.subr.mxu0 0.0
      %6017 = vmatpush1.msra.mxu0 0.0
      %6018 = vmatprep.mubr.f32.mxu0 0.0
      %6019 = vmatmul.mubr.f32.gmra.mrb[0].mxu0 %v5952
      %v6020 = vpop.f32.mrb[0].mxu0
      %v6021 = vadd.f32 %v5949, %v6020
      %v6022 = vpop.f32.mrb[0].mxu0
      %6023 = vdwg.mxu0
      %v6024 = vxor.u32 %v6021, 2147483648
      %v6025 = vmul.f32 %v6024, 1.442695
      %v6026 = vpow.pop %v6025
      %v6027 = vadd.f32 %v6026, 1.0
      %v6028 = vrcp.pop %v6027
      %v6029 = vmul.f32 1.0, %v6028
      %6030 = vst [vmem:[%s560] sm:$0xff] %v6029
      %p6031 = scmp.lt.s32.totalorder %s36, 1
      %s6032 = scalar_select %p6031, %s36, 1
      %s6033 = smul.addr %s6032, 8
      %s6034 = scalar_lea.vmem %s19, %s6033
      // Predicated region
      $region93: #{transformer_xl_forward.1} parent=91 // pred_check
        %p6035 = pneg %p432
      $region94: #{transformer_xl_forward.1} parent=91 // pred_check_branch
        %6037 = sbr.rel (%p6035) target = $region96
      $region95: #{transformer_xl_forward.1} parent=91 // pred_region
        _
      $region96: #{transformer_xl_forward.1} parent=91 // pred_fallthru
        _
    $region92: #{transformer_xl_forward.1} parent=5 // pred_fallthru
      _
    %p6038 = scmp.le.s32.totalorder 2, %s31
    // Predicated region
    $region97: #{transformer_xl_forward.1} parent=5 // pred_check
      %p6039 = pneg %p6038
    $region98: #{transformer_xl_forward.1} parent=5 // pred_check_branch
      %6041 = sbr.rel (%p6039) target = $region100
    $region99: #{transformer_xl_forward.1} parent=5 // pred_region
      %s6042 = ssub.s32 %s31, 2
      // Predicated region
      $region101: #{transformer_xl_forward.1} parent=99 // pred_check
        %p6043 = pneg %p438
      $region102: #{transformer_xl_forward.1} parent=99 // pred_check_branch
        %6045 = sbr.rel (%p6043) target = $region104
      $region103: #{transformer_xl_forward.1} parent=99 // pred_region
        %p6046 = scmp.lt.s32.totalorder %s37, 1
        %s6047 = scalar_select %p6046, %s37, 1
        %s6048 = smul.addr %s6047, 8
        %s6049 = scalar_lea.vmem %s19, %s6048
      $region104: #{transformer_xl_forward.1} parent=99 // pred_fallthru
        _
    $region100: #{transformer_xl_forward.1} parent=5 // pred_fallthru
      _
  $region6: #{transformer_xl_forward.1} parent=0 // loop_footer
    %s35 = sadd.s32 1, %s31
  $region7: #{transformer_xl_forward.1} parent=0 // loop_footer_branch
    %30 = sbr.rel target = $region3
  $region8: #{transformer_xl_forward.1} parent=0 // loop_exit
    _

</llo_original>
